<compile_context>
chip_gen: v7x
topology: tpu7x:2x2x1
jax: 0.10.0
libtpu: 0.0.40
codegen_flags: <defaults>
</compile_context>

<pallas_src>
import functools

import numpy as np

import jax
import jax.numpy as jnp
from jax import lax
from jax.experimental import pallas as pl
from jax.experimental.pallas import tpu as pltpu

EPS = 1e-5


# ----------------------------------------------------------------------------
# Kernel helpers
# ----------------------------------------------------------------------------
def _mxu_colsum(y, ones_bf):
    """Lane-axis sum of y (C, NT) -> (C, 1) on the MXU.

    hi/lo bf16 split keeps the result at ~f32 accuracy (ones are exactly
    representable in bf16; MXU accumulates in f32), so BN stats match the
    previous exact-XLU-sum numerics while freeing the XLU slot.
    """
    hi = y.astype(jnp.bfloat16)
    lo = (y - hi.astype(jnp.float32)).astype(jnp.bfloat16)
    s = jnp.dot(hi, ones_bf, preferred_element_type=jnp.float32)
    s = s + jnp.dot(lo, ones_bf, preferred_element_type=jnp.float32)
    return s[:, :1]


def _apply_block(h_in, whead_ref, wstk_ref, gam_ref, bet_ref, *,
                 n_groups, identity_shortcut, ones_bf, not_last_t, not_first_t):
    """One ResidualBlock, expressed on values (so blocks chain inside VMEM)."""
    C = wstk_ref.shape[-1]                 # n_fs
    NT = h_in.shape[-1]
    inv_n = 1.0 / NT
    ns = 2 * n_groups                      # number of temporally shifted rows

    # Thanks to the build-time shift-contiguity fold, shifted channels are the
    # first `ns` rows of every perm-conv output.  Roll only that sub-slab when
    # it is sublane-aligned; otherwise fall back to full-tile rolls.
    use_slab = (ns < C) and (ns % 8 == 0)
    if use_slab:
        is_left_top = lax.broadcasted_iota(jnp.int32, (ns, 1), 0) < n_groups
    else:
        ridx = lax.broadcasted_iota(jnp.int32, (C, 1), 0)
        is_left_full = ridx < n_groups
        is_right_full = (ridx >= n_groups) & (ridx < ns)

    def batchnorm(y, k):
        # training-mode BatchNorm1d: one-pass batch stats, folded into one FMA.
        mu = _mxu_colsum(y, ones_bf) * inv_n
        var = jnp.maximum(_mxu_colsum(y * y, ones_bf) * inv_n - mu * mu, 0.0)
        scale = gam_ref[k] * lax.rsqrt(var + EPS)       # (C, 1)
        shift = bet_ref[k] - mu * scale                 # (C, 1)
        return y * scale + shift

    def temporal_shift(h):
        # InplaceShift: c%slide==0 shifts left in time, c%slide==1 shifts
        # right, zero fill; time masks also stop leakage across batch
        # boundaries in the flattened N*T axis.
        src = h[:ns] if use_slab else h
        left = jnp.where(not_last_t, pltpu.roll(src, NT - 1, axis=1), 0.0)
        right = jnp.where(not_first_t, pltpu.roll(src, 1, axis=1), 0.0)
        if use_slab:
            shifted = jnp.where(is_left_top, left, right)
            return jnp.concatenate([shifted, h[ns:]], axis=0)
        return jnp.where(is_left_full, left, jnp.where(is_right_full, right, h))

    def gts_tail(h, w_gts, k_perm, k_gts):
        # BN+relu of the perm conv output -> shift -> GTS conv -> BN
        # (channel_shuffle is pre-folded into w_gts rows / BN params).
        h = jnp.maximum(batchnorm(h, k_perm), 0.0)
        h = temporal_shift(h)
        h = jnp.dot(w_gts, h, preferred_element_type=jnp.float32)
        return batchnorm(h, k_gts)

    if identity_shortcut:
        # i_nc == n_fs: shortcut is BatchNorm only (per the reference module).
        h1 = jnp.dot(whead_ref[...], h_in, preferred_element_type=jnp.float32)
        sc_pre = h_in
    else:
        # fused [perm1; shortcut-conv] matmul sharing the same input read.
        head = jnp.dot(whead_ref[...], h_in, preferred_element_type=jnp.float32)
        h1 = head[:C]
        sc_pre = head[C:]

    h = jnp.maximum(gts_tail(h1, wstk_ref[0], 0, 1), 0.0)            # relu(conv1)
    h = jnp.dot(wstk_ref[1], h, preferred_element_type=jnp.float32)  # perm2
    h = jnp.maximum(gts_tail(h, wstk_ref[2], 2, 3), 0.0)             # relu(conv2)
    h = jnp.dot(wstk_ref[3], h, preferred_element_type=jnp.float32)  # perm3
    h = gts_tail(h, wstk_ref[4], 4, 5)                               # conv3

    sc = batchnorm(sc_pre, 6)
    return jnp.maximum(h + sc, 0.0)


def _residual_chain_kernel(*refs, T, block_cfgs):
    """refs = (x_ref, [whead, wstack, gammas, betas] * n_blocks, o_ref)."""
    x_ref, o_ref = refs[0], refs[-1]
    NT = o_ref.shape[-1]

    # Hoisted once per call (shared by all blocks / all BNs): bf16 ones column
    # block for MXU moment sums and the time-boundary masks for the shift.
    ones_bf = jnp.ones((NT, 128), jnp.bfloat16)
    t_mod = lax.broadcasted_iota(jnp.int32, (1, NT), 1) % T
    not_last_t = t_mod != (T - 1)
    not_first_t = t_mod != 0

    h = x_ref[...]
    for b, (n_groups, identity_shortcut) in enumerate(block_cfgs):
        whead_ref, wstk_ref, gam_ref, bet_ref = refs[1 + 4 * b: 5 + 4 * b]
        h = _apply_block(h, whead_ref, wstk_ref, gam_ref, bet_ref,
                         n_groups=n_groups,
                         identity_shortcut=identity_shortcut,
                         ones_bf=ones_bf,
                         not_last_t=not_last_t, not_first_t=not_first_t)
    o_ref[...] = h


# ----------------------------------------------------------------------------
# Parameter construction (PyTorch shapes, bias=False) + build-time folds
# ----------------------------------------------------------------------------
def _block_diag(w, groups):
    """Expand a grouped 1x1-conv weight (Cout, Cin//groups) to dense (Cout, Cin)."""
    cout, cin_pg = w.shape
    cin = cin_pg * groups
    cout_pg = cout // groups
    dense = jnp.zeros((cout, cin), w.dtype)
    for g in range(groups):
        dense = dense.at[g * cout_pg:(g + 1) * cout_pg,
                         g * cin_pg:(g + 1) * cin_pg].set(
            w[g * cout_pg:(g + 1) * cout_pg])
    return dense


def build_params(key, i_nc, n_fs, n_groups, first_grouped_conv=True):
    """Deterministic parameters, then channel_shuffle + shift-contiguity folds."""
    g = n_groups
    gc1 = n_groups if first_grouped_conv else 1
    slide = n_fs // g
    assert slide >= 2, "GTSConv requires n_fs // n_groups >= 2"
    keys = jax.random.split(key, 32)
    kit = iter(range(32))

    def conv_w(cout, cin_per_group):
        bound = 1.0 / (cin_per_group ** 0.5)
        return jax.random.uniform(keys[next(kit)], (cout, cin_per_group),
                                  jnp.float32, -bound, bound)

    def bn_params():
        gamma = 1.0 + 0.1 * jax.random.normal(keys[next(kit)], (n_fs,), jnp.float32)
        beta = 0.1 * jax.random.normal(keys[next(kit)], (n_fs,), jnp.float32)
        return gamma, beta

    # conv1 = GTSConvUnit(i_nc, n_fs, g, first_grouped_conv)
    w1p = conv_w(n_fs, i_nc // gc1); g1p, b1p = bn_params()
    w1g = conv_w(n_fs, n_fs // g);   g1g, b1g = bn_params()
    # conv2 = GTSConvUnit(n_fs, n_fs, g)
    w2p = conv_w(n_fs, n_fs // g);   g2p, b2p = bn_params()
    w2g = conv_w(n_fs, n_fs // g);   g2g, b2g = bn_params()
    # conv3 = GTSConvUnit(n_fs, n_fs, g)
    w3p = conv_w(n_fs, n_fs // g);   g3p, b3p = bn_params()
    w3g = conv_w(n_fs, n_fs // g);   g3g, b3g = bn_params()
    # shortcut: BN only when i_nc == n_fs, else 1x1 conv (groups=1) + BN
    wsc = None if i_nc == n_fs else conv_w(n_fs, i_nc)
    gsc, bsc = bn_params()

    # Densify grouped convs to block-diagonal matrices.
    W1p = _block_diag(w1p, gc1)
    W1g = _block_diag(w1g, g)
    W2p = _block_diag(w2p, g)
    W2g = _block_diag(w2g, g)
    W3p = _block_diag(w3p, g)
    W3g = _block_diag(w3g, g)

    # (a) channel_shuffle fold: permute GTSConv output rows + its BN params so
    #     the kernel physically produces the shuffled order (like torch).
    cpg = n_fs // g
    shuf = np.arange(n_fs).reshape(g, cpg).T.reshape(-1)     # shuf[new_c] = old_c

    # (b) shift-contiguity fold: permute the perm-conv OUTPUT channel order so
    #     shifted channels (old c%slide==0 then ==1) are the first 2*g rows.
    #     Applied to perm-conv rows / its BN params and to GTSConv columns, so
    #     the block output is bit-identical to the unpermuted computation.
    left = np.arange(g) * slide
    right = left + 1
    rest = np.array([c for c in range(n_fs) if (c % slide) > 1], dtype=np.int64)
    Q = np.concatenate([left, right, rest])

    def fold_unit(Wp, gp, bp, Wg, gg, bg):
        Wp, gp, bp = Wp[Q], gp[Q], bp[Q]            # perm-conv rows + its BN
        Wg = Wg[:, Q]                               # matching GTSConv columns
        Wg, gg, bg = Wg[shuf], gg[shuf], bg[shuf]   # channel_shuffle on outputs
        return Wp, gp, bp, Wg, gg, bg

    W1p, g1p, b1p, W1g, g1g, b1g = fold_unit(W1p, g1p, b1p, W1g, g1g, b1g)
    W2p, g2p, b2p, W2g, g2g, b2g = fold_unit(W2p, g2p, b2p, W2g, g2g, b2g)
    W3p, g3p, b3p, W3g, g3g, b3g = fold_unit(W3p, g3p, b3p, W3g, g3g, b3g)

    # Fuse the shortcut conv with the first perm conv (same input operand).
    if wsc is None:
        whead = W1p
        identity_shortcut = True
    else:
        whead = jnp.concatenate([W1p, wsc], axis=0)
        identity_shortcut = False

    wstack = jnp.stack([W1g, W2p, W2g, W3p, W3g])
    gammas = jnp.stack([g1p, g1g, g2p, g2g, g3p, g3g, gsc])[:, :, None]
    betas = jnp.stack([b1p, b1g, b2p, b2g, b3p, b3g, bsc])[:, :, None]
    return dict(whead=whead, wstack=wstack, gammas=gammas, betas=betas,
                identity_shortcut=identity_shortcut, n_groups=n_groups)


# ----------------------------------------------------------------------------
# Wrappers
# ----------------------------------------------------------------------------
def _full_spec(shape):
    n = len(shape)
    return pl.BlockSpec(shape, lambda i, _n=n: (0,) * _n)


def _vmem_limit_bytes(operands, out_bytes, n_fs, nt):
    """Scoped-VMEM request clamped to the physical capacity (v7x: 64 MiB/TC)."""
    cap = 64 << 20
    try:
        info_cap = int(pltpu.get_tpu_info().vmem_capacity_bytes)
        if info_cap > 0:
            cap = info_cap
    except Exception:
        pass
    # Default BlockSpec pipelining double-buffers every operand even for a
    # single-step grid, so count inputs/outputs twice.
    io_bytes = 2 * (sum(int(o.size) * o.dtype.itemsize for o in operands) + out_bytes)
    live_acts = 12 * 4 * n_fs * nt            # activations live inside a block
    est = io_bytes + live_acts + (2 << 20)
    return int(min(max(est, 32 << 20), cap - (8 << 20)))


def residual_block_chain_2d(x2d, params_list, *, N, T):
    """Run a chain of ResidualBlocks (no pooling inside) as ONE pallas_call.

    x2d: (C, N*T) float32.  Returns (n_fs_last, N*T), chainable block-to-block.
    """
    NT = N * T
    assert x2d.shape[1] == NT
    n_fs_out = int(params_list[-1]["wstack"].shape[1])

    operands, in_specs, cfgs = [x2d], [_full_spec(x2d.shape)], []
    for p in params_list:
        for name in ("whead", "wstack", "gammas", "betas"):
            arr = p[name]
            operands.append(arr)
            in_specs.append(_full_spec(arr.shape))
        cfgs.append((int(p["n_groups"]), bool(p["identity_shortcut"])))

    vmem_limit = _vmem_limit_bytes(operands, 4 * n_fs_out * NT, n_fs_out, NT)
    kernel = functools.partial(_residual_chain_kernel, T=T, block_cfgs=tuple(cfgs))

    # TODO(synk): NT-tiled two-pass BatchNorm (stats pass + apply pass over a
    # lane grid, core-parallel on v7x) for N*T that outgrows VMEM is not
    # implemented; this path keeps the whole activation slab resident.
    return pl.pallas_call(
        kernel,
        out_shape=jax.ShapeDtypeStruct((n_fs_out, NT), jnp.float32),
        grid_spec=pltpu.PrefetchScalarGridSpec(
            num_scalar_prefetch=0,
            grid=(1,),
            in_specs=in_specs,
            out_specs=_full_spec((n_fs_out, NT)),
        ),
        compiler_params=pltpu.CompilerParams(
            dimension_semantics=("arbitrary",),
            vmem_limit_bytes=vmem_limit),
    )(*operands)


def _max_pool_time_2d(x2d, N, T):
    # adaptive_max_pool1d(x, T//2) for even T == kernel-2/stride-2 max pool.
    # TODO(synk): odd-T adaptive pooling (overlapping windows) not handled.
    assert T % 2 == 0
    C = x2d.shape[0]
    Tp = T // 2
    return x2d.reshape(C, N, Tp, 2).max(axis=-1).reshape(C, N * Tp), Tp


def residual_blocks(x, params_list, *, pools=None):
    """x: (N, C, T) float32 (PyTorch NCT).  Runs a chain of ResidualBlocks.

    Consecutive non-pooling blocks are fused into a single pallas_call; the
    chain is split only at pooling boundaries (pooling runs wrapper-side).
    """
    N, C, T = x.shape
    if pools is None:
        pools = [False] * len(params_list)
    h = jnp.transpose(x, (1, 0, 2)).reshape(C, N * T)
    i = 0
    while i < len(params_list):
        if pools[i]:
            h, T = _max_pool_time_2d(h, N, T)
        j = i + 1
        while j < len(params_list) and not pools[j]:
            j += 1
        h = residual_block_chain_2d(h, params_list[i:j], N=N, T=T)
        i = j
    n_fs = h.shape[0]
    return jnp.transpose(h.reshape(n_fs, N, T), (1, 0, 2))


def residual_block(x, params, *, pool=False):
    """Single-block convenience wrapper: x (N, C, T) -> (N, n_fs, T')."""
    return residual_blocks(x, [params], pools=[pool])


# ----------------------------------------------------------------------------
if __name__ == "__main__":
    N, i_nc, n_fs, n_groups, T = 2, 16, 32, 4, 128
    key = jax.random.PRNGKey(0)
    kx, kp1, kp2 = jax.random.split(key, 3)
    x = jax.random.normal(kx, (N, i_nc, T), jnp.float32)

    # Block 1: i_nc != n_fs -> fused [perm1; shortcut-conv] head matmul.
    params1 = build_params(kp1, i_nc, n_fs, n_groups, first_grouped_conv=True)
    # Block 2: i_nc == n_fs -> BatchNorm-only shortcut (no shortcut matmul).
    params2 = build_params(kp2, n_fs, n_fs, n_groups)

    # Both residual blocks fused into ONE pallas_call: the intermediate
    # (n_fs, N*T) activation never leaves VMEM.
    out = residual_blocks(x, [params1, params2])
    out = jax.block_until_ready(out)
    assert out.shape == (N, n_fs, T), out.shape
    assert bool(jnp.all(jnp.isfinite(out)))

    # Also exercise the single-block + pooling path.
    out_pooled = residual_block(x, params1, pool=True)
    out_pooled = jax.block_until_ready(out_pooled)
    assert out_pooled.shape == (N, n_fs, T // 2), out_pooled.shape
    assert bool(jnp.all(jnp.isfinite(out_pooled)))

    print("KERNEL_OK")
</pallas_src>

<mosaic_0001>
module attributes {stable_mosaic.version = 11 : i64} {
  func.func @_residual_chain_kernel(%arg0: i32, %arg1: memref<16x256xf32, #tpu.memory_space<vmem>>, %arg2: memref<64x16xf32, #tpu.memory_space<vmem>>, %arg3: memref<5x32x32xf32, #tpu.memory_space<vmem>>, %arg4: memref<7x32x1xf32, #tpu.memory_space<vmem>>, %arg5: memref<7x32x1xf32, #tpu.memory_space<vmem>>, %arg6: memref<32x32xf32, #tpu.memory_space<vmem>>, %arg7: memref<5x32x32xf32, #tpu.memory_space<vmem>>, %arg8: memref<7x32x1xf32, #tpu.memory_space<vmem>>, %arg9: memref<7x32x1xf32, #tpu.memory_space<vmem>>, %arg10: memref<32x256xf32, #tpu.memory_space<vmem>>) attributes {dimension_semantics = [#tpu.dimension_semantics<arbitrary>], iteration_bounds = array<i64: 1>, scalar_prefetch = 0 : i64, scratch_operands = 0 : i64, tpu.core_type = #tpu.core_type<tc>, window_params = [{pipeline_mode = #tpu.pipeline_mode<synchronous>, transform_indices = @transform_0, window_bounds = array<i64: 16, 256>}, {pipeline_mode = #tpu.pipeline_mode<synchronous>, transform_indices = @transform_1, window_bounds = array<i64: 64, 16>}, {pipeline_mode = #tpu.pipeline_mode<synchronous>, transform_indices = @transform_2, window_bounds = array<i64: 5, 32, 32>}, {pipeline_mode = #tpu.pipeline_mode<synchronous>, transform_indices = @transform_3, window_bounds = array<i64: 7, 32, 1>}, {pipeline_mode = #tpu.pipeline_mode<synchronous>, transform_indices = @transform_4, window_bounds = array<i64: 7, 32, 1>}, {pipeline_mode = #tpu.pipeline_mode<synchronous>, transform_indices = @transform_5, window_bounds = array<i64: 32, 32>}, {pipeline_mode = #tpu.pipeline_mode<synchronous>, transform_indices = @transform_6, window_bounds = array<i64: 5, 32, 32>}, {pipeline_mode = #tpu.pipeline_mode<synchronous>, transform_indices = @transform_7, window_bounds = array<i64: 7, 32, 1>}, {pipeline_mode = #tpu.pipeline_mode<synchronous>, transform_indices = @transform_8, window_bounds = array<i64: 7, 32, 1>}, {pipeline_mode = #tpu.pipeline_mode<synchronous>, transform_indices = @transform_9, window_bounds = array<i64: 32, 256>}]} {
    %cst = arith.constant 1.000000e+00 : bf16
    %0 = vector.broadcast %cst : bf16 to vector<256x128xbf16>
    %1 = tpu.iota {dimensions = array<i32: 1>} : vector<1x256xi32>
    %c128_i32 = arith.constant 128 : i32
    %c0_i32 = arith.constant 0 : i32
    %2 = arith.cmpi eq, %c128_i32, %c0_i32 : i32
    %c1_i32 = arith.constant 1 : i32
    %3 = arith.select %2, %c1_i32, %c128_i32 : i32
    %4 = vector.broadcast %3 : i32 to vector<1x256xi32>
    %5 = arith.remsi %1, %4 : vector<1x256xi32>
    %c0_i32_0 = arith.constant 0 : i32
    %6 = vector.broadcast %c0_i32_0 : i32 to vector<1x256xi32>
    %7 = arith.cmpi ne, %5, %6 : vector<1x256xi32>
    %c0_i32_1 = arith.constant 0 : i32
    %8 = vector.broadcast %c0_i32_1 : i32 to vector<1x256xi32>
    %9 = arith.cmpi slt, %5, %8 : vector<1x256xi32>
    %c0_i32_2 = arith.constant 0 : i32
    %10 = arith.cmpi slt, %3, %c0_i32_2 : i32
    %11 = vector.broadcast %10 : i1 to vector<1x256xi1>
    %12 = vector.broadcast %11 : vector<1x256xi1> to vector<1x256xi1>
    %13 = arith.xori %9, %12 : vector<1x256xi1>
    %14 = arith.andi %13, %7 : vector<1x256xi1>
    %15 = vector.broadcast %3 : i32 to vector<1x256xi32>
    %16 = arith.addi %5, %15 : vector<1x256xi32>
    %17 = arith.select %14, %16, %5 : vector<1x256xi1>, vector<1x256xi32>
    %c127_i32 = arith.constant 127 : i32
    %18 = vector.broadcast %c127_i32 : i32 to vector<1x256xi32>
    %19 = arith.cmpi ne, %17, %18 : vector<1x256xi32>
    %c0_i32_3 = arith.constant 0 : i32
    %20 = vector.broadcast %c0_i32_3 : i32 to vector<1x256xi32>
    %21 = arith.cmpi ne, %17, %20 : vector<1x256xi32>
    %c0 = arith.constant 0 : index
    %c0_4 = arith.constant 0 : index
    %22 = vector.load %arg1[%c0, %c0_4] : memref<16x256xf32, #tpu.memory_space<vmem>>, vector<16x256xf32>
    %23 = tpu.iota {dimensions = array<i32: 0>} : vector<8x1xi32>
    %c4_i32 = arith.constant 4 : i32
    %24 = vector.broadcast %c4_i32 : i32 to vector<8x1xi32>
    %25 = arith.cmpi slt, %23, %24 : vector<8x1xi32>
    %c0_5 = arith.constant 0 : index
    %c0_6 = arith.constant 0 : index
    %26 = vector.load %arg2[%c0_5, %c0_6] : memref<64x16xf32, #tpu.memory_space<vmem>>, vector<64x16xf32>
    %cst_7 = arith.constant dense<0.000000e+00> : vector<64x256xf32>
    %27 = tpu.matmul %26, %22, %cst_7 {dimension_numbers = #tpu.dot_dimension_numbers<[1], [0], [0], [1], [0, 0, 1, 1], [], []>} : vector<64x16xf32>, vector<16x256xf32>, vector<64x256xf32> -> vector<64x256xf32>
    %28 = vector.extract_strided_slice %27 {offsets = [0, 0], sizes = [32, 256], strides = [1, 1]} : vector<64x256xf32> to vector<32x256xf32>
    %29 = vector.extract_strided_slice %27 {offsets = [32, 0], sizes = [32, 256], strides = [1, 1]} : vector<64x256xf32> to vector<32x256xf32>
    %c0_8 = arith.constant 0 : index
    %c0_9 = arith.constant 0 : index
    %c0_10 = arith.constant 0 : index
    %30 = vector.load %arg3[%c0_8, %c0_9, %c0_10] : memref<5x32x32xf32, #tpu.memory_space<vmem>>, vector<1x32x32xf32>
    %31 = vector.shape_cast %30 : vector<1x32x32xf32> to vector<32x32xf32>
    %32 = arith.truncf %28 : vector<32x256xf32> to vector<32x256xbf16>
    %33 = arith.extf %32 : vector<32x256xbf16> to vector<32x256xf32>
    %34 = arith.subf %28, %33 : vector<32x256xf32>
    %35 = arith.truncf %34 : vector<32x256xf32> to vector<32x256xbf16>
    %cst_11 = arith.constant dense<0.000000e+00> : vector<32x128xf32>
    %36 = tpu.matmul %32, %0, %cst_11 {dimension_numbers = #tpu.dot_dimension_numbers<[1], [0], [0], [1], [0, 0, 1, 1], [], []>} : vector<32x256xbf16>, vector<256x128xbf16>, vector<32x128xf32> -> vector<32x128xf32>
    %cst_12 = arith.constant dense<0.000000e+00> : vector<32x128xf32>
    %37 = tpu.matmul %35, %0, %cst_12 {dimension_numbers = #tpu.dot_dimension_numbers<[1], [0], [0], [1], [0, 0, 1, 1], [], []>} : vector<32x256xbf16>, vector<256x128xbf16>, vector<32x128xf32> -> vector<32x128xf32>
    %38 = arith.addf %36, %37 : vector<32x128xf32>
    %39 = vector.extract_strided_slice %38 {offsets = [0, 0], sizes = [32, 1], strides = [1, 1]} : vector<32x128xf32> to vector<32x1xf32>
    %cst_13 = arith.constant 3.906250e-03 : f32
    %40 = vector.broadcast %cst_13 : f32 to vector<32x1xf32>
    %41 = arith.mulf %39, %40 : vector<32x1xf32>
    %42 = arith.mulf %28, %28 : vector<32x256xf32>
    %43 = arith.truncf %42 : vector<32x256xf32> to vector<32x256xbf16>
    %44 = arith.extf %43 : vector<32x256xbf16> to vector<32x256xf32>
    %45 = arith.subf %42, %44 : vector<32x256xf32>
    %46 = arith.truncf %45 : vector<32x256xf32> to vector<32x256xbf16>
    %cst_14 = arith.constant dense<0.000000e+00> : vector<32x128xf32>
    %47 = tpu.matmul %43, %0, %cst_14 {dimension_numbers = #tpu.dot_dimension_numbers<[1], [0], [0], [1], [0, 0, 1, 1], [], []>} : vector<32x256xbf16>, vector<256x128xbf16>, vector<32x128xf32> -> vector<32x128xf32>
    %cst_15 = arith.constant dense<0.000000e+00> : vector<32x128xf32>
    %48 = tpu.matmul %46, %0, %cst_15 {dimension_numbers = #tpu.dot_dimension_numbers<[1], [0], [0], [1], [0, 0, 1, 1], [], []>} : vector<32x256xbf16>, vector<256x128xbf16>, vector<32x128xf32> -> vector<32x128xf32>
    %49 = arith.addf %47, %48 : vector<32x128xf32>
    %50 = vector.extract_strided_slice %49 {offsets = [0, 0], sizes = [32, 1], strides = [1, 1]} : vector<32x128xf32> to vector<32x1xf32>
    %cst_16 = arith.constant 3.906250e-03 : f32
    %51 = vector.broadcast %cst_16 : f32 to vector<32x1xf32>
    %52 = arith.mulf %50, %51 : vector<32x1xf32>
    %53 = arith.mulf %41, %41 : vector<32x1xf32>
    %54 = arith.subf %52, %53 : vector<32x1xf32>
    %cst_17 = arith.constant 0.000000e+00 : f32
    %55 = vector.broadcast %cst_17 : f32 to vector<32x1xf32>
    %56 = arith.maximumf %54, %55 : vector<32x1xf32>
    %c0_18 = arith.constant 0 : index
    %c0_19 = arith.constant 0 : index
    %c0_20 = arith.constant 0 : index
    %57 = vector.load %arg4[%c0_18, %c0_19, %c0_20] : memref<7x32x1xf32, #tpu.memory_space<vmem>>, vector<1x32x1xf32>
    %58 = vector.shape_cast %57 : vector<1x32x1xf32> to vector<32x1xf32>
    %cst_21 = arith.constant 9.99999974E-6 : f32
    %59 = vector.broadcast %cst_21 : f32 to vector<32x1xf32>
    %60 = arith.addf %56, %59 : vector<32x1xf32>
    %61 = math.rsqrt %60 : vector<32x1xf32>
    %62 = arith.mulf %58, %61 : vector<32x1xf32>
    %c0_22 = arith.constant 0 : index
    %c0_23 = arith.constant 0 : index
    %c0_24 = arith.constant 0 : index
    %63 = vector.load %arg5[%c0_22, %c0_23, %c0_24] : memref<7x32x1xf32, #tpu.memory_space<vmem>>, vector<1x32x1xf32>
    %64 = vector.shape_cast %63 : vector<1x32x1xf32> to vector<32x1xf32>
    %65 = arith.mulf %41, %62 : vector<32x1xf32>
    %66 = arith.subf %64, %65 : vector<32x1xf32>
    %67 = vector.broadcast %62 : vector<32x1xf32> to vector<32x256xf32>
    %68 = arith.mulf %28, %67 : vector<32x256xf32>
    %69 = vector.broadcast %66 : vector<32x1xf32> to vector<32x256xf32>
    %70 = arith.addf %68, %69 : vector<32x256xf32>
    %cst_25 = arith.constant 0.000000e+00 : f32
    %71 = vector.broadcast %cst_25 : f32 to vector<32x256xf32>
    %72 = arith.maximumf %70, %71 : vector<32x256xf32>
    %73 = vector.extract_strided_slice %72 {offsets = [0, 0], sizes = [8, 256], strides = [1, 1]} : vector<32x256xf32> to vector<8x256xf32>
    %c255_i32 = arith.constant 255 : i32
    %74 = tpu.dynamic_rotate %73 by %c255_i32 dim 1 : vector<8x256xf32>, i32 -> vector<8x256xf32>
    %cst_26 = arith.constant 0.000000e+00 : f32
    %75 = vector.shape_cast %19 : vector<1x256xi1> to vector<1x256xi1>
    %76 = vector.broadcast %75 : vector<1x256xi1> to vector<8x256xi1>
    %77 = vector.broadcast %cst_26 : f32 to vector<8x256xf32>
    %78 = arith.select %76, %74, %77 : vector<8x256xi1>, vector<8x256xf32>
    %c1_i32_27 = arith.constant 1 : i32
    %79 = tpu.dynamic_rotate %73 by %c1_i32_27 dim 1 : vector<8x256xf32>, i32 -> vector<8x256xf32>
    %cst_28 = arith.constant 0.000000e+00 : f32
    %80 = vector.shape_cast %21 : vector<1x256xi1> to vector<1x256xi1>
    %81 = vector.broadcast %80 : vector<1x256xi1> to vector<8x256xi1>
    %82 = vector.broadcast %cst_28 : f32 to vector<8x256xf32>
    %83 = arith.select %81, %79, %82 : vector<8x256xi1>, vector<8x256xf32>
    %84 = vector.shape_cast %25 : vector<8x1xi1> to vector<8x1xi1>
    %85 = vector.broadcast %84 : vector<8x1xi1> to vector<8x256xi1>
    %86 = arith.select %85, %78, %83 : vector<8x256xi1>, vector<8x256xf32>
    %87 = vector.extract_strided_slice %72 {offsets = [8, 0], sizes = [24, 256], strides = [1, 1]} : vector<32x256xf32> to vector<24x256xf32>
    %88 = tpu.concatenate %86, %87 in 0 : vector<8x256xf32>, vector<24x256xf32> -> vector<32x256xf32>
    %cst_29 = arith.constant dense<0.000000e+00> : vector<32x256xf32>
    %89 = tpu.matmul %31, %88, %cst_29 {dimension_numbers = #tpu.dot_dimension_numbers<[1], [0], [0], [1], [0, 0, 1, 1], [], []>} : vector<32x32xf32>, vector<32x256xf32>, vector<32x256xf32> -> vector<32x256xf32>
    %90 = arith.truncf %89 : vector<32x256xf32> to vector<32x256xbf16>
    %91 = arith.extf %90 : vector<32x256xbf16> to vector<32x256xf32>
    %92 = arith.subf %89, %91 : vector<32x256xf32>
    %93 = arith.truncf %92 : vector<32x256xf32> to vector<32x256xbf16>
    %cst_30 = arith.constant dense<0.000000e+00> : vector<32x128xf32>
    %94 = tpu.matmul %90, %0, %cst_30 {dimension_numbers = #tpu.dot_dimension_numbers<[1], [0], [0], [1], [0, 0, 1, 1], [], []>} : vector<32x256xbf16>, vector<256x128xbf16>, vector<32x128xf32> -> vector<32x128xf32>
    %cst_31 = arith.constant dense<0.000000e+00> : vector<32x128xf32>
    %95 = tpu.matmul %93, %0, %cst_31 {dimension_numbers = #tpu.dot_dimension_numbers<[1], [0], [0], [1], [0, 0, 1, 1], [], []>} : vector<32x256xbf16>, vector<256x128xbf16>, vector<32x128xf32> -> vector<32x128xf32>
    %96 = arith.addf %94, %95 : vector<32x128xf32>
    %97 = vector.extract_strided_slice %96 {offsets = [0, 0], sizes = [32, 1], strides = [1, 1]} : vector<32x128xf32> to vector<32x1xf32>
    %cst_32 = arith.constant 3.906250e-03 : f32
    %98 = vector.broadcast %cst_32 : f32 to vector<32x1xf32>
    %99 = arith.mulf %97, %98 : vector<32x1xf32>
    %100 = arith.mulf %89, %89 : vector<32x256xf32>
    %101 = arith.truncf %100 : vector<32x256xf32> to vector<32x256xbf16>
    %102 = arith.extf %101 : vector<32x256xbf16> to vector<32x256xf32>
    %103 = arith.subf %100, %102 : vector<32x256xf32>
    %104 = arith.truncf %103 : vector<32x256xf32> to vector<32x256xbf16>
    %cst_33 = arith.constant dense<0.000000e+00> : vector<32x128xf32>
    %105 = tpu.matmul %101, %0, %cst_33 {dimension_numbers = #tpu.dot_dimension_numbers<[1], [0], [0], [1], [0, 0, 1, 1], [], []>} : vector<32x256xbf16>, vector<256x128xbf16>, vector<32x128xf32> -> vector<32x128xf32>
    %cst_34 = arith.constant dense<0.000000e+00> : vector<32x128xf32>
    %106 = tpu.matmul %104, %0, %cst_34 {dimension_numbers = #tpu.dot_dimension_numbers<[1], [0], [0], [1], [0, 0, 1, 1], [], []>} : vector<32x256xbf16>, vector<256x128xbf16>, vector<32x128xf32> -> vector<32x128xf32>
    %107 = arith.addf %105, %106 : vector<32x128xf32>
    %108 = vector.extract_strided_slice %107 {offsets = [0, 0], sizes = [32, 1], strides = [1, 1]} : vector<32x128xf32> to vector<32x1xf32>
    %cst_35 = arith.constant 3.906250e-03 : f32
    %109 = vector.broadcast %cst_35 : f32 to vector<32x1xf32>
    %110 = arith.mulf %108, %109 : vector<32x1xf32>
    %111 = arith.mulf %99, %99 : vector<32x1xf32>
    %112 = arith.subf %110, %111 : vector<32x1xf32>
    %cst_36 = arith.constant 0.000000e+00 : f32
    %113 = vector.broadcast %cst_36 : f32 to vector<32x1xf32>
    %114 = arith.maximumf %112, %113 : vector<32x1xf32>
    %c1 = arith.constant 1 : index
    %c0_37 = arith.constant 0 : index
    %c0_38 = arith.constant 0 : index
    %115 = vector.load %arg4[%c1, %c0_37, %c0_38] : memref<7x32x1xf32, #tpu.memory_space<vmem>>, vector<1x32x1xf32>
    %116 = vector.shape_cast %115 : vector<1x32x1xf32> to vector<32x1xf32>
    %cst_39 = arith.constant 9.99999974E-6 : f32
    %117 = vector.broadcast %cst_39 : f32 to vector<32x1xf32>
    %118 = arith.addf %114, %117 : vector<32x1xf32>
    %119 = math.rsqrt %118 : vector<32x1xf32>
    %120 = arith.mulf %116, %119 : vector<32x1xf32>
    %c1_40 = arith.constant 1 : index
    %c0_41 = arith.constant 0 : index
    %c0_42 = arith.constant 0 : index
    %121 = vector.load %arg5[%c1_40, %c0_41, %c0_42] : memref<7x32x1xf32, #tpu.memory_space<vmem>>, vector<1x32x1xf32>
    %122 = vector.shape_cast %121 : vector<1x32x1xf32> to vector<32x1xf32>
    %123 = arith.mulf %99, %120 : vector<32x1xf32>
    %124 = arith.subf %122, %123 : vector<32x1xf32>
    %125 = vector.broadcast %120 : vector<32x1xf32> to vector<32x256xf32>
    %126 = arith.mulf %89, %125 : vector<32x256xf32>
    %127 = vector.broadcast %124 : vector<32x1xf32> to vector<32x256xf32>
    %128 = arith.addf %126, %127 : vector<32x256xf32>
    %cst_43 = arith.constant 0.000000e+00 : f32
    %129 = vector.broadcast %cst_43 : f32 to vector<32x256xf32>
    %130 = arith.maximumf %128, %129 : vector<32x256xf32>
    %c1_44 = arith.constant 1 : index
    %c0_45 = arith.constant 0 : index
    %c0_46 = arith.constant 0 : index
    %131 = vector.load %arg3[%c1_44, %c0_45, %c0_46] : memref<5x32x32xf32, #tpu.memory_space<vmem>>, vector<1x32x32xf32>
    %132 = vector.shape_cast %131 : vector<1x32x32xf32> to vector<32x32xf32>
    %cst_47 = arith.constant dense<0.000000e+00> : vector<32x256xf32>
    %133 = tpu.matmul %132, %130, %cst_47 {dimension_numbers = #tpu.dot_dimension_numbers<[1], [0], [0], [1], [0, 0, 1, 1], [], []>} : vector<32x32xf32>, vector<32x256xf32>, vector<32x256xf32> -> vector<32x256xf32>
    %c2 = arith.constant 2 : index
    %c0_48 = arith.constant 0 : index
    %c0_49 = arith.constant 0 : index
    %134 = vector.load %arg3[%c2, %c0_48, %c0_49] : memref<5x32x32xf32, #tpu.memory_space<vmem>>, vector<1x32x32xf32>
    %135 = vector.shape_cast %134 : vector<1x32x32xf32> to vector<32x32xf32>
    %136 = arith.truncf %133 : vector<32x256xf32> to vector<32x256xbf16>
    %137 = arith.extf %136 : vector<32x256xbf16> to vector<32x256xf32>
    %138 = arith.subf %133, %137 : vector<32x256xf32>
    %139 = arith.truncf %138 : vector<32x256xf32> to vector<32x256xbf16>
    %cst_50 = arith.constant dense<0.000000e+00> : vector<32x128xf32>
    %140 = tpu.matmul %136, %0, %cst_50 {dimension_numbers = #tpu.dot_dimension_numbers<[1], [0], [0], [1], [0, 0, 1, 1], [], []>} : vector<32x256xbf16>, vector<256x128xbf16>, vector<32x128xf32> -> vector<32x128xf32>
    %cst_51 = arith.constant dense<0.000000e+00> : vector<32x128xf32>
    %141 = tpu.matmul %139, %0, %cst_51 {dimension_numbers = #tpu.dot_dimension_numbers<[1], [0], [0], [1], [0, 0, 1, 1], [], []>} : vector<32x256xbf16>, vector<256x128xbf16>, vector<32x128xf32> -> vector<32x128xf32>
    %142 = arith.addf %140, %141 : vector<32x128xf32>
    %143 = vector.extract_strided_slice %142 {offsets = [0, 0], sizes = [32, 1], strides = [1, 1]} : vector<32x128xf32> to vector<32x1xf32>
    %cst_52 = arith.constant 3.906250e-03 : f32
    %144 = vector.broadcast %cst_52 : f32 to vector<32x1xf32>
    %145 = arith.mulf %143, %144 : vector<32x1xf32>
    %146 = arith.mulf %133, %133 : vector<32x256xf32>
    %147 = arith.truncf %146 : vector<32x256xf32> to vector<32x256xbf16>
    %148 = arith.extf %147 : vector<32x256xbf16> to vector<32x256xf32>
    %149 = arith.subf %146, %148 : vector<32x256xf32>
    %150 = arith.truncf %149 : vector<32x256xf32> to vector<32x256xbf16>
    %cst_53 = arith.constant dense<0.000000e+00> : vector<32x128xf32>
    %151 = tpu.matmul %147, %0, %cst_53 {dimension_numbers = #tpu.dot_dimension_numbers<[1], [0], [0], [1], [0, 0, 1, 1], [], []>} : vector<32x256xbf16>, vector<256x128xbf16>, vector<32x128xf32> -> vector<32x128xf32>
    %cst_54 = arith.constant dense<0.000000e+00> : vector<32x128xf32>
    %152 = tpu.matmul %150, %0, %cst_54 {dimension_numbers = #tpu.dot_dimension_numbers<[1], [0], [0], [1], [0, 0, 1, 1], [], []>} : vector<32x256xbf16>, vector<256x128xbf16>, vector<32x128xf32> -> vector<32x128xf32>
    %153 = arith.addf %151, %152 : vector<32x128xf32>
    %154 = vector.extract_strided_slice %153 {offsets = [0, 0], sizes = [32, 1], strides = [1, 1]} : vector<32x128xf32> to vector<32x1xf32>
    %cst_55 = arith.constant 3.906250e-03 : f32
    %155 = vector.broadcast %cst_55 : f32 to vector<32x1xf32>
    %156 = arith.mulf %154, %155 : vector<32x1xf32>
    %157 = arith.mulf %145, %145 : vector<32x1xf32>
    %158 = arith.subf %156, %157 : vector<32x1xf32>
    %cst_56 = arith.constant 0.000000e+00 : f32
    %159 = vector.broadcast %cst_56 : f32 to vector<32x1xf32>
    %160 = arith.maximumf %158, %159 : vector<32x1xf32>
    %c2_57 = arith.constant 2 : index
    %c0_58 = arith.constant 0 : index
    %c0_59 = arith.constant 0 : index
    %161 = vector.load %arg4[%c2_57, %c0_58, %c0_59] : memref<7x32x1xf32, #tpu.memory_space<vmem>>, vector<1x32x1xf32>
    %162 = vector.shape_cast %161 : vector<1x32x1xf32> to vector<32x1xf32>
    %cst_60 = arith.constant 9.99999974E-6 : f32
    %163 = vector.broadcast %cst_60 : f32 to vector<32x1xf32>
    %164 = arith.addf %160, %163 : vector<32x1xf32>
    %165 = math.rsqrt %164 : vector<32x1xf32>
    %166 = arith.mulf %162, %165 : vector<32x1xf32>
    %c2_61 = arith.constant 2 : index
    %c0_62 = arith.constant 0 : index
    %c0_63 = arith.constant 0 : index
    %167 = vector.load %arg5[%c2_61, %c0_62, %c0_63] : memref<7x32x1xf32, #tpu.memory_space<vmem>>, vector<1x32x1xf32>
    %168 = vector.shape_cast %167 : vector<1x32x1xf32> to vector<32x1xf32>
    %169 = arith.mulf %145, %166 : vector<32x1xf32>
    %170 = arith.subf %168, %169 : vector<32x1xf32>
    %171 = vector.broadcast %166 : vector<32x1xf32> to vector<32x256xf32>
    %172 = arith.mulf %133, %171 : vector<32x256xf32>
    %173 = vector.broadcast %170 : vector<32x1xf32> to vector<32x256xf32>
    %174 = arith.addf %172, %173 : vector<32x256xf32>
    %cst_64 = arith.constant 0.000000e+00 : f32
    %175 = vector.broadcast %cst_64 : f32 to vector<32x256xf32>
    %176 = arith.maximumf %174, %175 : vector<32x256xf32>
    %177 = vector.extract_strided_slice %176 {offsets = [0, 0], sizes = [8, 256], strides = [1, 1]} : vector<32x256xf32> to vector<8x256xf32>
    %c255_i32_65 = arith.constant 255 : i32
    %178 = tpu.dynamic_rotate %177 by %c255_i32_65 dim 1 : vector<8x256xf32>, i32 -> vector<8x256xf32>
    %cst_66 = arith.constant 0.000000e+00 : f32
    %179 = vector.shape_cast %19 : vector<1x256xi1> to vector<1x256xi1>
    %180 = vector.broadcast %179 : vector<1x256xi1> to vector<8x256xi1>
    %181 = vector.broadcast %cst_66 : f32 to vector<8x256xf32>
    %182 = arith.select %180, %178, %181 : vector<8x256xi1>, vector<8x256xf32>
    %c1_i32_67 = arith.constant 1 : i32
    %183 = tpu.dynamic_rotate %177 by %c1_i32_67 dim 1 : vector<8x256xf32>, i32 -> vector<8x256xf32>
    %cst_68 = arith.constant 0.000000e+00 : f32
    %184 = vector.shape_cast %21 : vector<1x256xi1> to vector<1x256xi1>
    %185 = vector.broadcast %184 : vector<1x256xi1> to vector<8x256xi1>
    %186 = vector.broadcast %cst_68 : f32 to vector<8x256xf32>
    %187 = arith.select %185, %183, %186 : vector<8x256xi1>, vector<8x256xf32>
    %188 = vector.shape_cast %25 : vector<8x1xi1> to vector<8x1xi1>
    %189 = vector.broadcast %188 : vector<8x1xi1> to vector<8x256xi1>
    %190 = arith.select %189, %182, %187 : vector<8x256xi1>, vector<8x256xf32>
    %191 = vector.extract_strided_slice %176 {offsets = [8, 0], sizes = [24, 256], strides = [1, 1]} : vector<32x256xf32> to vector<24x256xf32>
    %192 = tpu.concatenate %190, %191 in 0 : vector<8x256xf32>, vector<24x256xf32> -> vector<32x256xf32>
    %cst_69 = arith.constant dense<0.000000e+00> : vector<32x256xf32>
    %193 = tpu.matmul %135, %192, %cst_69 {dimension_numbers = #tpu.dot_dimension_numbers<[1], [0], [0], [1], [0, 0, 1, 1], [], []>} : vector<32x32xf32>, vector<32x256xf32>, vector<32x256xf32> -> vector<32x256xf32>
    %194 = arith.truncf %193 : vector<32x256xf32> to vector<32x256xbf16>
    %195 = arith.extf %194 : vector<32x256xbf16> to vector<32x256xf32>
    %196 = arith.subf %193, %195 : vector<32x256xf32>
    %197 = arith.truncf %196 : vector<32x256xf32> to vector<32x256xbf16>
    %cst_70 = arith.constant dense<0.000000e+00> : vector<32x128xf32>
    %198 = tpu.matmul %194, %0, %cst_70 {dimension_numbers = #tpu.dot_dimension_numbers<[1], [0], [0], [1], [0, 0, 1, 1], [], []>} : vector<32x256xbf16>, vector<256x128xbf16>, vector<32x128xf32> -> vector<32x128xf32>
    %cst_71 = arith.constant dense<0.000000e+00> : vector<32x128xf32>
    %199 = tpu.matmul %197, %0, %cst_71 {dimension_numbers = #tpu.dot_dimension_numbers<[1], [0], [0], [1], [0, 0, 1, 1], [], []>} : vector<32x256xbf16>, vector<256x128xbf16>, vector<32x128xf32> -> vector<32x128xf32>
    %200 = arith.addf %198, %199 : vector<32x128xf32>
    %201 = vector.extract_strided_slice %200 {offsets = [0, 0], sizes = [32, 1], strides = [1, 1]} : vector<32x128xf32> to vector<32x1xf32>
    %cst_72 = arith.constant 3.906250e-03 : f32
    %202 = vector.broadcast %cst_72 : f32 to vector<32x1xf32>
    %203 = arith.mulf %201, %202 : vector<32x1xf32>
    %204 = arith.mulf %193, %193 : vector<32x256xf32>
    %205 = arith.truncf %204 : vector<32x256xf32> to vector<32x256xbf16>
    %206 = arith.extf %205 : vector<32x256xbf16> to vector<32x256xf32>
    %207 = arith.subf %204, %206 : vector<32x256xf32>
    %208 = arith.truncf %207 : vector<32x256xf32> to vector<32x256xbf16>
    %cst_73 = arith.constant dense<0.000000e+00> : vector<32x128xf32>
    %209 = tpu.matmul %205, %0, %cst_73 {dimension_numbers = #tpu.dot_dimension_numbers<[1], [0], [0], [1], [0, 0, 1, 1], [], []>} : vector<32x256xbf16>, vector<256x128xbf16>, vector<32x128xf32> -> vector<32x128xf32>
    %cst_74 = arith.constant dense<0.000000e+00> : vector<32x128xf32>
    %210 = tpu.matmul %208, %0, %cst_74 {dimension_numbers = #tpu.dot_dimension_numbers<[1], [0], [0], [1], [0, 0, 1, 1], [], []>} : vector<32x256xbf16>, vector<256x128xbf16>, vector<32x128xf32> -> vector<32x128xf32>
    %211 = arith.addf %209, %210 : vector<32x128xf32>
    %212 = vector.extract_strided_slice %211 {offsets = [0, 0], sizes = [32, 1], strides = [1, 1]} : vector<32x128xf32> to vector<32x1xf32>
    %cst_75 = arith.constant 3.906250e-03 : f32
    %213 = vector.broadcast %cst_75 : f32 to vector<32x1xf32>
    %214 = arith.mulf %212, %213 : vector<32x1xf32>
    %215 = arith.mulf %203, %203 : vector<32x1xf32>
    %216 = arith.subf %214, %215 : vector<32x1xf32>
    %cst_76 = arith.constant 0.000000e+00 : f32
    %217 = vector.broadcast %cst_76 : f32 to vector<32x1xf32>
    %218 = arith.maximumf %216, %217 : vector<32x1xf32>
    %c3 = arith.constant 3 : index
    %c0_77 = arith.constant 0 : index
    %c0_78 = arith.constant 0 : index
    %219 = vector.load %arg4[%c3, %c0_77, %c0_78] : memref<7x32x1xf32, #tpu.memory_space<vmem>>, vector<1x32x1xf32>
    %220 = vector.shape_cast %219 : vector<1x32x1xf32> to vector<32x1xf32>
    %cst_79 = arith.constant 9.99999974E-6 : f32
    %221 = vector.broadcast %cst_79 : f32 to vector<32x1xf32>
    %222 = arith.addf %218, %221 : vector<32x1xf32>
    %223 = math.rsqrt %222 : vector<32x1xf32>
    %224 = arith.mulf %220, %223 : vector<32x1xf32>
    %c3_80 = arith.constant 3 : index
    %c0_81 = arith.constant 0 : index
    %c0_82 = arith.constant 0 : index
    %225 = vector.load %arg5[%c3_80, %c0_81, %c0_82] : memref<7x32x1xf32, #tpu.memory_space<vmem>>, vector<1x32x1xf32>
    %226 = vector.shape_cast %225 : vector<1x32x1xf32> to vector<32x1xf32>
    %227 = arith.mulf %203, %224 : vector<32x1xf32>
    %228 = arith.subf %226, %227 : vector<32x1xf32>
    %229 = vector.broadcast %224 : vector<32x1xf32> to vector<32x256xf32>
    %230 = arith.mulf %193, %229 : vector<32x256xf32>
    %231 = vector.broadcast %228 : vector<32x1xf32> to vector<32x256xf32>
    %232 = arith.addf %230, %231 : vector<32x256xf32>
    %cst_83 = arith.constant 0.000000e+00 : f32
    %233 = vector.broadcast %cst_83 : f32 to vector<32x256xf32>
    %234 = arith.maximumf %232, %233 : vector<32x256xf32>
    %c3_84 = arith.constant 3 : index
    %c0_85 = arith.constant 0 : index
    %c0_86 = arith.constant 0 : index
    %235 = vector.load %arg3[%c3_84, %c0_85, %c0_86] : memref<5x32x32xf32, #tpu.memory_space<vmem>>, vector<1x32x32xf32>
    %236 = vector.shape_cast %235 : vector<1x32x32xf32> to vector<32x32xf32>
    %cst_87 = arith.constant dense<0.000000e+00> : vector<32x256xf32>
    %237 = tpu.matmul %236, %234, %cst_87 {dimension_numbers = #tpu.dot_dimension_numbers<[1], [0], [0], [1], [0, 0, 1, 1], [], []>} : vector<32x32xf32>, vector<32x256xf32>, vector<32x256xf32> -> vector<32x256xf32>
    %c4 = arith.constant 4 : index
    %c0_88 = arith.constant 0 : index
    %c0_89 = arith.constant 0 : index
    %238 = vector.load %arg3[%c4, %c0_88, %c0_89] : memref<5x32x32xf32, #tpu.memory_space<vmem>>, vector<1x32x32xf32>
    %239 = vector.shape_cast %238 : vector<1x32x32xf32> to vector<32x32xf32>
    %240 = arith.truncf %237 : vector<32x256xf32> to vector<32x256xbf16>
    %241 = arith.extf %240 : vector<32x256xbf16> to vector<32x256xf32>
    %242 = arith.subf %237, %241 : vector<32x256xf32>
    %243 = arith.truncf %242 : vector<32x256xf32> to vector<32x256xbf16>
    %cst_90 = arith.constant dense<0.000000e+00> : vector<32x128xf32>
    %244 = tpu.matmul %240, %0, %cst_90 {dimension_numbers = #tpu.dot_dimension_numbers<[1], [0], [0], [1], [0, 0, 1, 1], [], []>} : vector<32x256xbf16>, vector<256x128xbf16>, vector<32x128xf32> -> vector<32x128xf32>
    %cst_91 = arith.constant dense<0.000000e+00> : vector<32x128xf32>
    %245 = tpu.matmul %243, %0, %cst_91 {dimension_numbers = #tpu.dot_dimension_numbers<[1], [0], [0], [1], [0, 0, 1, 1], [], []>} : vector<32x256xbf16>, vector<256x128xbf16>, vector<32x128xf32> -> vector<32x128xf32>
    %246 = arith.addf %244, %245 : vector<32x128xf32>
    %247 = vector.extract_strided_slice %246 {offsets = [0, 0], sizes = [32, 1], strides = [1, 1]} : vector<32x128xf32> to vector<32x1xf32>
    %cst_92 = arith.constant 3.906250e-03 : f32
    %248 = vector.broadcast %cst_92 : f32 to vector<32x1xf32>
    %249 = arith.mulf %247, %248 : vector<32x1xf32>
    %250 = arith.mulf %237, %237 : vector<32x256xf32>
    %251 = arith.truncf %250 : vector<32x256xf32> to vector<32x256xbf16>
    %252 = arith.extf %251 : vector<32x256xbf16> to vector<32x256xf32>
    %253 = arith.subf %250, %252 : vector<32x256xf32>
    %254 = arith.truncf %253 : vector<32x256xf32> to vector<32x256xbf16>
    %cst_93 = arith.constant dense<0.000000e+00> : vector<32x128xf32>
    %255 = tpu.matmul %251, %0, %cst_93 {dimension_numbers = #tpu.dot_dimension_numbers<[1], [0], [0], [1], [0, 0, 1, 1], [], []>} : vector<32x256xbf16>, vector<256x128xbf16>, vector<32x128xf32> -> vector<32x128xf32>
    %cst_94 = arith.constant dense<0.000000e+00> : vector<32x128xf32>
    %256 = tpu.matmul %254, %0, %cst_94 {dimension_numbers = #tpu.dot_dimension_numbers<[1], [0], [0], [1], [0, 0, 1, 1], [], []>} : vector<32x256xbf16>, vector<256x128xbf16>, vector<32x128xf32> -> vector<32x128xf32>
    %257 = arith.addf %255, %256 : vector<32x128xf32>
    %258 = vector.extract_strided_slice %257 {offsets = [0, 0], sizes = [32, 1], strides = [1, 1]} : vector<32x128xf32> to vector<32x1xf32>
    %cst_95 = arith.constant 3.906250e-03 : f32
    %259 = vector.broadcast %cst_95 : f32 to vector<32x1xf32>
    %260 = arith.mulf %258, %259 : vector<32x1xf32>
    %261 = arith.mulf %249, %249 : vector<32x1xf32>
    %262 = arith.subf %260, %261 : vector<32x1xf32>
    %cst_96 = arith.constant 0.000000e+00 : f32
    %263 = vector.broadcast %cst_96 : f32 to vector<32x1xf32>
    %264 = arith.maximumf %262, %263 : vector<32x1xf32>
    %c4_97 = arith.constant 4 : index
    %c0_98 = arith.constant 0 : index
    %c0_99 = arith.constant 0 : index
    %265 = vector.load %arg4[%c4_97, %c0_98, %c0_99] : memref<7x32x1xf32, #tpu.memory_space<vmem>>, vector<1x32x1xf32>
    %266 = vector.shape_cast %265 : vector<1x32x1xf32> to vector<32x1xf32>
    %cst_100 = arith.constant 9.99999974E-6 : f32
    %267 = vector.broadcast %cst_100 : f32 to vector<32x1xf32>
    %268 = arith.addf %264, %267 : vector<32x1xf32>
    %269 = math.rsqrt %268 : vector<32x1xf32>
    %270 = arith.mulf %266, %269 : vector<32x1xf32>
    %c4_101 = arith.constant 4 : index
    %c0_102 = arith.constant 0 : index
    %c0_103 = arith.constant 0 : index
    %271 = vector.load %arg5[%c4_101, %c0_102, %c0_103] : memref<7x32x1xf32, #tpu.memory_space<vmem>>, vector<1x32x1xf32>
    %272 = vector.shape_cast %271 : vector<1x32x1xf32> to vector<32x1xf32>
    %273 = arith.mulf %249, %270 : vector<32x1xf32>
    %274 = arith.subf %272, %273 : vector<32x1xf32>
    %275 = vector.broadcast %270 : vector<32x1xf32> to vector<32x256xf32>
    %276 = arith.mulf %237, %275 : vector<32x256xf32>
    %277 = vector.broadcast %274 : vector<32x1xf32> to vector<32x256xf32>
    %278 = arith.addf %276, %277 : vector<32x256xf32>
    %cst_104 = arith.constant 0.000000e+00 : f32
    %279 = vector.broadcast %cst_104 : f32 to vector<32x256xf32>
    %280 = arith.maximumf %278, %279 : vector<32x256xf32>
    %281 = vector.extract_strided_slice %280 {offsets = [0, 0], sizes = [8, 256], strides = [1, 1]} : vector<32x256xf32> to vector<8x256xf32>
    %c255_i32_105 = arith.constant 255 : i32
    %282 = tpu.dynamic_rotate %281 by %c255_i32_105 dim 1 : vector<8x256xf32>, i32 -> vector<8x256xf32>
    %cst_106 = arith.constant 0.000000e+00 : f32
    %283 = vector.shape_cast %19 : vector<1x256xi1> to vector<1x256xi1>
    %284 = vector.broadcast %283 : vector<1x256xi1> to vector<8x256xi1>
    %285 = vector.broadcast %cst_106 : f32 to vector<8x256xf32>
    %286 = arith.select %284, %282, %285 : vector<8x256xi1>, vector<8x256xf32>
    %c1_i32_107 = arith.constant 1 : i32
    %287 = tpu.dynamic_rotate %281 by %c1_i32_107 dim 1 : vector<8x256xf32>, i32 -> vector<8x256xf32>
    %cst_108 = arith.constant 0.000000e+00 : f32
    %288 = vector.shape_cast %21 : vector<1x256xi1> to vector<1x256xi1>
    %289 = vector.broadcast %288 : vector<1x256xi1> to vector<8x256xi1>
    %290 = vector.broadcast %cst_108 : f32 to vector<8x256xf32>
    %291 = arith.select %289, %287, %290 : vector<8x256xi1>, vector<8x256xf32>
    %292 = vector.shape_cast %25 : vector<8x1xi1> to vector<8x1xi1>
    %293 = vector.broadcast %292 : vector<8x1xi1> to vector<8x256xi1>
    %294 = arith.select %293, %286, %291 : vector<8x256xi1>, vector<8x256xf32>
    %295 = vector.extract_strided_slice %280 {offsets = [8, 0], sizes = [24, 256], strides = [1, 1]} : vector<32x256xf32> to vector<24x256xf32>
    %296 = tpu.concatenate %294, %295 in 0 : vector<8x256xf32>, vector<24x256xf32> -> vector<32x256xf32>
    %cst_109 = arith.constant dense<0.000000e+00> : vector<32x256xf32>
    %297 = tpu.matmul %239, %296, %cst_109 {dimension_numbers = #tpu.dot_dimension_numbers<[1], [0], [0], [1], [0, 0, 1, 1], [], []>} : vector<32x32xf32>, vector<32x256xf32>, vector<32x256xf32> -> vector<32x256xf32>
    %298 = arith.truncf %297 : vector<32x256xf32> to vector<32x256xbf16>
    %299 = arith.extf %298 : vector<32x256xbf16> to vector<32x256xf32>
    %300 = arith.subf %297, %299 : vector<32x256xf32>
    %301 = arith.truncf %300 : vector<32x256xf32> to vector<32x256xbf16>
    %cst_110 = arith.constant dense<0.000000e+00> : vector<32x128xf32>
    %302 = tpu.matmul %298, %0, %cst_110 {dimension_numbers = #tpu.dot_dimension_numbers<[1], [0], [0], [1], [0, 0, 1, 1], [], []>} : vector<32x256xbf16>, vector<256x128xbf16>, vector<32x128xf32> -> vector<32x128xf32>
    %cst_111 = arith.constant dense<0.000000e+00> : vector<32x128xf32>
    %303 = tpu.matmul %301, %0, %cst_111 {dimension_numbers = #tpu.dot_dimension_numbers<[1], [0], [0], [1], [0, 0, 1, 1], [], []>} : vector<32x256xbf16>, vector<256x128xbf16>, vector<32x128xf32> -> vector<32x128xf32>
    %304 = arith.addf %302, %303 : vector<32x128xf32>
    %305 = vector.extract_strided_slice %304 {offsets = [0, 0], sizes = [32, 1], strides = [1, 1]} : vector<32x128xf32> to vector<32x1xf32>
    %cst_112 = arith.constant 3.906250e-03 : f32
    %306 = vector.broadcast %cst_112 : f32 to vector<32x1xf32>
    %307 = arith.mulf %305, %306 : vector<32x1xf32>
    %308 = arith.mulf %297, %297 : vector<32x256xf32>
    %309 = arith.truncf %308 : vector<32x256xf32> to vector<32x256xbf16>
    %310 = arith.extf %309 : vector<32x256xbf16> to vector<32x256xf32>
    %311 = arith.subf %308, %310 : vector<32x256xf32>
    %312 = arith.truncf %311 : vector<32x256xf32> to vector<32x256xbf16>
    %cst_113 = arith.constant dense<0.000000e+00> : vector<32x128xf32>
    %313 = tpu.matmul %309, %0, %cst_113 {dimension_numbers = #tpu.dot_dimension_numbers<[1], [0], [0], [1], [0, 0, 1, 1], [], []>} : vector<32x256xbf16>, vector<256x128xbf16>, vector<32x128xf32> -> vector<32x128xf32>
    %cst_114 = arith.constant dense<0.000000e+00> : vector<32x128xf32>
    %314 = tpu.matmul %312, %0, %cst_114 {dimension_numbers = #tpu.dot_dimension_numbers<[1], [0], [0], [1], [0, 0, 1, 1], [], []>} : vector<32x256xbf16>, vector<256x128xbf16>, vector<32x128xf32> -> vector<32x128xf32>
    %315 = arith.addf %313, %314 : vector<32x128xf32>
    %316 = vector.extract_strided_slice %315 {offsets = [0, 0], sizes = [32, 1], strides = [1, 1]} : vector<32x128xf32> to vector<32x1xf32>
    %cst_115 = arith.constant 3.906250e-03 : f32
    %317 = vector.broadcast %cst_115 : f32 to vector<32x1xf32>
    %318 = arith.mulf %316, %317 : vector<32x1xf32>
    %319 = arith.mulf %307, %307 : vector<32x1xf32>
    %320 = arith.subf %318, %319 : vector<32x1xf32>
    %cst_116 = arith.constant 0.000000e+00 : f32
    %321 = vector.broadcast %cst_116 : f32 to vector<32x1xf32>
    %322 = arith.maximumf %320, %321 : vector<32x1xf32>
    %c5 = arith.constant 5 : index
    %c0_117 = arith.constant 0 : index
    %c0_118 = arith.constant 0 : index
    %323 = vector.load %arg4[%c5, %c0_117, %c0_118] : memref<7x32x1xf32, #tpu.memory_space<vmem>>, vector<1x32x1xf32>
    %324 = vector.shape_cast %323 : vector<1x32x1xf32> to vector<32x1xf32>
    %cst_119 = arith.constant 9.99999974E-6 : f32
    %325 = vector.broadcast %cst_119 : f32 to vector<32x1xf32>
    %326 = arith.addf %322, %325 : vector<32x1xf32>
    %327 = math.rsqrt %326 : vector<32x1xf32>
    %328 = arith.mulf %324, %327 : vector<32x1xf32>
    %c5_120 = arith.constant 5 : index
    %c0_121 = arith.constant 0 : index
    %c0_122 = arith.constant 0 : index
    %329 = vector.load %arg5[%c5_120, %c0_121, %c0_122] : memref<7x32x1xf32, #tpu.memory_space<vmem>>, vector<1x32x1xf32>
    %330 = vector.shape_cast %329 : vector<1x32x1xf32> to vector<32x1xf32>
    %331 = arith.mulf %307, %328 : vector<32x1xf32>
    %332 = arith.subf %330, %331 : vector<32x1xf32>
    %333 = vector.broadcast %328 : vector<32x1xf32> to vector<32x256xf32>
    %334 = arith.mulf %297, %333 : vector<32x256xf32>
    %335 = vector.broadcast %332 : vector<32x1xf32> to vector<32x256xf32>
    %336 = arith.addf %334, %335 : vector<32x256xf32>
    %337 = arith.truncf %29 : vector<32x256xf32> to vector<32x256xbf16>
    %338 = arith.extf %337 : vector<32x256xbf16> to vector<32x256xf32>
    %339 = arith.subf %29, %338 : vector<32x256xf32>
    %340 = arith.truncf %339 : vector<32x256xf32> to vector<32x256xbf16>
    %cst_123 = arith.constant dense<0.000000e+00> : vector<32x128xf32>
    %341 = tpu.matmul %337, %0, %cst_123 {dimension_numbers = #tpu.dot_dimension_numbers<[1], [0], [0], [1], [0, 0, 1, 1], [], []>} : vector<32x256xbf16>, vector<256x128xbf16>, vector<32x128xf32> -> vector<32x128xf32>
    %cst_124 = arith.constant dense<0.000000e+00> : vector<32x128xf32>
    %342 = tpu.matmul %340, %0, %cst_124 {dimension_numbers = #tpu.dot_dimension_numbers<[1], [0], [0], [1], [0, 0, 1, 1], [], []>} : vector<32x256xbf16>, vector<256x128xbf16>, vector<32x128xf32> -> vector<32x128xf32>
    %343 = arith.addf %341, %342 : vector<32x128xf32>
    %344 = vector.extract_strided_slice %343 {offsets = [0, 0], sizes = [32, 1], strides = [1, 1]} : vector<32x128xf32> to vector<32x1xf32>
    %cst_125 = arith.constant 3.906250e-03 : f32
    %345 = vector.broadcast %cst_125 : f32 to vector<32x1xf32>
    %346 = arith.mulf %344, %345 : vector<32x1xf32>
    %347 = arith.mulf %29, %29 : vector<32x256xf32>
    %348 = arith.truncf %347 : vector<32x256xf32> to vector<32x256xbf16>
    %349 = arith.extf %348 : vector<32x256xbf16> to vector<32x256xf32>
    %350 = arith.subf %347, %349 : vector<32x256xf32>
    %351 = arith.truncf %350 : vector<32x256xf32> to vector<32x256xbf16>
    %cst_126 = arith.constant dense<0.000000e+00> : vector<32x128xf32>
    %352 = tpu.matmul %348, %0, %cst_126 {dimension_numbers = #tpu.dot_dimension_numbers<[1], [0], [0], [1], [0, 0, 1, 1], [], []>} : vector<32x256xbf16>, vector<256x128xbf16>, vector<32x128xf32> -> vector<32x128xf32>
    %cst_127 = arith.constant dense<0.000000e+00> : vector<32x128xf32>
    %353 = tpu.matmul %351, %0, %cst_127 {dimension_numbers = #tpu.dot_dimension_numbers<[1], [0], [0], [1], [0, 0, 1, 1], [], []>} : vector<32x256xbf16>, vector<256x128xbf16>, vector<32x128xf32> -> vector<32x128xf32>
    %354 = arith.addf %352, %353 : vector<32x128xf32>
    %355 = vector.extract_strided_slice %354 {offsets = [0, 0], sizes = [32, 1], strides = [1, 1]} : vector<32x128xf32> to vector<32x1xf32>
    %cst_128 = arith.constant 3.906250e-03 : f32
    %356 = vector.broadcast %cst_128 : f32 to vector<32x1xf32>
    %357 = arith.mulf %355, %356 : vector<32x1xf32>
    %358 = arith.mulf %346, %346 : vector<32x1xf32>
    %359 = arith.subf %357, %358 : vector<32x1xf32>
    %cst_129 = arith.constant 0.000000e+00 : f32
    %360 = vector.broadcast %cst_129 : f32 to vector<32x1xf32>
    %361 = arith.maximumf %359, %360 : vector<32x1xf32>
    %c6 = arith.constant 6 : index
    %c0_130 = arith.constant 0 : index
    %c0_131 = arith.constant 0 : index
    %362 = vector.load %arg4[%c6, %c0_130, %c0_131] : memref<7x32x1xf32, #tpu.memory_space<vmem>>, vector<1x32x1xf32>
    %363 = vector.shape_cast %362 : vector<1x32x1xf32> to vector<32x1xf32>
    %cst_132 = arith.constant 9.99999974E-6 : f32
    %364 = vector.broadcast %cst_132 : f32 to vector<32x1xf32>
    %365 = arith.addf %361, %364 : vector<32x1xf32>
    %366 = math.rsqrt %365 : vector<32x1xf32>
    %367 = arith.mulf %363, %366 : vector<32x1xf32>
    %c6_133 = arith.constant 6 : index
    %c0_134 = arith.constant 0 : index
    %c0_135 = arith.constant 0 : index
    %368 = vector.load %arg5[%c6_133, %c0_134, %c0_135] : memref<7x32x1xf32, #tpu.memory_space<vmem>>, vector<1x32x1xf32>
    %369 = vector.shape_cast %368 : vector<1x32x1xf32> to vector<32x1xf32>
    %370 = arith.mulf %346, %367 : vector<32x1xf32>
    %371 = arith.subf %369, %370 : vector<32x1xf32>
    %372 = vector.broadcast %367 : vector<32x1xf32> to vector<32x256xf32>
    %373 = arith.mulf %29, %372 : vector<32x256xf32>
    %374 = vector.broadcast %371 : vector<32x1xf32> to vector<32x256xf32>
    %375 = arith.addf %373, %374 : vector<32x256xf32>
    %376 = arith.addf %336, %375 : vector<32x256xf32>
    %cst_136 = arith.constant 0.000000e+00 : f32
    %377 = vector.broadcast %cst_136 : f32 to vector<32x256xf32>
    %378 = arith.maximumf %376, %377 : vector<32x256xf32>
    %379 = tpu.iota {dimensions = array<i32: 0>} : vector<8x1xi32>
    %c4_i32_137 = arith.constant 4 : i32
    %380 = vector.broadcast %c4_i32_137 : i32 to vector<8x1xi32>
    %381 = arith.cmpi slt, %379, %380 : vector<8x1xi32>
    %c0_138 = arith.constant 0 : index
    %c0_139 = arith.constant 0 : index
    %382 = vector.load %arg6[%c0_138, %c0_139] : memref<32x32xf32, #tpu.memory_space<vmem>>, vector<32x32xf32>
    %cst_140 = arith.constant dense<0.000000e+00> : vector<32x256xf32>
    %383 = tpu.matmul %382, %378, %cst_140 {dimension_numbers = #tpu.dot_dimension_numbers<[1], [0], [0], [1], [0, 0, 1, 1], [], []>} : vector<32x32xf32>, vector<32x256xf32>, vector<32x256xf32> -> vector<32x256xf32>
    %c0_141 = arith.constant 0 : index
    %c0_142 = arith.constant 0 : index
    %c0_143 = arith.constant 0 : index
    %384 = vector.load %arg7[%c0_141, %c0_142, %c0_143] : memref<5x32x32xf32, #tpu.memory_space<vmem>>, vector<1x32x32xf32>
    %385 = vector.shape_cast %384 : vector<1x32x32xf32> to vector<32x32xf32>
    %386 = arith.truncf %383 : vector<32x256xf32> to vector<32x256xbf16>
    %387 = arith.extf %386 : vector<32x256xbf16> to vector<32x256xf32>
    %388 = arith.subf %383, %387 : vector<32x256xf32>
    %389 = arith.truncf %388 : vector<32x256xf32> to vector<32x256xbf16>
    %cst_144 = arith.constant dense<0.000000e+00> : vector<32x128xf32>
    %390 = tpu.matmul %386, %0, %cst_144 {dimension_numbers = #tpu.dot_dimension_numbers<[1], [0], [0], [1], [0, 0, 1, 1], [], []>} : vector<32x256xbf16>, vector<256x128xbf16>, vector<32x128xf32> -> vector<32x128xf32>
    %cst_145 = arith.constant dense<0.000000e+00> : vector<32x128xf32>
    %391 = tpu.matmul %389, %0, %cst_145 {dimension_numbers = #tpu.dot_dimension_numbers<[1], [0], [0], [1], [0, 0, 1, 1], [], []>} : vector<32x256xbf16>, vector<256x128xbf16>, vector<32x128xf32> -> vector<32x128xf32>
    %392 = arith.addf %390, %391 : vector<32x128xf32>
    %393 = vector.extract_strided_slice %392 {offsets = [0, 0], sizes = [32, 1], strides = [1, 1]} : vector<32x128xf32> to vector<32x1xf32>
    %cst_146 = arith.constant 3.906250e-03 : f32
    %394 = vector.broadcast %cst_146 : f32 to vector<32x1xf32>
    %395 = arith.mulf %393, %394 : vector<32x1xf32>
    %396 = arith.mulf %383, %383 : vector<32x256xf32>
    %397 = arith.truncf %396 : vector<32x256xf32> to vector<32x256xbf16>
    %398 = arith.extf %397 : vector<32x256xbf16> to vector<32x256xf32>
    %399 = arith.subf %396, %398 : vector<32x256xf32>
    %400 = arith.truncf %399 : vector<32x256xf32> to vector<32x256xbf16>
    %cst_147 = arith.constant dense<0.000000e+00> : vector<32x128xf32>
    %401 = tpu.matmul %397, %0, %cst_147 {dimension_numbers = #tpu.dot_dimension_numbers<[1], [0], [0], [1], [0, 0, 1, 1], [], []>} : vector<32x256xbf16>, vector<256x128xbf16>, vector<32x128xf32> -> vector<32x128xf32>
    %cst_148 = arith.constant dense<0.000000e+00> : vector<32x128xf32>
    %402 = tpu.matmul %400, %0, %cst_148 {dimension_numbers = #tpu.dot_dimension_numbers<[1], [0], [0], [1], [0, 0, 1, 1], [], []>} : vector<32x256xbf16>, vector<256x128xbf16>, vector<32x128xf32> -> vector<32x128xf32>
    %403 = arith.addf %401, %402 : vector<32x128xf32>
    %404 = vector.extract_strided_slice %403 {offsets = [0, 0], sizes = [32, 1], strides = [1, 1]} : vector<32x128xf32> to vector<32x1xf32>
    %cst_149 = arith.constant 3.906250e-03 : f32
    %405 = vector.broadcast %cst_149 : f32 to vector<32x1xf32>
    %406 = arith.mulf %404, %405 : vector<32x1xf32>
    %407 = arith.mulf %395, %395 : vector<32x1xf32>
    %408 = arith.subf %406, %407 : vector<32x1xf32>
    %cst_150 = arith.constant 0.000000e+00 : f32
    %409 = vector.broadcast %cst_150 : f32 to vector<32x1xf32>
    %410 = arith.maximumf %408, %409 : vector<32x1xf32>
    %c0_151 = arith.constant 0 : index
    %c0_152 = arith.constant 0 : index
    %c0_153 = arith.constant 0 : index
    %411 = vector.load %arg8[%c0_151, %c0_152, %c0_153] : memref<7x32x1xf32, #tpu.memory_space<vmem>>, vector<1x32x1xf32>
    %412 = vector.shape_cast %411 : vector<1x32x1xf32> to vector<32x1xf32>
    %cst_154 = arith.constant 9.99999974E-6 : f32
    %413 = vector.broadcast %cst_154 : f32 to vector<32x1xf32>
    %414 = arith.addf %410, %413 : vector<32x1xf32>
    %415 = math.rsqrt %414 : vector<32x1xf32>
    %416 = arith.mulf %412, %415 : vector<32x1xf32>
    %c0_155 = arith.constant 0 : index
    %c0_156 = arith.constant 0 : index
    %c0_157 = arith.constant 0 : index
    %417 = vector.load %arg9[%c0_155, %c0_156, %c0_157] : memref<7x32x1xf32, #tpu.memory_space<vmem>>, vector<1x32x1xf32>
    %418 = vector.shape_cast %417 : vector<1x32x1xf32> to vector<32x1xf32>
    %419 = arith.mulf %395, %416 : vector<32x1xf32>
    %420 = arith.subf %418, %419 : vector<32x1xf32>
    %421 = vector.broadcast %416 : vector<32x1xf32> to vector<32x256xf32>
    %422 = arith.mulf %383, %421 : vector<32x256xf32>
    %423 = vector.broadcast %420 : vector<32x1xf32> to vector<32x256xf32>
    %424 = arith.addf %422, %423 : vector<32x256xf32>
    %cst_158 = arith.constant 0.000000e+00 : f32
    %425 = vector.broadcast %cst_158 : f32 to vector<32x256xf32>
    %426 = arith.maximumf %424, %425 : vector<32x256xf32>
    %427 = vector.extract_strided_slice %426 {offsets = [0, 0], sizes = [8, 256], strides = [1, 1]} : vector<32x256xf32> to vector<8x256xf32>
    %c255_i32_159 = arith.constant 255 : i32
    %428 = tpu.dynamic_rotate %427 by %c255_i32_159 dim 1 : vector<8x256xf32>, i32 -> vector<8x256xf32>
    %cst_160 = arith.constant 0.000000e+00 : f32
    %429 = vector.shape_cast %19 : vector<1x256xi1> to vector<1x256xi1>
    %430 = vector.broadcast %429 : vector<1x256xi1> to vector<8x256xi1>
    %431 = vector.broadcast %cst_160 : f32 to vector<8x256xf32>
    %432 = arith.select %430, %428, %431 : vector<8x256xi1>, vector<8x256xf32>
    %c1_i32_161 = arith.constant 1 : i32
    %433 = tpu.dynamic_rotate %427 by %c1_i32_161 dim 1 : vector<8x256xf32>, i32 -> vector<8x256xf32>
    %cst_162 = arith.constant 0.000000e+00 : f32
    %434 = vector.shape_cast %21 : vector<1x256xi1> to vector<1x256xi1>
    %435 = vector.broadcast %434 : vector<1x256xi1> to vector<8x256xi1>
    %436 = vector.broadcast %cst_162 : f32 to vector<8x256xf32>
    %437 = arith.select %435, %433, %436 : vector<8x256xi1>, vector<8x256xf32>
    %438 = vector.shape_cast %381 : vector<8x1xi1> to vector<8x1xi1>
    %439 = vector.broadcast %438 : vector<8x1xi1> to vector<8x256xi1>
    %440 = arith.select %439, %432, %437 : vector<8x256xi1>, vector<8x256xf32>
    %441 = vector.extract_strided_slice %426 {offsets = [8, 0], sizes = [24, 256], strides = [1, 1]} : vector<32x256xf32> to vector<24x256xf32>
    %442 = tpu.concatenate %440, %441 in 0 : vector<8x256xf32>, vector<24x256xf32> -> vector<32x256xf32>
    %cst_163 = arith.constant dense<0.000000e+00> : vector<32x256xf32>
    %443 = tpu.matmul %385, %442, %cst_163 {dimension_numbers = #tpu.dot_dimension_numbers<[1], [0], [0], [1], [0, 0, 1, 1], [], []>} : vector<32x32xf32>, vector<32x256xf32>, vector<32x256xf32> -> vector<32x256xf32>
    %444 = arith.truncf %443 : vector<32x256xf32> to vector<32x256xbf16>
    %445 = arith.extf %444 : vector<32x256xbf16> to vector<32x256xf32>
    %446 = arith.subf %443, %445 : vector<32x256xf32>
    %447 = arith.truncf %446 : vector<32x256xf32> to vector<32x256xbf16>
    %cst_164 = arith.constant dense<0.000000e+00> : vector<32x128xf32>
    %448 = tpu.matmul %444, %0, %cst_164 {dimension_numbers = #tpu.dot_dimension_numbers<[1], [0], [0], [1], [0, 0, 1, 1], [], []>} : vector<32x256xbf16>, vector<256x128xbf16>, vector<32x128xf32> -> vector<32x128xf32>
    %cst_165 = arith.constant dense<0.000000e+00> : vector<32x128xf32>
    %449 = tpu.matmul %447, %0, %cst_165 {dimension_numbers = #tpu.dot_dimension_numbers<[1], [0], [0], [1], [0, 0, 1, 1], [], []>} : vector<32x256xbf16>, vector<256x128xbf16>, vector<32x128xf32> -> vector<32x128xf32>
    %450 = arith.addf %448, %449 : vector<32x128xf32>
    %451 = vector.extract_strided_slice %450 {offsets = [0, 0], sizes = [32, 1], strides = [1, 1]} : vector<32x128xf32> to vector<32x1xf32>
    %cst_166 = arith.constant 3.906250e-03 : f32
    %452 = vector.broadcast %cst_166 : f32 to vector<32x1xf32>
    %453 = arith.mulf %451, %452 : vector<32x1xf32>
    %454 = arith.mulf %443, %443 : vector<32x256xf32>
    %455 = arith.truncf %454 : vector<32x256xf32> to vector<32x256xbf16>
    %456 = arith.extf %455 : vector<32x256xbf16> to vector<32x256xf32>
    %457 = arith.subf %454, %456 : vector<32x256xf32>
    %458 = arith.truncf %457 : vector<32x256xf32> to vector<32x256xbf16>
    %cst_167 = arith.constant dense<0.000000e+00> : vector<32x128xf32>
    %459 = tpu.matmul %455, %0, %cst_167 {dimension_numbers = #tpu.dot_dimension_numbers<[1], [0], [0], [1], [0, 0, 1, 1], [], []>} : vector<32x256xbf16>, vector<256x128xbf16>, vector<32x128xf32> -> vector<32x128xf32>
    %cst_168 = arith.constant dense<0.000000e+00> : vector<32x128xf32>
    %460 = tpu.matmul %458, %0, %cst_168 {dimension_numbers = #tpu.dot_dimension_numbers<[1], [0], [0], [1], [0, 0, 1, 1], [], []>} : vector<32x256xbf16>, vector<256x128xbf16>, vector<32x128xf32> -> vector<32x128xf32>
    %461 = arith.addf %459, %460 : vector<32x128xf32>
    %462 = vector.extract_strided_slice %461 {offsets = [0, 0], sizes = [32, 1], strides = [1, 1]} : vector<32x128xf32> to vector<32x1xf32>
    %cst_169 = arith.constant 3.906250e-03 : f32
    %463 = vector.broadcast %cst_169 : f32 to vector<32x1xf32>
    %464 = arith.mulf %462, %463 : vector<32x1xf32>
    %465 = arith.mulf %453, %453 : vector<32x1xf32>
    %466 = arith.subf %464, %465 : vector<32x1xf32>
    %cst_170 = arith.constant 0.000000e+00 : f32
    %467 = vector.broadcast %cst_170 : f32 to vector<32x1xf32>
    %468 = arith.maximumf %466, %467 : vector<32x1xf32>
    %c1_171 = arith.constant 1 : index
    %c0_172 = arith.constant 0 : index
    %c0_173 = arith.constant 0 : index
    %469 = vector.load %arg8[%c1_171, %c0_172, %c0_173] : memref<7x32x1xf32, #tpu.memory_space<vmem>>, vector<1x32x1xf32>
    %470 = vector.shape_cast %469 : vector<1x32x1xf32> to vector<32x1xf32>
    %cst_174 = arith.constant 9.99999974E-6 : f32
    %471 = vector.broadcast %cst_174 : f32 to vector<32x1xf32>
    %472 = arith.addf %468, %471 : vector<32x1xf32>
    %473 = math.rsqrt %472 : vector<32x1xf32>
    %474 = arith.mulf %470, %473 : vector<32x1xf32>
    %c1_175 = arith.constant 1 : index
    %c0_176 = arith.constant 0 : index
    %c0_177 = arith.constant 0 : index
    %475 = vector.load %arg9[%c1_175, %c0_176, %c0_177] : memref<7x32x1xf32, #tpu.memory_space<vmem>>, vector<1x32x1xf32>
    %476 = vector.shape_cast %475 : vector<1x32x1xf32> to vector<32x1xf32>
    %477 = arith.mulf %453, %474 : vector<32x1xf32>
    %478 = arith.subf %476, %477 : vector<32x1xf32>
    %479 = vector.broadcast %474 : vector<32x1xf32> to vector<32x256xf32>
    %480 = arith.mulf %443, %479 : vector<32x256xf32>
    %481 = vector.broadcast %478 : vector<32x1xf32> to vector<32x256xf32>
    %482 = arith.addf %480, %481 : vector<32x256xf32>
    %cst_178 = arith.constant 0.000000e+00 : f32
    %483 = vector.broadcast %cst_178 : f32 to vector<32x256xf32>
    %484 = arith.maximumf %482, %483 : vector<32x256xf32>
    %c1_179 = arith.constant 1 : index
    %c0_180 = arith.constant 0 : index
    %c0_181 = arith.constant 0 : index
    %485 = vector.load %arg7[%c1_179, %c0_180, %c0_181] : memref<5x32x32xf32, #tpu.memory_space<vmem>>, vector<1x32x32xf32>
    %486 = vector.shape_cast %485 : vector<1x32x32xf32> to vector<32x32xf32>
    %cst_182 = arith.constant dense<0.000000e+00> : vector<32x256xf32>
    %487 = tpu.matmul %486, %484, %cst_182 {dimension_numbers = #tpu.dot_dimension_numbers<[1], [0], [0], [1], [0, 0, 1, 1], [], []>} : vector<32x32xf32>, vector<32x256xf32>, vector<32x256xf32> -> vector<32x256xf32>
    %c2_183 = arith.constant 2 : index
    %c0_184 = arith.constant 0 : index
    %c0_185 = arith.constant 0 : index
    %488 = vector.load %arg7[%c2_183, %c0_184, %c0_185] : memref<5x32x32xf32, #tpu.memory_space<vmem>>, vector<1x32x32xf32>
    %489 = vector.shape_cast %488 : vector<1x32x32xf32> to vector<32x32xf32>
    %490 = arith.truncf %487 : vector<32x256xf32> to vector<32x256xbf16>
    %491 = arith.extf %490 : vector<32x256xbf16> to vector<32x256xf32>
    %492 = arith.subf %487, %491 : vector<32x256xf32>
    %493 = arith.truncf %492 : vector<32x256xf32> to vector<32x256xbf16>
    %cst_186 = arith.constant dense<0.000000e+00> : vector<32x128xf32>
    %494 = tpu.matmul %490, %0, %cst_186 {dimension_numbers = #tpu.dot_dimension_numbers<[1], [0], [0], [1], [0, 0, 1, 1], [], []>} : vector<32x256xbf16>, vector<256x128xbf16>, vector<32x128xf32> -> vector<32x128xf32>
    %cst_187 = arith.constant dense<0.000000e+00> : vector<32x128xf32>
    %495 = tpu.matmul %493, %0, %cst_187 {dimension_numbers = #tpu.dot_dimension_numbers<[1], [0], [0], [1], [0, 0, 1, 1], [], []>} : vector<32x256xbf16>, vector<256x128xbf16>, vector<32x128xf32> -> vector<32x128xf32>
    %496 = arith.addf %494, %495 : vector<32x128xf32>
    %497 = vector.extract_strided_slice %496 {offsets = [0, 0], sizes = [32, 1], strides = [1, 1]} : vector<32x128xf32> to vector<32x1xf32>
    %cst_188 = arith.constant 3.906250e-03 : f32
    %498 = vector.broadcast %cst_188 : f32 to vector<32x1xf32>
    %499 = arith.mulf %497, %498 : vector<32x1xf32>
    %500 = arith.mulf %487, %487 : vector<32x256xf32>
    %501 = arith.truncf %500 : vector<32x256xf32> to vector<32x256xbf16>
    %502 = arith.extf %501 : vector<32x256xbf16> to vector<32x256xf32>
    %503 = arith.subf %500, %502 : vector<32x256xf32>
    %504 = arith.truncf %503 : vector<32x256xf32> to vector<32x256xbf16>
    %cst_189 = arith.constant dense<0.000000e+00> : vector<32x128xf32>
    %505 = tpu.matmul %501, %0, %cst_189 {dimension_numbers = #tpu.dot_dimension_numbers<[1], [0], [0], [1], [0, 0, 1, 1], [], []>} : vector<32x256xbf16>, vector<256x128xbf16>, vector<32x128xf32> -> vector<32x128xf32>
    %cst_190 = arith.constant dense<0.000000e+00> : vector<32x128xf32>
    %506 = tpu.matmul %504, %0, %cst_190 {dimension_numbers = #tpu.dot_dimension_numbers<[1], [0], [0], [1], [0, 0, 1, 1], [], []>} : vector<32x256xbf16>, vector<256x128xbf16>, vector<32x128xf32> -> vector<32x128xf32>
    %507 = arith.addf %505, %506 : vector<32x128xf32>
    %508 = vector.extract_strided_slice %507 {offsets = [0, 0], sizes = [32, 1], strides = [1, 1]} : vector<32x128xf32> to vector<32x1xf32>
    %cst_191 = arith.constant 3.906250e-03 : f32
    %509 = vector.broadcast %cst_191 : f32 to vector<32x1xf32>
    %510 = arith.mulf %508, %509 : vector<32x1xf32>
    %511 = arith.mulf %499, %499 : vector<32x1xf32>
    %512 = arith.subf %510, %511 : vector<32x1xf32>
    %cst_192 = arith.constant 0.000000e+00 : f32
    %513 = vector.broadcast %cst_192 : f32 to vector<32x1xf32>
    %514 = arith.maximumf %512, %513 : vector<32x1xf32>
    %c2_193 = arith.constant 2 : index
    %c0_194 = arith.constant 0 : index
    %c0_195 = arith.constant 0 : index
    %515 = vector.load %arg8[%c2_193, %c0_194, %c0_195] : memref<7x32x1xf32, #tpu.memory_space<vmem>>, vector<1x32x1xf32>
    %516 = vector.shape_cast %515 : vector<1x32x1xf32> to vector<32x1xf32>
    %cst_196 = arith.constant 9.99999974E-6 : f32
    %517 = vector.broadcast %cst_196 : f32 to vector<32x1xf32>
    %518 = arith.addf %514, %517 : vector<32x1xf32>
    %519 = math.rsqrt %518 : vector<32x1xf32>
    %520 = arith.mulf %516, %519 : vector<32x1xf32>
    %c2_197 = arith.constant 2 : index
    %c0_198 = arith.constant 0 : index
    %c0_199 = arith.constant 0 : index
    %521 = vector.load %arg9[%c2_197, %c0_198, %c0_199] : memref<7x32x1xf32, #tpu.memory_space<vmem>>, vector<1x32x1xf32>
    %522 = vector.shape_cast %521 : vector<1x32x1xf32> to vector<32x1xf32>
    %523 = arith.mulf %499, %520 : vector<32x1xf32>
    %524 = arith.subf %522, %523 : vector<32x1xf32>
    %525 = vector.broadcast %520 : vector<32x1xf32> to vector<32x256xf32>
    %526 = arith.mulf %487, %525 : vector<32x256xf32>
    %527 = vector.broadcast %524 : vector<32x1xf32> to vector<32x256xf32>
    %528 = arith.addf %526, %527 : vector<32x256xf32>
    %cst_200 = arith.constant 0.000000e+00 : f32
    %529 = vector.broadcast %cst_200 : f32 to vector<32x256xf32>
    %530 = arith.maximumf %528, %529 : vector<32x256xf32>
    %531 = vector.extract_strided_slice %530 {offsets = [0, 0], sizes = [8, 256], strides = [1, 1]} : vector<32x256xf32> to vector<8x256xf32>
    %c255_i32_201 = arith.constant 255 : i32
    %532 = tpu.dynamic_rotate %531 by %c255_i32_201 dim 1 : vector<8x256xf32>, i32 -> vector<8x256xf32>
    %cst_202 = arith.constant 0.000000e+00 : f32
    %533 = vector.shape_cast %19 : vector<1x256xi1> to vector<1x256xi1>
    %534 = vector.broadcast %533 : vector<1x256xi1> to vector<8x256xi1>
    %535 = vector.broadcast %cst_202 : f32 to vector<8x256xf32>
    %536 = arith.select %534, %532, %535 : vector<8x256xi1>, vector<8x256xf32>
    %c1_i32_203 = arith.constant 1 : i32
    %537 = tpu.dynamic_rotate %531 by %c1_i32_203 dim 1 : vector<8x256xf32>, i32 -> vector<8x256xf32>
    %cst_204 = arith.constant 0.000000e+00 : f32
    %538 = vector.shape_cast %21 : vector<1x256xi1> to vector<1x256xi1>
    %539 = vector.broadcast %538 : vector<1x256xi1> to vector<8x256xi1>
    %540 = vector.broadcast %cst_204 : f32 to vector<8x256xf32>
    %541 = arith.select %539, %537, %540 : vector<8x256xi1>, vector<8x256xf32>
    %542 = vector.shape_cast %381 : vector<8x1xi1> to vector<8x1xi1>
    %543 = vector.broadcast %542 : vector<8x1xi1> to vector<8x256xi1>
    %544 = arith.select %543, %536, %541 : vector<8x256xi1>, vector<8x256xf32>
    %545 = vector.extract_strided_slice %530 {offsets = [8, 0], sizes = [24, 256], strides = [1, 1]} : vector<32x256xf32> to vector<24x256xf32>
    %546 = tpu.concatenate %544, %545 in 0 : vector<8x256xf32>, vector<24x256xf32> -> vector<32x256xf32>
    %cst_205 = arith.constant dense<0.000000e+00> : vector<32x256xf32>
    %547 = tpu.matmul %489, %546, %cst_205 {dimension_numbers = #tpu.dot_dimension_numbers<[1], [0], [0], [1], [0, 0, 1, 1], [], []>} : vector<32x32xf32>, vector<32x256xf32>, vector<32x256xf32> -> vector<32x256xf32>
    %548 = arith.truncf %547 : vector<32x256xf32> to vector<32x256xbf16>
    %549 = arith.extf %548 : vector<32x256xbf16> to vector<32x256xf32>
    %550 = arith.subf %547, %549 : vector<32x256xf32>
    %551 = arith.truncf %550 : vector<32x256xf32> to vector<32x256xbf16>
    %cst_206 = arith.constant dense<0.000000e+00> : vector<32x128xf32>
    %552 = tpu.matmul %548, %0, %cst_206 {dimension_numbers = #tpu.dot_dimension_numbers<[1], [0], [0], [1], [0, 0, 1, 1], [], []>} : vector<32x256xbf16>, vector<256x128xbf16>, vector<32x128xf32> -> vector<32x128xf32>
    %cst_207 = arith.constant dense<0.000000e+00> : vector<32x128xf32>
    %553 = tpu.matmul %551, %0, %cst_207 {dimension_numbers = #tpu.dot_dimension_numbers<[1], [0], [0], [1], [0, 0, 1, 1], [], []>} : vector<32x256xbf16>, vector<256x128xbf16>, vector<32x128xf32> -> vector<32x128xf32>
    %554 = arith.addf %552, %553 : vector<32x128xf32>
    %555 = vector.extract_strided_slice %554 {offsets = [0, 0], sizes = [32, 1], strides = [1, 1]} : vector<32x128xf32> to vector<32x1xf32>
    %cst_208 = arith.constant 3.906250e-03 : f32
    %556 = vector.broadcast %cst_208 : f32 to vector<32x1xf32>
    %557 = arith.mulf %555, %556 : vector<32x1xf32>
    %558 = arith.mulf %547, %547 : vector<32x256xf32>
    %559 = arith.truncf %558 : vector<32x256xf32> to vector<32x256xbf16>
    %560 = arith.extf %559 : vector<32x256xbf16> to vector<32x256xf32>
    %561 = arith.subf %558, %560 : vector<32x256xf32>
    %562 = arith.truncf %561 : vector<32x256xf32> to vector<32x256xbf16>
    %cst_209 = arith.constant dense<0.000000e+00> : vector<32x128xf32>
    %563 = tpu.matmul %559, %0, %cst_209 {dimension_numbers = #tpu.dot_dimension_numbers<[1], [0], [0], [1], [0, 0, 1, 1], [], []>} : vector<32x256xbf16>, vector<256x128xbf16>, vector<32x128xf32> -> vector<32x128xf32>
    %cst_210 = arith.constant dense<0.000000e+00> : vector<32x128xf32>
    %564 = tpu.matmul %562, %0, %cst_210 {dimension_numbers = #tpu.dot_dimension_numbers<[1], [0], [0], [1], [0, 0, 1, 1], [], []>} : vector<32x256xbf16>, vector<256x128xbf16>, vector<32x128xf32> -> vector<32x128xf32>
    %565 = arith.addf %563, %564 : vector<32x128xf32>
    %566 = vector.extract_strided_slice %565 {offsets = [0, 0], sizes = [32, 1], strides = [1, 1]} : vector<32x128xf32> to vector<32x1xf32>
    %cst_211 = arith.constant 3.906250e-03 : f32
    %567 = vector.broadcast %cst_211 : f32 to vector<32x1xf32>
    %568 = arith.mulf %566, %567 : vector<32x1xf32>
    %569 = arith.mulf %557, %557 : vector<32x1xf32>
    %570 = arith.subf %568, %569 : vector<32x1xf32>
    %cst_212 = arith.constant 0.000000e+00 : f32
    %571 = vector.broadcast %cst_212 : f32 to vector<32x1xf32>
    %572 = arith.maximumf %570, %571 : vector<32x1xf32>
    %c3_213 = arith.constant 3 : index
    %c0_214 = arith.constant 0 : index
    %c0_215 = arith.constant 0 : index
    %573 = vector.load %arg8[%c3_213, %c0_214, %c0_215] : memref<7x32x1xf32, #tpu.memory_space<vmem>>, vector<1x32x1xf32>
    %574 = vector.shape_cast %573 : vector<1x32x1xf32> to vector<32x1xf32>
    %cst_216 = arith.constant 9.99999974E-6 : f32
    %575 = vector.broadcast %cst_216 : f32 to vector<32x1xf32>
    %576 = arith.addf %572, %575 : vector<32x1xf32>
    %577 = math.rsqrt %576 : vector<32x1xf32>
    %578 = arith.mulf %574, %577 : vector<32x1xf32>
    %c3_217 = arith.constant 3 : index
    %c0_218 = arith.constant 0 : index
    %c0_219 = arith.constant 0 : index
    %579 = vector.load %arg9[%c3_217, %c0_218, %c0_219] : memref<7x32x1xf32, #tpu.memory_space<vmem>>, vector<1x32x1xf32>
    %580 = vector.shape_cast %579 : vector<1x32x1xf32> to vector<32x1xf32>
    %581 = arith.mulf %557, %578 : vector<32x1xf32>
    %582 = arith.subf %580, %581 : vector<32x1xf32>
    %583 = vector.broadcast %578 : vector<32x1xf32> to vector<32x256xf32>
    %584 = arith.mulf %547, %583 : vector<32x256xf32>
    %585 = vector.broadcast %582 : vector<32x1xf32> to vector<32x256xf32>
    %586 = arith.addf %584, %585 : vector<32x256xf32>
    %cst_220 = arith.constant 0.000000e+00 : f32
    %587 = vector.broadcast %cst_220 : f32 to vector<32x256xf32>
    %588 = arith.maximumf %586, %587 : vector<32x256xf32>
    %c3_221 = arith.constant 3 : index
    %c0_222 = arith.constant 0 : index
    %c0_223 = arith.constant 0 : index
    %589 = vector.load %arg7[%c3_221, %c0_222, %c0_223] : memref<5x32x32xf32, #tpu.memory_space<vmem>>, vector<1x32x32xf32>
    %590 = vector.shape_cast %589 : vector<1x32x32xf32> to vector<32x32xf32>
    %cst_224 = arith.constant dense<0.000000e+00> : vector<32x256xf32>
    %591 = tpu.matmul %590, %588, %cst_224 {dimension_numbers = #tpu.dot_dimension_numbers<[1], [0], [0], [1], [0, 0, 1, 1], [], []>} : vector<32x32xf32>, vector<32x256xf32>, vector<32x256xf32> -> vector<32x256xf32>
    %c4_225 = arith.constant 4 : index
    %c0_226 = arith.constant 0 : index
    %c0_227 = arith.constant 0 : index
    %592 = vector.load %arg7[%c4_225, %c0_226, %c0_227] : memref<5x32x32xf32, #tpu.memory_space<vmem>>, vector<1x32x32xf32>
    %593 = vector.shape_cast %592 : vector<1x32x32xf32> to vector<32x32xf32>
    %594 = arith.truncf %591 : vector<32x256xf32> to vector<32x256xbf16>
    %595 = arith.extf %594 : vector<32x256xbf16> to vector<32x256xf32>
    %596 = arith.subf %591, %595 : vector<32x256xf32>
    %597 = arith.truncf %596 : vector<32x256xf32> to vector<32x256xbf16>
    %cst_228 = arith.constant dense<0.000000e+00> : vector<32x128xf32>
    %598 = tpu.matmul %594, %0, %cst_228 {dimension_numbers = #tpu.dot_dimension_numbers<[1], [0], [0], [1], [0, 0, 1, 1], [], []>} : vector<32x256xbf16>, vector<256x128xbf16>, vector<32x128xf32> -> vector<32x128xf32>
    %cst_229 = arith.constant dense<0.000000e+00> : vector<32x128xf32>
    %599 = tpu.matmul %597, %0, %cst_229 {dimension_numbers = #tpu.dot_dimension_numbers<[1], [0], [0], [1], [0, 0, 1, 1], [], []>} : vector<32x256xbf16>, vector<256x128xbf16>, vector<32x128xf32> -> vector<32x128xf32>
    %600 = arith.addf %598, %599 : vector<32x128xf32>
    %601 = vector.extract_strided_slice %600 {offsets = [0, 0], sizes = [32, 1], strides = [1, 1]} : vector<32x128xf32> to vector<32x1xf32>
    %cst_230 = arith.constant 3.906250e-03 : f32
    %602 = vector.broadcast %cst_230 : f32 to vector<32x1xf32>
    %603 = arith.mulf %601, %602 : vector<32x1xf32>
    %604 = arith.mulf %591, %591 : vector<32x256xf32>
    %605 = arith.truncf %604 : vector<32x256xf32> to vector<32x256xbf16>
    %606 = arith.extf %605 : vector<32x256xbf16> to vector<32x256xf32>
    %607 = arith.subf %604, %606 : vector<32x256xf32>
    %608 = arith.truncf %607 : vector<32x256xf32> to vector<32x256xbf16>
    %cst_231 = arith.constant dense<0.000000e+00> : vector<32x128xf32>
    %609 = tpu.matmul %605, %0, %cst_231 {dimension_numbers = #tpu.dot_dimension_numbers<[1], [0], [0], [1], [0, 0, 1, 1], [], []>} : vector<32x256xbf16>, vector<256x128xbf16>, vector<32x128xf32> -> vector<32x128xf32>
    %cst_232 = arith.constant dense<0.000000e+00> : vector<32x128xf32>
    %610 = tpu.matmul %608, %0, %cst_232 {dimension_numbers = #tpu.dot_dimension_numbers<[1], [0], [0], [1], [0, 0, 1, 1], [], []>} : vector<32x256xbf16>, vector<256x128xbf16>, vector<32x128xf32> -> vector<32x128xf32>
    %611 = arith.addf %609, %610 : vector<32x128xf32>
    %612 = vector.extract_strided_slice %611 {offsets = [0, 0], sizes = [32, 1], strides = [1, 1]} : vector<32x128xf32> to vector<32x1xf32>
    %cst_233 = arith.constant 3.906250e-03 : f32
    %613 = vector.broadcast %cst_233 : f32 to vector<32x1xf32>
    %614 = arith.mulf %612, %613 : vector<32x1xf32>
    %615 = arith.mulf %603, %603 : vector<32x1xf32>
    %616 = arith.subf %614, %615 : vector<32x1xf32>
    %cst_234 = arith.constant 0.000000e+00 : f32
    %617 = vector.broadcast %cst_234 : f32 to vector<32x1xf32>
    %618 = arith.maximumf %616, %617 : vector<32x1xf32>
    %c4_235 = arith.constant 4 : index
    %c0_236 = arith.constant 0 : index
    %c0_237 = arith.constant 0 : index
    %619 = vector.load %arg8[%c4_235, %c0_236, %c0_237] : memref<7x32x1xf32, #tpu.memory_space<vmem>>, vector<1x32x1xf32>
    %620 = vector.shape_cast %619 : vector<1x32x1xf32> to vector<32x1xf32>
    %cst_238 = arith.constant 9.99999974E-6 : f32
    %621 = vector.broadcast %cst_238 : f32 to vector<32x1xf32>
    %622 = arith.addf %618, %621 : vector<32x1xf32>
    %623 = math.rsqrt %622 : vector<32x1xf32>
    %624 = arith.mulf %620, %623 : vector<32x1xf32>
    %c4_239 = arith.constant 4 : index
    %c0_240 = arith.constant 0 : index
    %c0_241 = arith.constant 0 : index
    %625 = vector.load %arg9[%c4_239, %c0_240, %c0_241] : memref<7x32x1xf32, #tpu.memory_space<vmem>>, vector<1x32x1xf32>
    %626 = vector.shape_cast %625 : vector<1x32x1xf32> to vector<32x1xf32>
    %627 = arith.mulf %603, %624 : vector<32x1xf32>
    %628 = arith.subf %626, %627 : vector<32x1xf32>
    %629 = vector.broadcast %624 : vector<32x1xf32> to vector<32x256xf32>
    %630 = arith.mulf %591, %629 : vector<32x256xf32>
    %631 = vector.broadcast %628 : vector<32x1xf32> to vector<32x256xf32>
    %632 = arith.addf %630, %631 : vector<32x256xf32>
    %cst_242 = arith.constant 0.000000e+00 : f32
    %633 = vector.broadcast %cst_242 : f32 to vector<32x256xf32>
    %634 = arith.maximumf %632, %633 : vector<32x256xf32>
    %635 = vector.extract_strided_slice %634 {offsets = [0, 0], sizes = [8, 256], strides = [1, 1]} : vector<32x256xf32> to vector<8x256xf32>
    %c255_i32_243 = arith.constant 255 : i32
    %636 = tpu.dynamic_rotate %635 by %c255_i32_243 dim 1 : vector<8x256xf32>, i32 -> vector<8x256xf32>
    %cst_244 = arith.constant 0.000000e+00 : f32
    %637 = vector.shape_cast %19 : vector<1x256xi1> to vector<1x256xi1>
    %638 = vector.broadcast %637 : vector<1x256xi1> to vector<8x256xi1>
    %639 = vector.broadcast %cst_244 : f32 to vector<8x256xf32>
    %640 = arith.select %638, %636, %639 : vector<8x256xi1>, vector<8x256xf32>
    %c1_i32_245 = arith.constant 1 : i32
    %641 = tpu.dynamic_rotate %635 by %c1_i32_245 dim 1 : vector<8x256xf32>, i32 -> vector<8x256xf32>
    %cst_246 = arith.constant 0.000000e+00 : f32
    %642 = vector.shape_cast %21 : vector<1x256xi1> to vector<1x256xi1>
    %643 = vector.broadcast %642 : vector<1x256xi1> to vector<8x256xi1>
    %644 = vector.broadcast %cst_246 : f32 to vector<8x256xf32>
    %645 = arith.select %643, %641, %644 : vector<8x256xi1>, vector<8x256xf32>
    %646 = vector.shape_cast %381 : vector<8x1xi1> to vector<8x1xi1>
    %647 = vector.broadcast %646 : vector<8x1xi1> to vector<8x256xi1>
    %648 = arith.select %647, %640, %645 : vector<8x256xi1>, vector<8x256xf32>
    %649 = vector.extract_strided_slice %634 {offsets = [8, 0], sizes = [24, 256], strides = [1, 1]} : vector<32x256xf32> to vector<24x256xf32>
    %650 = tpu.concatenate %648, %649 in 0 : vector<8x256xf32>, vector<24x256xf32> -> vector<32x256xf32>
    %cst_247 = arith.constant dense<0.000000e+00> : vector<32x256xf32>
    %651 = tpu.matmul %593, %650, %cst_247 {dimension_numbers = #tpu.dot_dimension_numbers<[1], [0], [0], [1], [0, 0, 1, 1], [], []>} : vector<32x32xf32>, vector<32x256xf32>, vector<32x256xf32> -> vector<32x256xf32>
    %652 = arith.truncf %651 : vector<32x256xf32> to vector<32x256xbf16>
    %653 = arith.extf %652 : vector<32x256xbf16> to vector<32x256xf32>
    %654 = arith.subf %651, %653 : vector<32x256xf32>
    %655 = arith.truncf %654 : vector<32x256xf32> to vector<32x256xbf16>
    %cst_248 = arith.constant dense<0.000000e+00> : vector<32x128xf32>
    %656 = tpu.matmul %652, %0, %cst_248 {dimension_numbers = #tpu.dot_dimension_numbers<[1], [0], [0], [1], [0, 0, 1, 1], [], []>} : vector<32x256xbf16>, vector<256x128xbf16>, vector<32x128xf32> -> vector<32x128xf32>
    %cst_249 = arith.constant dense<0.000000e+00> : vector<32x128xf32>
    %657 = tpu.matmul %655, %0, %cst_249 {dimension_numbers = #tpu.dot_dimension_numbers<[1], [0], [0], [1], [0, 0, 1, 1], [], []>} : vector<32x256xbf16>, vector<256x128xbf16>, vector<32x128xf32> -> vector<32x128xf32>
    %658 = arith.addf %656, %657 : vector<32x128xf32>
    %659 = vector.extract_strided_slice %658 {offsets = [0, 0], sizes = [32, 1], strides = [1, 1]} : vector<32x128xf32> to vector<32x1xf32>
    %cst_250 = arith.constant 3.906250e-03 : f32
    %660 = vector.broadcast %cst_250 : f32 to vector<32x1xf32>
    %661 = arith.mulf %659, %660 : vector<32x1xf32>
    %662 = arith.mulf %651, %651 : vector<32x256xf32>
    %663 = arith.truncf %662 : vector<32x256xf32> to vector<32x256xbf16>
    %664 = arith.extf %663 : vector<32x256xbf16> to vector<32x256xf32>
    %665 = arith.subf %662, %664 : vector<32x256xf32>
    %666 = arith.truncf %665 : vector<32x256xf32> to vector<32x256xbf16>
    %cst_251 = arith.constant dense<0.000000e+00> : vector<32x128xf32>
    %667 = tpu.matmul %663, %0, %cst_251 {dimension_numbers = #tpu.dot_dimension_numbers<[1], [0], [0], [1], [0, 0, 1, 1], [], []>} : vector<32x256xbf16>, vector<256x128xbf16>, vector<32x128xf32> -> vector<32x128xf32>
    %cst_252 = arith.constant dense<0.000000e+00> : vector<32x128xf32>
    %668 = tpu.matmul %666, %0, %cst_252 {dimension_numbers = #tpu.dot_dimension_numbers<[1], [0], [0], [1], [0, 0, 1, 1], [], []>} : vector<32x256xbf16>, vector<256x128xbf16>, vector<32x128xf32> -> vector<32x128xf32>
    %669 = arith.addf %667, %668 : vector<32x128xf32>
    %670 = vector.extract_strided_slice %669 {offsets = [0, 0], sizes = [32, 1], strides = [1, 1]} : vector<32x128xf32> to vector<32x1xf32>
    %cst_253 = arith.constant 3.906250e-03 : f32
    %671 = vector.broadcast %cst_253 : f32 to vector<32x1xf32>
    %672 = arith.mulf %670, %671 : vector<32x1xf32>
    %673 = arith.mulf %661, %661 : vector<32x1xf32>
    %674 = arith.subf %672, %673 : vector<32x1xf32>
    %cst_254 = arith.constant 0.000000e+00 : f32
    %675 = vector.broadcast %cst_254 : f32 to vector<32x1xf32>
    %676 = arith.maximumf %674, %675 : vector<32x1xf32>
    %c5_255 = arith.constant 5 : index
    %c0_256 = arith.constant 0 : index
    %c0_257 = arith.constant 0 : index
    %677 = vector.load %arg8[%c5_255, %c0_256, %c0_257] : memref<7x32x1xf32, #tpu.memory_space<vmem>>, vector<1x32x1xf32>
    %678 = vector.shape_cast %677 : vector<1x32x1xf32> to vector<32x1xf32>
    %cst_258 = arith.constant 9.99999974E-6 : f32
    %679 = vector.broadcast %cst_258 : f32 to vector<32x1xf32>
    %680 = arith.addf %676, %679 : vector<32x1xf32>
    %681 = math.rsqrt %680 : vector<32x1xf32>
    %682 = arith.mulf %678, %681 : vector<32x1xf32>
    %c5_259 = arith.constant 5 : index
    %c0_260 = arith.constant 0 : index
    %c0_261 = arith.constant 0 : index
    %683 = vector.load %arg9[%c5_259, %c0_260, %c0_261] : memref<7x32x1xf32, #tpu.memory_space<vmem>>, vector<1x32x1xf32>
    %684 = vector.shape_cast %683 : vector<1x32x1xf32> to vector<32x1xf32>
    %685 = arith.mulf %661, %682 : vector<32x1xf32>
    %686 = arith.subf %684, %685 : vector<32x1xf32>
    %687 = vector.broadcast %682 : vector<32x1xf32> to vector<32x256xf32>
    %688 = arith.mulf %651, %687 : vector<32x256xf32>
    %689 = vector.broadcast %686 : vector<32x1xf32> to vector<32x256xf32>
    %690 = arith.addf %688, %689 : vector<32x256xf32>
    %691 = arith.truncf %378 : vector<32x256xf32> to vector<32x256xbf16>
    %692 = arith.extf %691 : vector<32x256xbf16> to vector<32x256xf32>
    %693 = arith.subf %378, %692 : vector<32x256xf32>
    %694 = arith.truncf %693 : vector<32x256xf32> to vector<32x256xbf16>
    %cst_262 = arith.constant dense<0.000000e+00> : vector<32x128xf32>
    %695 = tpu.matmul %691, %0, %cst_262 {dimension_numbers = #tpu.dot_dimension_numbers<[1], [0], [0], [1], [0, 0, 1, 1], [], []>} : vector<32x256xbf16>, vector<256x128xbf16>, vector<32x128xf32> -> vector<32x128xf32>
    %cst_263 = arith.constant dense<0.000000e+00> : vector<32x128xf32>
    %696 = tpu.matmul %694, %0, %cst_263 {dimension_numbers = #tpu.dot_dimension_numbers<[1], [0], [0], [1], [0, 0, 1, 1], [], []>} : vector<32x256xbf16>, vector<256x128xbf16>, vector<32x128xf32> -> vector<32x128xf32>
    %697 = arith.addf %695, %696 : vector<32x128xf32>
    %698 = vector.extract_strided_slice %697 {offsets = [0, 0], sizes = [32, 1], strides = [1, 1]} : vector<32x128xf32> to vector<32x1xf32>
    %cst_264 = arith.constant 3.906250e-03 : f32
    %699 = vector.broadcast %cst_264 : f32 to vector<32x1xf32>
    %700 = arith.mulf %698, %699 : vector<32x1xf32>
    %701 = arith.mulf %378, %378 : vector<32x256xf32>
    %702 = arith.truncf %701 : vector<32x256xf32> to vector<32x256xbf16>
    %703 = arith.extf %702 : vector<32x256xbf16> to vector<32x256xf32>
    %704 = arith.subf %701, %703 : vector<32x256xf32>
    %705 = arith.truncf %704 : vector<32x256xf32> to vector<32x256xbf16>
    %cst_265 = arith.constant dense<0.000000e+00> : vector<32x128xf32>
    %706 = tpu.matmul %702, %0, %cst_265 {dimension_numbers = #tpu.dot_dimension_numbers<[1], [0], [0], [1], [0, 0, 1, 1], [], []>} : vector<32x256xbf16>, vector<256x128xbf16>, vector<32x128xf32> -> vector<32x128xf32>
    %cst_266 = arith.constant dense<0.000000e+00> : vector<32x128xf32>
    %707 = tpu.matmul %705, %0, %cst_266 {dimension_numbers = #tpu.dot_dimension_numbers<[1], [0], [0], [1], [0, 0, 1, 1], [], []>} : vector<32x256xbf16>, vector<256x128xbf16>, vector<32x128xf32> -> vector<32x128xf32>
    %708 = arith.addf %706, %707 : vector<32x128xf32>
    %709 = vector.extract_strided_slice %708 {offsets = [0, 0], sizes = [32, 1], strides = [1, 1]} : vector<32x128xf32> to vector<32x1xf32>
    %cst_267 = arith.constant 3.906250e-03 : f32
    %710 = vector.broadcast %cst_267 : f32 to vector<32x1xf32>
    %711 = arith.mulf %709, %710 : vector<32x1xf32>
    %712 = arith.mulf %700, %700 : vector<32x1xf32>
    %713 = arith.subf %711, %712 : vector<32x1xf32>
    %cst_268 = arith.constant 0.000000e+00 : f32
    %714 = vector.broadcast %cst_268 : f32 to vector<32x1xf32>
    %715 = arith.maximumf %713, %714 : vector<32x1xf32>
    %c6_269 = arith.constant 6 : index
    %c0_270 = arith.constant 0 : index
    %c0_271 = arith.constant 0 : index
    %716 = vector.load %arg8[%c6_269, %c0_270, %c0_271] : memref<7x32x1xf32, #tpu.memory_space<vmem>>, vector<1x32x1xf32>
    %717 = vector.shape_cast %716 : vector<1x32x1xf32> to vector<32x1xf32>
    %cst_272 = arith.constant 9.99999974E-6 : f32
    %718 = vector.broadcast %cst_272 : f32 to vector<32x1xf32>
    %719 = arith.addf %715, %718 : vector<32x1xf32>
    %720 = math.rsqrt %719 : vector<32x1xf32>
    %721 = arith.mulf %717, %720 : vector<32x1xf32>
    %c6_273 = arith.constant 6 : index
    %c0_274 = arith.constant 0 : index
    %c0_275 = arith.constant 0 : index
    %722 = vector.load %arg9[%c6_273, %c0_274, %c0_275] : memref<7x32x1xf32, #tpu.memory_space<vmem>>, vector<1x32x1xf32>
    %723 = vector.shape_cast %722 : vector<1x32x1xf32> to vector<32x1xf32>
    %724 = arith.mulf %700, %721 : vector<32x1xf32>
    %725 = arith.subf %723, %724 : vector<32x1xf32>
    %726 = vector.broadcast %721 : vector<32x1xf32> to vector<32x256xf32>
    %727 = arith.mulf %378, %726 : vector<32x256xf32>
    %728 = vector.broadcast %725 : vector<32x1xf32> to vector<32x256xf32>
    %729 = arith.addf %727, %728 : vector<32x256xf32>
    %730 = arith.addf %690, %729 : vector<32x256xf32>
    %cst_276 = arith.constant 0.000000e+00 : f32
    %731 = vector.broadcast %cst_276 : f32 to vector<32x256xf32>
    %732 = arith.maximumf %730, %731 : vector<32x256xf32>
    %c0_277 = arith.constant 0 : index
    %c0_278 = arith.constant 0 : index
    %733 = vector.load %arg10[%c0_277, %c0_278] : memref<32x256xf32, #tpu.memory_space<vmem>>, vector<32x256xf32>
    tpu.vector_store %arg10[%c0_277, %c0_278], %732 {strides = array<i32>} : memref<32x256xf32, #tpu.memory_space<vmem>>, vector<32x256xf32>,
    return
  }
  func.func @transform_0(%arg0: i32) -> (i32, i32) {
    %c0_i32 = arith.constant 0 : i32
    %c0_i32_0 = arith.constant 0 : i32
    %c0_i32_1 = arith.constant 0 : i32
    return %c0_i32, %c0_i32_0 : i32, i32
  }
  func.func @transform_1(%arg0: i32) -> (i32, i32) {
    %c0_i32 = arith.constant 0 : i32
    %c0_i32_0 = arith.constant 0 : i32
    %c0_i32_1 = arith.constant 0 : i32
    return %c0_i32, %c0_i32_0 : i32, i32
  }
  func.func @transform_2(%arg0: i32) -> (i32, i32, i32) {
    %c0_i32 = arith.constant 0 : i32
    %c0_i32_0 = arith.constant 0 : i32
    %c0_i32_1 = arith.constant 0 : i32
    %c0_i32_2 = arith.constant 0 : i32
    return %c0_i32, %c0_i32_0, %c0_i32_1 : i32, i32, i32
  }
  func.func @transform_3(%arg0: i32) -> (i32, i32, i32) {
    %c0_i32 = arith.constant 0 : i32
    %c0_i32_0 = arith.constant 0 : i32
    %c0_i32_1 = arith.constant 0 : i32
    %c0_i32_2 = arith.constant 0 : i32
    return %c0_i32, %c0_i32_0, %c0_i32_1 : i32, i32, i32
  }
  func.func @transform_4(%arg0: i32) -> (i32, i32, i32) {
    %c0_i32 = arith.constant 0 : i32
    %c0_i32_0 = arith.constant 0 : i32
    %c0_i32_1 = arith.constant 0 : i32
    %c0_i32_2 = arith.constant 0 : i32
    return %c0_i32, %c0_i32_0, %c0_i32_1 : i32, i32, i32
  }
  func.func @transform_5(%arg0: i32) -> (i32, i32) {
    %c0_i32 = arith.constant 0 : i32
    %c0_i32_0 = arith.constant 0 : i32
    %c0_i32_1 = arith.constant 0 : i32
    return %c0_i32, %c0_i32_0 : i32, i32
  }
  func.func @transform_6(%arg0: i32) -> (i32, i32, i32) {
    %c0_i32 = arith.constant 0 : i32
    %c0_i32_0 = arith.constant 0 : i32
    %c0_i32_1 = arith.constant 0 : i32
    %c0_i32_2 = arith.constant 0 : i32
    return %c0_i32, %c0_i32_0, %c0_i32_1 : i32, i32, i32
  }
  func.func @transform_7(%arg0: i32) -> (i32, i32, i32) {
    %c0_i32 = arith.constant 0 : i32
    %c0_i32_0 = arith.constant 0 : i32
    %c0_i32_1 = arith.constant 0 : i32
    %c0_i32_2 = arith.constant 0 : i32
    return %c0_i32, %c0_i32_0, %c0_i32_1 : i32, i32, i32
  }
  func.func @transform_8(%arg0: i32) -> (i32, i32, i32) {
    %c0_i32 = arith.constant 0 : i32
    %c0_i32_0 = arith.constant 0 : i32
    %c0_i32_1 = arith.constant 0 : i32
    %c0_i32_2 = arith.constant 0 : i32
    return %c0_i32, %c0_i32_0, %c0_i32_1 : i32, i32, i32
  }
  func.func @transform_9(%arg0: i32) -> (i32, i32) {
    %c0_i32 = arith.constant 0 : i32
    %c0_i32_0 = arith.constant 0 : i32
    %c0_i32_1 = arith.constant 0 : i32
    return %c0_i32, %c0_i32_0 : i32, i32
  }
}

</mosaic_0001>

<llo_original>
// kernel: tpu_custom_call.1
$region0: #{tpu_custom_call.1}
  #allocation0 [shape = 'u32[]', space=smem, size = 0x4, offset = 0x4, fixed_abs, tag = 'smem constant byte address 0x4 - core index']
  #allocation1 [shape = 'u32[144,128]{1,0:T(1,128)}', space=vmem, size = 0x12000, scoped, tag = 'internal scratch']
  %s0 = inlined_call_operand.vmem [shape: f32[16,256], index: 0, kind: input, shape index: {}]
  %s1 = inlined_call_operand.vmem [shape: f32[64,16], index: 1, kind: input, shape index: {}]
  %s2 = inlined_call_operand.vmem [shape: f32[5,32,32], index: 2, kind: input, shape index: {}]
  %s3 = inlined_call_operand.vmem [shape: f32[7,32,1], index: 3, kind: input, shape index: {}]
  %s4 = inlined_call_operand.vmem [shape: f32[7,32,1], index: 4, kind: input, shape index: {}]
  %s5 = inlined_call_operand.vmem [shape: f32[32,32], index: 5, kind: input, shape index: {}]
  %s6 = inlined_call_operand.vmem [shape: f32[5,32,32], index: 6, kind: input, shape index: {}]
  %s7 = inlined_call_operand.vmem [shape: f32[7,32,1], index: 7, kind: input, shape index: {}]
  %s8 = inlined_call_operand.vmem [shape: f32[7,32,1], index: 8, kind: input, shape index: {}]
  %s9 = inlined_call_operand.hbm [shape: f32[32,256], index: 9, kind: output, shape index: {}]
  %s10 = sld [smem:[#allocation0]]
  $region46: #{tpu_custom_call.1} parent=0
    _
  %s12 = ssub.s32 1, %s10
  %s13 = scalar_select 0, %s12, %s10
  $region1: #{tpu_custom_call.1} parent=0
    #allocation2 [shape = 'u8[32768]{0}', space=vmem, size = 0x8000, scoped, tag = 'output window, operand 0, single buffered']
    #allocation3 [shape = 's32[1]{0}', space=sflag, size = 0x4, scoped, tag = 'scoped memory for tpu_custom_call.1']
    %14 = vsyncpa [#allocation3], 0
    // Predicated region
    $region2: #{tpu_custom_call.1} parent=1 // pred_check
      _
    $region3: #{tpu_custom_call.1} parent=1 // pred_check_branch
      %16 = sbr.rel (0) target = $region5
    $region4: #{tpu_custom_call.1} parent=1 // pred_region
      _
    $region5: #{tpu_custom_call.1} parent=1 // pred_fallthru
      _
    // Predicated region
    $region6: #{tpu_custom_call.1} parent=1 // pred_check
      _
    $region7: #{tpu_custom_call.1} parent=1 // pred_check_branch
      %18 = sbr.rel (0) target = $region9
    $region8: #{tpu_custom_call.1} parent=1 // pred_region
      _
    $region9: #{tpu_custom_call.1} parent=1 // pred_fallthru
      _
    // Predicated region
    $region10: #{tpu_custom_call.1} parent=1 // pred_check
      _
    $region11: #{tpu_custom_call.1} parent=1 // pred_check_branch
      %20 = sbr.rel (0) target = $region13
    $region12: #{tpu_custom_call.1} parent=1 // pred_region
      _
    $region13: #{tpu_custom_call.1} parent=1 // pred_fallthru
      _
    // Predicated region
    $region14: #{tpu_custom_call.1} parent=1 // pred_check
      _
    $region15: #{tpu_custom_call.1} parent=1 // pred_check_branch
      %22 = sbr.rel (0) target = $region17
    $region16: #{tpu_custom_call.1} parent=1 // pred_region
      _
    $region17: #{tpu_custom_call.1} parent=1 // pred_fallthru
      _
    // Predicated region
    $region18: #{tpu_custom_call.1} parent=1 // pred_check
      _
    $region19: #{tpu_custom_call.1} parent=1 // pred_check_branch
      %24 = sbr.rel (0) target = $region21
    $region20: #{tpu_custom_call.1} parent=1 // pred_region
      _
    $region21: #{tpu_custom_call.1} parent=1 // pred_fallthru
      _
    // Predicated region
    $region22: #{tpu_custom_call.1} parent=1 // pred_check
      _
    $region23: #{tpu_custom_call.1} parent=1 // pred_check_branch
      %26 = sbr.rel (0) target = $region25
    $region24: #{tpu_custom_call.1} parent=1 // pred_region
      _
    $region25: #{tpu_custom_call.1} parent=1 // pred_fallthru
      _
    // Predicated region
    $region26: #{tpu_custom_call.1} parent=1 // pred_check
      _
    $region27: #{tpu_custom_call.1} parent=1 // pred_check_branch
      %28 = sbr.rel (0) target = $region29
    $region28: #{tpu_custom_call.1} parent=1 // pred_region
      _
    $region29: #{tpu_custom_call.1} parent=1 // pred_fallthru
      _
    // Predicated region
    $region30: #{tpu_custom_call.1} parent=1 // pred_check
      _
    $region31: #{tpu_custom_call.1} parent=1 // pred_check_branch
      %30 = sbr.rel (0) target = $region33
    $region32: #{tpu_custom_call.1} parent=1 // pred_region
      _
    $region33: #{tpu_custom_call.1} parent=1 // pred_fallthru
      _
    // Predicated region
    $region34: #{tpu_custom_call.1} parent=1 // pred_check
      _
    $region35: #{tpu_custom_call.1} parent=1 // pred_check_branch
      %32 = sbr.rel (0) target = $region37
    $region36: #{tpu_custom_call.1} parent=1 // pred_region
      _
    $region37: #{tpu_custom_call.1} parent=1 // pred_fallthru
      _
    %v35 = vlaneseq
    %v36 = vand.u32 %v35, 127
    %v37 = vadd.s32 %v36, 128
    %vm38 = vcmp.lt.s32.totalorder %v36, 0
    %v39 = vsub.s32 0, %v36
    %v40 = vsel %vm38, %v39, %v36
    %v41 = vshrl.u32 %v40, 7
    %v42 = vand.u32 %v40, 127
    %v43 = vsub.s32 0, %v42
    %v44 = vsel %vm38, %v43, %v42
    %vm45 = vcmp.lt.s32.totalorder %v37, 0
    %v46 = vsub.s32 0, %v37
    %v47 = vsel %vm45, %v46, %v37
    %v48 = vshrl.u32 %v47, 7
    %v49 = vand.u32 %v47, 127
    %v50 = vsub.s32 0, %v49
    %v51 = vsel %vm45, %v50, %v49
    %vm52 = vcmp.ne.s32.totalorder %v44, 0
    %vm53 = vcmp.ne.s32.totalorder %v51, 0
    %vm54 = vcmp.lt.s32.totalorder %v44, 0
    %vm55 = vcmp.lt.s32.totalorder %v51, 0
    %vm56 = vmand %vm54, %vm52
    %vm57 = vmand %vm55, %vm53
    %v58 = vadd.s32 %v44, 128
    %v59 = vadd.s32 %v51, 128
    %v60 = vsel %vm56, %v58, %v44
    %v61 = vsel %vm57, %v59, %v51
    %vm62 = vcmp.ne.s32.totalorder %v60, 127
    %vm63 = vcmp.ne.s32.totalorder %v61, 127
    %vm64 = vcmp.ne.s32.totalorder %v60, 0
    %vm65 = vcmp.ne.s32.totalorder %v61, 0
    %v66 = vld [vmem:[%s0] sm:$0xff]
    %v67 = vld [vmem:[%s0 + $0x8] sm:$0xff]
    %v68 = vld [vmem:[%s0 + $0x10] sm:$0xff]
    %v69 = vld [vmem:[%s0 + $0x18] sm:$0xff]
    %v70 = vlaneseq
    %v71 = vshrl.u32 %v70, 7
    %vm72 = vcmp.lt.s32.totalorder %v71, 4
    %v73 = vld [vmem:[%s1] sm:$0xff]
    %v74 = vld [vmem:[%s1 + $0x8] sm:$0xff]
    %v75 = vld [vmem:[%s1 + $0x10] sm:$0xff]
    %v76 = vld [vmem:[%s1 + $0x18] sm:$0xff]
    %v77 = vld [vmem:[%s1 + $0x20] sm:$0xff]
    %v78 = vld [vmem:[%s1 + $0x28] sm:$0xff]
    %v79 = vld [vmem:[%s1 + $0x30] sm:$0xff]
    %v80 = vld [vmem:[%s1 + $0x38] sm:$0xff]
    %vm81 = vcmask 130048
    %v83 = vsel %vm81, %v73, 0
    %v86 = vsel %vm81, %v74, 0
    %v89 = vsel %vm81, %v75, 0
    %v92 = vsel %vm81, %v76, 0
    %v95 = vsel %vm81, %v77, 0
    %v98 = vsel %vm81, %v78, 0
    %v101 = vsel %vm81, %v79, 0
    %v104 = vsel %vm81, %v80, 0
    %106 = vmatprep.subr.mxu0 %v67
    %107 = vmatpush1.msra.mxu0 %v66
    %108 = vmatprep.subr.mxu0 %v69
    %109 = vmatpush1.msra.mxu0 %v68
    %110 = vmatprep.subr.mxu0 0.0
    %111 = vmatpush1.msra.mxu0 0.0
    %112 = vmatprep.subr.mxu0 0.0
    %113 = vmatpush1.msra.mxu0 0.0
    %114 = vmatprep.subr.mxu0 0.0
    %115 = vmatpush1.msra.mxu0 0.0
    %116 = vmatprep.subr.mxu0 0.0
    %117 = vmatpush1.msra.mxu0 0.0
    %118 = vmatprep.subr.mxu0 0.0
    %119 = vmatpush1.msra.mxu0 0.0
    %120 = vmatprep.subr.mxu0 0.0
    %121 = vmatpush1.msra.mxu0 0.0
    %122 = vmatprep.subr.mxu0 0.0
    %123 = vmatpush1.msra.mxu0 0.0
    %124 = vmatprep.subr.mxu0 0.0
    %125 = vmatpush1.msra.mxu0 0.0
    %126 = vmatprep.subr.mxu0 0.0
    %127 = vmatpush1.msra.mxu0 0.0
    %128 = vmatprep.subr.mxu0 0.0
    %129 = vmatpush1.msra.mxu0 0.0
    %130 = vmatprep.subr.mxu0 0.0
    %131 = vmatpush1.msra.mxu0 0.0
    %132 = vmatprep.subr.mxu0 0.0
    %133 = vmatpush1.msra.mxu0 0.0
    %134 = vmatprep.subr.mxu0 0.0
    %135 = vmatpush1.msra.mxu0 0.0
    %136 = vmatprep.subr.mxu0 0.0
    %137 = vmatpush1.msra.mxu0 0.0
    %138 = vmatprep.subr.mxu0 0.0
    %139 = vmatpush1.msra.mxu0 0.0
    %140 = vmatprep.subr.mxu0 0.0
    %141 = vmatpush1.msra.mxu0 0.0
    %142 = vmatprep.subr.mxu0 0.0
    %143 = vmatpush1.msra.mxu0 0.0
    %144 = vmatprep.subr.mxu0 0.0
    %145 = vmatpush1.msra.mxu0 0.0
    %146 = vmatprep.subr.mxu0 0.0
    %147 = vmatpush1.msra.mxu0 0.0
    %148 = vmatprep.subr.mxu0 0.0
    %149 = vmatpush1.msra.mxu0 0.0
    %150 = vmatprep.subr.mxu0 0.0
    %151 = vmatpush1.msra.mxu0 0.0
    %152 = vmatprep.subr.mxu0 0.0
    %153 = vmatpush1.msra.mxu0 0.0
    %154 = vmatprep.subr.mxu0 0.0
    %155 = vmatpush1.msra.mxu0 0.0
    %156 = vmatprep.subr.mxu0 0.0
    %157 = vmatpush1.msra.mxu0 0.0
    %158 = vmatprep.subr.mxu0 0.0
    %159 = vmatpush1.msra.mxu0 0.0
    %160 = vmatprep.subr.mxu0 0.0
    %161 = vmatpush1.msra.mxu0 0.0
    %162 = vmatprep.subr.mxu0 0.0
    %163 = vmatpush1.msra.mxu0 0.0
    %164 = vmatprep.subr.mxu0 0.0
    %165 = vmatpush1.msra.mxu0 0.0
    %166 = vmatprep.subr.mxu0 0.0
    %167 = vmatpush1.msra.mxu0 0.0
    %168 = vmatprep.subr.mxu0 0.0
    %169 = vmatpush1.msra.mxu0 0.0
    %170 = vmatprep.mubr.f32.mxu0 0.0
    %171 = vmatmul.mubr.f32.gmra.mrb[0].mxu0 %v83
    %v172 = vpop.f32.mrb[0].mxu0
    %v173 = vadd.f32 0.0, %v172
    %v174 = vpop.f32.mrb[0].mxu0
    %v175 = vadd.f32 0.0, %v174
    %176 = vmatprep.mubr.f32.mxu0 0.0
    %177 = vmatmul.mubr.f32.gmra.mrb[0].mxu0 %v86
    %v178 = vpop.f32.mrb[0].mxu0
    %v179 = vadd.f32 0.0, %v178
    %v180 = vpop.f32.mrb[0].mxu0
    %v181 = vadd.f32 0.0, %v180
    %182 = vmatprep.mubr.f32.mxu0 0.0
    %183 = vmatmul.mubr.f32.gmra.mrb[0].mxu0 %v89
    %v184 = vpop.f32.mrb[0].mxu0
    %v185 = vadd.f32 0.0, %v184
    %v186 = vpop.f32.mrb[0].mxu0
    %v187 = vadd.f32 0.0, %v186
    %188 = vmatprep.mubr.f32.mxu0 0.0
    %189 = vmatmul.mubr.f32.gmra.mrb[0].mxu0 %v92
    %v190 = vpop.f32.mrb[0].mxu0
    %v191 = vadd.f32 0.0, %v190
    %v192 = vpop.f32.mrb[0].mxu0
    %v193 = vadd.f32 0.0, %v192
    %194 = vmatprep.mubr.f32.mxu0 0.0
    %195 = vmatmul.mubr.f32.gmra.mrb[0].mxu0 %v95
    %v196 = vpop.f32.mrb[0].mxu0
    %v197 = vadd.f32 0.0, %v196
    %v198 = vpop.f32.mrb[0].mxu0
    %v199 = vadd.f32 0.0, %v198
    %200 = vmatprep.mubr.f32.mxu0 0.0
    %201 = vmatmul.mubr.f32.gmra.mrb[0].mxu0 %v98
    %v202 = vpop.f32.mrb[0].mxu0
    %v203 = vadd.f32 0.0, %v202
    %v204 = vpop.f32.mrb[0].mxu0
    %v205 = vadd.f32 0.0, %v204
    %206 = vmatprep.mubr.f32.mxu0 0.0
    %207 = vmatmul.mubr.f32.gmra.mrb[0].mxu0 %v101
    %v208 = vpop.f32.mrb[0].mxu0
    %v209 = vadd.f32 0.0, %v208
    %v210 = vpop.f32.mrb[0].mxu0
    %v211 = vadd.f32 0.0, %v210
    %212 = vmatprep.mubr.f32.mxu0 0.0
    %213 = vmatmul.mubr.f32.gmra.mrb[0].mxu0 %v104
    %v214 = vpop.f32.mrb[0].mxu0
    %v215 = vadd.f32 0.0, %v214
    %v216 = vpop.f32.mrb[0].mxu0
    %v217 = vadd.f32 0.0, %v216
    %218 = vdwg.mxu0
    %v219 = vld [vmem:[%s2] sm:$0xff]
    %v220 = vld [vmem:[%s2 + $0x8] sm:$0xff]
    %v221 = vld [vmem:[%s2 + $0x10] sm:$0xff]
    %v222 = vld [vmem:[%s2 + $0x18] sm:$0xff]
    %v223 = vpack.c.bf16 %v179, %v173
    %v224 = vpack.c.bf16 %v181, %v175
    %v225 = vpack.c.bf16 %v191, %v185
    %v226 = vpack.c.bf16 %v193, %v187
    %v227 = vunpack.c.l.bf16 %v223
    %v228 = vunpack.c.l.bf16 %v224
    %v229 = vunpack.c.h.bf16 %v223
    %v230 = vunpack.c.h.bf16 %v224
    %v231 = vunpack.c.l.bf16 %v225
    %v232 = vunpack.c.l.bf16 %v226
    %v233 = vunpack.c.h.bf16 %v225
    %v234 = vunpack.c.h.bf16 %v226
    %v235 = vsub.f32 %v173, %v227
    %v236 = vsub.f32 %v175, %v228
    %v237 = vsub.f32 %v179, %v229
    %v238 = vsub.f32 %v181, %v230
    %v239 = vsub.f32 %v185, %v231
    %v240 = vsub.f32 %v187, %v232
    %v241 = vsub.f32 %v191, %v233
    %v242 = vsub.f32 %v193, %v234
    %v243 = vpack.c.bf16 %v237, %v235
    %v244 = vpack.c.bf16 %v238, %v236
    %v245 = vpack.c.bf16 %v241, %v239
    %v246 = vpack.c.bf16 %v242, %v240
    %247 = vmatprep.subr.bf16.mxu0 0
    %248 = vmatpush1.bf16.msra.mxu0 1065369472
    %249 = vmatprep.subr.bf16.mxu0 0
    %250 = vmatpush1.bf16.msra.mxu0 1065369472
    %251 = vmatprep.subr.bf16.mxu0 0
    %252 = vmatpush1.bf16.msra.mxu0 1065369472
    %253 = vmatprep.subr.bf16.mxu0 0
    %254 = vmatpush1.bf16.msra.mxu0 1065369472
    %255 = vmatprep.subr.bf16.mxu0 0
    %256 = vmatpush1.bf16.msra.mxu0 1065369472
    %257 = vmatprep.subr.bf16.mxu0 0
    %258 = vmatpush1.bf16.msra.mxu0 1065369472
    %259 = vmatprep.subr.bf16.mxu0 0
    %260 = vmatpush1.bf16.msra.mxu0 1065369472
    %261 = vmatprep.subr.bf16.mxu0 0
    %262 = vmatpush1.bf16.msra.mxu0 1065369472
    %263 = vmatprep.subr.bf16.mxu0 0
    %264 = vmatpush1.bf16.msra.mxu0 1065369472
    %265 = vmatprep.subr.bf16.mxu0 0
    %266 = vmatpush1.bf16.msra.mxu0 1065369472
    %267 = vmatprep.subr.bf16.mxu0 0
    %268 = vmatpush1.bf16.msra.mxu0 1065369472
    %269 = vmatprep.subr.bf16.mxu0 0
    %270 = vmatpush1.bf16.msra.mxu0 1065369472
    %271 = vmatprep.subr.bf16.mxu0 0
    %272 = vmatpush1.bf16.msra.mxu0 1065369472
    %273 = vmatprep.subr.bf16.mxu0 0
    %274 = vmatpush1.bf16.msra.mxu0 1065369472
    %275 = vmatprep.subr.bf16.mxu0 0
    %276 = vmatpush1.bf16.msra.mxu0 1065369472
    %277 = vmatprep.subr.bf16.mxu0 0
    %278 = vmatpush1.bf16.msra.mxu0 1065369472
    %279 = vmatprep.mubr.bf16.mxu0 %v244
    %280 = vmatmul.mubr.bf16.gmra.mrb[0].mxu0 %v243
    %v281 = vpop.f32.mrb[0].mxu0
    %v282 = vadd.f32 0.0, %v281
    %v283 = vpop.f32.mrb[0].mxu0
    %v284 = vpop.f32.mrb[0].mxu0
    %v285 = vadd.f32 0.0, %v284
    %v286 = vpop.f32.mrb[0].mxu0
    %287 = vmatprep.mubr.bf16.mxu0 %v246
    %288 = vmatmul.mubr.bf16.gmra.mrb[0].mxu0 %v245
    %v289 = vpop.f32.mrb[0].mxu0
    %v290 = vadd.f32 0.0, %v289
    %v291 = vpop.f32.mrb[0].mxu0
    %v292 = vpop.f32.mrb[0].mxu0
    %v293 = vadd.f32 0.0, %v292
    %v294 = vpop.f32.mrb[0].mxu0
    %295 = vdwg.mxu0
    %296 = vmatprep.subr.bf16.mxu0 0
    %297 = vmatpush1.bf16.msra.mxu0 1065369472
    %298 = vmatprep.subr.bf16.mxu0 0
    %299 = vmatpush1.bf16.msra.mxu0 1065369472
    %300 = vmatprep.subr.bf16.mxu0 0
    %301 = vmatpush1.bf16.msra.mxu0 1065369472
    %302 = vmatprep.subr.bf16.mxu0 0
    %303 = vmatpush1.bf16.msra.mxu0 1065369472
    %304 = vmatprep.subr.bf16.mxu0 0
    %305 = vmatpush1.bf16.msra.mxu0 1065369472
    %306 = vmatprep.subr.bf16.mxu0 0
    %307 = vmatpush1.bf16.msra.mxu0 1065369472
    %308 = vmatprep.subr.bf16.mxu0 0
    %309 = vmatpush1.bf16.msra.mxu0 1065369472
    %310 = vmatprep.subr.bf16.mxu0 0
    %311 = vmatpush1.bf16.msra.mxu0 1065369472
    %312 = vmatprep.subr.bf16.mxu0 0
    %313 = vmatpush1.bf16.msra.mxu0 1065369472
    %314 = vmatprep.subr.bf16.mxu0 0
    %315 = vmatpush1.bf16.msra.mxu0 1065369472
    %316 = vmatprep.subr.bf16.mxu0 0
    %317 = vmatpush1.bf16.msra.mxu0 1065369472
    %318 = vmatprep.subr.bf16.mxu0 0
    %319 = vmatpush1.bf16.msra.mxu0 1065369472
    %320 = vmatprep.subr.bf16.mxu0 0
    %321 = vmatpush1.bf16.msra.mxu0 1065369472
    %322 = vmatprep.subr.bf16.mxu0 0
    %323 = vmatpush1.bf16.msra.mxu0 1065369472
    %324 = vmatprep.subr.bf16.mxu0 0
    %325 = vmatpush1.bf16.msra.mxu0 1065369472
    %326 = vmatprep.subr.bf16.mxu0 0
    %327 = vmatpush1.bf16.msra.mxu0 1065369472
    %328 = vmatprep.mubr.bf16.mxu0 %v224
    %329 = vmatmul.mubr.bf16.gmra.mrb[0].mxu0 %v223
    %v330 = vpop.f32.mrb[0].mxu0
    %v331 = vadd.f32 %v282, %v330
    %v332 = vpop.f32.mrb[0].mxu0
    %v333 = vpop.f32.mrb[0].mxu0
    %v334 = vadd.f32 %v285, %v333
    %v335 = vpop.f32.mrb[0].mxu0
    %336 = vmatprep.mubr.bf16.mxu0 %v226
    %337 = vmatmul.mubr.bf16.gmra.mrb[0].mxu0 %v225
    %v338 = vpop.f32.mrb[0].mxu0
    %v339 = vadd.f32 %v290, %v338
    %v340 = vpop.f32.mrb[0].mxu0
    %v341 = vpop.f32.mrb[0].mxu0
    %v342 = vadd.f32 %v293, %v341
    %v343 = vpop.f32.mrb[0].mxu0
    %344 = vdwg.mxu0
    %v345 = vmul.f32 %v331, 0.00390625
    %v346 = vmul.f32 %v334, 0.00390625
    %v347 = vmul.f32 %v339, 0.00390625
    %v348 = vmul.f32 %v342, 0.00390625
    %v349 = vmul.f32 %v173, %v173
    %v350 = vmul.f32 %v175, %v175
    %v351 = vmul.f32 %v179, %v179
    %v352 = vmul.f32 %v181, %v181
    %v353 = vmul.f32 %v185, %v185
    %v354 = vmul.f32 %v187, %v187
    %v355 = vmul.f32 %v191, %v191
    %v356 = vmul.f32 %v193, %v193
    %v357 = vpack.c.bf16 %v351, %v349
    %v358 = vpack.c.bf16 %v352, %v350
    %v359 = vpack.c.bf16 %v355, %v353
    %v360 = vpack.c.bf16 %v356, %v354
    %v361 = vunpack.c.l.bf16 %v357
    %v362 = vunpack.c.l.bf16 %v358
    %v363 = vunpack.c.h.bf16 %v357
    %v364 = vunpack.c.h.bf16 %v358
    %v365 = vunpack.c.l.bf16 %v359
    %v366 = vunpack.c.l.bf16 %v360
    %v367 = vunpack.c.h.bf16 %v359
    %v368 = vunpack.c.h.bf16 %v360
    %v369 = vsub.f32 %v349, %v361
    %v370 = vsub.f32 %v350, %v362
    %v371 = vsub.f32 %v351, %v363
    %v372 = vsub.f32 %v352, %v364
    %v373 = vsub.f32 %v353, %v365
    %v374 = vsub.f32 %v354, %v366
    %v375 = vsub.f32 %v355, %v367
    %v376 = vsub.f32 %v356, %v368
    %v377 = vpack.c.bf16 %v371, %v369
    %v378 = vpack.c.bf16 %v372, %v370
    %v379 = vpack.c.bf16 %v375, %v373
    %v380 = vpack.c.bf16 %v376, %v374
    %381 = vmatprep.subr.bf16.mxu0 0
    %382 = vmatpush1.bf16.msra.mxu0 1065369472
    %383 = vmatprep.subr.bf16.mxu0 0
    %384 = vmatpush1.bf16.msra.mxu0 1065369472
    %385 = vmatprep.subr.bf16.mxu0 0
    %386 = vmatpush1.bf16.msra.mxu0 1065369472
    %387 = vmatprep.subr.bf16.mxu0 0
    %388 = vmatpush1.bf16.msra.mxu0 1065369472
    %389 = vmatprep.subr.bf16.mxu0 0
    %390 = vmatpush1.bf16.msra.mxu0 1065369472
    %391 = vmatprep.subr.bf16.mxu0 0
    %392 = vmatpush1.bf16.msra.mxu0 1065369472
    %393 = vmatprep.subr.bf16.mxu0 0
    %394 = vmatpush1.bf16.msra.mxu0 1065369472
    %395 = vmatprep.subr.bf16.mxu0 0
    %396 = vmatpush1.bf16.msra.mxu0 1065369472
    %397 = vmatprep.subr.bf16.mxu0 0
    %398 = vmatpush1.bf16.msra.mxu0 1065369472
    %399 = vmatprep.subr.bf16.mxu0 0
    %400 = vmatpush1.bf16.msra.mxu0 1065369472
    %401 = vmatprep.subr.bf16.mxu0 0
    %402 = vmatpush1.bf16.msra.mxu0 1065369472
    %403 = vmatprep.subr.bf16.mxu0 0
    %404 = vmatpush1.bf16.msra.mxu0 1065369472
    %405 = vmatprep.subr.bf16.mxu0 0
    %406 = vmatpush1.bf16.msra.mxu0 1065369472
    %407 = vmatprep.subr.bf16.mxu0 0
    %408 = vmatpush1.bf16.msra.mxu0 1065369472
    %409 = vmatprep.subr.bf16.mxu0 0
    %410 = vmatpush1.bf16.msra.mxu0 1065369472
    %411 = vmatprep.subr.bf16.mxu0 0
    %412 = vmatpush1.bf16.msra.mxu0 1065369472
    %413 = vmatprep.mubr.bf16.mxu0 %v378
    %414 = vmatmul.mubr.bf16.gmra.mrb[0].mxu0 %v377
    %v415 = vpop.f32.mrb[0].mxu0
    %v416 = vadd.f32 0.0, %v415
    %v417 = vpop.f32.mrb[0].mxu0
    %v418 = vpop.f32.mrb[0].mxu0
    %v419 = vadd.f32 0.0, %v418
    %v420 = vpop.f32.mrb[0].mxu0
    %421 = vmatprep.mubr.bf16.mxu0 %v380
    %422 = vmatmul.mubr.bf16.gmra.mrb[0].mxu0 %v379
    %v423 = vpop.f32.mrb[0].mxu0
    %v424 = vadd.f32 0.0, %v423
    %v425 = vpop.f32.mrb[0].mxu0
    %v426 = vpop.f32.mrb[0].mxu0
    %v427 = vadd.f32 0.0, %v426
    %v428 = vpop.f32.mrb[0].mxu0
    %429 = vdwg.mxu0
    %430 = vmatprep.subr.bf16.mxu0 0
    %431 = vmatpush1.bf16.msra.mxu0 1065369472
    %432 = vmatprep.subr.bf16.mxu0 0
    %433 = vmatpush1.bf16.msra.mxu0 1065369472
    %434 = vmatprep.subr.bf16.mxu0 0
    %435 = vmatpush1.bf16.msra.mxu0 1065369472
    %436 = vmatprep.subr.bf16.mxu0 0
    %437 = vmatpush1.bf16.msra.mxu0 1065369472
    %438 = vmatprep.subr.bf16.mxu0 0
    %439 = vmatpush1.bf16.msra.mxu0 1065369472
    %440 = vmatprep.subr.bf16.mxu0 0
    %441 = vmatpush1.bf16.msra.mxu0 1065369472
    %442 = vmatprep.subr.bf16.mxu0 0
    %443 = vmatpush1.bf16.msra.mxu0 1065369472
    %444 = vmatprep.subr.bf16.mxu0 0
    %445 = vmatpush1.bf16.msra.mxu0 1065369472
    %446 = vmatprep.subr.bf16.mxu0 0
    %447 = vmatpush1.bf16.msra.mxu0 1065369472
    %448 = vmatprep.subr.bf16.mxu0 0
    %449 = vmatpush1.bf16.msra.mxu0 1065369472
    %450 = vmatprep.subr.bf16.mxu0 0
    %451 = vmatpush1.bf16.msra.mxu0 1065369472
    %452 = vmatprep.subr.bf16.mxu0 0
    %453 = vmatpush1.bf16.msra.mxu0 1065369472
    %454 = vmatprep.subr.bf16.mxu0 0
    %455 = vmatpush1.bf16.msra.mxu0 1065369472
    %456 = vmatprep.subr.bf16.mxu0 0
    %457 = vmatpush1.bf16.msra.mxu0 1065369472
    %458 = vmatprep.subr.bf16.mxu0 0
    %459 = vmatpush1.bf16.msra.mxu0 1065369472
    %460 = vmatprep.subr.bf16.mxu0 0
    %461 = vmatpush1.bf16.msra.mxu0 1065369472
    %462 = vmatprep.mubr.bf16.mxu0 %v358
    %463 = vmatmul.mubr.bf16.gmra.mrb[0].mxu0 %v357
    %v464 = vpop.f32.mrb[0].mxu0
    %v465 = vadd.f32 %v416, %v464
    %v466 = vpop.f32.mrb[0].mxu0
    %v467 = vpop.f32.mrb[0].mxu0
    %v468 = vadd.f32 %v419, %v467
    %v469 = vpop.f32.mrb[0].mxu0
    %470 = vmatprep.mubr.bf16.mxu0 %v360
    %471 = vmatmul.mubr.bf16.gmra.mrb[0].mxu0 %v359
    %v472 = vpop.f32.mrb[0].mxu0
    %v473 = vadd.f32 %v424, %v472
    %v474 = vpop.f32.mrb[0].mxu0
    %v475 = vpop.f32.mrb[0].mxu0
    %v476 = vadd.f32 %v427, %v475
    %v477 = vpop.f32.mrb[0].mxu0
    %478 = vdwg.mxu0
    %v479 = vmul.f32 %v465, 0.00390625
    %v480 = vmul.f32 %v468, 0.00390625
    %v481 = vmul.f32 %v473, 0.00390625
    %v482 = vmul.f32 %v476, 0.00390625
    %v483 = vmul.f32 %v345, %v345
    %v484 = vmul.f32 %v346, %v346
    %v485 = vmul.f32 %v347, %v347
    %v486 = vmul.f32 %v348, %v348
    %v487 = vsub.f32 %v479, %v483
    %v488 = vsub.f32 %v480, %v484
    %v489 = vsub.f32 %v481, %v485
    %v490 = vsub.f32 %v482, %v486
    %v491 = vmax.f32 %v487, 0.0
    %v492 = vmax.f32 %v488, 0.0
    %v493 = vmax.f32 %v489, 0.0
    %v494 = vmax.f32 %v490, 0.0
    %v495 = vld [vmem:[%s3] sm:$0xff]
    %v496 = vld [vmem:[%s3 + $0x8] sm:$0xff]
    %v497 = vld [vmem:[%s3 + $0x10] sm:$0xff]
    %v498 = vld [vmem:[%s3 + $0x18] sm:$0xff]
    %v499 = vadd.f32 %v491, 1e-05
    %v500 = vadd.f32 %v492, 1e-05
    %v501 = vadd.f32 %v493, 1e-05
    %v502 = vadd.f32 %v494, 1e-05
    %v503 = vrsqrt.pop %v499
    %v504 = vrsqrt.pop %v500
    %v505 = vrsqrt.pop %v501
    %v506 = vrsqrt.pop %v502
    %v507 = vmul.f32 %v495, %v503
    %v508 = vmul.f32 %v496, %v504
    %v509 = vmul.f32 %v497, %v505
    %v510 = vmul.f32 %v498, %v506
    %v511 = vld [vmem:[%s4] sm:$0xff]
    %v512 = vld [vmem:[%s4 + $0x8] sm:$0xff]
    %v513 = vld [vmem:[%s4 + $0x10] sm:$0xff]
    %v514 = vld [vmem:[%s4 + $0x18] sm:$0xff]
    %v515 = vmul.f32 %v345, %v507
    %v516 = vmul.f32 %v346, %v508
    %v517 = vmul.f32 %v347, %v509
    %v518 = vmul.f32 %v348, %v510
    %v519 = vsub.f32 %v511, %v515
    %v520 = vsub.f32 %v512, %v516
    %v521 = vsub.f32 %v513, %v517
    %v522 = vsub.f32 %v514, %v518
    %524 = vset.pattern.permute.xlu0 0
    %525 = vperm.xlu0 %524, %v507
    %v526 = vpop.permute.xlu0 %525
    %529 = vset.pattern.permute.xlu0 0
    %530 = vperm.xlu0 %529, %v508
    %v531 = vpop.permute.xlu0 %530
    %534 = vset.pattern.permute.xlu0 0
    %535 = vperm.xlu0 %534, %v509
    %v536 = vpop.permute.xlu0 %535
    %539 = vset.pattern.permute.xlu0 0
    %540 = vperm.xlu0 %539, %v510
    %v541 = vpop.permute.xlu0 %540
    %v543 = vmul.f32 %v173, %v526
    %v544 = vmul.f32 %v175, %v526
    %v545 = vmul.f32 %v179, %v531
    %v546 = vmul.f32 %v181, %v531
    %v547 = vmul.f32 %v185, %v536
    %v548 = vmul.f32 %v187, %v536
    %v549 = vmul.f32 %v191, %v541
    %v550 = vmul.f32 %v193, %v541
    %552 = vset.pattern.permute.xlu0 0
    %553 = vperm.xlu0 %552, %v519
    %v554 = vpop.permute.xlu0 %553
    %557 = vset.pattern.permute.xlu0 0
    %558 = vperm.xlu0 %557, %v520
    %v559 = vpop.permute.xlu0 %558
    %562 = vset.pattern.permute.xlu0 0
    %563 = vperm.xlu0 %562, %v521
    %v564 = vpop.permute.xlu0 %563
    %567 = vset.pattern.permute.xlu0 0
    %568 = vperm.xlu0 %567, %v522
    %v569 = vpop.permute.xlu0 %568
    %v571 = vadd.f32 %v543, %v554
    %v572 = vadd.f32 %v544, %v554
    %v573 = vadd.f32 %v545, %v559
    %v574 = vadd.f32 %v546, %v559
    %v575 = vadd.f32 %v547, %v564
    %v576 = vadd.f32 %v548, %v564
    %v577 = vadd.f32 %v549, %v569
    %v578 = vadd.f32 %v550, %v569
    %v579 = vmax.f32 %v571, 0.0
    %v580 = vmax.f32 %v572, 0.0
    %v581 = vmax.f32 %v573, 0.0
    %v582 = vmax.f32 %v574, 0.0
    %v583 = vmax.f32 %v575, 0.0
    %v584 = vmax.f32 %v576, 0.0
    %v585 = vmax.f32 %v577, 0.0
    %v586 = vmax.f32 %v578, 0.0
    %587 = vrot.lane.b32.xlu0 %v579, 127
    %v588 = vpop.permute.xlu0 %587
    %589 = vrot.lane.b32.xlu0 %v580, 127
    %v590 = vpop.permute.xlu0 %589
    %vm591 = vcmp.lt.s32.totalorder %v36, 127
    %v592 = vsel %vm591, %v588, %v590
    %v593 = vsel %vm591, %v590, %v588
    %v594 = vsel %vm62, 1, 0
    %v595 = vsel %vm63, 1, 0
    %vm596 = vcmp.eq.s32.totalorder %v594, 1
    %vm597 = vcmp.eq.s32.totalorder %v595, 1
    %v598 = vsel %vm596, %v592, 0.0
    %v599 = vsel %vm597, %v593, 0.0
    %600 = vrot.lane.b32.xlu0 %v579, 1
    %v601 = vpop.permute.xlu0 %600
    %602 = vrot.lane.b32.xlu0 %v580, 1
    %v603 = vpop.permute.xlu0 %602
    %vm604 = vcmp.lt.s32.totalorder %v36, 1
    %v605 = vsel %vm604, %v601, %v603
    %v606 = vsel %vm604, %v603, %v601
    %v607 = vsel %vm64, 1, 0
    %v608 = vsel %vm65, 1, 0
    %vm609 = vcmp.eq.s32.totalorder %v607, 1
    %vm610 = vcmp.eq.s32.totalorder %v608, 1
    %v611 = vsel %vm609, %v606, 0.0
    %v612 = vsel %vm610, %v605, 0.0
    %v613 = vsel %vm72, 1, 0
    %vm614 = vcmp.eq.s32.totalorder %v613, 1
    %v615 = vsel %vm614, %v598, %v611
    %v616 = vsel %vm614, %v599, %v612
    %vm617 = vcmask 261120
    %v619 = vsel %vm617, %v219, 0
    %v622 = vsel %vm617, %v220, 0
    %v625 = vsel %vm617, %v221, 0
    %v628 = vsel %vm617, %v222, 0
    %630 = vmatprep.subr.mxu0 %v616
    %631 = vmatpush1.msra.mxu0 %v615
    %632 = vmatprep.subr.mxu0 %v582
    %633 = vmatpush1.msra.mxu0 %v581
    %634 = vmatprep.subr.mxu0 %v584
    %635 = vmatpush1.msra.mxu0 %v583
    %636 = vmatprep.subr.mxu0 %v586
    %637 = vmatpush1.msra.mxu0 %v585
    %638 = vmatprep.subr.mxu0 0.0
    %639 = vmatpush1.msra.mxu0 0.0
    %640 = vmatprep.subr.mxu0 0.0
    %641 = vmatpush1.msra.mxu0 0.0
    %642 = vmatprep.subr.mxu0 0.0
    %643 = vmatpush1.msra.mxu0 0.0
    %644 = vmatprep.subr.mxu0 0.0
    %645 = vmatpush1.msra.mxu0 0.0
    %646 = vmatprep.subr.mxu0 0.0
    %647 = vmatpush1.msra.mxu0 0.0
    %648 = vmatprep.subr.mxu0 0.0
    %649 = vmatpush1.msra.mxu0 0.0
    %650 = vmatprep.subr.mxu0 0.0
    %651 = vmatpush1.msra.mxu0 0.0
    %652 = vmatprep.subr.mxu0 0.0
    %653 = vmatpush1.msra.mxu0 0.0
    %654 = vmatprep.subr.mxu0 0.0
    %655 = vmatpush1.msra.mxu0 0.0
    %656 = vmatprep.subr.mxu0 0.0
    %657 = vmatpush1.msra.mxu0 0.0
    %658 = vmatprep.subr.mxu0 0.0
    %659 = vmatpush1.msra.mxu0 0.0
    %660 = vmatprep.subr.mxu0 0.0
    %661 = vmatpush1.msra.mxu0 0.0
    %662 = vmatprep.subr.mxu0 0.0
    %663 = vmatpush1.msra.mxu0 0.0
    %664 = vmatprep.subr.mxu0 0.0
    %665 = vmatpush1.msra.mxu0 0.0
    %666 = vmatprep.subr.mxu0 0.0
    %667 = vmatpush1.msra.mxu0 0.0
    %668 = vmatprep.subr.mxu0 0.0
    %669 = vmatpush1.msra.mxu0 0.0
    %670 = vmatprep.subr.mxu0 0.0
    %671 = vmatpush1.msra.mxu0 0.0
    %672 = vmatprep.subr.mxu0 0.0
    %673 = vmatpush1.msra.mxu0 0.0
    %674 = vmatprep.subr.mxu0 0.0
    %675 = vmatpush1.msra.mxu0 0.0
    %676 = vmatprep.subr.mxu0 0.0
    %677 = vmatpush1.msra.mxu0 0.0
    %678 = vmatprep.subr.mxu0 0.0
    %679 = vmatpush1.msra.mxu0 0.0
    %680 = vmatprep.subr.mxu0 0.0
    %681 = vmatpush1.msra.mxu0 0.0
    %682 = vmatprep.subr.mxu0 0.0
    %683 = vmatpush1.msra.mxu0 0.0
    %684 = vmatprep.subr.mxu0 0.0
    %685 = vmatpush1.msra.mxu0 0.0
    %686 = vmatprep.subr.mxu0 0.0
    %687 = vmatpush1.msra.mxu0 0.0
    %688 = vmatprep.subr.mxu0 0.0
    %689 = vmatpush1.msra.mxu0 0.0
    %690 = vmatprep.subr.mxu0 0.0
    %691 = vmatpush1.msra.mxu0 0.0
    %692 = vmatprep.subr.mxu0 0.0
    %693 = vmatpush1.msra.mxu0 0.0
    %694 = vmatprep.mubr.f32.mxu0 0.0
    %695 = vmatmul.mubr.f32.gmra.mrb[0].mxu0 %v619
    %v696 = vpop.f32.mrb[0].mxu0
    %v697 = vadd.f32 0.0, %v696
    %v698 = vpop.f32.mrb[0].mxu0
    %v699 = vadd.f32 0.0, %v698
    %700 = vmatprep.mubr.f32.mxu0 0.0
    %701 = vmatmul.mubr.f32.gmra.mrb[0].mxu0 %v622
    %v702 = vpop.f32.mrb[0].mxu0
    %v703 = vadd.f32 0.0, %v702
    %v704 = vpop.f32.mrb[0].mxu0
    %v705 = vadd.f32 0.0, %v704
    %706 = vmatprep.mubr.f32.mxu0 0.0
    %707 = vmatmul.mubr.f32.gmra.mrb[0].mxu0 %v625
    %v708 = vpop.f32.mrb[0].mxu0
    %v709 = vadd.f32 0.0, %v708
    %v710 = vpop.f32.mrb[0].mxu0
    %v711 = vadd.f32 0.0, %v710
    %712 = vmatprep.mubr.f32.mxu0 0.0
    %713 = vmatmul.mubr.f32.gmra.mrb[0].mxu0 %v628
    %v714 = vpop.f32.mrb[0].mxu0
    %v715 = vadd.f32 0.0, %v714
    %v716 = vpop.f32.mrb[0].mxu0
    %v717 = vadd.f32 0.0, %v716
    %718 = vdwg.mxu0
    %v719 = vpack.c.bf16 %v703, %v697
    %v720 = vpack.c.bf16 %v705, %v699
    %v721 = vpack.c.bf16 %v715, %v709
    %v722 = vpack.c.bf16 %v717, %v711
    %v723 = vunpack.c.l.bf16 %v719
    %v724 = vunpack.c.l.bf16 %v720
    %v725 = vunpack.c.h.bf16 %v719
    %v726 = vunpack.c.h.bf16 %v720
    %v727 = vunpack.c.l.bf16 %v721
    %v728 = vunpack.c.l.bf16 %v722
    %v729 = vunpack.c.h.bf16 %v721
    %v730 = vunpack.c.h.bf16 %v722
    %v731 = vsub.f32 %v697, %v723
    %v732 = vsub.f32 %v699, %v724
    %v733 = vsub.f32 %v703, %v725
    %v734 = vsub.f32 %v705, %v726
    %v735 = vsub.f32 %v709, %v727
    %v736 = vsub.f32 %v711, %v728
    %v737 = vsub.f32 %v715, %v729
    %v738 = vsub.f32 %v717, %v730
    %v739 = vpack.c.bf16 %v733, %v731
    %v740 = vpack.c.bf16 %v734, %v732
    %v741 = vpack.c.bf16 %v737, %v735
    %v742 = vpack.c.bf16 %v738, %v736
    %743 = vmatprep.subr.bf16.mxu0 0
    %744 = vmatpush1.bf16.msra.mxu0 1065369472
    %745 = vmatprep.subr.bf16.mxu0 0
    %746 = vmatpush1.bf16.msra.mxu0 1065369472
    %747 = vmatprep.subr.bf16.mxu0 0
    %748 = vmatpush1.bf16.msra.mxu0 1065369472
    %749 = vmatprep.subr.bf16.mxu0 0
    %750 = vmatpush1.bf16.msra.mxu0 1065369472
    %751 = vmatprep.subr.bf16.mxu0 0
    %752 = vmatpush1.bf16.msra.mxu0 1065369472
    %753 = vmatprep.subr.bf16.mxu0 0
    %754 = vmatpush1.bf16.msra.mxu0 1065369472
    %755 = vmatprep.subr.bf16.mxu0 0
    %756 = vmatpush1.bf16.msra.mxu0 1065369472
    %757 = vmatprep.subr.bf16.mxu0 0
    %758 = vmatpush1.bf16.msra.mxu0 1065369472
    %759 = vmatprep.subr.bf16.mxu0 0
    %760 = vmatpush1.bf16.msra.mxu0 1065369472
    %761 = vmatprep.subr.bf16.mxu0 0
    %762 = vmatpush1.bf16.msra.mxu0 1065369472
    %763 = vmatprep.subr.bf16.mxu0 0
    %764 = vmatpush1.bf16.msra.mxu0 1065369472
    %765 = vmatprep.subr.bf16.mxu0 0
    %766 = vmatpush1.bf16.msra.mxu0 1065369472
    %767 = vmatprep.subr.bf16.mxu0 0
    %768 = vmatpush1.bf16.msra.mxu0 1065369472
    %769 = vmatprep.subr.bf16.mxu0 0
    %770 = vmatpush1.bf16.msra.mxu0 1065369472
    %771 = vmatprep.subr.bf16.mxu0 0
    %772 = vmatpush1.bf16.msra.mxu0 1065369472
    %773 = vmatprep.subr.bf16.mxu0 0
    %774 = vmatpush1.bf16.msra.mxu0 1065369472
    %775 = vmatprep.mubr.bf16.mxu0 %v740
    %776 = vmatmul.mubr.bf16.gmra.mrb[0].mxu0 %v739
    %v777 = vpop.f32.mrb[0].mxu0
    %v778 = vadd.f32 0.0, %v777
    %v779 = vpop.f32.mrb[0].mxu0
    %v780 = vpop.f32.mrb[0].mxu0
    %v781 = vadd.f32 0.0, %v780
    %v782 = vpop.f32.mrb[0].mxu0
    %783 = vmatprep.mubr.bf16.mxu0 %v742
    %784 = vmatmul.mubr.bf16.gmra.mrb[0].mxu0 %v741
    %v785 = vpop.f32.mrb[0].mxu0
    %v786 = vadd.f32 0.0, %v785
    %v787 = vpop.f32.mrb[0].mxu0
    %v788 = vpop.f32.mrb[0].mxu0
    %v789 = vadd.f32 0.0, %v788
    %v790 = vpop.f32.mrb[0].mxu0
    %791 = vdwg.mxu0
    %792 = vmatprep.subr.bf16.mxu0 0
    %793 = vmatpush1.bf16.msra.mxu0 1065369472
    %794 = vmatprep.subr.bf16.mxu0 0
    %795 = vmatpush1.bf16.msra.mxu0 1065369472
    %796 = vmatprep.subr.bf16.mxu0 0
    %797 = vmatpush1.bf16.msra.mxu0 1065369472
    %798 = vmatprep.subr.bf16.mxu0 0
    %799 = vmatpush1.bf16.msra.mxu0 1065369472
    %800 = vmatprep.subr.bf16.mxu0 0
    %801 = vmatpush1.bf16.msra.mxu0 1065369472
    %802 = vmatprep.subr.bf16.mxu0 0
    %803 = vmatpush1.bf16.msra.mxu0 1065369472
    %804 = vmatprep.subr.bf16.mxu0 0
    %805 = vmatpush1.bf16.msra.mxu0 1065369472
    %806 = vmatprep.subr.bf16.mxu0 0
    %807 = vmatpush1.bf16.msra.mxu0 1065369472
    %808 = vmatprep.subr.bf16.mxu0 0
    %809 = vmatpush1.bf16.msra.mxu0 1065369472
    %810 = vmatprep.subr.bf16.mxu0 0
    %811 = vmatpush1.bf16.msra.mxu0 1065369472
    %812 = vmatprep.subr.bf16.mxu0 0
    %813 = vmatpush1.bf16.msra.mxu0 1065369472
    %814 = vmatprep.subr.bf16.mxu0 0
    %815 = vmatpush1.bf16.msra.mxu0 1065369472
    %816 = vmatprep.subr.bf16.mxu0 0
    %817 = vmatpush1.bf16.msra.mxu0 1065369472
    %818 = vmatprep.subr.bf16.mxu0 0
    %819 = vmatpush1.bf16.msra.mxu0 1065369472
    %820 = vmatprep.subr.bf16.mxu0 0
    %821 = vmatpush1.bf16.msra.mxu0 1065369472
    %822 = vmatprep.subr.bf16.mxu0 0
    %823 = vmatpush1.bf16.msra.mxu0 1065369472
    %824 = vmatprep.mubr.bf16.mxu0 %v720
    %825 = vmatmul.mubr.bf16.gmra.mrb[0].mxu0 %v719
    %v826 = vpop.f32.mrb[0].mxu0
    %v827 = vadd.f32 %v778, %v826
    %v828 = vpop.f32.mrb[0].mxu0
    %v829 = vpop.f32.mrb[0].mxu0
    %v830 = vadd.f32 %v781, %v829
    %v831 = vpop.f32.mrb[0].mxu0
    %832 = vmatprep.mubr.bf16.mxu0 %v722
    %833 = vmatmul.mubr.bf16.gmra.mrb[0].mxu0 %v721
    %v834 = vpop.f32.mrb[0].mxu0
    %v835 = vadd.f32 %v786, %v834
    %v836 = vpop.f32.mrb[0].mxu0
    %v837 = vpop.f32.mrb[0].mxu0
    %v838 = vadd.f32 %v789, %v837
    %v839 = vpop.f32.mrb[0].mxu0
    %840 = vdwg.mxu0
    %v841 = vmul.f32 %v827, 0.00390625
    %v842 = vmul.f32 %v830, 0.00390625
    %v843 = vmul.f32 %v835, 0.00390625
    %v844 = vmul.f32 %v838, 0.00390625
    %v845 = vmul.f32 %v697, %v697
    %v846 = vmul.f32 %v699, %v699
    %v847 = vmul.f32 %v703, %v703
    %v848 = vmul.f32 %v705, %v705
    %v849 = vmul.f32 %v709, %v709
    %v850 = vmul.f32 %v711, %v711
    %v851 = vmul.f32 %v715, %v715
    %v852 = vmul.f32 %v717, %v717
    %v853 = vpack.c.bf16 %v847, %v845
    %v854 = vpack.c.bf16 %v848, %v846
    %v855 = vpack.c.bf16 %v851, %v849
    %v856 = vpack.c.bf16 %v852, %v850
    %v857 = vunpack.c.l.bf16 %v853
    %v858 = vunpack.c.l.bf16 %v854
    %v859 = vunpack.c.h.bf16 %v853
    %v860 = vunpack.c.h.bf16 %v854
    %v861 = vunpack.c.l.bf16 %v855
    %v862 = vunpack.c.l.bf16 %v856
    %v863 = vunpack.c.h.bf16 %v855
    %v864 = vunpack.c.h.bf16 %v856
    %v865 = vsub.f32 %v845, %v857
    %v866 = vsub.f32 %v846, %v858
    %v867 = vsub.f32 %v847, %v859
    %v868 = vsub.f32 %v848, %v860
    %v869 = vsub.f32 %v849, %v861
    %v870 = vsub.f32 %v850, %v862
    %v871 = vsub.f32 %v851, %v863
    %v872 = vsub.f32 %v852, %v864
    %v873 = vpack.c.bf16 %v867, %v865
    %v874 = vpack.c.bf16 %v868, %v866
    %v875 = vpack.c.bf16 %v871, %v869
    %v876 = vpack.c.bf16 %v872, %v870
    %877 = vmatprep.subr.bf16.mxu0 0
    %878 = vmatpush1.bf16.msra.mxu0 1065369472
    %879 = vmatprep.subr.bf16.mxu0 0
    %880 = vmatpush1.bf16.msra.mxu0 1065369472
    %881 = vmatprep.subr.bf16.mxu0 0
    %882 = vmatpush1.bf16.msra.mxu0 1065369472
    %883 = vmatprep.subr.bf16.mxu0 0
    %884 = vmatpush1.bf16.msra.mxu0 1065369472
    %885 = vmatprep.subr.bf16.mxu0 0
    %886 = vmatpush1.bf16.msra.mxu0 1065369472
    %887 = vmatprep.subr.bf16.mxu0 0
    %888 = vmatpush1.bf16.msra.mxu0 1065369472
    %889 = vmatprep.subr.bf16.mxu0 0
    %890 = vmatpush1.bf16.msra.mxu0 1065369472
    %891 = vmatprep.subr.bf16.mxu0 0
    %892 = vmatpush1.bf16.msra.mxu0 1065369472
    %893 = vmatprep.subr.bf16.mxu0 0
    %894 = vmatpush1.bf16.msra.mxu0 1065369472
    %895 = vmatprep.subr.bf16.mxu0 0
    %896 = vmatpush1.bf16.msra.mxu0 1065369472
    %897 = vmatprep.subr.bf16.mxu0 0
    %898 = vmatpush1.bf16.msra.mxu0 1065369472
    %899 = vmatprep.subr.bf16.mxu0 0
    %900 = vmatpush1.bf16.msra.mxu0 1065369472
    %901 = vmatprep.subr.bf16.mxu0 0
    %902 = vmatpush1.bf16.msra.mxu0 1065369472
    %903 = vmatprep.subr.bf16.mxu0 0
    %904 = vmatpush1.bf16.msra.mxu0 1065369472
    %905 = vmatprep.subr.bf16.mxu0 0
    %906 = vmatpush1.bf16.msra.mxu0 1065369472
    %907 = vmatprep.subr.bf16.mxu0 0
    %908 = vmatpush1.bf16.msra.mxu0 1065369472
    %909 = vmatprep.mubr.bf16.mxu0 %v874
    %910 = vmatmul.mubr.bf16.gmra.mrb[0].mxu0 %v873
    %v911 = vpop.f32.mrb[0].mxu0
    %v912 = vadd.f32 0.0, %v911
    %v913 = vpop.f32.mrb[0].mxu0
    %v914 = vpop.f32.mrb[0].mxu0
    %v915 = vadd.f32 0.0, %v914
    %v916 = vpop.f32.mrb[0].mxu0
    %917 = vmatprep.mubr.bf16.mxu0 %v876
    %918 = vmatmul.mubr.bf16.gmra.mrb[0].mxu0 %v875
    %v919 = vpop.f32.mrb[0].mxu0
    %v920 = vadd.f32 0.0, %v919
    %v921 = vpop.f32.mrb[0].mxu0
    %v922 = vpop.f32.mrb[0].mxu0
    %v923 = vadd.f32 0.0, %v922
    %v924 = vpop.f32.mrb[0].mxu0
    %925 = vdwg.mxu0
    %926 = vmatprep.subr.bf16.mxu0 0
    %927 = vmatpush1.bf16.msra.mxu0 1065369472
    %928 = vmatprep.subr.bf16.mxu0 0
    %929 = vmatpush1.bf16.msra.mxu0 1065369472
    %930 = vmatprep.subr.bf16.mxu0 0
    %931 = vmatpush1.bf16.msra.mxu0 1065369472
    %932 = vmatprep.subr.bf16.mxu0 0
    %933 = vmatpush1.bf16.msra.mxu0 1065369472
    %934 = vmatprep.subr.bf16.mxu0 0
    %935 = vmatpush1.bf16.msra.mxu0 1065369472
    %936 = vmatprep.subr.bf16.mxu0 0
    %937 = vmatpush1.bf16.msra.mxu0 1065369472
    %938 = vmatprep.subr.bf16.mxu0 0
    %939 = vmatpush1.bf16.msra.mxu0 1065369472
    %940 = vmatprep.subr.bf16.mxu0 0
    %941 = vmatpush1.bf16.msra.mxu0 1065369472
    %942 = vmatprep.subr.bf16.mxu0 0
    %943 = vmatpush1.bf16.msra.mxu0 1065369472
    %944 = vmatprep.subr.bf16.mxu0 0
    %945 = vmatpush1.bf16.msra.mxu0 1065369472
    %946 = vmatprep.subr.bf16.mxu0 0
    %947 = vmatpush1.bf16.msra.mxu0 1065369472
    %948 = vmatprep.subr.bf16.mxu0 0
    %949 = vmatpush1.bf16.msra.mxu0 1065369472
    %950 = vmatprep.subr.bf16.mxu0 0
    %951 = vmatpush1.bf16.msra.mxu0 1065369472
    %952 = vmatprep.subr.bf16.mxu0 0
    %953 = vmatpush1.bf16.msra.mxu0 1065369472
    %954 = vmatprep.subr.bf16.mxu0 0
    %955 = vmatpush1.bf16.msra.mxu0 1065369472
    %956 = vmatprep.subr.bf16.mxu0 0
    %957 = vmatpush1.bf16.msra.mxu0 1065369472
    %958 = vmatprep.mubr.bf16.mxu0 %v854
    %959 = vmatmul.mubr.bf16.gmra.mrb[0].mxu0 %v853
    %v960 = vpop.f32.mrb[0].mxu0
    %v961 = vadd.f32 %v912, %v960
    %v962 = vpop.f32.mrb[0].mxu0
    %v963 = vpop.f32.mrb[0].mxu0
    %v964 = vadd.f32 %v915, %v963
    %v965 = vpop.f32.mrb[0].mxu0
    %966 = vmatprep.mubr.bf16.mxu0 %v856
    %967 = vmatmul.mubr.bf16.gmra.mrb[0].mxu0 %v855
    %v968 = vpop.f32.mrb[0].mxu0
    %v969 = vadd.f32 %v920, %v968
    %v970 = vpop.f32.mrb[0].mxu0
    %v971 = vpop.f32.mrb[0].mxu0
    %v972 = vadd.f32 %v923, %v971
    %v973 = vpop.f32.mrb[0].mxu0
    %974 = vdwg.mxu0
    %v975 = vmul.f32 %v961, 0.00390625
    %v976 = vmul.f32 %v964, 0.00390625
    %v977 = vmul.f32 %v969, 0.00390625
    %v978 = vmul.f32 %v972, 0.00390625
    %v979 = vmul.f32 %v841, %v841
    %v980 = vmul.f32 %v842, %v842
    %v981 = vmul.f32 %v843, %v843
    %v982 = vmul.f32 %v844, %v844
    %v983 = vsub.f32 %v975, %v979
    %v984 = vsub.f32 %v976, %v980
    %v985 = vsub.f32 %v977, %v981
    %v986 = vsub.f32 %v978, %v982
    %v987 = vmax.f32 %v983, 0.0
    %v988 = vmax.f32 %v984, 0.0
    %v989 = vmax.f32 %v985, 0.0
    %v990 = vmax.f32 %v986, 0.0
    %s991 = scalar_lea.vmem %s3, 32
    %v992 = vld [vmem:[%s991] sm:$0xff]
    %v993 = vld [vmem:[%s991 + $0x8] sm:$0xff]
    %v994 = vld [vmem:[%s991 + $0x10] sm:$0xff]
    %v995 = vld [vmem:[%s991 + $0x18] sm:$0xff]
    %v996 = vadd.f32 %v987, 1e-05
    %v997 = vadd.f32 %v988, 1e-05
    %v998 = vadd.f32 %v989, 1e-05
    %v999 = vadd.f32 %v990, 1e-05
    %v1000 = vrsqrt.pop %v996
    %v1001 = vrsqrt.pop %v997
    %v1002 = vrsqrt.pop %v998
    %v1003 = vrsqrt.pop %v999
    %v1004 = vmul.f32 %v992, %v1000
    %v1005 = vmul.f32 %v993, %v1001
    %v1006 = vmul.f32 %v994, %v1002
    %v1007 = vmul.f32 %v995, %v1003
    %s1008 = scalar_lea.vmem %s4, 32
    %v1009 = vld [vmem:[%s1008] sm:$0xff]
    %v1010 = vld [vmem:[%s1008 + $0x8] sm:$0xff]
    %v1011 = vld [vmem:[%s1008 + $0x10] sm:$0xff]
    %v1012 = vld [vmem:[%s1008 + $0x18] sm:$0xff]
    %v1013 = vmul.f32 %v841, %v1004
    %v1014 = vmul.f32 %v842, %v1005
    %v1015 = vmul.f32 %v843, %v1006
    %v1016 = vmul.f32 %v844, %v1007
    %v1017 = vsub.f32 %v1009, %v1013
    %v1018 = vsub.f32 %v1010, %v1014
    %v1019 = vsub.f32 %v1011, %v1015
    %v1020 = vsub.f32 %v1012, %v1016
    %1022 = vset.pattern.permute.xlu0 0
    %1023 = vperm.xlu0 %1022, %v1004
    %v1024 = vpop.permute.xlu0 %1023
    %1027 = vset.pattern.permute.xlu0 0
    %1028 = vperm.xlu0 %1027, %v1005
    %v1029 = vpop.permute.xlu0 %1028
    %1032 = vset.pattern.permute.xlu0 0
    %1033 = vperm.xlu0 %1032, %v1006
    %v1034 = vpop.permute.xlu0 %1033
    %1037 = vset.pattern.permute.xlu0 0
    %1038 = vperm.xlu0 %1037, %v1007
    %v1039 = vpop.permute.xlu0 %1038
    %v1041 = vmul.f32 %v697, %v1024
    %v1042 = vmul.f32 %v699, %v1024
    %v1043 = vmul.f32 %v703, %v1029
    %v1044 = vmul.f32 %v705, %v1029
    %v1045 = vmul.f32 %v709, %v1034
    %v1046 = vmul.f32 %v711, %v1034
    %v1047 = vmul.f32 %v715, %v1039
    %v1048 = vmul.f32 %v717, %v1039
    %1050 = vset.pattern.permute.xlu0 0
    %1051 = vperm.xlu0 %1050, %v1017
    %v1052 = vpop.permute.xlu0 %1051
    %1055 = vset.pattern.permute.xlu0 0
    %1056 = vperm.xlu0 %1055, %v1018
    %v1057 = vpop.permute.xlu0 %1056
    %1060 = vset.pattern.permute.xlu0 0
    %1061 = vperm.xlu0 %1060, %v1019
    %v1062 = vpop.permute.xlu0 %1061
    %1065 = vset.pattern.permute.xlu0 0
    %1066 = vperm.xlu0 %1065, %v1020
    %v1067 = vpop.permute.xlu0 %1066
    %v1069 = vadd.f32 %v1041, %v1052
    %v1070 = vadd.f32 %v1042, %v1052
    %v1071 = vadd.f32 %v1043, %v1057
    %v1072 = vadd.f32 %v1044, %v1057
    %v1073 = vadd.f32 %v1045, %v1062
    %v1074 = vadd.f32 %v1046, %v1062
    %v1075 = vadd.f32 %v1047, %v1067
    %v1076 = vadd.f32 %v1048, %v1067
    %v1077 = vmax.f32 %v1069, 0.0
    %v1078 = vmax.f32 %v1070, 0.0
    %v1079 = vmax.f32 %v1071, 0.0
    %v1080 = vmax.f32 %v1072, 0.0
    %v1081 = vmax.f32 %v1073, 0.0
    %v1082 = vmax.f32 %v1074, 0.0
    %v1083 = vmax.f32 %v1075, 0.0
    %v1084 = vmax.f32 %v1076, 0.0
    %s1085 = scalar_lea.vmem %s2, 32
    %v1086 = vld [vmem:[%s1085] sm:$0xff]
    %v1087 = vld [vmem:[%s1085 + $0x8] sm:$0xff]
    %v1088 = vld [vmem:[%s1085 + $0x10] sm:$0xff]
    %v1089 = vld [vmem:[%s1085 + $0x18] sm:$0xff]
    %v1091 = vsel %vm617, %v1086, 0
    %v1094 = vsel %vm617, %v1087, 0
    %v1097 = vsel %vm617, %v1088, 0
    %v1100 = vsel %vm617, %v1089, 0
    %1102 = vmatprep.subr.mxu0 %v1078
    %1103 = vmatpush1.msra.mxu0 %v1077
    %1104 = vmatprep.subr.mxu0 %v1080
    %1105 = vmatpush1.msra.mxu0 %v1079
    %1106 = vmatprep.subr.mxu0 %v1082
    %1107 = vmatpush1.msra.mxu0 %v1081
    %1108 = vmatprep.subr.mxu0 %v1084
    %1109 = vmatpush1.msra.mxu0 %v1083
    %1110 = vmatprep.subr.mxu0 0.0
    %1111 = vmatpush1.msra.mxu0 0.0
    %1112 = vmatprep.subr.mxu0 0.0
    %1113 = vmatpush1.msra.mxu0 0.0
    %1114 = vmatprep.subr.mxu0 0.0
    %1115 = vmatpush1.msra.mxu0 0.0
    %1116 = vmatprep.subr.mxu0 0.0
    %1117 = vmatpush1.msra.mxu0 0.0
    %1118 = vmatprep.subr.mxu0 0.0
    %1119 = vmatpush1.msra.mxu0 0.0
    %1120 = vmatprep.subr.mxu0 0.0
    %1121 = vmatpush1.msra.mxu0 0.0
    %1122 = vmatprep.subr.mxu0 0.0
    %1123 = vmatpush1.msra.mxu0 0.0
    %1124 = vmatprep.subr.mxu0 0.0
    %1125 = vmatpush1.msra.mxu0 0.0
    %1126 = vmatprep.subr.mxu0 0.0
    %1127 = vmatpush1.msra.mxu0 0.0
    %1128 = vmatprep.subr.mxu0 0.0
    %1129 = vmatpush1.msra.mxu0 0.0
    %1130 = vmatprep.subr.mxu0 0.0
    %1131 = vmatpush1.msra.mxu0 0.0
    %1132 = vmatprep.subr.mxu0 0.0
    %1133 = vmatpush1.msra.mxu0 0.0
    %1134 = vmatprep.subr.mxu0 0.0
    %1135 = vmatpush1.msra.mxu0 0.0
    %1136 = vmatprep.subr.mxu0 0.0
    %1137 = vmatpush1.msra.mxu0 0.0
    %1138 = vmatprep.subr.mxu0 0.0
    %1139 = vmatpush1.msra.mxu0 0.0
    %1140 = vmatprep.subr.mxu0 0.0
    %1141 = vmatpush1.msra.mxu0 0.0
    %1142 = vmatprep.subr.mxu0 0.0
    %1143 = vmatpush1.msra.mxu0 0.0
    %1144 = vmatprep.subr.mxu0 0.0
    %1145 = vmatpush1.msra.mxu0 0.0
    %1146 = vmatprep.subr.mxu0 0.0
    %1147 = vmatpush1.msra.mxu0 0.0
    %1148 = vmatprep.subr.mxu0 0.0
    %1149 = vmatpush1.msra.mxu0 0.0
    %1150 = vmatprep.subr.mxu0 0.0
    %1151 = vmatpush1.msra.mxu0 0.0
    %1152 = vmatprep.subr.mxu0 0.0
    %1153 = vmatpush1.msra.mxu0 0.0
    %1154 = vmatprep.subr.mxu0 0.0
    %1155 = vmatpush1.msra.mxu0 0.0
    %1156 = vmatprep.subr.mxu0 0.0
    %1157 = vmatpush1.msra.mxu0 0.0
    %1158 = vmatprep.subr.mxu0 0.0
    %1159 = vmatpush1.msra.mxu0 0.0
    %1160 = vmatprep.subr.mxu0 0.0
    %1161 = vmatpush1.msra.mxu0 0.0
    %1162 = vmatprep.subr.mxu0 0.0
    %1163 = vmatpush1.msra.mxu0 0.0
    %1164 = vmatprep.subr.mxu0 0.0
    %1165 = vmatpush1.msra.mxu0 0.0
    %1166 = vmatprep.mubr.f32.mxu0 0.0
    %1167 = vmatmul.mubr.f32.gmra.mrb[0].mxu0 %v1091
    %v1168 = vpop.f32.mrb[0].mxu0
    %v1169 = vadd.f32 0.0, %v1168
    %v1170 = vpop.f32.mrb[0].mxu0
    %v1171 = vadd.f32 0.0, %v1170
    %1172 = vmatprep.mubr.f32.mxu0 0.0
    %1173 = vmatmul.mubr.f32.gmra.mrb[0].mxu0 %v1094
    %v1174 = vpop.f32.mrb[0].mxu0
    %v1175 = vadd.f32 0.0, %v1174
    %v1176 = vpop.f32.mrb[0].mxu0
    %v1177 = vadd.f32 0.0, %v1176
    %1178 = vmatprep.mubr.f32.mxu0 0.0
    %1179 = vmatmul.mubr.f32.gmra.mrb[0].mxu0 %v1097
    %v1180 = vpop.f32.mrb[0].mxu0
    %v1181 = vadd.f32 0.0, %v1180
    %v1182 = vpop.f32.mrb[0].mxu0
    %v1183 = vadd.f32 0.0, %v1182
    %1184 = vmatprep.mubr.f32.mxu0 0.0
    %1185 = vmatmul.mubr.f32.gmra.mrb[0].mxu0 %v1100
    %v1186 = vpop.f32.mrb[0].mxu0
    %v1187 = vadd.f32 0.0, %v1186
    %v1188 = vpop.f32.mrb[0].mxu0
    %v1189 = vadd.f32 0.0, %v1188
    %1190 = vdwg.mxu0
    %s1191 = scalar_lea.vmem %s2, 64
    %v1192 = vld [vmem:[%s1191] sm:$0xff]
    %v1193 = vld [vmem:[%s1191 + $0x8] sm:$0xff]
    %v1194 = vld [vmem:[%s1191 + $0x10] sm:$0xff]
    %v1195 = vld [vmem:[%s1191 + $0x18] sm:$0xff]
    %v1196 = vpack.c.bf16 %v1175, %v1169
    %v1197 = vpack.c.bf16 %v1177, %v1171
    %v1198 = vpack.c.bf16 %v1187, %v1181
    %v1199 = vpack.c.bf16 %v1189, %v1183
    %v1200 = vunpack.c.l.bf16 %v1196
    %v1201 = vunpack.c.l.bf16 %v1197
    %v1202 = vunpack.c.h.bf16 %v1196
    %v1203 = vunpack.c.h.bf16 %v1197
    %v1204 = vunpack.c.l.bf16 %v1198
    %v1205 = vunpack.c.l.bf16 %v1199
    %v1206 = vunpack.c.h.bf16 %v1198
    %v1207 = vunpack.c.h.bf16 %v1199
    %v1208 = vsub.f32 %v1169, %v1200
    %v1209 = vsub.f32 %v1171, %v1201
    %v1210 = vsub.f32 %v1175, %v1202
    %v1211 = vsub.f32 %v1177, %v1203
    %v1212 = vsub.f32 %v1181, %v1204
    %v1213 = vsub.f32 %v1183, %v1205
    %v1214 = vsub.f32 %v1187, %v1206
    %v1215 = vsub.f32 %v1189, %v1207
    %v1216 = vpack.c.bf16 %v1210, %v1208
    %v1217 = vpack.c.bf16 %v1211, %v1209
    %v1218 = vpack.c.bf16 %v1214, %v1212
    %v1219 = vpack.c.bf16 %v1215, %v1213
    %1220 = vmatprep.subr.bf16.mxu0 0
    %1221 = vmatpush1.bf16.msra.mxu0 1065369472
    %1222 = vmatprep.subr.bf16.mxu0 0
    %1223 = vmatpush1.bf16.msra.mxu0 1065369472
    %1224 = vmatprep.subr.bf16.mxu0 0
    %1225 = vmatpush1.bf16.msra.mxu0 1065369472
    %1226 = vmatprep.subr.bf16.mxu0 0
    %1227 = vmatpush1.bf16.msra.mxu0 1065369472
    %1228 = vmatprep.subr.bf16.mxu0 0
    %1229 = vmatpush1.bf16.msra.mxu0 1065369472
    %1230 = vmatprep.subr.bf16.mxu0 0
    %1231 = vmatpush1.bf16.msra.mxu0 1065369472
    %1232 = vmatprep.subr.bf16.mxu0 0
    %1233 = vmatpush1.bf16.msra.mxu0 1065369472
    %1234 = vmatprep.subr.bf16.mxu0 0
    %1235 = vmatpush1.bf16.msra.mxu0 1065369472
    %1236 = vmatprep.subr.bf16.mxu0 0
    %1237 = vmatpush1.bf16.msra.mxu0 1065369472
    %1238 = vmatprep.subr.bf16.mxu0 0
    %1239 = vmatpush1.bf16.msra.mxu0 1065369472
    %1240 = vmatprep.subr.bf16.mxu0 0
    %1241 = vmatpush1.bf16.msra.mxu0 1065369472
    %1242 = vmatprep.subr.bf16.mxu0 0
    %1243 = vmatpush1.bf16.msra.mxu0 1065369472
    %1244 = vmatprep.subr.bf16.mxu0 0
    %1245 = vmatpush1.bf16.msra.mxu0 1065369472
    %1246 = vmatprep.subr.bf16.mxu0 0
    %1247 = vmatpush1.bf16.msra.mxu0 1065369472
    %1248 = vmatprep.subr.bf16.mxu0 0
    %1249 = vmatpush1.bf16.msra.mxu0 1065369472
    %1250 = vmatprep.subr.bf16.mxu0 0
    %1251 = vmatpush1.bf16.msra.mxu0 1065369472
    %1252 = vmatprep.mubr.bf16.mxu0 %v1217
    %1253 = vmatmul.mubr.bf16.gmra.mrb[0].mxu0 %v1216
    %v1254 = vpop.f32.mrb[0].mxu0
    %v1255 = vadd.f32 0.0, %v1254
    %v1256 = vpop.f32.mrb[0].mxu0
    %v1257 = vpop.f32.mrb[0].mxu0
    %v1258 = vadd.f32 0.0, %v1257
    %v1259 = vpop.f32.mrb[0].mxu0
    %1260 = vmatprep.mubr.bf16.mxu0 %v1219
    %1261 = vmatmul.mubr.bf16.gmra.mrb[0].mxu0 %v1218
    %v1262 = vpop.f32.mrb[0].mxu0
    %v1263 = vadd.f32 0.0, %v1262
    %v1264 = vpop.f32.mrb[0].mxu0
    %v1265 = vpop.f32.mrb[0].mxu0
    %v1266 = vadd.f32 0.0, %v1265
    %v1267 = vpop.f32.mrb[0].mxu0
    %1268 = vdwg.mxu0
    %1269 = vmatprep.subr.bf16.mxu0 0
    %1270 = vmatpush1.bf16.msra.mxu0 1065369472
    %1271 = vmatprep.subr.bf16.mxu0 0
    %1272 = vmatpush1.bf16.msra.mxu0 1065369472
    %1273 = vmatprep.subr.bf16.mxu0 0
    %1274 = vmatpush1.bf16.msra.mxu0 1065369472
    %1275 = vmatprep.subr.bf16.mxu0 0
    %1276 = vmatpush1.bf16.msra.mxu0 1065369472
    %1277 = vmatprep.subr.bf16.mxu0 0
    %1278 = vmatpush1.bf16.msra.mxu0 1065369472
    %1279 = vmatprep.subr.bf16.mxu0 0
    %1280 = vmatpush1.bf16.msra.mxu0 1065369472
    %1281 = vmatprep.subr.bf16.mxu0 0
    %1282 = vmatpush1.bf16.msra.mxu0 1065369472
    %1283 = vmatprep.subr.bf16.mxu0 0
    %1284 = vmatpush1.bf16.msra.mxu0 1065369472
    %1285 = vmatprep.subr.bf16.mxu0 0
    %1286 = vmatpush1.bf16.msra.mxu0 1065369472
    %1287 = vmatprep.subr.bf16.mxu0 0
    %1288 = vmatpush1.bf16.msra.mxu0 1065369472
    %1289 = vmatprep.subr.bf16.mxu0 0
    %1290 = vmatpush1.bf16.msra.mxu0 1065369472
    %1291 = vmatprep.subr.bf16.mxu0 0
    %1292 = vmatpush1.bf16.msra.mxu0 1065369472
    %1293 = vmatprep.subr.bf16.mxu0 0
    %1294 = vmatpush1.bf16.msra.mxu0 1065369472
    %1295 = vmatprep.subr.bf16.mxu0 0
    %1296 = vmatpush1.bf16.msra.mxu0 1065369472
    %1297 = vmatprep.subr.bf16.mxu0 0
    %1298 = vmatpush1.bf16.msra.mxu0 1065369472
    %1299 = vmatprep.subr.bf16.mxu0 0
    %1300 = vmatpush1.bf16.msra.mxu0 1065369472
    %1301 = vmatprep.mubr.bf16.mxu0 %v1197
    %1302 = vmatmul.mubr.bf16.gmra.mrb[0].mxu0 %v1196
    %v1303 = vpop.f32.mrb[0].mxu0
    %v1304 = vadd.f32 %v1255, %v1303
    %v1305 = vpop.f32.mrb[0].mxu0
    %v1306 = vpop.f32.mrb[0].mxu0
    %v1307 = vadd.f32 %v1258, %v1306
    %v1308 = vpop.f32.mrb[0].mxu0
    %1309 = vmatprep.mubr.bf16.mxu0 %v1199
    %1310 = vmatmul.mubr.bf16.gmra.mrb[0].mxu0 %v1198
    %v1311 = vpop.f32.mrb[0].mxu0
    %v1312 = vadd.f32 %v1263, %v1311
    %v1313 = vpop.f32.mrb[0].mxu0
    %v1314 = vpop.f32.mrb[0].mxu0
    %v1315 = vadd.f32 %v1266, %v1314
    %v1316 = vpop.f32.mrb[0].mxu0
    %1317 = vdwg.mxu0
    %v1318 = vmul.f32 %v1304, 0.00390625
    %v1319 = vmul.f32 %v1307, 0.00390625
    %v1320 = vmul.f32 %v1312, 0.00390625
    %v1321 = vmul.f32 %v1315, 0.00390625
    %v1322 = vmul.f32 %v1169, %v1169
    %v1323 = vmul.f32 %v1171, %v1171
    %v1324 = vmul.f32 %v1175, %v1175
    %v1325 = vmul.f32 %v1177, %v1177
    %v1326 = vmul.f32 %v1181, %v1181
    %v1327 = vmul.f32 %v1183, %v1183
    %v1328 = vmul.f32 %v1187, %v1187
    %v1329 = vmul.f32 %v1189, %v1189
    %v1330 = vpack.c.bf16 %v1324, %v1322
    %v1331 = vpack.c.bf16 %v1325, %v1323
    %v1332 = vpack.c.bf16 %v1328, %v1326
    %v1333 = vpack.c.bf16 %v1329, %v1327
    %v1334 = vunpack.c.l.bf16 %v1330
    %v1335 = vunpack.c.l.bf16 %v1331
    %v1336 = vunpack.c.h.bf16 %v1330
    %v1337 = vunpack.c.h.bf16 %v1331
    %v1338 = vunpack.c.l.bf16 %v1332
    %v1339 = vunpack.c.l.bf16 %v1333
    %v1340 = vunpack.c.h.bf16 %v1332
    %v1341 = vunpack.c.h.bf16 %v1333
    %v1342 = vsub.f32 %v1322, %v1334
    %v1343 = vsub.f32 %v1323, %v1335
    %v1344 = vsub.f32 %v1324, %v1336
    %v1345 = vsub.f32 %v1325, %v1337
    %v1346 = vsub.f32 %v1326, %v1338
    %v1347 = vsub.f32 %v1327, %v1339
    %v1348 = vsub.f32 %v1328, %v1340
    %v1349 = vsub.f32 %v1329, %v1341
    %v1350 = vpack.c.bf16 %v1344, %v1342
    %v1351 = vpack.c.bf16 %v1345, %v1343
    %v1352 = vpack.c.bf16 %v1348, %v1346
    %v1353 = vpack.c.bf16 %v1349, %v1347
    %1354 = vmatprep.subr.bf16.mxu0 0
    %1355 = vmatpush1.bf16.msra.mxu0 1065369472
    %1356 = vmatprep.subr.bf16.mxu0 0
    %1357 = vmatpush1.bf16.msra.mxu0 1065369472
    %1358 = vmatprep.subr.bf16.mxu0 0
    %1359 = vmatpush1.bf16.msra.mxu0 1065369472
    %1360 = vmatprep.subr.bf16.mxu0 0
    %1361 = vmatpush1.bf16.msra.mxu0 1065369472
    %1362 = vmatprep.subr.bf16.mxu0 0
    %1363 = vmatpush1.bf16.msra.mxu0 1065369472
    %1364 = vmatprep.subr.bf16.mxu0 0
    %1365 = vmatpush1.bf16.msra.mxu0 1065369472
    %1366 = vmatprep.subr.bf16.mxu0 0
    %1367 = vmatpush1.bf16.msra.mxu0 1065369472
    %1368 = vmatprep.subr.bf16.mxu0 0
    %1369 = vmatpush1.bf16.msra.mxu0 1065369472
    %1370 = vmatprep.subr.bf16.mxu0 0
    %1371 = vmatpush1.bf16.msra.mxu0 1065369472
    %1372 = vmatprep.subr.bf16.mxu0 0
    %1373 = vmatpush1.bf16.msra.mxu0 1065369472
    %1374 = vmatprep.subr.bf16.mxu0 0
    %1375 = vmatpush1.bf16.msra.mxu0 1065369472
    %1376 = vmatprep.subr.bf16.mxu0 0
    %1377 = vmatpush1.bf16.msra.mxu0 1065369472
    %1378 = vmatprep.subr.bf16.mxu0 0
    %1379 = vmatpush1.bf16.msra.mxu0 1065369472
    %1380 = vmatprep.subr.bf16.mxu0 0
    %1381 = vmatpush1.bf16.msra.mxu0 1065369472
    %1382 = vmatprep.subr.bf16.mxu0 0
    %1383 = vmatpush1.bf16.msra.mxu0 1065369472
    %1384 = vmatprep.subr.bf16.mxu0 0
    %1385 = vmatpush1.bf16.msra.mxu0 1065369472
    %1386 = vmatprep.mubr.bf16.mxu0 %v1351
    %1387 = vmatmul.mubr.bf16.gmra.mrb[0].mxu0 %v1350
    %v1388 = vpop.f32.mrb[0].mxu0
    %v1389 = vadd.f32 0.0, %v1388
    %v1390 = vpop.f32.mrb[0].mxu0
    %v1391 = vpop.f32.mrb[0].mxu0
    %v1392 = vadd.f32 0.0, %v1391
    %v1393 = vpop.f32.mrb[0].mxu0
    %1394 = vmatprep.mubr.bf16.mxu0 %v1353
    %1395 = vmatmul.mubr.bf16.gmra.mrb[0].mxu0 %v1352
    %v1396 = vpop.f32.mrb[0].mxu0
    %v1397 = vadd.f32 0.0, %v1396
    %v1398 = vpop.f32.mrb[0].mxu0
    %v1399 = vpop.f32.mrb[0].mxu0
    %v1400 = vadd.f32 0.0, %v1399
    %v1401 = vpop.f32.mrb[0].mxu0
    %1402 = vdwg.mxu0
    %1403 = vmatprep.subr.bf16.mxu0 0
    %1404 = vmatpush1.bf16.msra.mxu0 1065369472
    %1405 = vmatprep.subr.bf16.mxu0 0
    %1406 = vmatpush1.bf16.msra.mxu0 1065369472
    %1407 = vmatprep.subr.bf16.mxu0 0
    %1408 = vmatpush1.bf16.msra.mxu0 1065369472
    %1409 = vmatprep.subr.bf16.mxu0 0
    %1410 = vmatpush1.bf16.msra.mxu0 1065369472
    %1411 = vmatprep.subr.bf16.mxu0 0
    %1412 = vmatpush1.bf16.msra.mxu0 1065369472
    %1413 = vmatprep.subr.bf16.mxu0 0
    %1414 = vmatpush1.bf16.msra.mxu0 1065369472
    %1415 = vmatprep.subr.bf16.mxu0 0
    %1416 = vmatpush1.bf16.msra.mxu0 1065369472
    %1417 = vmatprep.subr.bf16.mxu0 0
    %1418 = vmatpush1.bf16.msra.mxu0 1065369472
    %1419 = vmatprep.subr.bf16.mxu0 0
    %1420 = vmatpush1.bf16.msra.mxu0 1065369472
    %1421 = vmatprep.subr.bf16.mxu0 0
    %1422 = vmatpush1.bf16.msra.mxu0 1065369472
    %1423 = vmatprep.subr.bf16.mxu0 0
    %1424 = vmatpush1.bf16.msra.mxu0 1065369472
    %1425 = vmatprep.subr.bf16.mxu0 0
    %1426 = vmatpush1.bf16.msra.mxu0 1065369472
    %1427 = vmatprep.subr.bf16.mxu0 0
    %1428 = vmatpush1.bf16.msra.mxu0 1065369472
    %1429 = vmatprep.subr.bf16.mxu0 0
    %1430 = vmatpush1.bf16.msra.mxu0 1065369472
    %1431 = vmatprep.subr.bf16.mxu0 0
    %1432 = vmatpush1.bf16.msra.mxu0 1065369472
    %1433 = vmatprep.subr.bf16.mxu0 0
    %1434 = vmatpush1.bf16.msra.mxu0 1065369472
    %1435 = vmatprep.mubr.bf16.mxu0 %v1331
    %1436 = vmatmul.mubr.bf16.gmra.mrb[0].mxu0 %v1330
    %v1437 = vpop.f32.mrb[0].mxu0
    %v1438 = vadd.f32 %v1389, %v1437
    %v1439 = vpop.f32.mrb[0].mxu0
    %v1440 = vpop.f32.mrb[0].mxu0
    %v1441 = vadd.f32 %v1392, %v1440
    %v1442 = vpop.f32.mrb[0].mxu0
    %1443 = vmatprep.mubr.bf16.mxu0 %v1333
    %1444 = vmatmul.mubr.bf16.gmra.mrb[0].mxu0 %v1332
    %v1445 = vpop.f32.mrb[0].mxu0
    %v1446 = vadd.f32 %v1397, %v1445
    %v1447 = vpop.f32.mrb[0].mxu0
    %v1448 = vpop.f32.mrb[0].mxu0
    %v1449 = vadd.f32 %v1400, %v1448
    %v1450 = vpop.f32.mrb[0].mxu0
    %1451 = vdwg.mxu0
    %v1452 = vmul.f32 %v1438, 0.00390625
    %v1453 = vmul.f32 %v1441, 0.00390625
    %v1454 = vmul.f32 %v1446, 0.00390625
    %v1455 = vmul.f32 %v1449, 0.00390625
    %v1456 = vmul.f32 %v1318, %v1318
    %v1457 = vmul.f32 %v1319, %v1319
    %v1458 = vmul.f32 %v1320, %v1320
    %v1459 = vmul.f32 %v1321, %v1321
    %v1460 = vsub.f32 %v1452, %v1456
    %v1461 = vsub.f32 %v1453, %v1457
    %v1462 = vsub.f32 %v1454, %v1458
    %v1463 = vsub.f32 %v1455, %v1459
    %v1464 = vmax.f32 %v1460, 0.0
    %v1465 = vmax.f32 %v1461, 0.0
    %v1466 = vmax.f32 %v1462, 0.0
    %v1467 = vmax.f32 %v1463, 0.0
    %s1468 = scalar_lea.vmem %s3, 64
    %v1469 = vld [vmem:[%s1468] sm:$0xff]
    %v1470 = vld [vmem:[%s1468 + $0x8] sm:$0xff]
    %v1471 = vld [vmem:[%s1468 + $0x10] sm:$0xff]
    %v1472 = vld [vmem:[%s1468 + $0x18] sm:$0xff]
    %v1473 = vadd.f32 %v1464, 1e-05
    %v1474 = vadd.f32 %v1465, 1e-05
    %v1475 = vadd.f32 %v1466, 1e-05
    %v1476 = vadd.f32 %v1467, 1e-05
    %v1477 = vrsqrt.pop %v1473
    %v1478 = vrsqrt.pop %v1474
    %v1479 = vrsqrt.pop %v1475
    %v1480 = vrsqrt.pop %v1476
    %v1481 = vmul.f32 %v1469, %v1477
    %v1482 = vmul.f32 %v1470, %v1478
    %v1483 = vmul.f32 %v1471, %v1479
    %v1484 = vmul.f32 %v1472, %v1480
    %s1485 = scalar_lea.vmem %s4, 64
    %v1486 = vld [vmem:[%s1485] sm:$0xff]
    %v1487 = vld [vmem:[%s1485 + $0x8] sm:$0xff]
    %v1488 = vld [vmem:[%s1485 + $0x10] sm:$0xff]
    %v1489 = vld [vmem:[%s1485 + $0x18] sm:$0xff]
    %v1490 = vmul.f32 %v1318, %v1481
    %v1491 = vmul.f32 %v1319, %v1482
    %v1492 = vmul.f32 %v1320, %v1483
    %v1493 = vmul.f32 %v1321, %v1484
    %v1494 = vsub.f32 %v1486, %v1490
    %v1495 = vsub.f32 %v1487, %v1491
    %v1496 = vsub.f32 %v1488, %v1492
    %v1497 = vsub.f32 %v1489, %v1493
    %1499 = vset.pattern.permute.xlu0 0
    %1500 = vperm.xlu0 %1499, %v1481
    %v1501 = vpop.permute.xlu0 %1500
    %1504 = vset.pattern.permute.xlu0 0
    %1505 = vperm.xlu0 %1504, %v1482
    %v1506 = vpop.permute.xlu0 %1505
    %1509 = vset.pattern.permute.xlu0 0
    %1510 = vperm.xlu0 %1509, %v1483
    %v1511 = vpop.permute.xlu0 %1510
    %1514 = vset.pattern.permute.xlu0 0
    %1515 = vperm.xlu0 %1514, %v1484
    %v1516 = vpop.permute.xlu0 %1515
    %v1518 = vmul.f32 %v1169, %v1501
    %v1519 = vmul.f32 %v1171, %v1501
    %v1520 = vmul.f32 %v1175, %v1506
    %v1521 = vmul.f32 %v1177, %v1506
    %v1522 = vmul.f32 %v1181, %v1511
    %v1523 = vmul.f32 %v1183, %v1511
    %v1524 = vmul.f32 %v1187, %v1516
    %v1525 = vmul.f32 %v1189, %v1516
    %1527 = vset.pattern.permute.xlu0 0
    %1528 = vperm.xlu0 %1527, %v1494
    %v1529 = vpop.permute.xlu0 %1528
    %1532 = vset.pattern.permute.xlu0 0
    %1533 = vperm.xlu0 %1532, %v1495
    %v1534 = vpop.permute.xlu0 %1533
    %1537 = vset.pattern.permute.xlu0 0
    %1538 = vperm.xlu0 %1537, %v1496
    %v1539 = vpop.permute.xlu0 %1538
    %1542 = vset.pattern.permute.xlu0 0
    %1543 = vperm.xlu0 %1542, %v1497
    %v1544 = vpop.permute.xlu0 %1543
    %v1546 = vadd.f32 %v1518, %v1529
    %v1547 = vadd.f32 %v1519, %v1529
    %v1548 = vadd.f32 %v1520, %v1534
    %v1549 = vadd.f32 %v1521, %v1534
    %v1550 = vadd.f32 %v1522, %v1539
    %v1551 = vadd.f32 %v1523, %v1539
    %v1552 = vadd.f32 %v1524, %v1544
    %v1553 = vadd.f32 %v1525, %v1544
    %v1554 = vmax.f32 %v1546, 0.0
    %v1555 = vmax.f32 %v1547, 0.0
    %v1556 = vmax.f32 %v1548, 0.0
    %v1557 = vmax.f32 %v1549, 0.0
    %v1558 = vmax.f32 %v1550, 0.0
    %v1559 = vmax.f32 %v1551, 0.0
    %v1560 = vmax.f32 %v1552, 0.0
    %v1561 = vmax.f32 %v1553, 0.0
    %1562 = vrot.lane.b32.xlu0 %v1554, 127
    %v1563 = vpop.permute.xlu0 %1562
    %1564 = vrot.lane.b32.xlu0 %v1555, 127
    %v1565 = vpop.permute.xlu0 %1564
    %v1566 = vsel %vm591, %v1563, %v1565
    %v1567 = vsel %vm591, %v1565, %v1563
    %v1568 = vsel %vm596, %v1566, 0.0
    %v1569 = vsel %vm597, %v1567, 0.0
    %1570 = vrot.lane.b32.xlu0 %v1554, 1
    %v1571 = vpop.permute.xlu0 %1570
    %1572 = vrot.lane.b32.xlu0 %v1555, 1
    %v1573 = vpop.permute.xlu0 %1572
    %v1574 = vsel %vm604, %v1571, %v1573
    %v1575 = vsel %vm604, %v1573, %v1571
    %v1576 = vsel %vm609, %v1575, 0.0
    %v1577 = vsel %vm610, %v1574, 0.0
    %v1578 = vsel %vm614, %v1568, %v1576
    %v1579 = vsel %vm614, %v1569, %v1577
    %v1581 = vsel %vm617, %v1192, 0
    %v1584 = vsel %vm617, %v1193, 0
    %v1587 = vsel %vm617, %v1194, 0
    %v1590 = vsel %vm617, %v1195, 0
    %1592 = vmatprep.subr.mxu0 %v1579
    %1593 = vmatpush1.msra.mxu0 %v1578
    %1594 = vmatprep.subr.mxu0 %v1557
    %1595 = vmatpush1.msra.mxu0 %v1556
    %1596 = vmatprep.subr.mxu0 %v1559
    %1597 = vmatpush1.msra.mxu0 %v1558
    %1598 = vmatprep.subr.mxu0 %v1561
    %1599 = vmatpush1.msra.mxu0 %v1560
    %1600 = vmatprep.subr.mxu0 0.0
    %1601 = vmatpush1.msra.mxu0 0.0
    %1602 = vmatprep.subr.mxu0 0.0
    %1603 = vmatpush1.msra.mxu0 0.0
    %1604 = vmatprep.subr.mxu0 0.0
    %1605 = vmatpush1.msra.mxu0 0.0
    %1606 = vmatprep.subr.mxu0 0.0
    %1607 = vmatpush1.msra.mxu0 0.0
    %1608 = vmatprep.subr.mxu0 0.0
    %1609 = vmatpush1.msra.mxu0 0.0
    %1610 = vmatprep.subr.mxu0 0.0
    %1611 = vmatpush1.msra.mxu0 0.0
    %1612 = vmatprep.subr.mxu0 0.0
    %1613 = vmatpush1.msra.mxu0 0.0
    %1614 = vmatprep.subr.mxu0 0.0
    %1615 = vmatpush1.msra.mxu0 0.0
    %1616 = vmatprep.subr.mxu0 0.0
    %1617 = vmatpush1.msra.mxu0 0.0
    %1618 = vmatprep.subr.mxu0 0.0
    %1619 = vmatpush1.msra.mxu0 0.0
    %1620 = vmatprep.subr.mxu0 0.0
    %1621 = vmatpush1.msra.mxu0 0.0
    %1622 = vmatprep.subr.mxu0 0.0
    %1623 = vmatpush1.msra.mxu0 0.0
    %1624 = vmatprep.subr.mxu0 0.0
    %1625 = vmatpush1.msra.mxu0 0.0
    %1626 = vmatprep.subr.mxu0 0.0
    %1627 = vmatpush1.msra.mxu0 0.0
    %1628 = vmatprep.subr.mxu0 0.0
    %1629 = vmatpush1.msra.mxu0 0.0
    %1630 = vmatprep.subr.mxu0 0.0
    %1631 = vmatpush1.msra.mxu0 0.0
    %1632 = vmatprep.subr.mxu0 0.0
    %1633 = vmatpush1.msra.mxu0 0.0
    %1634 = vmatprep.subr.mxu0 0.0
    %1635 = vmatpush1.msra.mxu0 0.0
    %1636 = vmatprep.subr.mxu0 0.0
    %1637 = vmatpush1.msra.mxu0 0.0
    %1638 = vmatprep.subr.mxu0 0.0
    %1639 = vmatpush1.msra.mxu0 0.0
    %1640 = vmatprep.subr.mxu0 0.0
    %1641 = vmatpush1.msra.mxu0 0.0
    %1642 = vmatprep.subr.mxu0 0.0
    %1643 = vmatpush1.msra.mxu0 0.0
    %1644 = vmatprep.subr.mxu0 0.0
    %1645 = vmatpush1.msra.mxu0 0.0
    %1646 = vmatprep.subr.mxu0 0.0
    %1647 = vmatpush1.msra.mxu0 0.0
    %1648 = vmatprep.subr.mxu0 0.0
    %1649 = vmatpush1.msra.mxu0 0.0
    %1650 = vmatprep.subr.mxu0 0.0
    %1651 = vmatpush1.msra.mxu0 0.0
    %1652 = vmatprep.subr.mxu0 0.0
    %1653 = vmatpush1.msra.mxu0 0.0
    %1654 = vmatprep.subr.mxu0 0.0
    %1655 = vmatpush1.msra.mxu0 0.0
    %1656 = vmatprep.mubr.f32.mxu0 0.0
    %1657 = vmatmul.mubr.f32.gmra.mrb[0].mxu0 %v1581
    %v1658 = vpop.f32.mrb[0].mxu0
    %v1659 = vadd.f32 0.0, %v1658
    %v1660 = vpop.f32.mrb[0].mxu0
    %v1661 = vadd.f32 0.0, %v1660
    %1662 = vmatprep.mubr.f32.mxu0 0.0
    %1663 = vmatmul.mubr.f32.gmra.mrb[0].mxu0 %v1584
    %v1664 = vpop.f32.mrb[0].mxu0
    %v1665 = vadd.f32 0.0, %v1664
    %v1666 = vpop.f32.mrb[0].mxu0
    %v1667 = vadd.f32 0.0, %v1666
    %1668 = vmatprep.mubr.f32.mxu0 0.0
    %1669 = vmatmul.mubr.f32.gmra.mrb[0].mxu0 %v1587
    %v1670 = vpop.f32.mrb[0].mxu0
    %v1671 = vadd.f32 0.0, %v1670
    %v1672 = vpop.f32.mrb[0].mxu0
    %v1673 = vadd.f32 0.0, %v1672
    %1674 = vmatprep.mubr.f32.mxu0 0.0
    %1675 = vmatmul.mubr.f32.gmra.mrb[0].mxu0 %v1590
    %v1676 = vpop.f32.mrb[0].mxu0
    %v1677 = vadd.f32 0.0, %v1676
    %v1678 = vpop.f32.mrb[0].mxu0
    %v1679 = vadd.f32 0.0, %v1678
    %1680 = vdwg.mxu0
    %v1681 = vpack.c.bf16 %v1665, %v1659
    %v1682 = vpack.c.bf16 %v1667, %v1661
    %v1683 = vpack.c.bf16 %v1677, %v1671
    %v1684 = vpack.c.bf16 %v1679, %v1673
    %v1685 = vunpack.c.l.bf16 %v1681
    %v1686 = vunpack.c.l.bf16 %v1682
    %v1687 = vunpack.c.h.bf16 %v1681
    %v1688 = vunpack.c.h.bf16 %v1682
    %v1689 = vunpack.c.l.bf16 %v1683
    %v1690 = vunpack.c.l.bf16 %v1684
    %v1691 = vunpack.c.h.bf16 %v1683
    %v1692 = vunpack.c.h.bf16 %v1684
    %v1693 = vsub.f32 %v1659, %v1685
    %v1694 = vsub.f32 %v1661, %v1686
    %v1695 = vsub.f32 %v1665, %v1687
    %v1696 = vsub.f32 %v1667, %v1688
    %v1697 = vsub.f32 %v1671, %v1689
    %v1698 = vsub.f32 %v1673, %v1690
    %v1699 = vsub.f32 %v1677, %v1691
    %v1700 = vsub.f32 %v1679, %v1692
    %v1701 = vpack.c.bf16 %v1695, %v1693
    %v1702 = vpack.c.bf16 %v1696, %v1694
    %v1703 = vpack.c.bf16 %v1699, %v1697
    %v1704 = vpack.c.bf16 %v1700, %v1698
    %1705 = vmatprep.subr.bf16.mxu0 0
    %1706 = vmatpush1.bf16.msra.mxu0 1065369472
    %1707 = vmatprep.subr.bf16.mxu0 0
    %1708 = vmatpush1.bf16.msra.mxu0 1065369472
    %1709 = vmatprep.subr.bf16.mxu0 0
    %1710 = vmatpush1.bf16.msra.mxu0 1065369472
    %1711 = vmatprep.subr.bf16.mxu0 0
    %1712 = vmatpush1.bf16.msra.mxu0 1065369472
    %1713 = vmatprep.subr.bf16.mxu0 0
    %1714 = vmatpush1.bf16.msra.mxu0 1065369472
    %1715 = vmatprep.subr.bf16.mxu0 0
    %1716 = vmatpush1.bf16.msra.mxu0 1065369472
    %1717 = vmatprep.subr.bf16.mxu0 0
    %1718 = vmatpush1.bf16.msra.mxu0 1065369472
    %1719 = vmatprep.subr.bf16.mxu0 0
    %1720 = vmatpush1.bf16.msra.mxu0 1065369472
    %1721 = vmatprep.subr.bf16.mxu0 0
    %1722 = vmatpush1.bf16.msra.mxu0 1065369472
    %1723 = vmatprep.subr.bf16.mxu0 0
    %1724 = vmatpush1.bf16.msra.mxu0 1065369472
    %1725 = vmatprep.subr.bf16.mxu0 0
    %1726 = vmatpush1.bf16.msra.mxu0 1065369472
    %1727 = vmatprep.subr.bf16.mxu0 0
    %1728 = vmatpush1.bf16.msra.mxu0 1065369472
    %1729 = vmatprep.subr.bf16.mxu0 0
    %1730 = vmatpush1.bf16.msra.mxu0 1065369472
    %1731 = vmatprep.subr.bf16.mxu0 0
    %1732 = vmatpush1.bf16.msra.mxu0 1065369472
    %1733 = vmatprep.subr.bf16.mxu0 0
    %1734 = vmatpush1.bf16.msra.mxu0 1065369472
    %1735 = vmatprep.subr.bf16.mxu0 0
    %1736 = vmatpush1.bf16.msra.mxu0 1065369472
    %1737 = vmatprep.mubr.bf16.mxu0 %v1702
    %1738 = vmatmul.mubr.bf16.gmra.mrb[0].mxu0 %v1701
    %v1739 = vpop.f32.mrb[0].mxu0
    %v1740 = vadd.f32 0.0, %v1739
    %v1741 = vpop.f32.mrb[0].mxu0
    %v1742 = vpop.f32.mrb[0].mxu0
    %v1743 = vadd.f32 0.0, %v1742
    %v1744 = vpop.f32.mrb[0].mxu0
    %1745 = vmatprep.mubr.bf16.mxu0 %v1704
    %1746 = vmatmul.mubr.bf16.gmra.mrb[0].mxu0 %v1703
    %v1747 = vpop.f32.mrb[0].mxu0
    %v1748 = vadd.f32 0.0, %v1747
    %v1749 = vpop.f32.mrb[0].mxu0
    %v1750 = vpop.f32.mrb[0].mxu0
    %v1751 = vadd.f32 0.0, %v1750
    %v1752 = vpop.f32.mrb[0].mxu0
    %1753 = vdwg.mxu0
    %1754 = vmatprep.subr.bf16.mxu0 0
    %1755 = vmatpush1.bf16.msra.mxu0 1065369472
    %1756 = vmatprep.subr.bf16.mxu0 0
    %1757 = vmatpush1.bf16.msra.mxu0 1065369472
    %1758 = vmatprep.subr.bf16.mxu0 0
    %1759 = vmatpush1.bf16.msra.mxu0 1065369472
    %1760 = vmatprep.subr.bf16.mxu0 0
    %1761 = vmatpush1.bf16.msra.mxu0 1065369472
    %1762 = vmatprep.subr.bf16.mxu0 0
    %1763 = vmatpush1.bf16.msra.mxu0 1065369472
    %1764 = vmatprep.subr.bf16.mxu0 0
    %1765 = vmatpush1.bf16.msra.mxu0 1065369472
    %1766 = vmatprep.subr.bf16.mxu0 0
    %1767 = vmatpush1.bf16.msra.mxu0 1065369472
    %1768 = vmatprep.subr.bf16.mxu0 0
    %1769 = vmatpush1.bf16.msra.mxu0 1065369472
    %1770 = vmatprep.subr.bf16.mxu0 0
    %1771 = vmatpush1.bf16.msra.mxu0 1065369472
    %1772 = vmatprep.subr.bf16.mxu0 0
    %1773 = vmatpush1.bf16.msra.mxu0 1065369472
    %1774 = vmatprep.subr.bf16.mxu0 0
    %1775 = vmatpush1.bf16.msra.mxu0 1065369472
    %1776 = vmatprep.subr.bf16.mxu0 0
    %1777 = vmatpush1.bf16.msra.mxu0 1065369472
    %1778 = vmatprep.subr.bf16.mxu0 0
    %1779 = vmatpush1.bf16.msra.mxu0 1065369472
    %1780 = vmatprep.subr.bf16.mxu0 0
    %1781 = vmatpush1.bf16.msra.mxu0 1065369472
    %1782 = vmatprep.subr.bf16.mxu0 0
    %1783 = vmatpush1.bf16.msra.mxu0 1065369472
    %1784 = vmatprep.subr.bf16.mxu0 0
    %1785 = vmatpush1.bf16.msra.mxu0 1065369472
    %1786 = vmatprep.mubr.bf16.mxu0 %v1682
    %1787 = vmatmul.mubr.bf16.gmra.mrb[0].mxu0 %v1681
    %v1788 = vpop.f32.mrb[0].mxu0
    %v1789 = vadd.f32 %v1740, %v1788
    %v1790 = vpop.f32.mrb[0].mxu0
    %v1791 = vpop.f32.mrb[0].mxu0
    %v1792 = vadd.f32 %v1743, %v1791
    %v1793 = vpop.f32.mrb[0].mxu0
    %1794 = vmatprep.mubr.bf16.mxu0 %v1684
    %1795 = vmatmul.mubr.bf16.gmra.mrb[0].mxu0 %v1683
    %v1796 = vpop.f32.mrb[0].mxu0
    %v1797 = vadd.f32 %v1748, %v1796
    %v1798 = vpop.f32.mrb[0].mxu0
    %v1799 = vpop.f32.mrb[0].mxu0
    %v1800 = vadd.f32 %v1751, %v1799
    %v1801 = vpop.f32.mrb[0].mxu0
    %1802 = vdwg.mxu0
    %v1803 = vmul.f32 %v1789, 0.00390625
    %v1804 = vmul.f32 %v1792, 0.00390625
    %v1805 = vmul.f32 %v1797, 0.00390625
    %v1806 = vmul.f32 %v1800, 0.00390625
    %v1807 = vmul.f32 %v1659, %v1659
    %v1808 = vmul.f32 %v1661, %v1661
    %v1809 = vmul.f32 %v1665, %v1665
    %v1810 = vmul.f32 %v1667, %v1667
    %v1811 = vmul.f32 %v1671, %v1671
    %v1812 = vmul.f32 %v1673, %v1673
    %v1813 = vmul.f32 %v1677, %v1677
    %v1814 = vmul.f32 %v1679, %v1679
    %v1815 = vpack.c.bf16 %v1809, %v1807
    %v1816 = vpack.c.bf16 %v1810, %v1808
    %v1817 = vpack.c.bf16 %v1813, %v1811
    %v1818 = vpack.c.bf16 %v1814, %v1812
    %v1819 = vunpack.c.l.bf16 %v1815
    %v1820 = vunpack.c.l.bf16 %v1816
    %v1821 = vunpack.c.h.bf16 %v1815
    %v1822 = vunpack.c.h.bf16 %v1816
    %v1823 = vunpack.c.l.bf16 %v1817
    %v1824 = vunpack.c.l.bf16 %v1818
    %v1825 = vunpack.c.h.bf16 %v1817
    %v1826 = vunpack.c.h.bf16 %v1818
    %v1827 = vsub.f32 %v1807, %v1819
    %v1828 = vsub.f32 %v1808, %v1820
    %v1829 = vsub.f32 %v1809, %v1821
    %v1830 = vsub.f32 %v1810, %v1822
    %v1831 = vsub.f32 %v1811, %v1823
    %v1832 = vsub.f32 %v1812, %v1824
    %v1833 = vsub.f32 %v1813, %v1825
    %v1834 = vsub.f32 %v1814, %v1826
    %v1835 = vpack.c.bf16 %v1829, %v1827
    %v1836 = vpack.c.bf16 %v1830, %v1828
    %v1837 = vpack.c.bf16 %v1833, %v1831
    %v1838 = vpack.c.bf16 %v1834, %v1832
    %1839 = vmatprep.subr.bf16.mxu0 0
    %1840 = vmatpush1.bf16.msra.mxu0 1065369472
    %1841 = vmatprep.subr.bf16.mxu0 0
    %1842 = vmatpush1.bf16.msra.mxu0 1065369472
    %1843 = vmatprep.subr.bf16.mxu0 0
    %1844 = vmatpush1.bf16.msra.mxu0 1065369472
    %1845 = vmatprep.subr.bf16.mxu0 0
    %1846 = vmatpush1.bf16.msra.mxu0 1065369472
    %1847 = vmatprep.subr.bf16.mxu0 0
    %1848 = vmatpush1.bf16.msra.mxu0 1065369472
    %1849 = vmatprep.subr.bf16.mxu0 0
    %1850 = vmatpush1.bf16.msra.mxu0 1065369472
    %1851 = vmatprep.subr.bf16.mxu0 0
    %1852 = vmatpush1.bf16.msra.mxu0 1065369472
    %1853 = vmatprep.subr.bf16.mxu0 0
    %1854 = vmatpush1.bf16.msra.mxu0 1065369472
    %1855 = vmatprep.subr.bf16.mxu0 0
    %1856 = vmatpush1.bf16.msra.mxu0 1065369472
    %1857 = vmatprep.subr.bf16.mxu0 0
    %1858 = vmatpush1.bf16.msra.mxu0 1065369472
    %1859 = vmatprep.subr.bf16.mxu0 0
    %1860 = vmatpush1.bf16.msra.mxu0 1065369472
    %1861 = vmatprep.subr.bf16.mxu0 0
    %1862 = vmatpush1.bf16.msra.mxu0 1065369472
    %1863 = vmatprep.subr.bf16.mxu0 0
    %1864 = vmatpush1.bf16.msra.mxu0 1065369472
    %1865 = vmatprep.subr.bf16.mxu0 0
    %1866 = vmatpush1.bf16.msra.mxu0 1065369472
    %1867 = vmatprep.subr.bf16.mxu0 0
    %1868 = vmatpush1.bf16.msra.mxu0 1065369472
    %1869 = vmatprep.subr.bf16.mxu0 0
    %1870 = vmatpush1.bf16.msra.mxu0 1065369472
    %1871 = vmatprep.mubr.bf16.mxu0 %v1836
    %1872 = vmatmul.mubr.bf16.gmra.mrb[0].mxu0 %v1835
    %v1873 = vpop.f32.mrb[0].mxu0
    %v1874 = vadd.f32 0.0, %v1873
    %v1875 = vpop.f32.mrb[0].mxu0
    %v1876 = vpop.f32.mrb[0].mxu0
    %v1877 = vadd.f32 0.0, %v1876
    %v1878 = vpop.f32.mrb[0].mxu0
    %1879 = vmatprep.mubr.bf16.mxu0 %v1838
    %1880 = vmatmul.mubr.bf16.gmra.mrb[0].mxu0 %v1837
    %v1881 = vpop.f32.mrb[0].mxu0
    %v1882 = vadd.f32 0.0, %v1881
    %v1883 = vpop.f32.mrb[0].mxu0
    %v1884 = vpop.f32.mrb[0].mxu0
    %v1885 = vadd.f32 0.0, %v1884
    %v1886 = vpop.f32.mrb[0].mxu0
    %1887 = vdwg.mxu0
    %1888 = vmatprep.subr.bf16.mxu0 0
    %1889 = vmatpush1.bf16.msra.mxu0 1065369472
    %1890 = vmatprep.subr.bf16.mxu0 0
    %1891 = vmatpush1.bf16.msra.mxu0 1065369472
    %1892 = vmatprep.subr.bf16.mxu0 0
    %1893 = vmatpush1.bf16.msra.mxu0 1065369472
    %1894 = vmatprep.subr.bf16.mxu0 0
    %1895 = vmatpush1.bf16.msra.mxu0 1065369472
    %1896 = vmatprep.subr.bf16.mxu0 0
    %1897 = vmatpush1.bf16.msra.mxu0 1065369472
    %1898 = vmatprep.subr.bf16.mxu0 0
    %1899 = vmatpush1.bf16.msra.mxu0 1065369472
    %1900 = vmatprep.subr.bf16.mxu0 0
    %1901 = vmatpush1.bf16.msra.mxu0 1065369472
    %1902 = vmatprep.subr.bf16.mxu0 0
    %1903 = vmatpush1.bf16.msra.mxu0 1065369472
    %1904 = vmatprep.subr.bf16.mxu0 0
    %1905 = vmatpush1.bf16.msra.mxu0 1065369472
    %1906 = vmatprep.subr.bf16.mxu0 0
    %1907 = vmatpush1.bf16.msra.mxu0 1065369472
    %1908 = vmatprep.subr.bf16.mxu0 0
    %1909 = vmatpush1.bf16.msra.mxu0 1065369472
    %1910 = vmatprep.subr.bf16.mxu0 0
    %1911 = vmatpush1.bf16.msra.mxu0 1065369472
    %1912 = vmatprep.subr.bf16.mxu0 0
    %1913 = vmatpush1.bf16.msra.mxu0 1065369472
    %1914 = vmatprep.subr.bf16.mxu0 0
    %1915 = vmatpush1.bf16.msra.mxu0 1065369472
    %1916 = vmatprep.subr.bf16.mxu0 0
    %1917 = vmatpush1.bf16.msra.mxu0 1065369472
    %1918 = vmatprep.subr.bf16.mxu0 0
    %1919 = vmatpush1.bf16.msra.mxu0 1065369472
    %1920 = vmatprep.mubr.bf16.mxu0 %v1816
    %1921 = vmatmul.mubr.bf16.gmra.mrb[0].mxu0 %v1815
    %v1922 = vpop.f32.mrb[0].mxu0
    %v1923 = vadd.f32 %v1874, %v1922
    %v1924 = vpop.f32.mrb[0].mxu0
    %v1925 = vpop.f32.mrb[0].mxu0
    %v1926 = vadd.f32 %v1877, %v1925
    %v1927 = vpop.f32.mrb[0].mxu0
    %1928 = vmatprep.mubr.bf16.mxu0 %v1818
    %1929 = vmatmul.mubr.bf16.gmra.mrb[0].mxu0 %v1817
    %v1930 = vpop.f32.mrb[0].mxu0
    %v1931 = vadd.f32 %v1882, %v1930
    %v1932 = vpop.f32.mrb[0].mxu0
    %v1933 = vpop.f32.mrb[0].mxu0
    %v1934 = vadd.f32 %v1885, %v1933
    %v1935 = vpop.f32.mrb[0].mxu0
    %1936 = vdwg.mxu0
    %v1937 = vmul.f32 %v1923, 0.00390625
    %v1938 = vmul.f32 %v1926, 0.00390625
    %v1939 = vmul.f32 %v1931, 0.00390625
    %v1940 = vmul.f32 %v1934, 0.00390625
    %v1941 = vmul.f32 %v1803, %v1803
    %v1942 = vmul.f32 %v1804, %v1804
    %v1943 = vmul.f32 %v1805, %v1805
    %v1944 = vmul.f32 %v1806, %v1806
    %v1945 = vsub.f32 %v1937, %v1941
    %v1946 = vsub.f32 %v1938, %v1942
    %v1947 = vsub.f32 %v1939, %v1943
    %v1948 = vsub.f32 %v1940, %v1944
    %v1949 = vmax.f32 %v1945, 0.0
    %v1950 = vmax.f32 %v1946, 0.0
    %v1951 = vmax.f32 %v1947, 0.0
    %v1952 = vmax.f32 %v1948, 0.0
    %s1953 = scalar_lea.vmem %s3, 96
    %v1954 = vld [vmem:[%s1953] sm:$0xff]
    %v1955 = vld [vmem:[%s1953 + $0x8] sm:$0xff]
    %v1956 = vld [vmem:[%s1953 + $0x10] sm:$0xff]
    %v1957 = vld [vmem:[%s1953 + $0x18] sm:$0xff]
    %v1958 = vadd.f32 %v1949, 1e-05
    %v1959 = vadd.f32 %v1950, 1e-05
    %v1960 = vadd.f32 %v1951, 1e-05
    %v1961 = vadd.f32 %v1952, 1e-05
    %v1962 = vrsqrt.pop %v1958
    %v1963 = vrsqrt.pop %v1959
    %v1964 = vrsqrt.pop %v1960
    %v1965 = vrsqrt.pop %v1961
    %v1966 = vmul.f32 %v1954, %v1962
    %v1967 = vmul.f32 %v1955, %v1963
    %v1968 = vmul.f32 %v1956, %v1964
    %v1969 = vmul.f32 %v1957, %v1965
    %s1970 = scalar_lea.vmem %s4, 96
    %v1971 = vld [vmem:[%s1970] sm:$0xff]
    %v1972 = vld [vmem:[%s1970 + $0x8] sm:$0xff]
    %v1973 = vld [vmem:[%s1970 + $0x10] sm:$0xff]
    %v1974 = vld [vmem:[%s1970 + $0x18] sm:$0xff]
    %v1975 = vmul.f32 %v1803, %v1966
    %v1976 = vmul.f32 %v1804, %v1967
    %v1977 = vmul.f32 %v1805, %v1968
    %v1978 = vmul.f32 %v1806, %v1969
    %v1979 = vsub.f32 %v1971, %v1975
    %v1980 = vsub.f32 %v1972, %v1976
    %v1981 = vsub.f32 %v1973, %v1977
    %v1982 = vsub.f32 %v1974, %v1978
    %1984 = vset.pattern.permute.xlu0 0
    %1985 = vperm.xlu0 %1984, %v1966
    %v1986 = vpop.permute.xlu0 %1985
    %1989 = vset.pattern.permute.xlu0 0
    %1990 = vperm.xlu0 %1989, %v1967
    %v1991 = vpop.permute.xlu0 %1990
    %1994 = vset.pattern.permute.xlu0 0
    %1995 = vperm.xlu0 %1994, %v1968
    %v1996 = vpop.permute.xlu0 %1995
    %1999 = vset.pattern.permute.xlu0 0
    %2000 = vperm.xlu0 %1999, %v1969
    %v2001 = vpop.permute.xlu0 %2000
    %v2003 = vmul.f32 %v1659, %v1986
    %v2004 = vmul.f32 %v1661, %v1986
    %v2005 = vmul.f32 %v1665, %v1991
    %v2006 = vmul.f32 %v1667, %v1991
    %v2007 = vmul.f32 %v1671, %v1996
    %v2008 = vmul.f32 %v1673, %v1996
    %v2009 = vmul.f32 %v1677, %v2001
    %v2010 = vmul.f32 %v1679, %v2001
    %2012 = vset.pattern.permute.xlu0 0
    %2013 = vperm.xlu0 %2012, %v1979
    %v2014 = vpop.permute.xlu0 %2013
    %2017 = vset.pattern.permute.xlu0 0
    %2018 = vperm.xlu0 %2017, %v1980
    %v2019 = vpop.permute.xlu0 %2018
    %2022 = vset.pattern.permute.xlu0 0
    %2023 = vperm.xlu0 %2022, %v1981
    %v2024 = vpop.permute.xlu0 %2023
    %2027 = vset.pattern.permute.xlu0 0
    %2028 = vperm.xlu0 %2027, %v1982
    %v2029 = vpop.permute.xlu0 %2028
    %v2031 = vadd.f32 %v2003, %v2014
    %v2032 = vadd.f32 %v2004, %v2014
    %v2033 = vadd.f32 %v2005, %v2019
    %v2034 = vadd.f32 %v2006, %v2019
    %v2035 = vadd.f32 %v2007, %v2024
    %v2036 = vadd.f32 %v2008, %v2024
    %v2037 = vadd.f32 %v2009, %v2029
    %v2038 = vadd.f32 %v2010, %v2029
    %v2039 = vmax.f32 %v2031, 0.0
    %v2040 = vmax.f32 %v2032, 0.0
    %v2041 = vmax.f32 %v2033, 0.0
    %v2042 = vmax.f32 %v2034, 0.0
    %v2043 = vmax.f32 %v2035, 0.0
    %v2044 = vmax.f32 %v2036, 0.0
    %v2045 = vmax.f32 %v2037, 0.0
    %v2046 = vmax.f32 %v2038, 0.0
    %s2047 = scalar_lea.vmem %s2, 96
    %v2048 = vld [vmem:[%s2047] sm:$0xff]
    %v2049 = vld [vmem:[%s2047 + $0x8] sm:$0xff]
    %v2050 = vld [vmem:[%s2047 + $0x10] sm:$0xff]
    %v2051 = vld [vmem:[%s2047 + $0x18] sm:$0xff]
    %v2053 = vsel %vm617, %v2048, 0
    %v2056 = vsel %vm617, %v2049, 0
    %v2059 = vsel %vm617, %v2050, 0
    %v2062 = vsel %vm617, %v2051, 0
    %2064 = vmatprep.subr.mxu0 %v2040
    %2065 = vmatpush1.msra.mxu0 %v2039
    %2066 = vmatprep.subr.mxu0 %v2042
    %2067 = vmatpush1.msra.mxu0 %v2041
    %2068 = vmatprep.subr.mxu0 %v2044
    %2069 = vmatpush1.msra.mxu0 %v2043
    %2070 = vmatprep.subr.mxu0 %v2046
    %2071 = vmatpush1.msra.mxu0 %v2045
    %2072 = vmatprep.subr.mxu0 0.0
    %2073 = vmatpush1.msra.mxu0 0.0
    %2074 = vmatprep.subr.mxu0 0.0
    %2075 = vmatpush1.msra.mxu0 0.0
    %2076 = vmatprep.subr.mxu0 0.0
    %2077 = vmatpush1.msra.mxu0 0.0
    %2078 = vmatprep.subr.mxu0 0.0
    %2079 = vmatpush1.msra.mxu0 0.0
    %2080 = vmatprep.subr.mxu0 0.0
    %2081 = vmatpush1.msra.mxu0 0.0
    %2082 = vmatprep.subr.mxu0 0.0
    %2083 = vmatpush1.msra.mxu0 0.0
    %2084 = vmatprep.subr.mxu0 0.0
    %2085 = vmatpush1.msra.mxu0 0.0
    %2086 = vmatprep.subr.mxu0 0.0
    %2087 = vmatpush1.msra.mxu0 0.0
    %2088 = vmatprep.subr.mxu0 0.0
    %2089 = vmatpush1.msra.mxu0 0.0
    %2090 = vmatprep.subr.mxu0 0.0
    %2091 = vmatpush1.msra.mxu0 0.0
    %2092 = vmatprep.subr.mxu0 0.0
    %2093 = vmatpush1.msra.mxu0 0.0
    %2094 = vmatprep.subr.mxu0 0.0
    %2095 = vmatpush1.msra.mxu0 0.0
    %2096 = vmatprep.subr.mxu0 0.0
    %2097 = vmatpush1.msra.mxu0 0.0
    %2098 = vmatprep.subr.mxu0 0.0
    %2099 = vmatpush1.msra.mxu0 0.0
    %2100 = vmatprep.subr.mxu0 0.0
    %2101 = vmatpush1.msra.mxu0 0.0
    %2102 = vmatprep.subr.mxu0 0.0
    %2103 = vmatpush1.msra.mxu0 0.0
    %2104 = vmatprep.subr.mxu0 0.0
    %2105 = vmatpush1.msra.mxu0 0.0
    %2106 = vmatprep.subr.mxu0 0.0
    %2107 = vmatpush1.msra.mxu0 0.0
    %2108 = vmatprep.subr.mxu0 0.0
    %2109 = vmatpush1.msra.mxu0 0.0
    %2110 = vmatprep.subr.mxu0 0.0
    %2111 = vmatpush1.msra.mxu0 0.0
    %2112 = vmatprep.subr.mxu0 0.0
    %2113 = vmatpush1.msra.mxu0 0.0
    %2114 = vmatprep.subr.mxu0 0.0
    %2115 = vmatpush1.msra.mxu0 0.0
    %2116 = vmatprep.subr.mxu0 0.0
    %2117 = vmatpush1.msra.mxu0 0.0
    %2118 = vmatprep.subr.mxu0 0.0
    %2119 = vmatpush1.msra.mxu0 0.0
    %2120 = vmatprep.subr.mxu0 0.0
    %2121 = vmatpush1.msra.mxu0 0.0
    %2122 = vmatprep.subr.mxu0 0.0
    %2123 = vmatpush1.msra.mxu0 0.0
    %2124 = vmatprep.subr.mxu0 0.0
    %2125 = vmatpush1.msra.mxu0 0.0
    %2126 = vmatprep.subr.mxu0 0.0
    %2127 = vmatpush1.msra.mxu0 0.0
    %2128 = vmatprep.mubr.f32.mxu0 0.0
    %2129 = vmatmul.mubr.f32.gmra.mrb[0].mxu0 %v2053
    %v2130 = vpop.f32.mrb[0].mxu0
    %v2131 = vadd.f32 0.0, %v2130
    %v2132 = vpop.f32.mrb[0].mxu0
    %v2133 = vadd.f32 0.0, %v2132
    %2134 = vmatprep.mubr.f32.mxu0 0.0
    %2135 = vmatmul.mubr.f32.gmra.mrb[0].mxu0 %v2056
    %v2136 = vpop.f32.mrb[0].mxu0
    %v2137 = vadd.f32 0.0, %v2136
    %v2138 = vpop.f32.mrb[0].mxu0
    %v2139 = vadd.f32 0.0, %v2138
    %2140 = vmatprep.mubr.f32.mxu0 0.0
    %2141 = vmatmul.mubr.f32.gmra.mrb[0].mxu0 %v2059
    %v2142 = vpop.f32.mrb[0].mxu0
    %v2143 = vadd.f32 0.0, %v2142
    %v2144 = vpop.f32.mrb[0].mxu0
    %v2145 = vadd.f32 0.0, %v2144
    %2146 = vmatprep.mubr.f32.mxu0 0.0
    %2147 = vmatmul.mubr.f32.gmra.mrb[0].mxu0 %v2062
    %v2148 = vpop.f32.mrb[0].mxu0
    %v2149 = vadd.f32 0.0, %v2148
    %v2150 = vpop.f32.mrb[0].mxu0
    %v2151 = vadd.f32 0.0, %v2150
    %2152 = vdwg.mxu0
    %s2153 = scalar_lea.vmem %s2, 128
    %v2154 = vld [vmem:[%s2153] sm:$0xff]
    %v2155 = vld [vmem:[%s2153 + $0x8] sm:$0xff]
    %v2156 = vld [vmem:[%s2153 + $0x10] sm:$0xff]
    %v2157 = vld [vmem:[%s2153 + $0x18] sm:$0xff]
    %v2158 = vpack.c.bf16 %v2137, %v2131
    %v2159 = vpack.c.bf16 %v2139, %v2133
    %v2160 = vpack.c.bf16 %v2149, %v2143
    %v2161 = vpack.c.bf16 %v2151, %v2145
    %v2162 = vunpack.c.l.bf16 %v2158
    %v2163 = vunpack.c.l.bf16 %v2159
    %v2164 = vunpack.c.h.bf16 %v2158
    %v2165 = vunpack.c.h.bf16 %v2159
    %v2166 = vunpack.c.l.bf16 %v2160
    %v2167 = vunpack.c.l.bf16 %v2161
    %v2168 = vunpack.c.h.bf16 %v2160
    %v2169 = vunpack.c.h.bf16 %v2161
    %v2170 = vsub.f32 %v2131, %v2162
    %v2171 = vsub.f32 %v2133, %v2163
    %v2172 = vsub.f32 %v2137, %v2164
    %v2173 = vsub.f32 %v2139, %v2165
    %v2174 = vsub.f32 %v2143, %v2166
    %v2175 = vsub.f32 %v2145, %v2167
    %v2176 = vsub.f32 %v2149, %v2168
    %v2177 = vsub.f32 %v2151, %v2169
    %v2178 = vpack.c.bf16 %v2172, %v2170
    %v2179 = vpack.c.bf16 %v2173, %v2171
    %v2180 = vpack.c.bf16 %v2176, %v2174
    %v2181 = vpack.c.bf16 %v2177, %v2175
    %2182 = vmatprep.subr.bf16.mxu0 0
    %2183 = vmatpush1.bf16.msra.mxu0 1065369472
    %2184 = vmatprep.subr.bf16.mxu0 0
    %2185 = vmatpush1.bf16.msra.mxu0 1065369472
    %2186 = vmatprep.subr.bf16.mxu0 0
    %2187 = vmatpush1.bf16.msra.mxu0 1065369472
    %2188 = vmatprep.subr.bf16.mxu0 0
    %2189 = vmatpush1.bf16.msra.mxu0 1065369472
    %2190 = vmatprep.subr.bf16.mxu0 0
    %2191 = vmatpush1.bf16.msra.mxu0 1065369472
    %2192 = vmatprep.subr.bf16.mxu0 0
    %2193 = vmatpush1.bf16.msra.mxu0 1065369472
    %2194 = vmatprep.subr.bf16.mxu0 0
    %2195 = vmatpush1.bf16.msra.mxu0 1065369472
    %2196 = vmatprep.subr.bf16.mxu0 0
    %2197 = vmatpush1.bf16.msra.mxu0 1065369472
    %2198 = vmatprep.subr.bf16.mxu0 0
    %2199 = vmatpush1.bf16.msra.mxu0 1065369472
    %2200 = vmatprep.subr.bf16.mxu0 0
    %2201 = vmatpush1.bf16.msra.mxu0 1065369472
    %2202 = vmatprep.subr.bf16.mxu0 0
    %2203 = vmatpush1.bf16.msra.mxu0 1065369472
    %2204 = vmatprep.subr.bf16.mxu0 0
    %2205 = vmatpush1.bf16.msra.mxu0 1065369472
    %2206 = vmatprep.subr.bf16.mxu0 0
    %2207 = vmatpush1.bf16.msra.mxu0 1065369472
    %2208 = vmatprep.subr.bf16.mxu0 0
    %2209 = vmatpush1.bf16.msra.mxu0 1065369472
    %2210 = vmatprep.subr.bf16.mxu0 0
    %2211 = vmatpush1.bf16.msra.mxu0 1065369472
    %2212 = vmatprep.subr.bf16.mxu0 0
    %2213 = vmatpush1.bf16.msra.mxu0 1065369472
    %2214 = vmatprep.mubr.bf16.mxu0 %v2179
    %2215 = vmatmul.mubr.bf16.gmra.mrb[0].mxu0 %v2178
    %v2216 = vpop.f32.mrb[0].mxu0
    %v2217 = vadd.f32 0.0, %v2216
    %v2218 = vpop.f32.mrb[0].mxu0
    %v2219 = vpop.f32.mrb[0].mxu0
    %v2220 = vadd.f32 0.0, %v2219
    %v2221 = vpop.f32.mrb[0].mxu0
    %2222 = vmatprep.mubr.bf16.mxu0 %v2181
    %2223 = vmatmul.mubr.bf16.gmra.mrb[0].mxu0 %v2180
    %v2224 = vpop.f32.mrb[0].mxu0
    %v2225 = vadd.f32 0.0, %v2224
    %v2226 = vpop.f32.mrb[0].mxu0
    %v2227 = vpop.f32.mrb[0].mxu0
    %v2228 = vadd.f32 0.0, %v2227
    %v2229 = vpop.f32.mrb[0].mxu0
    %2230 = vdwg.mxu0
    %2231 = vmatprep.subr.bf16.mxu0 0
    %2232 = vmatpush1.bf16.msra.mxu0 1065369472
    %2233 = vmatprep.subr.bf16.mxu0 0
    %2234 = vmatpush1.bf16.msra.mxu0 1065369472
    %2235 = vmatprep.subr.bf16.mxu0 0
    %2236 = vmatpush1.bf16.msra.mxu0 1065369472
    %2237 = vmatprep.subr.bf16.mxu0 0
    %2238 = vmatpush1.bf16.msra.mxu0 1065369472
    %2239 = vmatprep.subr.bf16.mxu0 0
    %2240 = vmatpush1.bf16.msra.mxu0 1065369472
    %2241 = vmatprep.subr.bf16.mxu0 0
    %2242 = vmatpush1.bf16.msra.mxu0 1065369472
    %2243 = vmatprep.subr.bf16.mxu0 0
    %2244 = vmatpush1.bf16.msra.mxu0 1065369472
    %2245 = vmatprep.subr.bf16.mxu0 0
    %2246 = vmatpush1.bf16.msra.mxu0 1065369472
    %2247 = vmatprep.subr.bf16.mxu0 0
    %2248 = vmatpush1.bf16.msra.mxu0 1065369472
    %2249 = vmatprep.subr.bf16.mxu0 0
    %2250 = vmatpush1.bf16.msra.mxu0 1065369472
    %2251 = vmatprep.subr.bf16.mxu0 0
    %2252 = vmatpush1.bf16.msra.mxu0 1065369472
    %2253 = vmatprep.subr.bf16.mxu0 0
    %2254 = vmatpush1.bf16.msra.mxu0 1065369472
    %2255 = vmatprep.subr.bf16.mxu0 0
    %2256 = vmatpush1.bf16.msra.mxu0 1065369472
    %2257 = vmatprep.subr.bf16.mxu0 0
    %2258 = vmatpush1.bf16.msra.mxu0 1065369472
    %2259 = vmatprep.subr.bf16.mxu0 0
    %2260 = vmatpush1.bf16.msra.mxu0 1065369472
    %2261 = vmatprep.subr.bf16.mxu0 0
    %2262 = vmatpush1.bf16.msra.mxu0 1065369472
    %2263 = vmatprep.mubr.bf16.mxu0 %v2159
    %2264 = vmatmul.mubr.bf16.gmra.mrb[0].mxu0 %v2158
    %v2265 = vpop.f32.mrb[0].mxu0
    %v2266 = vadd.f32 %v2217, %v2265
    %v2267 = vpop.f32.mrb[0].mxu0
    %v2268 = vpop.f32.mrb[0].mxu0
    %v2269 = vadd.f32 %v2220, %v2268
    %v2270 = vpop.f32.mrb[0].mxu0
    %2271 = vmatprep.mubr.bf16.mxu0 %v2161
    %2272 = vmatmul.mubr.bf16.gmra.mrb[0].mxu0 %v2160
    %v2273 = vpop.f32.mrb[0].mxu0
    %v2274 = vadd.f32 %v2225, %v2273
    %v2275 = vpop.f32.mrb[0].mxu0
    %v2276 = vpop.f32.mrb[0].mxu0
    %v2277 = vadd.f32 %v2228, %v2276
    %v2278 = vpop.f32.mrb[0].mxu0
    %2279 = vdwg.mxu0
    %v2280 = vmul.f32 %v2266, 0.00390625
    %v2281 = vmul.f32 %v2269, 0.00390625
    %v2282 = vmul.f32 %v2274, 0.00390625
    %v2283 = vmul.f32 %v2277, 0.00390625
    %v2284 = vmul.f32 %v2131, %v2131
    %v2285 = vmul.f32 %v2133, %v2133
    %v2286 = vmul.f32 %v2137, %v2137
    %v2287 = vmul.f32 %v2139, %v2139
    %v2288 = vmul.f32 %v2143, %v2143
    %v2289 = vmul.f32 %v2145, %v2145
    %v2290 = vmul.f32 %v2149, %v2149
    %v2291 = vmul.f32 %v2151, %v2151
    %v2292 = vpack.c.bf16 %v2286, %v2284
    %v2293 = vpack.c.bf16 %v2287, %v2285
    %v2294 = vpack.c.bf16 %v2290, %v2288
    %v2295 = vpack.c.bf16 %v2291, %v2289
    %v2296 = vunpack.c.l.bf16 %v2292
    %v2297 = vunpack.c.l.bf16 %v2293
    %v2298 = vunpack.c.h.bf16 %v2292
    %v2299 = vunpack.c.h.bf16 %v2293
    %v2300 = vunpack.c.l.bf16 %v2294
    %v2301 = vunpack.c.l.bf16 %v2295
    %v2302 = vunpack.c.h.bf16 %v2294
    %v2303 = vunpack.c.h.bf16 %v2295
    %v2304 = vsub.f32 %v2284, %v2296
    %v2305 = vsub.f32 %v2285, %v2297
    %v2306 = vsub.f32 %v2286, %v2298
    %v2307 = vsub.f32 %v2287, %v2299
    %v2308 = vsub.f32 %v2288, %v2300
    %v2309 = vsub.f32 %v2289, %v2301
    %v2310 = vsub.f32 %v2290, %v2302
    %v2311 = vsub.f32 %v2291, %v2303
    %v2312 = vpack.c.bf16 %v2306, %v2304
    %v2313 = vpack.c.bf16 %v2307, %v2305
    %v2314 = vpack.c.bf16 %v2310, %v2308
    %v2315 = vpack.c.bf16 %v2311, %v2309
    %2316 = vmatprep.subr.bf16.mxu0 0
    %2317 = vmatpush1.bf16.msra.mxu0 1065369472
    %2318 = vmatprep.subr.bf16.mxu0 0
    %2319 = vmatpush1.bf16.msra.mxu0 1065369472
    %2320 = vmatprep.subr.bf16.mxu0 0
    %2321 = vmatpush1.bf16.msra.mxu0 1065369472
    %2322 = vmatprep.subr.bf16.mxu0 0
    %2323 = vmatpush1.bf16.msra.mxu0 1065369472
    %2324 = vmatprep.subr.bf16.mxu0 0
    %2325 = vmatpush1.bf16.msra.mxu0 1065369472
    %2326 = vmatprep.subr.bf16.mxu0 0
    %2327 = vmatpush1.bf16.msra.mxu0 1065369472
    %2328 = vmatprep.subr.bf16.mxu0 0
    %2329 = vmatpush1.bf16.msra.mxu0 1065369472
    %2330 = vmatprep.subr.bf16.mxu0 0
    %2331 = vmatpush1.bf16.msra.mxu0 1065369472
    %2332 = vmatprep.subr.bf16.mxu0 0
    %2333 = vmatpush1.bf16.msra.mxu0 1065369472
    %2334 = vmatprep.subr.bf16.mxu0 0
    %2335 = vmatpush1.bf16.msra.mxu0 1065369472
    %2336 = vmatprep.subr.bf16.mxu0 0
    %2337 = vmatpush1.bf16.msra.mxu0 1065369472
    %2338 = vmatprep.subr.bf16.mxu0 0
    %2339 = vmatpush1.bf16.msra.mxu0 1065369472
    %2340 = vmatprep.subr.bf16.mxu0 0
    %2341 = vmatpush1.bf16.msra.mxu0 1065369472
    %2342 = vmatprep.subr.bf16.mxu0 0
    %2343 = vmatpush1.bf16.msra.mxu0 1065369472
    %2344 = vmatprep.subr.bf16.mxu0 0
    %2345 = vmatpush1.bf16.msra.mxu0 1065369472
    %2346 = vmatprep.subr.bf16.mxu0 0
    %2347 = vmatpush1.bf16.msra.mxu0 1065369472
    %2348 = vmatprep.mubr.bf16.mxu0 %v2313
    %2349 = vmatmul.mubr.bf16.gmra.mrb[0].mxu0 %v2312
    %v2350 = vpop.f32.mrb[0].mxu0
    %v2351 = vadd.f32 0.0, %v2350
    %v2352 = vpop.f32.mrb[0].mxu0
    %v2353 = vpop.f32.mrb[0].mxu0
    %v2354 = vadd.f32 0.0, %v2353
    %v2355 = vpop.f32.mrb[0].mxu0
    %2356 = vmatprep.mubr.bf16.mxu0 %v2315
    %2357 = vmatmul.mubr.bf16.gmra.mrb[0].mxu0 %v2314
    %v2358 = vpop.f32.mrb[0].mxu0
    %v2359 = vadd.f32 0.0, %v2358
    %v2360 = vpop.f32.mrb[0].mxu0
    %v2361 = vpop.f32.mrb[0].mxu0
    %v2362 = vadd.f32 0.0, %v2361
    %v2363 = vpop.f32.mrb[0].mxu0
    %2364 = vdwg.mxu0
    %2365 = vmatprep.subr.bf16.mxu0 0
    %2366 = vmatpush1.bf16.msra.mxu0 1065369472
    %2367 = vmatprep.subr.bf16.mxu0 0
    %2368 = vmatpush1.bf16.msra.mxu0 1065369472
    %2369 = vmatprep.subr.bf16.mxu0 0
    %2370 = vmatpush1.bf16.msra.mxu0 1065369472
    %2371 = vmatprep.subr.bf16.mxu0 0
    %2372 = vmatpush1.bf16.msra.mxu0 1065369472
    %2373 = vmatprep.subr.bf16.mxu0 0
    %2374 = vmatpush1.bf16.msra.mxu0 1065369472
    %2375 = vmatprep.subr.bf16.mxu0 0
    %2376 = vmatpush1.bf16.msra.mxu0 1065369472
    %2377 = vmatprep.subr.bf16.mxu0 0
    %2378 = vmatpush1.bf16.msra.mxu0 1065369472
    %2379 = vmatprep.subr.bf16.mxu0 0
    %2380 = vmatpush1.bf16.msra.mxu0 1065369472
    %2381 = vmatprep.subr.bf16.mxu0 0
    %2382 = vmatpush1.bf16.msra.mxu0 1065369472
    %2383 = vmatprep.subr.bf16.mxu0 0
    %2384 = vmatpush1.bf16.msra.mxu0 1065369472
    %2385 = vmatprep.subr.bf16.mxu0 0
    %2386 = vmatpush1.bf16.msra.mxu0 1065369472
    %2387 = vmatprep.subr.bf16.mxu0 0
    %2388 = vmatpush1.bf16.msra.mxu0 1065369472
    %2389 = vmatprep.subr.bf16.mxu0 0
    %2390 = vmatpush1.bf16.msra.mxu0 1065369472
    %2391 = vmatprep.subr.bf16.mxu0 0
    %2392 = vmatpush1.bf16.msra.mxu0 1065369472
    %2393 = vmatprep.subr.bf16.mxu0 0
    %2394 = vmatpush1.bf16.msra.mxu0 1065369472
    %2395 = vmatprep.subr.bf16.mxu0 0
    %2396 = vmatpush1.bf16.msra.mxu0 1065369472
    %2397 = vmatprep.mubr.bf16.mxu0 %v2293
    %2398 = vmatmul.mubr.bf16.gmra.mrb[0].mxu0 %v2292
    %v2399 = vpop.f32.mrb[0].mxu0
    %v2400 = vadd.f32 %v2351, %v2399
    %v2401 = vpop.f32.mrb[0].mxu0
    %v2402 = vpop.f32.mrb[0].mxu0
    %v2403 = vadd.f32 %v2354, %v2402
    %v2404 = vpop.f32.mrb[0].mxu0
    %2405 = vmatprep.mubr.bf16.mxu0 %v2295
    %2406 = vmatmul.mubr.bf16.gmra.mrb[0].mxu0 %v2294
    %v2407 = vpop.f32.mrb[0].mxu0
    %v2408 = vadd.f32 %v2359, %v2407
    %v2409 = vpop.f32.mrb[0].mxu0
    %v2410 = vpop.f32.mrb[0].mxu0
    %v2411 = vadd.f32 %v2362, %v2410
    %v2412 = vpop.f32.mrb[0].mxu0
    %2413 = vdwg.mxu0
    %v2414 = vmul.f32 %v2400, 0.00390625
    %v2415 = vmul.f32 %v2403, 0.00390625
    %v2416 = vmul.f32 %v2408, 0.00390625
    %v2417 = vmul.f32 %v2411, 0.00390625
    %v2418 = vmul.f32 %v2280, %v2280
    %v2419 = vmul.f32 %v2281, %v2281
    %v2420 = vmul.f32 %v2282, %v2282
    %v2421 = vmul.f32 %v2283, %v2283
    %v2422 = vsub.f32 %v2414, %v2418
    %v2423 = vsub.f32 %v2415, %v2419
    %v2424 = vsub.f32 %v2416, %v2420
    %v2425 = vsub.f32 %v2417, %v2421
    %v2426 = vmax.f32 %v2422, 0.0
    %v2427 = vmax.f32 %v2423, 0.0
    %v2428 = vmax.f32 %v2424, 0.0
    %v2429 = vmax.f32 %v2425, 0.0
    %s2430 = scalar_lea.vmem %s3, 128
    %v2431 = vld [vmem:[%s2430] sm:$0xff]
    %v2432 = vld [vmem:[%s2430 + $0x8] sm:$0xff]
    %v2433 = vld [vmem:[%s2430 + $0x10] sm:$0xff]
    %v2434 = vld [vmem:[%s2430 + $0x18] sm:$0xff]
    %v2435 = vadd.f32 %v2426, 1e-05
    %v2436 = vadd.f32 %v2427, 1e-05
    %v2437 = vadd.f32 %v2428, 1e-05
    %v2438 = vadd.f32 %v2429, 1e-05
    %v2439 = vrsqrt.pop %v2435
    %v2440 = vrsqrt.pop %v2436
    %v2441 = vrsqrt.pop %v2437
    %v2442 = vrsqrt.pop %v2438
    %v2443 = vmul.f32 %v2431, %v2439
    %v2444 = vmul.f32 %v2432, %v2440
    %v2445 = vmul.f32 %v2433, %v2441
    %v2446 = vmul.f32 %v2434, %v2442
    %s2447 = scalar_lea.vmem %s4, 128
    %v2448 = vld [vmem:[%s2447] sm:$0xff]
    %v2449 = vld [vmem:[%s2447 + $0x8] sm:$0xff]
    %v2450 = vld [vmem:[%s2447 + $0x10] sm:$0xff]
    %v2451 = vld [vmem:[%s2447 + $0x18] sm:$0xff]
    %v2452 = vmul.f32 %v2280, %v2443
    %v2453 = vmul.f32 %v2281, %v2444
    %v2454 = vmul.f32 %v2282, %v2445
    %v2455 = vmul.f32 %v2283, %v2446
    %v2456 = vsub.f32 %v2448, %v2452
    %v2457 = vsub.f32 %v2449, %v2453
    %v2458 = vsub.f32 %v2450, %v2454
    %v2459 = vsub.f32 %v2451, %v2455
    %2461 = vset.pattern.permute.xlu0 0
    %2462 = vperm.xlu0 %2461, %v2443
    %v2463 = vpop.permute.xlu0 %2462
    %2466 = vset.pattern.permute.xlu0 0
    %2467 = vperm.xlu0 %2466, %v2444
    %v2468 = vpop.permute.xlu0 %2467
    %2471 = vset.pattern.permute.xlu0 0
    %2472 = vperm.xlu0 %2471, %v2445
    %v2473 = vpop.permute.xlu0 %2472
    %2476 = vset.pattern.permute.xlu0 0
    %2477 = vperm.xlu0 %2476, %v2446
    %v2478 = vpop.permute.xlu0 %2477
    %v2480 = vmul.f32 %v2131, %v2463
    %v2481 = vmul.f32 %v2133, %v2463
    %v2482 = vmul.f32 %v2137, %v2468
    %v2483 = vmul.f32 %v2139, %v2468
    %v2484 = vmul.f32 %v2143, %v2473
    %v2485 = vmul.f32 %v2145, %v2473
    %v2486 = vmul.f32 %v2149, %v2478
    %v2487 = vmul.f32 %v2151, %v2478
    %2489 = vset.pattern.permute.xlu0 0
    %2490 = vperm.xlu0 %2489, %v2456
    %v2491 = vpop.permute.xlu0 %2490
    %2494 = vset.pattern.permute.xlu0 0
    %2495 = vperm.xlu0 %2494, %v2457
    %v2496 = vpop.permute.xlu0 %2495
    %2499 = vset.pattern.permute.xlu0 0
    %2500 = vperm.xlu0 %2499, %v2458
    %v2501 = vpop.permute.xlu0 %2500
    %2504 = vset.pattern.permute.xlu0 0
    %2505 = vperm.xlu0 %2504, %v2459
    %v2506 = vpop.permute.xlu0 %2505
    %v2508 = vadd.f32 %v2480, %v2491
    %v2509 = vadd.f32 %v2481, %v2491
    %v2510 = vadd.f32 %v2482, %v2496
    %v2511 = vadd.f32 %v2483, %v2496
    %v2512 = vadd.f32 %v2484, %v2501
    %v2513 = vadd.f32 %v2485, %v2501
    %v2514 = vadd.f32 %v2486, %v2506
    %v2515 = vadd.f32 %v2487, %v2506
    %v2516 = vmax.f32 %v2508, 0.0
    %v2517 = vmax.f32 %v2509, 0.0
    %v2518 = vmax.f32 %v2510, 0.0
    %v2519 = vmax.f32 %v2511, 0.0
    %v2520 = vmax.f32 %v2512, 0.0
    %v2521 = vmax.f32 %v2513, 0.0
    %v2522 = vmax.f32 %v2514, 0.0
    %v2523 = vmax.f32 %v2515, 0.0
    %2524 = vrot.lane.b32.xlu0 %v2516, 127
    %v2525 = vpop.permute.xlu0 %2524
    %2526 = vrot.lane.b32.xlu0 %v2517, 127
    %v2527 = vpop.permute.xlu0 %2526
    %v2528 = vsel %vm591, %v2525, %v2527
    %v2529 = vsel %vm591, %v2527, %v2525
    %v2530 = vsel %vm596, %v2528, 0.0
    %v2531 = vsel %vm597, %v2529, 0.0
    %2532 = vrot.lane.b32.xlu0 %v2516, 1
    %v2533 = vpop.permute.xlu0 %2532
    %2534 = vrot.lane.b32.xlu0 %v2517, 1
    %v2535 = vpop.permute.xlu0 %2534
    %v2536 = vsel %vm604, %v2533, %v2535
    %v2537 = vsel %vm604, %v2535, %v2533
    %v2538 = vsel %vm609, %v2537, 0.0
    %v2539 = vsel %vm610, %v2536, 0.0
    %v2540 = vsel %vm614, %v2530, %v2538
    %v2541 = vsel %vm614, %v2531, %v2539
    %v2543 = vsel %vm617, %v2154, 0
    %v2546 = vsel %vm617, %v2155, 0
    %v2549 = vsel %vm617, %v2156, 0
    %v2552 = vsel %vm617, %v2157, 0
    %2554 = vmatprep.subr.mxu0 %v2541
    %2555 = vmatpush1.msra.mxu0 %v2540
    %2556 = vmatprep.subr.mxu0 %v2519
    %2557 = vmatpush1.msra.mxu0 %v2518
    %2558 = vmatprep.subr.mxu0 %v2521
    %2559 = vmatpush1.msra.mxu0 %v2520
    %2560 = vmatprep.subr.mxu0 %v2523
    %2561 = vmatpush1.msra.mxu0 %v2522
    %2562 = vmatprep.subr.mxu0 0.0
    %2563 = vmatpush1.msra.mxu0 0.0
    %2564 = vmatprep.subr.mxu0 0.0
    %2565 = vmatpush1.msra.mxu0 0.0
    %2566 = vmatprep.subr.mxu0 0.0
    %2567 = vmatpush1.msra.mxu0 0.0
    %2568 = vmatprep.subr.mxu0 0.0
    %2569 = vmatpush1.msra.mxu0 0.0
    %2570 = vmatprep.subr.mxu0 0.0
    %2571 = vmatpush1.msra.mxu0 0.0
    %2572 = vmatprep.subr.mxu0 0.0
    %2573 = vmatpush1.msra.mxu0 0.0
    %2574 = vmatprep.subr.mxu0 0.0
    %2575 = vmatpush1.msra.mxu0 0.0
    %2576 = vmatprep.subr.mxu0 0.0
    %2577 = vmatpush1.msra.mxu0 0.0
    %2578 = vmatprep.subr.mxu0 0.0
    %2579 = vmatpush1.msra.mxu0 0.0
    %2580 = vmatprep.subr.mxu0 0.0
    %2581 = vmatpush1.msra.mxu0 0.0
    %2582 = vmatprep.subr.mxu0 0.0
    %2583 = vmatpush1.msra.mxu0 0.0
    %2584 = vmatprep.subr.mxu0 0.0
    %2585 = vmatpush1.msra.mxu0 0.0
    %2586 = vmatprep.subr.mxu0 0.0
    %2587 = vmatpush1.msra.mxu0 0.0
    %2588 = vmatprep.subr.mxu0 0.0
    %2589 = vmatpush1.msra.mxu0 0.0
    %2590 = vmatprep.subr.mxu0 0.0
    %2591 = vmatpush1.msra.mxu0 0.0
    %2592 = vmatprep.subr.mxu0 0.0
    %2593 = vmatpush1.msra.mxu0 0.0
    %2594 = vmatprep.subr.mxu0 0.0
    %2595 = vmatpush1.msra.mxu0 0.0
    %2596 = vmatprep.subr.mxu0 0.0
    %2597 = vmatpush1.msra.mxu0 0.0
    %2598 = vmatprep.subr.mxu0 0.0
    %2599 = vmatpush1.msra.mxu0 0.0
    %2600 = vmatprep.subr.mxu0 0.0
    %2601 = vmatpush1.msra.mxu0 0.0
    %2602 = vmatprep.subr.mxu0 0.0
    %2603 = vmatpush1.msra.mxu0 0.0
    %2604 = vmatprep.subr.mxu0 0.0
    %2605 = vmatpush1.msra.mxu0 0.0
    %2606 = vmatprep.subr.mxu0 0.0
    %2607 = vmatpush1.msra.mxu0 0.0
    %2608 = vmatprep.subr.mxu0 0.0
    %2609 = vmatpush1.msra.mxu0 0.0
    %2610 = vmatprep.subr.mxu0 0.0
    %2611 = vmatpush1.msra.mxu0 0.0
    %2612 = vmatprep.subr.mxu0 0.0
    %2613 = vmatpush1.msra.mxu0 0.0
    %2614 = vmatprep.subr.mxu0 0.0
    %2615 = vmatpush1.msra.mxu0 0.0
    %2616 = vmatprep.subr.mxu0 0.0
    %2617 = vmatpush1.msra.mxu0 0.0
    %2618 = vmatprep.mubr.f32.mxu0 0.0
    %2619 = vmatmul.mubr.f32.gmra.mrb[0].mxu0 %v2543
    %v2620 = vpop.f32.mrb[0].mxu0
    %v2621 = vadd.f32 0.0, %v2620
    %v2622 = vpop.f32.mrb[0].mxu0
    %v2623 = vadd.f32 0.0, %v2622
    %2624 = vmatprep.mubr.f32.mxu0 0.0
    %2625 = vmatmul.mubr.f32.gmra.mrb[0].mxu0 %v2546
    %v2626 = vpop.f32.mrb[0].mxu0
    %v2627 = vadd.f32 0.0, %v2626
    %v2628 = vpop.f32.mrb[0].mxu0
    %v2629 = vadd.f32 0.0, %v2628
    %2630 = vmatprep.mubr.f32.mxu0 0.0
    %2631 = vmatmul.mubr.f32.gmra.mrb[0].mxu0 %v2549
    %v2632 = vpop.f32.mrb[0].mxu0
    %v2633 = vadd.f32 0.0, %v2632
    %v2634 = vpop.f32.mrb[0].mxu0
    %v2635 = vadd.f32 0.0, %v2634
    %2636 = vmatprep.mubr.f32.mxu0 0.0
    %2637 = vmatmul.mubr.f32.gmra.mrb[0].mxu0 %v2552
    %v2638 = vpop.f32.mrb[0].mxu0
    %v2639 = vadd.f32 0.0, %v2638
    %v2640 = vpop.f32.mrb[0].mxu0
    %v2641 = vadd.f32 0.0, %v2640
    %2642 = vdwg.mxu0
    %v2643 = vpack.c.bf16 %v2627, %v2621
    %v2644 = vpack.c.bf16 %v2629, %v2623
    %v2645 = vpack.c.bf16 %v2639, %v2633
    %v2646 = vpack.c.bf16 %v2641, %v2635
    %v2647 = vunpack.c.l.bf16 %v2643
    %v2648 = vunpack.c.l.bf16 %v2644
    %v2649 = vunpack.c.h.bf16 %v2643
    %v2650 = vunpack.c.h.bf16 %v2644
    %v2651 = vunpack.c.l.bf16 %v2645
    %v2652 = vunpack.c.l.bf16 %v2646
    %v2653 = vunpack.c.h.bf16 %v2645
    %v2654 = vunpack.c.h.bf16 %v2646
    %v2655 = vsub.f32 %v2621, %v2647
    %v2656 = vsub.f32 %v2623, %v2648
    %v2657 = vsub.f32 %v2627, %v2649
    %v2658 = vsub.f32 %v2629, %v2650
    %v2659 = vsub.f32 %v2633, %v2651
    %v2660 = vsub.f32 %v2635, %v2652
    %v2661 = vsub.f32 %v2639, %v2653
    %v2662 = vsub.f32 %v2641, %v2654
    %v2663 = vpack.c.bf16 %v2657, %v2655
    %v2664 = vpack.c.bf16 %v2658, %v2656
    %v2665 = vpack.c.bf16 %v2661, %v2659
    %v2666 = vpack.c.bf16 %v2662, %v2660
    %2667 = vmatprep.subr.bf16.mxu0 0
    %2668 = vmatpush1.bf16.msra.mxu0 1065369472
    %2669 = vmatprep.subr.bf16.mxu0 0
    %2670 = vmatpush1.bf16.msra.mxu0 1065369472
    %2671 = vmatprep.subr.bf16.mxu0 0
    %2672 = vmatpush1.bf16.msra.mxu0 1065369472
    %2673 = vmatprep.subr.bf16.mxu0 0
    %2674 = vmatpush1.bf16.msra.mxu0 1065369472
    %2675 = vmatprep.subr.bf16.mxu0 0
    %2676 = vmatpush1.bf16.msra.mxu0 1065369472
    %2677 = vmatprep.subr.bf16.mxu0 0
    %2678 = vmatpush1.bf16.msra.mxu0 1065369472
    %2679 = vmatprep.subr.bf16.mxu0 0
    %2680 = vmatpush1.bf16.msra.mxu0 1065369472
    %2681 = vmatprep.subr.bf16.mxu0 0
    %2682 = vmatpush1.bf16.msra.mxu0 1065369472
    %2683 = vmatprep.subr.bf16.mxu0 0
    %2684 = vmatpush1.bf16.msra.mxu0 1065369472
    %2685 = vmatprep.subr.bf16.mxu0 0
    %2686 = vmatpush1.bf16.msra.mxu0 1065369472
    %2687 = vmatprep.subr.bf16.mxu0 0
    %2688 = vmatpush1.bf16.msra.mxu0 1065369472
    %2689 = vmatprep.subr.bf16.mxu0 0
    %2690 = vmatpush1.bf16.msra.mxu0 1065369472
    %2691 = vmatprep.subr.bf16.mxu0 0
    %2692 = vmatpush1.bf16.msra.mxu0 1065369472
    %2693 = vmatprep.subr.bf16.mxu0 0
    %2694 = vmatpush1.bf16.msra.mxu0 1065369472
    %2695 = vmatprep.subr.bf16.mxu0 0
    %2696 = vmatpush1.bf16.msra.mxu0 1065369472
    %2697 = vmatprep.subr.bf16.mxu0 0
    %2698 = vmatpush1.bf16.msra.mxu0 1065369472
    %2699 = vmatprep.mubr.bf16.mxu0 %v2664
    %2700 = vmatmul.mubr.bf16.gmra.mrb[0].mxu0 %v2663
    %v2701 = vpop.f32.mrb[0].mxu0
    %v2702 = vadd.f32 0.0, %v2701
    %v2703 = vpop.f32.mrb[0].mxu0
    %v2704 = vpop.f32.mrb[0].mxu0
    %v2705 = vadd.f32 0.0, %v2704
    %v2706 = vpop.f32.mrb[0].mxu0
    %2707 = vmatprep.mubr.bf16.mxu0 %v2666
    %2708 = vmatmul.mubr.bf16.gmra.mrb[0].mxu0 %v2665
    %v2709 = vpop.f32.mrb[0].mxu0
    %v2710 = vadd.f32 0.0, %v2709
    %v2711 = vpop.f32.mrb[0].mxu0
    %v2712 = vpop.f32.mrb[0].mxu0
    %v2713 = vadd.f32 0.0, %v2712
    %v2714 = vpop.f32.mrb[0].mxu0
    %2715 = vdwg.mxu0
    %2716 = vmatprep.subr.bf16.mxu0 0
    %2717 = vmatpush1.bf16.msra.mxu0 1065369472
    %2718 = vmatprep.subr.bf16.mxu0 0
    %2719 = vmatpush1.bf16.msra.mxu0 1065369472
    %2720 = vmatprep.subr.bf16.mxu0 0
    %2721 = vmatpush1.bf16.msra.mxu0 1065369472
    %2722 = vmatprep.subr.bf16.mxu0 0
    %2723 = vmatpush1.bf16.msra.mxu0 1065369472
    %2724 = vmatprep.subr.bf16.mxu0 0
    %2725 = vmatpush1.bf16.msra.mxu0 1065369472
    %2726 = vmatprep.subr.bf16.mxu0 0
    %2727 = vmatpush1.bf16.msra.mxu0 1065369472
    %2728 = vmatprep.subr.bf16.mxu0 0
    %2729 = vmatpush1.bf16.msra.mxu0 1065369472
    %2730 = vmatprep.subr.bf16.mxu0 0
    %2731 = vmatpush1.bf16.msra.mxu0 1065369472
    %2732 = vmatprep.subr.bf16.mxu0 0
    %2733 = vmatpush1.bf16.msra.mxu0 1065369472
    %2734 = vmatprep.subr.bf16.mxu0 0
    %2735 = vmatpush1.bf16.msra.mxu0 1065369472
    %2736 = vmatprep.subr.bf16.mxu0 0
    %2737 = vmatpush1.bf16.msra.mxu0 1065369472
    %2738 = vmatprep.subr.bf16.mxu0 0
    %2739 = vmatpush1.bf16.msra.mxu0 1065369472
    %2740 = vmatprep.subr.bf16.mxu0 0
    %2741 = vmatpush1.bf16.msra.mxu0 1065369472
    %2742 = vmatprep.subr.bf16.mxu0 0
    %2743 = vmatpush1.bf16.msra.mxu0 1065369472
    %2744 = vmatprep.subr.bf16.mxu0 0
    %2745 = vmatpush1.bf16.msra.mxu0 1065369472
    %2746 = vmatprep.subr.bf16.mxu0 0
    %2747 = vmatpush1.bf16.msra.mxu0 1065369472
    %2748 = vmatprep.mubr.bf16.mxu0 %v2644
    %2749 = vmatmul.mubr.bf16.gmra.mrb[0].mxu0 %v2643
    %v2750 = vpop.f32.mrb[0].mxu0
    %v2751 = vadd.f32 %v2702, %v2750
    %v2752 = vpop.f32.mrb[0].mxu0
    %v2753 = vpop.f32.mrb[0].mxu0
    %v2754 = vadd.f32 %v2705, %v2753
    %v2755 = vpop.f32.mrb[0].mxu0
    %2756 = vmatprep.mubr.bf16.mxu0 %v2646
    %2757 = vmatmul.mubr.bf16.gmra.mrb[0].mxu0 %v2645
    %v2758 = vpop.f32.mrb[0].mxu0
    %v2759 = vadd.f32 %v2710, %v2758
    %v2760 = vpop.f32.mrb[0].mxu0
    %v2761 = vpop.f32.mrb[0].mxu0
    %v2762 = vadd.f32 %v2713, %v2761
    %v2763 = vpop.f32.mrb[0].mxu0
    %2764 = vdwg.mxu0
    %v2765 = vmul.f32 %v2751, 0.00390625
    %v2766 = vmul.f32 %v2754, 0.00390625
    %v2767 = vmul.f32 %v2759, 0.00390625
    %v2768 = vmul.f32 %v2762, 0.00390625
    %v2769 = vmul.f32 %v2621, %v2621
    %v2770 = vmul.f32 %v2623, %v2623
    %v2771 = vmul.f32 %v2627, %v2627
    %v2772 = vmul.f32 %v2629, %v2629
    %v2773 = vmul.f32 %v2633, %v2633
    %v2774 = vmul.f32 %v2635, %v2635
    %v2775 = vmul.f32 %v2639, %v2639
    %v2776 = vmul.f32 %v2641, %v2641
    %v2777 = vpack.c.bf16 %v2771, %v2769
    %v2778 = vpack.c.bf16 %v2772, %v2770
    %v2779 = vpack.c.bf16 %v2775, %v2773
    %v2780 = vpack.c.bf16 %v2776, %v2774
    %v2781 = vunpack.c.l.bf16 %v2777
    %v2782 = vunpack.c.l.bf16 %v2778
    %v2783 = vunpack.c.h.bf16 %v2777
    %v2784 = vunpack.c.h.bf16 %v2778
    %v2785 = vunpack.c.l.bf16 %v2779
    %v2786 = vunpack.c.l.bf16 %v2780
    %v2787 = vunpack.c.h.bf16 %v2779
    %v2788 = vunpack.c.h.bf16 %v2780
    %v2789 = vsub.f32 %v2769, %v2781
    %v2790 = vsub.f32 %v2770, %v2782
    %v2791 = vsub.f32 %v2771, %v2783
    %v2792 = vsub.f32 %v2772, %v2784
    %v2793 = vsub.f32 %v2773, %v2785
    %v2794 = vsub.f32 %v2774, %v2786
    %v2795 = vsub.f32 %v2775, %v2787
    %v2796 = vsub.f32 %v2776, %v2788
    %v2797 = vpack.c.bf16 %v2791, %v2789
    %v2798 = vpack.c.bf16 %v2792, %v2790
    %v2799 = vpack.c.bf16 %v2795, %v2793
    %v2800 = vpack.c.bf16 %v2796, %v2794
    %2801 = vmatprep.subr.bf16.mxu0 0
    %2802 = vmatpush1.bf16.msra.mxu0 1065369472
    %2803 = vmatprep.subr.bf16.mxu0 0
    %2804 = vmatpush1.bf16.msra.mxu0 1065369472
    %2805 = vmatprep.subr.bf16.mxu0 0
    %2806 = vmatpush1.bf16.msra.mxu0 1065369472
    %2807 = vmatprep.subr.bf16.mxu0 0
    %2808 = vmatpush1.bf16.msra.mxu0 1065369472
    %2809 = vmatprep.subr.bf16.mxu0 0
    %2810 = vmatpush1.bf16.msra.mxu0 1065369472
    %2811 = vmatprep.subr.bf16.mxu0 0
    %2812 = vmatpush1.bf16.msra.mxu0 1065369472
    %2813 = vmatprep.subr.bf16.mxu0 0
    %2814 = vmatpush1.bf16.msra.mxu0 1065369472
    %2815 = vmatprep.subr.bf16.mxu0 0
    %2816 = vmatpush1.bf16.msra.mxu0 1065369472
    %2817 = vmatprep.subr.bf16.mxu0 0
    %2818 = vmatpush1.bf16.msra.mxu0 1065369472
    %2819 = vmatprep.subr.bf16.mxu0 0
    %2820 = vmatpush1.bf16.msra.mxu0 1065369472
    %2821 = vmatprep.subr.bf16.mxu0 0
    %2822 = vmatpush1.bf16.msra.mxu0 1065369472
    %2823 = vmatprep.subr.bf16.mxu0 0
    %2824 = vmatpush1.bf16.msra.mxu0 1065369472
    %2825 = vmatprep.subr.bf16.mxu0 0
    %2826 = vmatpush1.bf16.msra.mxu0 1065369472
    %2827 = vmatprep.subr.bf16.mxu0 0
    %2828 = vmatpush1.bf16.msra.mxu0 1065369472
    %2829 = vmatprep.subr.bf16.mxu0 0
    %2830 = vmatpush1.bf16.msra.mxu0 1065369472
    %2831 = vmatprep.subr.bf16.mxu0 0
    %2832 = vmatpush1.bf16.msra.mxu0 1065369472
    %2833 = vmatprep.mubr.bf16.mxu0 %v2798
    %2834 = vmatmul.mubr.bf16.gmra.mrb[0].mxu0 %v2797
    %v2835 = vpop.f32.mrb[0].mxu0
    %v2836 = vadd.f32 0.0, %v2835
    %v2837 = vpop.f32.mrb[0].mxu0
    %v2838 = vpop.f32.mrb[0].mxu0
    %v2839 = vadd.f32 0.0, %v2838
    %v2840 = vpop.f32.mrb[0].mxu0
    %2841 = vmatprep.mubr.bf16.mxu0 %v2800
    %2842 = vmatmul.mubr.bf16.gmra.mrb[0].mxu0 %v2799
    %v2843 = vpop.f32.mrb[0].mxu0
    %v2844 = vadd.f32 0.0, %v2843
    %v2845 = vpop.f32.mrb[0].mxu0
    %v2846 = vpop.f32.mrb[0].mxu0
    %v2847 = vadd.f32 0.0, %v2846
    %v2848 = vpop.f32.mrb[0].mxu0
    %2849 = vdwg.mxu0
    %2850 = vmatprep.subr.bf16.mxu0 0
    %2851 = vmatpush1.bf16.msra.mxu0 1065369472
    %2852 = vmatprep.subr.bf16.mxu0 0
    %2853 = vmatpush1.bf16.msra.mxu0 1065369472
    %2854 = vmatprep.subr.bf16.mxu0 0
    %2855 = vmatpush1.bf16.msra.mxu0 1065369472
    %2856 = vmatprep.subr.bf16.mxu0 0
    %2857 = vmatpush1.bf16.msra.mxu0 1065369472
    %2858 = vmatprep.subr.bf16.mxu0 0
    %2859 = vmatpush1.bf16.msra.mxu0 1065369472
    %2860 = vmatprep.subr.bf16.mxu0 0
    %2861 = vmatpush1.bf16.msra.mxu0 1065369472
    %2862 = vmatprep.subr.bf16.mxu0 0
    %2863 = vmatpush1.bf16.msra.mxu0 1065369472
    %2864 = vmatprep.subr.bf16.mxu0 0
    %2865 = vmatpush1.bf16.msra.mxu0 1065369472
    %2866 = vmatprep.subr.bf16.mxu0 0
    %2867 = vmatpush1.bf16.msra.mxu0 1065369472
    %2868 = vmatprep.subr.bf16.mxu0 0
    %2869 = vmatpush1.bf16.msra.mxu0 1065369472
    %2870 = vmatprep.subr.bf16.mxu0 0
    %2871 = vmatpush1.bf16.msra.mxu0 1065369472
    %2872 = vmatprep.subr.bf16.mxu0 0
    %2873 = vmatpush1.bf16.msra.mxu0 1065369472
    %2874 = vmatprep.subr.bf16.mxu0 0
    %2875 = vmatpush1.bf16.msra.mxu0 1065369472
    %2876 = vmatprep.subr.bf16.mxu0 0
    %2877 = vmatpush1.bf16.msra.mxu0 1065369472
    %2878 = vmatprep.subr.bf16.mxu0 0
    %2879 = vmatpush1.bf16.msra.mxu0 1065369472
    %2880 = vmatprep.subr.bf16.mxu0 0
    %2881 = vmatpush1.bf16.msra.mxu0 1065369472
    %2882 = vmatprep.mubr.bf16.mxu0 %v2778
    %2883 = vmatmul.mubr.bf16.gmra.mrb[0].mxu0 %v2777
    %v2884 = vpop.f32.mrb[0].mxu0
    %v2885 = vadd.f32 %v2836, %v2884
    %v2886 = vpop.f32.mrb[0].mxu0
    %v2887 = vpop.f32.mrb[0].mxu0
    %v2888 = vadd.f32 %v2839, %v2887
    %v2889 = vpop.f32.mrb[0].mxu0
    %2890 = vmatprep.mubr.bf16.mxu0 %v2780
    %2891 = vmatmul.mubr.bf16.gmra.mrb[0].mxu0 %v2779
    %v2892 = vpop.f32.mrb[0].mxu0
    %v2893 = vadd.f32 %v2844, %v2892
    %v2894 = vpop.f32.mrb[0].mxu0
    %v2895 = vpop.f32.mrb[0].mxu0
    %v2896 = vadd.f32 %v2847, %v2895
    %v2897 = vpop.f32.mrb[0].mxu0
    %2898 = vdwg.mxu0
    %v2899 = vmul.f32 %v2885, 0.00390625
    %v2900 = vmul.f32 %v2888, 0.00390625
    %v2901 = vmul.f32 %v2893, 0.00390625
    %v2902 = vmul.f32 %v2896, 0.00390625
    %v2903 = vmul.f32 %v2765, %v2765
    %v2904 = vmul.f32 %v2766, %v2766
    %v2905 = vmul.f32 %v2767, %v2767
    %v2906 = vmul.f32 %v2768, %v2768
    %v2907 = vsub.f32 %v2899, %v2903
    %v2908 = vsub.f32 %v2900, %v2904
    %v2909 = vsub.f32 %v2901, %v2905
    %v2910 = vsub.f32 %v2902, %v2906
    %v2911 = vmax.f32 %v2907, 0.0
    %v2912 = vmax.f32 %v2908, 0.0
    %v2913 = vmax.f32 %v2909, 0.0
    %v2914 = vmax.f32 %v2910, 0.0
    %s2915 = scalar_lea.vmem %s3, 160
    %v2916 = vld [vmem:[%s2915] sm:$0xff]
    %v2917 = vld [vmem:[%s2915 + $0x8] sm:$0xff]
    %v2918 = vld [vmem:[%s2915 + $0x10] sm:$0xff]
    %v2919 = vld [vmem:[%s2915 + $0x18] sm:$0xff]
    %v2920 = vadd.f32 %v2911, 1e-05
    %v2921 = vadd.f32 %v2912, 1e-05
    %v2922 = vadd.f32 %v2913, 1e-05
    %v2923 = vadd.f32 %v2914, 1e-05
    %v2924 = vrsqrt.pop %v2920
    %v2925 = vrsqrt.pop %v2921
    %v2926 = vrsqrt.pop %v2922
    %v2927 = vrsqrt.pop %v2923
    %v2928 = vmul.f32 %v2916, %v2924
    %v2929 = vmul.f32 %v2917, %v2925
    %v2930 = vmul.f32 %v2918, %v2926
    %v2931 = vmul.f32 %v2919, %v2927
    %s2932 = scalar_lea.vmem %s4, 160
    %v2933 = vld [vmem:[%s2932] sm:$0xff]
    %v2934 = vld [vmem:[%s2932 + $0x8] sm:$0xff]
    %v2935 = vld [vmem:[%s2932 + $0x10] sm:$0xff]
    %v2936 = vld [vmem:[%s2932 + $0x18] sm:$0xff]
    %v2937 = vmul.f32 %v2765, %v2928
    %v2938 = vmul.f32 %v2766, %v2929
    %v2939 = vmul.f32 %v2767, %v2930
    %v2940 = vmul.f32 %v2768, %v2931
    %v2941 = vsub.f32 %v2933, %v2937
    %v2942 = vsub.f32 %v2934, %v2938
    %v2943 = vsub.f32 %v2935, %v2939
    %v2944 = vsub.f32 %v2936, %v2940
    %2946 = vset.pattern.permute.xlu0 0
    %2947 = vperm.xlu0 %2946, %v2928
    %v2948 = vpop.permute.xlu0 %2947
    %2951 = vset.pattern.permute.xlu0 0
    %2952 = vperm.xlu0 %2951, %v2929
    %v2953 = vpop.permute.xlu0 %2952
    %2956 = vset.pattern.permute.xlu0 0
    %2957 = vperm.xlu0 %2956, %v2930
    %v2958 = vpop.permute.xlu0 %2957
    %2961 = vset.pattern.permute.xlu0 0
    %2962 = vperm.xlu0 %2961, %v2931
    %v2963 = vpop.permute.xlu0 %2962
    %v2965 = vmul.f32 %v2621, %v2948
    %v2966 = vmul.f32 %v2623, %v2948
    %v2967 = vmul.f32 %v2627, %v2953
    %v2968 = vmul.f32 %v2629, %v2953
    %v2969 = vmul.f32 %v2633, %v2958
    %v2970 = vmul.f32 %v2635, %v2958
    %v2971 = vmul.f32 %v2639, %v2963
    %v2972 = vmul.f32 %v2641, %v2963
    %2974 = vset.pattern.permute.xlu0 0
    %2975 = vperm.xlu0 %2974, %v2941
    %v2976 = vpop.permute.xlu0 %2975
    %2979 = vset.pattern.permute.xlu0 0
    %2980 = vperm.xlu0 %2979, %v2942
    %v2981 = vpop.permute.xlu0 %2980
    %2984 = vset.pattern.permute.xlu0 0
    %2985 = vperm.xlu0 %2984, %v2943
    %v2986 = vpop.permute.xlu0 %2985
    %2989 = vset.pattern.permute.xlu0 0
    %2990 = vperm.xlu0 %2989, %v2944
    %v2991 = vpop.permute.xlu0 %2990
    %v2993 = vadd.f32 %v2965, %v2976
    %v2994 = vadd.f32 %v2966, %v2976
    %v2995 = vadd.f32 %v2967, %v2981
    %v2996 = vadd.f32 %v2968, %v2981
    %v2997 = vadd.f32 %v2969, %v2986
    %v2998 = vadd.f32 %v2970, %v2986
    %v2999 = vadd.f32 %v2971, %v2991
    %v3000 = vadd.f32 %v2972, %v2991
    %v3001 = vpack.c.bf16 %v203, %v197
    %v3002 = vpack.c.bf16 %v205, %v199
    %v3003 = vpack.c.bf16 %v215, %v209
    %v3004 = vpack.c.bf16 %v217, %v211
    %v3005 = vunpack.c.l.bf16 %v3001
    %v3006 = vunpack.c.l.bf16 %v3002
    %v3007 = vunpack.c.h.bf16 %v3001
    %v3008 = vunpack.c.h.bf16 %v3002
    %v3009 = vunpack.c.l.bf16 %v3003
    %v3010 = vunpack.c.l.bf16 %v3004
    %v3011 = vunpack.c.h.bf16 %v3003
    %v3012 = vunpack.c.h.bf16 %v3004
    %v3013 = vsub.f32 %v197, %v3005
    %v3014 = vsub.f32 %v199, %v3006
    %v3015 = vsub.f32 %v203, %v3007
    %v3016 = vsub.f32 %v205, %v3008
    %v3017 = vsub.f32 %v209, %v3009
    %v3018 = vsub.f32 %v211, %v3010
    %v3019 = vsub.f32 %v215, %v3011
    %v3020 = vsub.f32 %v217, %v3012
    %v3021 = vpack.c.bf16 %v3015, %v3013
    %v3022 = vpack.c.bf16 %v3016, %v3014
    %v3023 = vpack.c.bf16 %v3019, %v3017
    %v3024 = vpack.c.bf16 %v3020, %v3018
    %3025 = vmatprep.subr.bf16.mxu0 0
    %3026 = vmatpush1.bf16.msra.mxu0 1065369472
    %3027 = vmatprep.subr.bf16.mxu0 0
    %3028 = vmatpush1.bf16.msra.mxu0 1065369472
    %3029 = vmatprep.subr.bf16.mxu0 0
    %3030 = vmatpush1.bf16.msra.mxu0 1065369472
    %3031 = vmatprep.subr.bf16.mxu0 0
    %3032 = vmatpush1.bf16.msra.mxu0 1065369472
    %3033 = vmatprep.subr.bf16.mxu0 0
    %3034 = vmatpush1.bf16.msra.mxu0 1065369472
    %3035 = vmatprep.subr.bf16.mxu0 0
    %3036 = vmatpush1.bf16.msra.mxu0 1065369472
    %3037 = vmatprep.subr.bf16.mxu0 0
    %3038 = vmatpush1.bf16.msra.mxu0 1065369472
    %3039 = vmatprep.subr.bf16.mxu0 0
    %3040 = vmatpush1.bf16.msra.mxu0 1065369472
    %3041 = vmatprep.subr.bf16.mxu0 0
    %3042 = vmatpush1.bf16.msra.mxu0 1065369472
    %3043 = vmatprep.subr.bf16.mxu0 0
    %3044 = vmatpush1.bf16.msra.mxu0 1065369472
    %3045 = vmatprep.subr.bf16.mxu0 0
    %3046 = vmatpush1.bf16.msra.mxu0 1065369472
    %3047 = vmatprep.subr.bf16.mxu0 0
    %3048 = vmatpush1.bf16.msra.mxu0 1065369472
    %3049 = vmatprep.subr.bf16.mxu0 0
    %3050 = vmatpush1.bf16.msra.mxu0 1065369472
    %3051 = vmatprep.subr.bf16.mxu0 0
    %3052 = vmatpush1.bf16.msra.mxu0 1065369472
    %3053 = vmatprep.subr.bf16.mxu0 0
    %3054 = vmatpush1.bf16.msra.mxu0 1065369472
    %3055 = vmatprep.subr.bf16.mxu0 0
    %3056 = vmatpush1.bf16.msra.mxu0 1065369472
    %3057 = vmatprep.mubr.bf16.mxu0 %v3022
    %3058 = vmatmul.mubr.bf16.gmra.mrb[0].mxu0 %v3021
    %v3059 = vpop.f32.mrb[0].mxu0
    %v3060 = vadd.f32 0.0, %v3059
    %v3061 = vpop.f32.mrb[0].mxu0
    %v3062 = vpop.f32.mrb[0].mxu0
    %v3063 = vadd.f32 0.0, %v3062
    %v3064 = vpop.f32.mrb[0].mxu0
    %3065 = vmatprep.mubr.bf16.mxu0 %v3024
    %3066 = vmatmul.mubr.bf16.gmra.mrb[0].mxu0 %v3023
    %v3067 = vpop.f32.mrb[0].mxu0
    %v3068 = vadd.f32 0.0, %v3067
    %v3069 = vpop.f32.mrb[0].mxu0
    %v3070 = vpop.f32.mrb[0].mxu0
    %v3071 = vadd.f32 0.0, %v3070
    %v3072 = vpop.f32.mrb[0].mxu0
    %3073 = vdwg.mxu0
    %3074 = vmatprep.subr.bf16.mxu0 0
    %3075 = vmatpush1.bf16.msra.mxu0 1065369472
    %3076 = vmatprep.subr.bf16.mxu0 0
    %3077 = vmatpush1.bf16.msra.mxu0 1065369472
    %3078 = vmatprep.subr.bf16.mxu0 0
    %3079 = vmatpush1.bf16.msra.mxu0 1065369472
    %3080 = vmatprep.subr.bf16.mxu0 0
    %3081 = vmatpush1.bf16.msra.mxu0 1065369472
    %3082 = vmatprep.subr.bf16.mxu0 0
    %3083 = vmatpush1.bf16.msra.mxu0 1065369472
    %3084 = vmatprep.subr.bf16.mxu0 0
    %3085 = vmatpush1.bf16.msra.mxu0 1065369472
    %3086 = vmatprep.subr.bf16.mxu0 0
    %3087 = vmatpush1.bf16.msra.mxu0 1065369472
    %3088 = vmatprep.subr.bf16.mxu0 0
    %3089 = vmatpush1.bf16.msra.mxu0 1065369472
    %3090 = vmatprep.subr.bf16.mxu0 0
    %3091 = vmatpush1.bf16.msra.mxu0 1065369472
    %3092 = vmatprep.subr.bf16.mxu0 0
    %3093 = vmatpush1.bf16.msra.mxu0 1065369472
    %3094 = vmatprep.subr.bf16.mxu0 0
    %3095 = vmatpush1.bf16.msra.mxu0 1065369472
    %3096 = vmatprep.subr.bf16.mxu0 0
    %3097 = vmatpush1.bf16.msra.mxu0 1065369472
    %3098 = vmatprep.subr.bf16.mxu0 0
    %3099 = vmatpush1.bf16.msra.mxu0 1065369472
    %3100 = vmatprep.subr.bf16.mxu0 0
    %3101 = vmatpush1.bf16.msra.mxu0 1065369472
    %3102 = vmatprep.subr.bf16.mxu0 0
    %3103 = vmatpush1.bf16.msra.mxu0 1065369472
    %3104 = vmatprep.subr.bf16.mxu0 0
    %3105 = vmatpush1.bf16.msra.mxu0 1065369472
    %3106 = vmatprep.mubr.bf16.mxu0 %v3002
    %3107 = vmatmul.mubr.bf16.gmra.mrb[0].mxu0 %v3001
    %v3108 = vpop.f32.mrb[0].mxu0
    %v3109 = vadd.f32 %v3060, %v3108
    %v3110 = vpop.f32.mrb[0].mxu0
    %v3111 = vpop.f32.mrb[0].mxu0
    %v3112 = vadd.f32 %v3063, %v3111
    %v3113 = vpop.f32.mrb[0].mxu0
    %3114 = vmatprep.mubr.bf16.mxu0 %v3004
    %3115 = vmatmul.mubr.bf16.gmra.mrb[0].mxu0 %v3003
    %v3116 = vpop.f32.mrb[0].mxu0
    %v3117 = vadd.f32 %v3068, %v3116
    %v3118 = vpop.f32.mrb[0].mxu0
    %v3119 = vpop.f32.mrb[0].mxu0
    %v3120 = vadd.f32 %v3071, %v3119
    %v3121 = vpop.f32.mrb[0].mxu0
    %3122 = vdwg.mxu0
    %v3123 = vmul.f32 %v3109, 0.00390625
    %v3124 = vmul.f32 %v3112, 0.00390625
    %v3125 = vmul.f32 %v3117, 0.00390625
    %v3126 = vmul.f32 %v3120, 0.00390625
    %v3127 = vmul.f32 %v197, %v197
    %v3128 = vmul.f32 %v199, %v199
    %v3129 = vmul.f32 %v203, %v203
    %v3130 = vmul.f32 %v205, %v205
    %v3131 = vmul.f32 %v209, %v209
    %v3132 = vmul.f32 %v211, %v211
    %v3133 = vmul.f32 %v215, %v215
    %v3134 = vmul.f32 %v217, %v217
    %v3135 = vpack.c.bf16 %v3129, %v3127
    %v3136 = vpack.c.bf16 %v3130, %v3128
    %v3137 = vpack.c.bf16 %v3133, %v3131
    %v3138 = vpack.c.bf16 %v3134, %v3132
    %v3139 = vunpack.c.l.bf16 %v3135
    %v3140 = vunpack.c.l.bf16 %v3136
    %v3141 = vunpack.c.h.bf16 %v3135
    %v3142 = vunpack.c.h.bf16 %v3136
    %v3143 = vunpack.c.l.bf16 %v3137
    %v3144 = vunpack.c.l.bf16 %v3138
    %v3145 = vunpack.c.h.bf16 %v3137
    %v3146 = vunpack.c.h.bf16 %v3138
    %v3147 = vsub.f32 %v3127, %v3139
    %v3148 = vsub.f32 %v3128, %v3140
    %v3149 = vsub.f32 %v3129, %v3141
    %v3150 = vsub.f32 %v3130, %v3142
    %v3151 = vsub.f32 %v3131, %v3143
    %v3152 = vsub.f32 %v3132, %v3144
    %v3153 = vsub.f32 %v3133, %v3145
    %v3154 = vsub.f32 %v3134, %v3146
    %v3155 = vpack.c.bf16 %v3149, %v3147
    %v3156 = vpack.c.bf16 %v3150, %v3148
    %v3157 = vpack.c.bf16 %v3153, %v3151
    %v3158 = vpack.c.bf16 %v3154, %v3152
    %3159 = vmatprep.subr.bf16.mxu0 0
    %3160 = vmatpush1.bf16.msra.mxu0 1065369472
    %3161 = vmatprep.subr.bf16.mxu0 0
    %3162 = vmatpush1.bf16.msra.mxu0 1065369472
    %3163 = vmatprep.subr.bf16.mxu0 0
    %3164 = vmatpush1.bf16.msra.mxu0 1065369472
    %3165 = vmatprep.subr.bf16.mxu0 0
    %3166 = vmatpush1.bf16.msra.mxu0 1065369472
    %3167 = vmatprep.subr.bf16.mxu0 0
    %3168 = vmatpush1.bf16.msra.mxu0 1065369472
    %3169 = vmatprep.subr.bf16.mxu0 0
    %3170 = vmatpush1.bf16.msra.mxu0 1065369472
    %3171 = vmatprep.subr.bf16.mxu0 0
    %3172 = vmatpush1.bf16.msra.mxu0 1065369472
    %3173 = vmatprep.subr.bf16.mxu0 0
    %3174 = vmatpush1.bf16.msra.mxu0 1065369472
    %3175 = vmatprep.subr.bf16.mxu0 0
    %3176 = vmatpush1.bf16.msra.mxu0 1065369472
    %3177 = vmatprep.subr.bf16.mxu0 0
    %3178 = vmatpush1.bf16.msra.mxu0 1065369472
    %3179 = vmatprep.subr.bf16.mxu0 0
    %3180 = vmatpush1.bf16.msra.mxu0 1065369472
    %3181 = vmatprep.subr.bf16.mxu0 0
    %3182 = vmatpush1.bf16.msra.mxu0 1065369472
    %3183 = vmatprep.subr.bf16.mxu0 0
    %3184 = vmatpush1.bf16.msra.mxu0 1065369472
    %3185 = vmatprep.subr.bf16.mxu0 0
    %3186 = vmatpush1.bf16.msra.mxu0 1065369472
    %3187 = vmatprep.subr.bf16.mxu0 0
    %3188 = vmatpush1.bf16.msra.mxu0 1065369472
    %3189 = vmatprep.subr.bf16.mxu0 0
    %3190 = vmatpush1.bf16.msra.mxu0 1065369472
    %3191 = vmatprep.mubr.bf16.mxu0 %v3156
    %3192 = vmatmul.mubr.bf16.gmra.mrb[0].mxu0 %v3155
    %v3193 = vpop.f32.mrb[0].mxu0
    %v3194 = vadd.f32 0.0, %v3193
    %v3195 = vpop.f32.mrb[0].mxu0
    %v3196 = vpop.f32.mrb[0].mxu0
    %v3197 = vadd.f32 0.0, %v3196
    %v3198 = vpop.f32.mrb[0].mxu0
    %3199 = vmatprep.mubr.bf16.mxu0 %v3158
    %3200 = vmatmul.mubr.bf16.gmra.mrb[0].mxu0 %v3157
    %v3201 = vpop.f32.mrb[0].mxu0
    %v3202 = vadd.f32 0.0, %v3201
    %v3203 = vpop.f32.mrb[0].mxu0
    %v3204 = vpop.f32.mrb[0].mxu0
    %v3205 = vadd.f32 0.0, %v3204
    %v3206 = vpop.f32.mrb[0].mxu0
    %3207 = vdwg.mxu0
    %3208 = vmatprep.subr.bf16.mxu0 0
    %3209 = vmatpush1.bf16.msra.mxu0 1065369472
    %3210 = vmatprep.subr.bf16.mxu0 0
    %3211 = vmatpush1.bf16.msra.mxu0 1065369472
    %3212 = vmatprep.subr.bf16.mxu0 0
    %3213 = vmatpush1.bf16.msra.mxu0 1065369472
    %3214 = vmatprep.subr.bf16.mxu0 0
    %3215 = vmatpush1.bf16.msra.mxu0 1065369472
    %3216 = vmatprep.subr.bf16.mxu0 0
    %3217 = vmatpush1.bf16.msra.mxu0 1065369472
    %3218 = vmatprep.subr.bf16.mxu0 0
    %3219 = vmatpush1.bf16.msra.mxu0 1065369472
    %3220 = vmatprep.subr.bf16.mxu0 0
    %3221 = vmatpush1.bf16.msra.mxu0 1065369472
    %3222 = vmatprep.subr.bf16.mxu0 0
    %3223 = vmatpush1.bf16.msra.mxu0 1065369472
    %3224 = vmatprep.subr.bf16.mxu0 0
    %3225 = vmatpush1.bf16.msra.mxu0 1065369472
    %3226 = vmatprep.subr.bf16.mxu0 0
    %3227 = vmatpush1.bf16.msra.mxu0 1065369472
    %3228 = vmatprep.subr.bf16.mxu0 0
    %3229 = vmatpush1.bf16.msra.mxu0 1065369472
    %3230 = vmatprep.subr.bf16.mxu0 0
    %3231 = vmatpush1.bf16.msra.mxu0 1065369472
    %3232 = vmatprep.subr.bf16.mxu0 0
    %3233 = vmatpush1.bf16.msra.mxu0 1065369472
    %3234 = vmatprep.subr.bf16.mxu0 0
    %3235 = vmatpush1.bf16.msra.mxu0 1065369472
    %3236 = vmatprep.subr.bf16.mxu0 0
    %3237 = vmatpush1.bf16.msra.mxu0 1065369472
    %3238 = vmatprep.subr.bf16.mxu0 0
    %3239 = vmatpush1.bf16.msra.mxu0 1065369472
    %3240 = vmatprep.mubr.bf16.mxu0 %v3136
    %3241 = vmatmul.mubr.bf16.gmra.mrb[0].mxu0 %v3135
    %v3242 = vpop.f32.mrb[0].mxu0
    %v3243 = vadd.f32 %v3194, %v3242
    %v3244 = vpop.f32.mrb[0].mxu0
    %v3245 = vpop.f32.mrb[0].mxu0
    %v3246 = vadd.f32 %v3197, %v3245
    %v3247 = vpop.f32.mrb[0].mxu0
    %3248 = vmatprep.mubr.bf16.mxu0 %v3138
    %3249 = vmatmul.mubr.bf16.gmra.mrb[0].mxu0 %v3137
    %v3250 = vpop.f32.mrb[0].mxu0
    %v3251 = vadd.f32 %v3202, %v3250
    %v3252 = vpop.f32.mrb[0].mxu0
    %v3253 = vpop.f32.mrb[0].mxu0
    %v3254 = vadd.f32 %v3205, %v3253
    %v3255 = vpop.f32.mrb[0].mxu0
    %3256 = vdwg.mxu0
    %v3257 = vmul.f32 %v3243, 0.00390625
    %v3258 = vmul.f32 %v3246, 0.00390625
    %v3259 = vmul.f32 %v3251, 0.00390625
    %v3260 = vmul.f32 %v3254, 0.00390625
    %v3261 = vmul.f32 %v3123, %v3123
    %v3262 = vmul.f32 %v3124, %v3124
    %v3263 = vmul.f32 %v3125, %v3125
    %v3264 = vmul.f32 %v3126, %v3126
    %v3265 = vsub.f32 %v3257, %v3261
    %v3266 = vsub.f32 %v3258, %v3262
    %v3267 = vsub.f32 %v3259, %v3263
    %v3268 = vsub.f32 %v3260, %v3264
    %v3269 = vmax.f32 %v3265, 0.0
    %v3270 = vmax.f32 %v3266, 0.0
    %v3271 = vmax.f32 %v3267, 0.0
    %v3272 = vmax.f32 %v3268, 0.0
    %s3273 = scalar_lea.vmem %s3, 192
    %v3274 = vld [vmem:[%s3273] sm:$0xff]
    %v3275 = vld [vmem:[%s3273 + $0x8] sm:$0xff]
    %v3276 = vld [vmem:[%s3273 + $0x10] sm:$0xff]
    %v3277 = vld [vmem:[%s3273 + $0x18] sm:$0xff]
    %v3278 = vadd.f32 %v3269, 1e-05
    %v3279 = vadd.f32 %v3270, 1e-05
    %v3280 = vadd.f32 %v3271, 1e-05
    %v3281 = vadd.f32 %v3272, 1e-05
    %v3282 = vrsqrt.pop %v3278
    %v3283 = vrsqrt.pop %v3279
    %v3284 = vrsqrt.pop %v3280
    %v3285 = vrsqrt.pop %v3281
    %v3286 = vmul.f32 %v3274, %v3282
    %v3287 = vmul.f32 %v3275, %v3283
    %v3288 = vmul.f32 %v3276, %v3284
    %v3289 = vmul.f32 %v3277, %v3285
    %s3290 = scalar_lea.vmem %s4, 192
    %v3291 = vld [vmem:[%s3290] sm:$0xff]
    %v3292 = vld [vmem:[%s3290 + $0x8] sm:$0xff]
    %v3293 = vld [vmem:[%s3290 + $0x10] sm:$0xff]
    %v3294 = vld [vmem:[%s3290 + $0x18] sm:$0xff]
    %v3295 = vmul.f32 %v3123, %v3286
    %v3296 = vmul.f32 %v3124, %v3287
    %v3297 = vmul.f32 %v3125, %v3288
    %v3298 = vmul.f32 %v3126, %v3289
    %v3299 = vsub.f32 %v3291, %v3295
    %v3300 = vsub.f32 %v3292, %v3296
    %v3301 = vsub.f32 %v3293, %v3297
    %v3302 = vsub.f32 %v3294, %v3298
    %3304 = vset.pattern.permute.xlu0 0
    %3305 = vperm.xlu0 %3304, %v3286
    %v3306 = vpop.permute.xlu0 %3305
    %3309 = vset.pattern.permute.xlu0 0
    %3310 = vperm.xlu0 %3309, %v3287
    %v3311 = vpop.permute.xlu0 %3310
    %3314 = vset.pattern.permute.xlu0 0
    %3315 = vperm.xlu0 %3314, %v3288
    %v3316 = vpop.permute.xlu0 %3315
    %3319 = vset.pattern.permute.xlu0 0
    %3320 = vperm.xlu0 %3319, %v3289
    %v3321 = vpop.permute.xlu0 %3320
    %v3323 = vmul.f32 %v197, %v3306
    %v3324 = vmul.f32 %v199, %v3306
    %v3325 = vmul.f32 %v203, %v3311
    %v3326 = vmul.f32 %v205, %v3311
    %v3327 = vmul.f32 %v209, %v3316
    %v3328 = vmul.f32 %v211, %v3316
    %v3329 = vmul.f32 %v215, %v3321
    %v3330 = vmul.f32 %v217, %v3321
    %3332 = vset.pattern.permute.xlu0 0
    %3333 = vperm.xlu0 %3332, %v3299
    %v3334 = vpop.permute.xlu0 %3333
    %3337 = vset.pattern.permute.xlu0 0
    %3338 = vperm.xlu0 %3337, %v3300
    %v3339 = vpop.permute.xlu0 %3338
    %3342 = vset.pattern.permute.xlu0 0
    %3343 = vperm.xlu0 %3342, %v3301
    %v3344 = vpop.permute.xlu0 %3343
    %3347 = vset.pattern.permute.xlu0 0
    %3348 = vperm.xlu0 %3347, %v3302
    %v3349 = vpop.permute.xlu0 %3348
    %v3351 = vadd.f32 %v3323, %v3334
    %v3352 = vadd.f32 %v3324, %v3334
    %v3353 = vadd.f32 %v3325, %v3339
    %v3354 = vadd.f32 %v3326, %v3339
    %v3355 = vadd.f32 %v3327, %v3344
    %v3356 = vadd.f32 %v3328, %v3344
    %v3357 = vadd.f32 %v3329, %v3349
    %v3358 = vadd.f32 %v3330, %v3349
    %v3359 = vadd.f32 %v2993, %v3351
    %v3360 = vadd.f32 %v2994, %v3352
    %v3361 = vadd.f32 %v2995, %v3353
    %v3362 = vadd.f32 %v2996, %v3354
    %v3363 = vadd.f32 %v2997, %v3355
    %v3364 = vadd.f32 %v2998, %v3356
    %v3365 = vadd.f32 %v2999, %v3357
    %v3366 = vadd.f32 %v3000, %v3358
    %v3367 = vmax.f32 %v3359, 0.0
    %v3368 = vmax.f32 %v3360, 0.0
    %v3369 = vmax.f32 %v3361, 0.0
    %v3370 = vmax.f32 %v3362, 0.0
    %v3371 = vmax.f32 %v3363, 0.0
    %v3372 = vmax.f32 %v3364, 0.0
    %v3373 = vmax.f32 %v3365, 0.0
    %v3374 = vmax.f32 %v3366, 0.0
    %v3375 = vld [vmem:[%s5] sm:$0xff]
    %v3376 = vld [vmem:[%s5 + $0x8] sm:$0xff]
    %v3377 = vld [vmem:[%s5 + $0x10] sm:$0xff]
    %v3378 = vld [vmem:[%s5 + $0x18] sm:$0xff]
    %v3380 = vsel %vm617, %v3375, 0
    %v3383 = vsel %vm617, %v3376, 0
    %v3386 = vsel %vm617, %v3377, 0
    %v3389 = vsel %vm617, %v3378, 0
    %3391 = vmatprep.subr.mxu0 %v3368
    %3392 = vmatpush1.msra.mxu0 %v3367
    %3393 = vmatprep.subr.mxu0 %v3370
    %3394 = vmatpush1.msra.mxu0 %v3369
    %3395 = vmatprep.subr.mxu0 %v3372
    %3396 = vmatpush1.msra.mxu0 %v3371
    %3397 = vmatprep.subr.mxu0 %v3374
    %3398 = vmatpush1.msra.mxu0 %v3373
    %3399 = vmatprep.subr.mxu0 0.0
    %3400 = vmatpush1.msra.mxu0 0.0
    %3401 = vmatprep.subr.mxu0 0.0
    %3402 = vmatpush1.msra.mxu0 0.0
    %3403 = vmatprep.subr.mxu0 0.0
    %3404 = vmatpush1.msra.mxu0 0.0
    %3405 = vmatprep.subr.mxu0 0.0
    %3406 = vmatpush1.msra.mxu0 0.0
    %3407 = vmatprep.subr.mxu0 0.0
    %3408 = vmatpush1.msra.mxu0 0.0
    %3409 = vmatprep.subr.mxu0 0.0
    %3410 = vmatpush1.msra.mxu0 0.0
    %3411 = vmatprep.subr.mxu0 0.0
    %3412 = vmatpush1.msra.mxu0 0.0
    %3413 = vmatprep.subr.mxu0 0.0
    %3414 = vmatpush1.msra.mxu0 0.0
    %3415 = vmatprep.subr.mxu0 0.0
    %3416 = vmatpush1.msra.mxu0 0.0
    %3417 = vmatprep.subr.mxu0 0.0
    %3418 = vmatpush1.msra.mxu0 0.0
    %3419 = vmatprep.subr.mxu0 0.0
    %3420 = vmatpush1.msra.mxu0 0.0
    %3421 = vmatprep.subr.mxu0 0.0
    %3422 = vmatpush1.msra.mxu0 0.0
    %3423 = vmatprep.subr.mxu0 0.0
    %3424 = vmatpush1.msra.mxu0 0.0
    %3425 = vmatprep.subr.mxu0 0.0
    %3426 = vmatpush1.msra.mxu0 0.0
    %3427 = vmatprep.subr.mxu0 0.0
    %3428 = vmatpush1.msra.mxu0 0.0
    %3429 = vmatprep.subr.mxu0 0.0
    %3430 = vmatpush1.msra.mxu0 0.0
    %3431 = vmatprep.subr.mxu0 0.0
    %3432 = vmatpush1.msra.mxu0 0.0
    %3433 = vmatprep.subr.mxu0 0.0
    %3434 = vmatpush1.msra.mxu0 0.0
    %3435 = vmatprep.subr.mxu0 0.0
    %3436 = vmatpush1.msra.mxu0 0.0
    %3437 = vmatprep.subr.mxu0 0.0
    %3438 = vmatpush1.msra.mxu0 0.0
    %3439 = vmatprep.subr.mxu0 0.0
    %3440 = vmatpush1.msra.mxu0 0.0
    %3441 = vmatprep.subr.mxu0 0.0
    %3442 = vmatpush1.msra.mxu0 0.0
    %3443 = vmatprep.subr.mxu0 0.0
    %3444 = vmatpush1.msra.mxu0 0.0
    %3445 = vmatprep.subr.mxu0 0.0
    %3446 = vmatpush1.msra.mxu0 0.0
    %3447 = vmatprep.subr.mxu0 0.0
    %3448 = vmatpush1.msra.mxu0 0.0
    %3449 = vmatprep.subr.mxu0 0.0
    %3450 = vmatpush1.msra.mxu0 0.0
    %3451 = vmatprep.subr.mxu0 0.0
    %3452 = vmatpush1.msra.mxu0 0.0
    %3453 = vmatprep.subr.mxu0 0.0
    %3454 = vmatpush1.msra.mxu0 0.0
    %3455 = vmatprep.mubr.f32.mxu0 0.0
    %3456 = vmatmul.mubr.f32.gmra.mrb[0].mxu0 %v3380
    %v3457 = vpop.f32.mrb[0].mxu0
    %v3458 = vadd.f32 0.0, %v3457
    %v3459 = vpop.f32.mrb[0].mxu0
    %v3460 = vadd.f32 0.0, %v3459
    %3461 = vmatprep.mubr.f32.mxu0 0.0
    %3462 = vmatmul.mubr.f32.gmra.mrb[0].mxu0 %v3383
    %v3463 = vpop.f32.mrb[0].mxu0
    %v3464 = vadd.f32 0.0, %v3463
    %v3465 = vpop.f32.mrb[0].mxu0
    %v3466 = vadd.f32 0.0, %v3465
    %3467 = vmatprep.mubr.f32.mxu0 0.0
    %3468 = vmatmul.mubr.f32.gmra.mrb[0].mxu0 %v3386
    %v3469 = vpop.f32.mrb[0].mxu0
    %v3470 = vadd.f32 0.0, %v3469
    %v3471 = vpop.f32.mrb[0].mxu0
    %v3472 = vadd.f32 0.0, %v3471
    %3473 = vmatprep.mubr.f32.mxu0 0.0
    %3474 = vmatmul.mubr.f32.gmra.mrb[0].mxu0 %v3389
    %v3475 = vpop.f32.mrb[0].mxu0
    %v3476 = vadd.f32 0.0, %v3475
    %v3477 = vpop.f32.mrb[0].mxu0
    %v3478 = vadd.f32 0.0, %v3477
    %3479 = vdwg.mxu0
    %v3480 = vld [vmem:[%s6] sm:$0xff]
    %v3481 = vld [vmem:[%s6 + $0x8] sm:$0xff]
    %v3482 = vld [vmem:[%s6 + $0x10] sm:$0xff]
    %v3483 = vld [vmem:[%s6 + $0x18] sm:$0xff]
    %v3484 = vpack.c.bf16 %v3464, %v3458
    %v3485 = vpack.c.bf16 %v3466, %v3460
    %v3486 = vpack.c.bf16 %v3476, %v3470
    %v3487 = vpack.c.bf16 %v3478, %v3472
    %v3488 = vunpack.c.l.bf16 %v3484
    %v3489 = vunpack.c.l.bf16 %v3485
    %v3490 = vunpack.c.h.bf16 %v3484
    %v3491 = vunpack.c.h.bf16 %v3485
    %v3492 = vunpack.c.l.bf16 %v3486
    %v3493 = vunpack.c.l.bf16 %v3487
    %v3494 = vunpack.c.h.bf16 %v3486
    %v3495 = vunpack.c.h.bf16 %v3487
    %v3496 = vsub.f32 %v3458, %v3488
    %v3497 = vsub.f32 %v3460, %v3489
    %v3498 = vsub.f32 %v3464, %v3490
    %v3499 = vsub.f32 %v3466, %v3491
    %v3500 = vsub.f32 %v3470, %v3492
    %v3501 = vsub.f32 %v3472, %v3493
    %v3502 = vsub.f32 %v3476, %v3494
    %v3503 = vsub.f32 %v3478, %v3495
    %v3504 = vpack.c.bf16 %v3498, %v3496
    %v3505 = vpack.c.bf16 %v3499, %v3497
    %v3506 = vpack.c.bf16 %v3502, %v3500
    %v3507 = vpack.c.bf16 %v3503, %v3501
    %3508 = vmatprep.subr.bf16.mxu0 0
    %3509 = vmatpush1.bf16.msra.mxu0 1065369472
    %3510 = vmatprep.subr.bf16.mxu0 0
    %3511 = vmatpush1.bf16.msra.mxu0 1065369472
    %3512 = vmatprep.subr.bf16.mxu0 0
    %3513 = vmatpush1.bf16.msra.mxu0 1065369472
    %3514 = vmatprep.subr.bf16.mxu0 0
    %3515 = vmatpush1.bf16.msra.mxu0 1065369472
    %3516 = vmatprep.subr.bf16.mxu0 0
    %3517 = vmatpush1.bf16.msra.mxu0 1065369472
    %3518 = vmatprep.subr.bf16.mxu0 0
    %3519 = vmatpush1.bf16.msra.mxu0 1065369472
    %3520 = vmatprep.subr.bf16.mxu0 0
    %3521 = vmatpush1.bf16.msra.mxu0 1065369472
    %3522 = vmatprep.subr.bf16.mxu0 0
    %3523 = vmatpush1.bf16.msra.mxu0 1065369472
    %3524 = vmatprep.subr.bf16.mxu0 0
    %3525 = vmatpush1.bf16.msra.mxu0 1065369472
    %3526 = vmatprep.subr.bf16.mxu0 0
    %3527 = vmatpush1.bf16.msra.mxu0 1065369472
    %3528 = vmatprep.subr.bf16.mxu0 0
    %3529 = vmatpush1.bf16.msra.mxu0 1065369472
    %3530 = vmatprep.subr.bf16.mxu0 0
    %3531 = vmatpush1.bf16.msra.mxu0 1065369472
    %3532 = vmatprep.subr.bf16.mxu0 0
    %3533 = vmatpush1.bf16.msra.mxu0 1065369472
    %3534 = vmatprep.subr.bf16.mxu0 0
    %3535 = vmatpush1.bf16.msra.mxu0 1065369472
    %3536 = vmatprep.subr.bf16.mxu0 0
    %3537 = vmatpush1.bf16.msra.mxu0 1065369472
    %3538 = vmatprep.subr.bf16.mxu0 0
    %3539 = vmatpush1.bf16.msra.mxu0 1065369472
    %3540 = vmatprep.mubr.bf16.mxu0 %v3505
    %3541 = vmatmul.mubr.bf16.gmra.mrb[0].mxu0 %v3504
    %v3542 = vpop.f32.mrb[0].mxu0
    %v3543 = vadd.f32 0.0, %v3542
    %v3544 = vpop.f32.mrb[0].mxu0
    %v3545 = vpop.f32.mrb[0].mxu0
    %v3546 = vadd.f32 0.0, %v3545
    %v3547 = vpop.f32.mrb[0].mxu0
    %3548 = vmatprep.mubr.bf16.mxu0 %v3507
    %3549 = vmatmul.mubr.bf16.gmra.mrb[0].mxu0 %v3506
    %v3550 = vpop.f32.mrb[0].mxu0
    %v3551 = vadd.f32 0.0, %v3550
    %v3552 = vpop.f32.mrb[0].mxu0
    %v3553 = vpop.f32.mrb[0].mxu0
    %v3554 = vadd.f32 0.0, %v3553
    %v3555 = vpop.f32.mrb[0].mxu0
    %3556 = vdwg.mxu0
    %3557 = vmatprep.subr.bf16.mxu0 0
    %3558 = vmatpush1.bf16.msra.mxu0 1065369472
    %3559 = vmatprep.subr.bf16.mxu0 0
    %3560 = vmatpush1.bf16.msra.mxu0 1065369472
    %3561 = vmatprep.subr.bf16.mxu0 0
    %3562 = vmatpush1.bf16.msra.mxu0 1065369472
    %3563 = vmatprep.subr.bf16.mxu0 0
    %3564 = vmatpush1.bf16.msra.mxu0 1065369472
    %3565 = vmatprep.subr.bf16.mxu0 0
    %3566 = vmatpush1.bf16.msra.mxu0 1065369472
    %3567 = vmatprep.subr.bf16.mxu0 0
    %3568 = vmatpush1.bf16.msra.mxu0 1065369472
    %3569 = vmatprep.subr.bf16.mxu0 0
    %3570 = vmatpush1.bf16.msra.mxu0 1065369472
    %3571 = vmatprep.subr.bf16.mxu0 0
    %3572 = vmatpush1.bf16.msra.mxu0 1065369472
    %3573 = vmatprep.subr.bf16.mxu0 0
    %3574 = vmatpush1.bf16.msra.mxu0 1065369472
    %3575 = vmatprep.subr.bf16.mxu0 0
    %3576 = vmatpush1.bf16.msra.mxu0 1065369472
    %3577 = vmatprep.subr.bf16.mxu0 0
    %3578 = vmatpush1.bf16.msra.mxu0 1065369472
    %3579 = vmatprep.subr.bf16.mxu0 0
    %3580 = vmatpush1.bf16.msra.mxu0 1065369472
    %3581 = vmatprep.subr.bf16.mxu0 0
    %3582 = vmatpush1.bf16.msra.mxu0 1065369472
    %3583 = vmatprep.subr.bf16.mxu0 0
    %3584 = vmatpush1.bf16.msra.mxu0 1065369472
    %3585 = vmatprep.subr.bf16.mxu0 0
    %3586 = vmatpush1.bf16.msra.mxu0 1065369472
    %3587 = vmatprep.subr.bf16.mxu0 0
    %3588 = vmatpush1.bf16.msra.mxu0 1065369472
    %3589 = vmatprep.mubr.bf16.mxu0 %v3485
    %3590 = vmatmul.mubr.bf16.gmra.mrb[0].mxu0 %v3484
    %v3591 = vpop.f32.mrb[0].mxu0
    %v3592 = vadd.f32 %v3543, %v3591
    %v3593 = vpop.f32.mrb[0].mxu0
    %v3594 = vpop.f32.mrb[0].mxu0
    %v3595 = vadd.f32 %v3546, %v3594
    %v3596 = vpop.f32.mrb[0].mxu0
    %3597 = vmatprep.mubr.bf16.mxu0 %v3487
    %3598 = vmatmul.mubr.bf16.gmra.mrb[0].mxu0 %v3486
    %v3599 = vpop.f32.mrb[0].mxu0
    %v3600 = vadd.f32 %v3551, %v3599
    %v3601 = vpop.f32.mrb[0].mxu0
    %v3602 = vpop.f32.mrb[0].mxu0
    %v3603 = vadd.f32 %v3554, %v3602
    %v3604 = vpop.f32.mrb[0].mxu0
    %3605 = vdwg.mxu0
    %v3606 = vmul.f32 %v3592, 0.00390625
    %v3607 = vmul.f32 %v3595, 0.00390625
    %v3608 = vmul.f32 %v3600, 0.00390625
    %v3609 = vmul.f32 %v3603, 0.00390625
    %v3610 = vmul.f32 %v3458, %v3458
    %v3611 = vmul.f32 %v3460, %v3460
    %v3612 = vmul.f32 %v3464, %v3464
    %v3613 = vmul.f32 %v3466, %v3466
    %v3614 = vmul.f32 %v3470, %v3470
    %v3615 = vmul.f32 %v3472, %v3472
    %v3616 = vmul.f32 %v3476, %v3476
    %v3617 = vmul.f32 %v3478, %v3478
    %v3618 = vpack.c.bf16 %v3612, %v3610
    %v3619 = vpack.c.bf16 %v3613, %v3611
    %v3620 = vpack.c.bf16 %v3616, %v3614
    %v3621 = vpack.c.bf16 %v3617, %v3615
    %v3622 = vunpack.c.l.bf16 %v3618
    %v3623 = vunpack.c.l.bf16 %v3619
    %v3624 = vunpack.c.h.bf16 %v3618
    %v3625 = vunpack.c.h.bf16 %v3619
    %v3626 = vunpack.c.l.bf16 %v3620
    %v3627 = vunpack.c.l.bf16 %v3621
    %v3628 = vunpack.c.h.bf16 %v3620
    %v3629 = vunpack.c.h.bf16 %v3621
    %v3630 = vsub.f32 %v3610, %v3622
    %v3631 = vsub.f32 %v3611, %v3623
    %v3632 = vsub.f32 %v3612, %v3624
    %v3633 = vsub.f32 %v3613, %v3625
    %v3634 = vsub.f32 %v3614, %v3626
    %v3635 = vsub.f32 %v3615, %v3627
    %v3636 = vsub.f32 %v3616, %v3628
    %v3637 = vsub.f32 %v3617, %v3629
    %v3638 = vpack.c.bf16 %v3632, %v3630
    %v3639 = vpack.c.bf16 %v3633, %v3631
    %v3640 = vpack.c.bf16 %v3636, %v3634
    %v3641 = vpack.c.bf16 %v3637, %v3635
    %3642 = vmatprep.subr.bf16.mxu0 0
    %3643 = vmatpush1.bf16.msra.mxu0 1065369472
    %3644 = vmatprep.subr.bf16.mxu0 0
    %3645 = vmatpush1.bf16.msra.mxu0 1065369472
    %3646 = vmatprep.subr.bf16.mxu0 0
    %3647 = vmatpush1.bf16.msra.mxu0 1065369472
    %3648 = vmatprep.subr.bf16.mxu0 0
    %3649 = vmatpush1.bf16.msra.mxu0 1065369472
    %3650 = vmatprep.subr.bf16.mxu0 0
    %3651 = vmatpush1.bf16.msra.mxu0 1065369472
    %3652 = vmatprep.subr.bf16.mxu0 0
    %3653 = vmatpush1.bf16.msra.mxu0 1065369472
    %3654 = vmatprep.subr.bf16.mxu0 0
    %3655 = vmatpush1.bf16.msra.mxu0 1065369472
    %3656 = vmatprep.subr.bf16.mxu0 0
    %3657 = vmatpush1.bf16.msra.mxu0 1065369472
    %3658 = vmatprep.subr.bf16.mxu0 0
    %3659 = vmatpush1.bf16.msra.mxu0 1065369472
    %3660 = vmatprep.subr.bf16.mxu0 0
    %3661 = vmatpush1.bf16.msra.mxu0 1065369472
    %3662 = vmatprep.subr.bf16.mxu0 0
    %3663 = vmatpush1.bf16.msra.mxu0 1065369472
    %3664 = vmatprep.subr.bf16.mxu0 0
    %3665 = vmatpush1.bf16.msra.mxu0 1065369472
    %3666 = vmatprep.subr.bf16.mxu0 0
    %3667 = vmatpush1.bf16.msra.mxu0 1065369472
    %3668 = vmatprep.subr.bf16.mxu0 0
    %3669 = vmatpush1.bf16.msra.mxu0 1065369472
    %3670 = vmatprep.subr.bf16.mxu0 0
    %3671 = vmatpush1.bf16.msra.mxu0 1065369472
    %3672 = vmatprep.subr.bf16.mxu0 0
    %3673 = vmatpush1.bf16.msra.mxu0 1065369472
    %3674 = vmatprep.mubr.bf16.mxu0 %v3639
    %3675 = vmatmul.mubr.bf16.gmra.mrb[0].mxu0 %v3638
    %v3676 = vpop.f32.mrb[0].mxu0
    %v3677 = vadd.f32 0.0, %v3676
    %v3678 = vpop.f32.mrb[0].mxu0
    %v3679 = vpop.f32.mrb[0].mxu0
    %v3680 = vadd.f32 0.0, %v3679
    %v3681 = vpop.f32.mrb[0].mxu0
    %3682 = vmatprep.mubr.bf16.mxu0 %v3641
    %3683 = vmatmul.mubr.bf16.gmra.mrb[0].mxu0 %v3640
    %v3684 = vpop.f32.mrb[0].mxu0
    %v3685 = vadd.f32 0.0, %v3684
    %v3686 = vpop.f32.mrb[0].mxu0
    %v3687 = vpop.f32.mrb[0].mxu0
    %v3688 = vadd.f32 0.0, %v3687
    %v3689 = vpop.f32.mrb[0].mxu0
    %3690 = vdwg.mxu0
    %3691 = vmatprep.subr.bf16.mxu0 0
    %3692 = vmatpush1.bf16.msra.mxu0 1065369472
    %3693 = vmatprep.subr.bf16.mxu0 0
    %3694 = vmatpush1.bf16.msra.mxu0 1065369472
    %3695 = vmatprep.subr.bf16.mxu0 0
    %3696 = vmatpush1.bf16.msra.mxu0 1065369472
    %3697 = vmatprep.subr.bf16.mxu0 0
    %3698 = vmatpush1.bf16.msra.mxu0 1065369472
    %3699 = vmatprep.subr.bf16.mxu0 0
    %3700 = vmatpush1.bf16.msra.mxu0 1065369472
    %3701 = vmatprep.subr.bf16.mxu0 0
    %3702 = vmatpush1.bf16.msra.mxu0 1065369472
    %3703 = vmatprep.subr.bf16.mxu0 0
    %3704 = vmatpush1.bf16.msra.mxu0 1065369472
    %3705 = vmatprep.subr.bf16.mxu0 0
    %3706 = vmatpush1.bf16.msra.mxu0 1065369472
    %3707 = vmatprep.subr.bf16.mxu0 0
    %3708 = vmatpush1.bf16.msra.mxu0 1065369472
    %3709 = vmatprep.subr.bf16.mxu0 0
    %3710 = vmatpush1.bf16.msra.mxu0 1065369472
    %3711 = vmatprep.subr.bf16.mxu0 0
    %3712 = vmatpush1.bf16.msra.mxu0 1065369472
    %3713 = vmatprep.subr.bf16.mxu0 0
    %3714 = vmatpush1.bf16.msra.mxu0 1065369472
    %3715 = vmatprep.subr.bf16.mxu0 0
    %3716 = vmatpush1.bf16.msra.mxu0 1065369472
    %3717 = vmatprep.subr.bf16.mxu0 0
    %3718 = vmatpush1.bf16.msra.mxu0 1065369472
    %3719 = vmatprep.subr.bf16.mxu0 0
    %3720 = vmatpush1.bf16.msra.mxu0 1065369472
    %3721 = vmatprep.subr.bf16.mxu0 0
    %3722 = vmatpush1.bf16.msra.mxu0 1065369472
    %3723 = vmatprep.mubr.bf16.mxu0 %v3619
    %3724 = vmatmul.mubr.bf16.gmra.mrb[0].mxu0 %v3618
    %v3725 = vpop.f32.mrb[0].mxu0
    %v3726 = vadd.f32 %v3677, %v3725
    %v3727 = vpop.f32.mrb[0].mxu0
    %v3728 = vpop.f32.mrb[0].mxu0
    %v3729 = vadd.f32 %v3680, %v3728
    %v3730 = vpop.f32.mrb[0].mxu0
    %3731 = vmatprep.mubr.bf16.mxu0 %v3621
    %3732 = vmatmul.mubr.bf16.gmra.mrb[0].mxu0 %v3620
    %v3733 = vpop.f32.mrb[0].mxu0
    %v3734 = vadd.f32 %v3685, %v3733
    %v3735 = vpop.f32.mrb[0].mxu0
    %v3736 = vpop.f32.mrb[0].mxu0
    %v3737 = vadd.f32 %v3688, %v3736
    %v3738 = vpop.f32.mrb[0].mxu0
    %3739 = vdwg.mxu0
    %v3740 = vmul.f32 %v3726, 0.00390625
    %v3741 = vmul.f32 %v3729, 0.00390625
    %v3742 = vmul.f32 %v3734, 0.00390625
    %v3743 = vmul.f32 %v3737, 0.00390625
    %v3744 = vmul.f32 %v3606, %v3606
    %v3745 = vmul.f32 %v3607, %v3607
    %v3746 = vmul.f32 %v3608, %v3608
    %v3747 = vmul.f32 %v3609, %v3609
    %v3748 = vsub.f32 %v3740, %v3744
    %v3749 = vsub.f32 %v3741, %v3745
    %v3750 = vsub.f32 %v3742, %v3746
    %v3751 = vsub.f32 %v3743, %v3747
    %v3752 = vmax.f32 %v3748, 0.0
    %v3753 = vmax.f32 %v3749, 0.0
    %v3754 = vmax.f32 %v3750, 0.0
    %v3755 = vmax.f32 %v3751, 0.0
    %v3756 = vld [vmem:[%s7] sm:$0xff]
    %v3757 = vld [vmem:[%s7 + $0x8] sm:$0xff]
    %v3758 = vld [vmem:[%s7 + $0x10] sm:$0xff]
    %v3759 = vld [vmem:[%s7 + $0x18] sm:$0xff]
    %v3760 = vadd.f32 %v3752, 1e-05
    %v3761 = vadd.f32 %v3753, 1e-05
    %v3762 = vadd.f32 %v3754, 1e-05
    %v3763 = vadd.f32 %v3755, 1e-05
    %v3764 = vrsqrt.pop %v3760
    %v3765 = vrsqrt.pop %v3761
    %v3766 = vrsqrt.pop %v3762
    %v3767 = vrsqrt.pop %v3763
    %v3768 = vmul.f32 %v3756, %v3764
    %v3769 = vmul.f32 %v3757, %v3765
    %v3770 = vmul.f32 %v3758, %v3766
    %v3771 = vmul.f32 %v3759, %v3767
    %v3772 = vld [vmem:[%s8] sm:$0xff]
    %v3773 = vld [vmem:[%s8 + $0x8] sm:$0xff]
    %v3774 = vld [vmem:[%s8 + $0x10] sm:$0xff]
    %v3775 = vld [vmem:[%s8 + $0x18] sm:$0xff]
    %v3776 = vmul.f32 %v3606, %v3768
    %v3777 = vmul.f32 %v3607, %v3769
    %v3778 = vmul.f32 %v3608, %v3770
    %v3779 = vmul.f32 %v3609, %v3771
    %v3780 = vsub.f32 %v3772, %v3776
    %v3781 = vsub.f32 %v3773, %v3777
    %v3782 = vsub.f32 %v3774, %v3778
    %v3783 = vsub.f32 %v3775, %v3779
    %3785 = vset.pattern.permute.xlu0 0
    %3786 = vperm.xlu0 %3785, %v3768
    %v3787 = vpop.permute.xlu0 %3786
    %3790 = vset.pattern.permute.xlu0 0
    %3791 = vperm.xlu0 %3790, %v3769
    %v3792 = vpop.permute.xlu0 %3791
    %3795 = vset.pattern.permute.xlu0 0
    %3796 = vperm.xlu0 %3795, %v3770
    %v3797 = vpop.permute.xlu0 %3796
    %3800 = vset.pattern.permute.xlu0 0
    %3801 = vperm.xlu0 %3800, %v3771
    %v3802 = vpop.permute.xlu0 %3801
    %v3804 = vmul.f32 %v3458, %v3787
    %v3805 = vmul.f32 %v3460, %v3787
    %v3806 = vmul.f32 %v3464, %v3792
    %v3807 = vmul.f32 %v3466, %v3792
    %v3808 = vmul.f32 %v3470, %v3797
    %v3809 = vmul.f32 %v3472, %v3797
    %v3810 = vmul.f32 %v3476, %v3802
    %v3811 = vmul.f32 %v3478, %v3802
    %3813 = vset.pattern.permute.xlu0 0
    %3814 = vperm.xlu0 %3813, %v3780
    %v3815 = vpop.permute.xlu0 %3814
    %3818 = vset.pattern.permute.xlu0 0
    %3819 = vperm.xlu0 %3818, %v3781
    %v3820 = vpop.permute.xlu0 %3819
    %3823 = vset.pattern.permute.xlu0 0
    %3824 = vperm.xlu0 %3823, %v3782
    %v3825 = vpop.permute.xlu0 %3824
    %3828 = vset.pattern.permute.xlu0 0
    %3829 = vperm.xlu0 %3828, %v3783
    %v3830 = vpop.permute.xlu0 %3829
    %v3832 = vadd.f32 %v3804, %v3815
    %v3833 = vadd.f32 %v3805, %v3815
    %v3834 = vadd.f32 %v3806, %v3820
    %v3835 = vadd.f32 %v3807, %v3820
    %v3836 = vadd.f32 %v3808, %v3825
    %v3837 = vadd.f32 %v3809, %v3825
    %v3838 = vadd.f32 %v3810, %v3830
    %v3839 = vadd.f32 %v3811, %v3830
    %v3840 = vmax.f32 %v3832, 0.0
    %v3841 = vmax.f32 %v3833, 0.0
    %v3842 = vmax.f32 %v3834, 0.0
    %v3843 = vmax.f32 %v3835, 0.0
    %v3844 = vmax.f32 %v3836, 0.0
    %v3845 = vmax.f32 %v3837, 0.0
    %v3846 = vmax.f32 %v3838, 0.0
    %v3847 = vmax.f32 %v3839, 0.0
    %3848 = vrot.lane.b32.xlu0 %v3840, 127
    %v3849 = vpop.permute.xlu0 %3848
    %3850 = vrot.lane.b32.xlu0 %v3841, 127
    %v3851 = vpop.permute.xlu0 %3850
    %v3852 = vsel %vm591, %v3849, %v3851
    %v3853 = vsel %vm591, %v3851, %v3849
    %v3854 = vsel %vm596, %v3852, 0.0
    %v3855 = vsel %vm597, %v3853, 0.0
    %3856 = vrot.lane.b32.xlu0 %v3840, 1
    %v3857 = vpop.permute.xlu0 %3856
    %3858 = vrot.lane.b32.xlu0 %v3841, 1
    %v3859 = vpop.permute.xlu0 %3858
    %v3860 = vsel %vm604, %v3857, %v3859
    %v3861 = vsel %vm604, %v3859, %v3857
    %v3862 = vsel %vm609, %v3861, 0.0
    %v3863 = vsel %vm610, %v3860, 0.0
    %v3864 = vsel %vm614, %v3854, %v3862
    %v3865 = vsel %vm614, %v3855, %v3863
    %v3867 = vsel %vm617, %v3480, 0
    %v3870 = vsel %vm617, %v3481, 0
    %v3873 = vsel %vm617, %v3482, 0
    %v3876 = vsel %vm617, %v3483, 0
    %3878 = vmatprep.subr.mxu0 %v3865
    %3879 = vmatpush1.msra.mxu0 %v3864
    %3880 = vmatprep.subr.mxu0 %v3843
    %3881 = vmatpush1.msra.mxu0 %v3842
    %3882 = vmatprep.subr.mxu0 %v3845
    %3883 = vmatpush1.msra.mxu0 %v3844
    %3884 = vmatprep.subr.mxu0 %v3847
    %3885 = vmatpush1.msra.mxu0 %v3846
    %3886 = vmatprep.subr.mxu0 0.0
    %3887 = vmatpush1.msra.mxu0 0.0
    %3888 = vmatprep.subr.mxu0 0.0
    %3889 = vmatpush1.msra.mxu0 0.0
    %3890 = vmatprep.subr.mxu0 0.0
    %3891 = vmatpush1.msra.mxu0 0.0
    %3892 = vmatprep.subr.mxu0 0.0
    %3893 = vmatpush1.msra.mxu0 0.0
    %3894 = vmatprep.subr.mxu0 0.0
    %3895 = vmatpush1.msra.mxu0 0.0
    %3896 = vmatprep.subr.mxu0 0.0
    %3897 = vmatpush1.msra.mxu0 0.0
    %3898 = vmatprep.subr.mxu0 0.0
    %3899 = vmatpush1.msra.mxu0 0.0
    %3900 = vmatprep.subr.mxu0 0.0
    %3901 = vmatpush1.msra.mxu0 0.0
    %3902 = vmatprep.subr.mxu0 0.0
    %3903 = vmatpush1.msra.mxu0 0.0
    %3904 = vmatprep.subr.mxu0 0.0
    %3905 = vmatpush1.msra.mxu0 0.0
    %3906 = vmatprep.subr.mxu0 0.0
    %3907 = vmatpush1.msra.mxu0 0.0
    %3908 = vmatprep.subr.mxu0 0.0
    %3909 = vmatpush1.msra.mxu0 0.0
    %3910 = vmatprep.subr.mxu0 0.0
    %3911 = vmatpush1.msra.mxu0 0.0
    %3912 = vmatprep.subr.mxu0 0.0
    %3913 = vmatpush1.msra.mxu0 0.0
    %3914 = vmatprep.subr.mxu0 0.0
    %3915 = vmatpush1.msra.mxu0 0.0
    %3916 = vmatprep.subr.mxu0 0.0
    %3917 = vmatpush1.msra.mxu0 0.0
    %3918 = vmatprep.subr.mxu0 0.0
    %3919 = vmatpush1.msra.mxu0 0.0
    %3920 = vmatprep.subr.mxu0 0.0
    %3921 = vmatpush1.msra.mxu0 0.0
    %3922 = vmatprep.subr.mxu0 0.0
    %3923 = vmatpush1.msra.mxu0 0.0
    %3924 = vmatprep.subr.mxu0 0.0
    %3925 = vmatpush1.msra.mxu0 0.0
    %3926 = vmatprep.subr.mxu0 0.0
    %3927 = vmatpush1.msra.mxu0 0.0
    %3928 = vmatprep.subr.mxu0 0.0
    %3929 = vmatpush1.msra.mxu0 0.0
    %3930 = vmatprep.subr.mxu0 0.0
    %3931 = vmatpush1.msra.mxu0 0.0
    %3932 = vmatprep.subr.mxu0 0.0
    %3933 = vmatpush1.msra.mxu0 0.0
    %3934 = vmatprep.subr.mxu0 0.0
    %3935 = vmatpush1.msra.mxu0 0.0
    %3936 = vmatprep.subr.mxu0 0.0
    %3937 = vmatpush1.msra.mxu0 0.0
    %3938 = vmatprep.subr.mxu0 0.0
    %3939 = vmatpush1.msra.mxu0 0.0
    %3940 = vmatprep.subr.mxu0 0.0
    %3941 = vmatpush1.msra.mxu0 0.0
    %3942 = vmatprep.mubr.f32.mxu0 0.0
    %3943 = vmatmul.mubr.f32.gmra.mrb[0].mxu0 %v3867
    %v3944 = vpop.f32.mrb[0].mxu0
    %v3945 = vadd.f32 0.0, %v3944
    %v3946 = vpop.f32.mrb[0].mxu0
    %v3947 = vadd.f32 0.0, %v3946
    %3948 = vmatprep.mubr.f32.mxu0 0.0
    %3949 = vmatmul.mubr.f32.gmra.mrb[0].mxu0 %v3870
    %v3950 = vpop.f32.mrb[0].mxu0
    %v3951 = vadd.f32 0.0, %v3950
    %v3952 = vpop.f32.mrb[0].mxu0
    %v3953 = vadd.f32 0.0, %v3952
    %3954 = vmatprep.mubr.f32.mxu0 0.0
    %3955 = vmatmul.mubr.f32.gmra.mrb[0].mxu0 %v3873
    %v3956 = vpop.f32.mrb[0].mxu0
    %v3957 = vadd.f32 0.0, %v3956
    %v3958 = vpop.f32.mrb[0].mxu0
    %v3959 = vadd.f32 0.0, %v3958
    %3960 = vmatprep.mubr.f32.mxu0 0.0
    %3961 = vmatmul.mubr.f32.gmra.mrb[0].mxu0 %v3876
    %v3962 = vpop.f32.mrb[0].mxu0
    %v3963 = vadd.f32 0.0, %v3962
    %v3964 = vpop.f32.mrb[0].mxu0
    %v3965 = vadd.f32 0.0, %v3964
    %3966 = vdwg.mxu0
    %v3967 = vpack.c.bf16 %v3951, %v3945
    %v3968 = vpack.c.bf16 %v3953, %v3947
    %v3969 = vpack.c.bf16 %v3963, %v3957
    %v3970 = vpack.c.bf16 %v3965, %v3959
    %v3971 = vunpack.c.l.bf16 %v3967
    %v3972 = vunpack.c.l.bf16 %v3968
    %v3973 = vunpack.c.h.bf16 %v3967
    %v3974 = vunpack.c.h.bf16 %v3968
    %v3975 = vunpack.c.l.bf16 %v3969
    %v3976 = vunpack.c.l.bf16 %v3970
    %v3977 = vunpack.c.h.bf16 %v3969
    %v3978 = vunpack.c.h.bf16 %v3970
    %v3979 = vsub.f32 %v3945, %v3971
    %v3980 = vsub.f32 %v3947, %v3972
    %v3981 = vsub.f32 %v3951, %v3973
    %v3982 = vsub.f32 %v3953, %v3974
    %v3983 = vsub.f32 %v3957, %v3975
    %v3984 = vsub.f32 %v3959, %v3976
    %v3985 = vsub.f32 %v3963, %v3977
    %v3986 = vsub.f32 %v3965, %v3978
    %v3987 = vpack.c.bf16 %v3981, %v3979
    %v3988 = vpack.c.bf16 %v3982, %v3980
    %v3989 = vpack.c.bf16 %v3985, %v3983
    %v3990 = vpack.c.bf16 %v3986, %v3984
    %3991 = vmatprep.subr.bf16.mxu0 0
    %3992 = vmatpush1.bf16.msra.mxu0 1065369472
    %3993 = vmatprep.subr.bf16.mxu0 0
    %3994 = vmatpush1.bf16.msra.mxu0 1065369472
    %3995 = vmatprep.subr.bf16.mxu0 0
    %3996 = vmatpush1.bf16.msra.mxu0 1065369472
    %3997 = vmatprep.subr.bf16.mxu0 0
    %3998 = vmatpush1.bf16.msra.mxu0 1065369472
    %3999 = vmatprep.subr.bf16.mxu0 0
    %4000 = vmatpush1.bf16.msra.mxu0 1065369472
    %4001 = vmatprep.subr.bf16.mxu0 0
    %4002 = vmatpush1.bf16.msra.mxu0 1065369472
    %4003 = vmatprep.subr.bf16.mxu0 0
    %4004 = vmatpush1.bf16.msra.mxu0 1065369472
    %4005 = vmatprep.subr.bf16.mxu0 0
    %4006 = vmatpush1.bf16.msra.mxu0 1065369472
    %4007 = vmatprep.subr.bf16.mxu0 0
    %4008 = vmatpush1.bf16.msra.mxu0 1065369472
    %4009 = vmatprep.subr.bf16.mxu0 0
    %4010 = vmatpush1.bf16.msra.mxu0 1065369472
    %4011 = vmatprep.subr.bf16.mxu0 0
    %4012 = vmatpush1.bf16.msra.mxu0 1065369472
    %4013 = vmatprep.subr.bf16.mxu0 0
    %4014 = vmatpush1.bf16.msra.mxu0 1065369472
    %4015 = vmatprep.subr.bf16.mxu0 0
    %4016 = vmatpush1.bf16.msra.mxu0 1065369472
    %4017 = vmatprep.subr.bf16.mxu0 0
    %4018 = vmatpush1.bf16.msra.mxu0 1065369472
    %4019 = vmatprep.subr.bf16.mxu0 0
    %4020 = vmatpush1.bf16.msra.mxu0 1065369472
    %4021 = vmatprep.subr.bf16.mxu0 0
    %4022 = vmatpush1.bf16.msra.mxu0 1065369472
    %4023 = vmatprep.mubr.bf16.mxu0 %v3988
    %4024 = vmatmul.mubr.bf16.gmra.mrb[0].mxu0 %v3987
    %v4025 = vpop.f32.mrb[0].mxu0
    %v4026 = vadd.f32 0.0, %v4025
    %v4027 = vpop.f32.mrb[0].mxu0
    %v4028 = vpop.f32.mrb[0].mxu0
    %v4029 = vadd.f32 0.0, %v4028
    %v4030 = vpop.f32.mrb[0].mxu0
    %4031 = vmatprep.mubr.bf16.mxu0 %v3990
    %4032 = vmatmul.mubr.bf16.gmra.mrb[0].mxu0 %v3989
    %v4033 = vpop.f32.mrb[0].mxu0
    %v4034 = vadd.f32 0.0, %v4033
    %v4035 = vpop.f32.mrb[0].mxu0
    %v4036 = vpop.f32.mrb[0].mxu0
    %v4037 = vadd.f32 0.0, %v4036
    %v4038 = vpop.f32.mrb[0].mxu0
    %4039 = vdwg.mxu0
    %4040 = vmatprep.subr.bf16.mxu0 0
    %4041 = vmatpush1.bf16.msra.mxu0 1065369472
    %4042 = vmatprep.subr.bf16.mxu0 0
    %4043 = vmatpush1.bf16.msra.mxu0 1065369472
    %4044 = vmatprep.subr.bf16.mxu0 0
    %4045 = vmatpush1.bf16.msra.mxu0 1065369472
    %4046 = vmatprep.subr.bf16.mxu0 0
    %4047 = vmatpush1.bf16.msra.mxu0 1065369472
    %4048 = vmatprep.subr.bf16.mxu0 0
    %4049 = vmatpush1.bf16.msra.mxu0 1065369472
    %4050 = vmatprep.subr.bf16.mxu0 0
    %4051 = vmatpush1.bf16.msra.mxu0 1065369472
    %4052 = vmatprep.subr.bf16.mxu0 0
    %4053 = vmatpush1.bf16.msra.mxu0 1065369472
    %4054 = vmatprep.subr.bf16.mxu0 0
    %4055 = vmatpush1.bf16.msra.mxu0 1065369472
    %4056 = vmatprep.subr.bf16.mxu0 0
    %4057 = vmatpush1.bf16.msra.mxu0 1065369472
    %4058 = vmatprep.subr.bf16.mxu0 0
    %4059 = vmatpush1.bf16.msra.mxu0 1065369472
    %4060 = vmatprep.subr.bf16.mxu0 0
    %4061 = vmatpush1.bf16.msra.mxu0 1065369472
    %4062 = vmatprep.subr.bf16.mxu0 0
    %4063 = vmatpush1.bf16.msra.mxu0 1065369472
    %4064 = vmatprep.subr.bf16.mxu0 0
    %4065 = vmatpush1.bf16.msra.mxu0 1065369472
    %4066 = vmatprep.subr.bf16.mxu0 0
    %4067 = vmatpush1.bf16.msra.mxu0 1065369472
    %4068 = vmatprep.subr.bf16.mxu0 0
    %4069 = vmatpush1.bf16.msra.mxu0 1065369472
    %4070 = vmatprep.subr.bf16.mxu0 0
    %4071 = vmatpush1.bf16.msra.mxu0 1065369472
    %4072 = vmatprep.mubr.bf16.mxu0 %v3968
    %4073 = vmatmul.mubr.bf16.gmra.mrb[0].mxu0 %v3967
    %v4074 = vpop.f32.mrb[0].mxu0
    %v4075 = vadd.f32 %v4026, %v4074
    %v4076 = vpop.f32.mrb[0].mxu0
    %v4077 = vpop.f32.mrb[0].mxu0
    %v4078 = vadd.f32 %v4029, %v4077
    %v4079 = vpop.f32.mrb[0].mxu0
    %4080 = vmatprep.mubr.bf16.mxu0 %v3970
    %4081 = vmatmul.mubr.bf16.gmra.mrb[0].mxu0 %v3969
    %v4082 = vpop.f32.mrb[0].mxu0
    %v4083 = vadd.f32 %v4034, %v4082
    %v4084 = vpop.f32.mrb[0].mxu0
    %v4085 = vpop.f32.mrb[0].mxu0
    %v4086 = vadd.f32 %v4037, %v4085
    %v4087 = vpop.f32.mrb[0].mxu0
    %4088 = vdwg.mxu0
    %v4089 = vmul.f32 %v4075, 0.00390625
    %v4090 = vmul.f32 %v4078, 0.00390625
    %v4091 = vmul.f32 %v4083, 0.00390625
    %v4092 = vmul.f32 %v4086, 0.00390625
    %v4093 = vmul.f32 %v3945, %v3945
    %v4094 = vmul.f32 %v3947, %v3947
    %v4095 = vmul.f32 %v3951, %v3951
    %v4096 = vmul.f32 %v3953, %v3953
    %v4097 = vmul.f32 %v3957, %v3957
    %v4098 = vmul.f32 %v3959, %v3959
    %v4099 = vmul.f32 %v3963, %v3963
    %v4100 = vmul.f32 %v3965, %v3965
    %v4101 = vpack.c.bf16 %v4095, %v4093
    %v4102 = vpack.c.bf16 %v4096, %v4094
    %v4103 = vpack.c.bf16 %v4099, %v4097
    %v4104 = vpack.c.bf16 %v4100, %v4098
    %v4105 = vunpack.c.l.bf16 %v4101
    %v4106 = vunpack.c.l.bf16 %v4102
    %v4107 = vunpack.c.h.bf16 %v4101
    %v4108 = vunpack.c.h.bf16 %v4102
    %v4109 = vunpack.c.l.bf16 %v4103
    %v4110 = vunpack.c.l.bf16 %v4104
    %v4111 = vunpack.c.h.bf16 %v4103
    %v4112 = vunpack.c.h.bf16 %v4104
    %v4113 = vsub.f32 %v4093, %v4105
    %v4114 = vsub.f32 %v4094, %v4106
    %v4115 = vsub.f32 %v4095, %v4107
    %v4116 = vsub.f32 %v4096, %v4108
    %v4117 = vsub.f32 %v4097, %v4109
    %v4118 = vsub.f32 %v4098, %v4110
    %v4119 = vsub.f32 %v4099, %v4111
    %v4120 = vsub.f32 %v4100, %v4112
    %v4121 = vpack.c.bf16 %v4115, %v4113
    %v4122 = vpack.c.bf16 %v4116, %v4114
    %v4123 = vpack.c.bf16 %v4119, %v4117
    %v4124 = vpack.c.bf16 %v4120, %v4118
    %4125 = vmatprep.subr.bf16.mxu0 0
    %4126 = vmatpush1.bf16.msra.mxu0 1065369472
    %4127 = vmatprep.subr.bf16.mxu0 0
    %4128 = vmatpush1.bf16.msra.mxu0 1065369472
    %4129 = vmatprep.subr.bf16.mxu0 0
    %4130 = vmatpush1.bf16.msra.mxu0 1065369472
    %4131 = vmatprep.subr.bf16.mxu0 0
    %4132 = vmatpush1.bf16.msra.mxu0 1065369472
    %4133 = vmatprep.subr.bf16.mxu0 0
    %4134 = vmatpush1.bf16.msra.mxu0 1065369472
    %4135 = vmatprep.subr.bf16.mxu0 0
    %4136 = vmatpush1.bf16.msra.mxu0 1065369472
    %4137 = vmatprep.subr.bf16.mxu0 0
    %4138 = vmatpush1.bf16.msra.mxu0 1065369472
    %4139 = vmatprep.subr.bf16.mxu0 0
    %4140 = vmatpush1.bf16.msra.mxu0 1065369472
    %4141 = vmatprep.subr.bf16.mxu0 0
    %4142 = vmatpush1.bf16.msra.mxu0 1065369472
    %4143 = vmatprep.subr.bf16.mxu0 0
    %4144 = vmatpush1.bf16.msra.mxu0 1065369472
    %4145 = vmatprep.subr.bf16.mxu0 0
    %4146 = vmatpush1.bf16.msra.mxu0 1065369472
    %4147 = vmatprep.subr.bf16.mxu0 0
    %4148 = vmatpush1.bf16.msra.mxu0 1065369472
    %4149 = vmatprep.subr.bf16.mxu0 0
    %4150 = vmatpush1.bf16.msra.mxu0 1065369472
    %4151 = vmatprep.subr.bf16.mxu0 0
    %4152 = vmatpush1.bf16.msra.mxu0 1065369472
    %4153 = vmatprep.subr.bf16.mxu0 0
    %4154 = vmatpush1.bf16.msra.mxu0 1065369472
    %4155 = vmatprep.subr.bf16.mxu0 0
    %4156 = vmatpush1.bf16.msra.mxu0 1065369472
    %4157 = vmatprep.mubr.bf16.mxu0 %v4122
    %4158 = vmatmul.mubr.bf16.gmra.mrb[0].mxu0 %v4121
    %v4159 = vpop.f32.mrb[0].mxu0
    %v4160 = vadd.f32 0.0, %v4159
    %v4161 = vpop.f32.mrb[0].mxu0
    %v4162 = vpop.f32.mrb[0].mxu0
    %v4163 = vadd.f32 0.0, %v4162
    %v4164 = vpop.f32.mrb[0].mxu0
    %4165 = vmatprep.mubr.bf16.mxu0 %v4124
    %4166 = vmatmul.mubr.bf16.gmra.mrb[0].mxu0 %v4123
    %v4167 = vpop.f32.mrb[0].mxu0
    %v4168 = vadd.f32 0.0, %v4167
    %v4169 = vpop.f32.mrb[0].mxu0
    %v4170 = vpop.f32.mrb[0].mxu0
    %v4171 = vadd.f32 0.0, %v4170
    %v4172 = vpop.f32.mrb[0].mxu0
    %4173 = vdwg.mxu0
    %4174 = vmatprep.subr.bf16.mxu0 0
    %4175 = vmatpush1.bf16.msra.mxu0 1065369472
    %4176 = vmatprep.subr.bf16.mxu0 0
    %4177 = vmatpush1.bf16.msra.mxu0 1065369472
    %4178 = vmatprep.subr.bf16.mxu0 0
    %4179 = vmatpush1.bf16.msra.mxu0 1065369472
    %4180 = vmatprep.subr.bf16.mxu0 0
    %4181 = vmatpush1.bf16.msra.mxu0 1065369472
    %4182 = vmatprep.subr.bf16.mxu0 0
    %4183 = vmatpush1.bf16.msra.mxu0 1065369472
    %4184 = vmatprep.subr.bf16.mxu0 0
    %4185 = vmatpush1.bf16.msra.mxu0 1065369472
    %4186 = vmatprep.subr.bf16.mxu0 0
    %4187 = vmatpush1.bf16.msra.mxu0 1065369472
    %4188 = vmatprep.subr.bf16.mxu0 0
    %4189 = vmatpush1.bf16.msra.mxu0 1065369472
    %4190 = vmatprep.subr.bf16.mxu0 0
    %4191 = vmatpush1.bf16.msra.mxu0 1065369472
    %4192 = vmatprep.subr.bf16.mxu0 0
    %4193 = vmatpush1.bf16.msra.mxu0 1065369472
    %4194 = vmatprep.subr.bf16.mxu0 0
    %4195 = vmatpush1.bf16.msra.mxu0 1065369472
    %4196 = vmatprep.subr.bf16.mxu0 0
    %4197 = vmatpush1.bf16.msra.mxu0 1065369472
    %4198 = vmatprep.subr.bf16.mxu0 0
    %4199 = vmatpush1.bf16.msra.mxu0 1065369472
    %4200 = vmatprep.subr.bf16.mxu0 0
    %4201 = vmatpush1.bf16.msra.mxu0 1065369472
    %4202 = vmatprep.subr.bf16.mxu0 0
    %4203 = vmatpush1.bf16.msra.mxu0 1065369472
    %4204 = vmatprep.subr.bf16.mxu0 0
    %4205 = vmatpush1.bf16.msra.mxu0 1065369472
    %4206 = vmatprep.mubr.bf16.mxu0 %v4102
    %4207 = vmatmul.mubr.bf16.gmra.mrb[0].mxu0 %v4101
    %v4208 = vpop.f32.mrb[0].mxu0
    %v4209 = vadd.f32 %v4160, %v4208
    %v4210 = vpop.f32.mrb[0].mxu0
    %v4211 = vpop.f32.mrb[0].mxu0
    %v4212 = vadd.f32 %v4163, %v4211
    %v4213 = vpop.f32.mrb[0].mxu0
    %4214 = vmatprep.mubr.bf16.mxu0 %v4104
    %4215 = vmatmul.mubr.bf16.gmra.mrb[0].mxu0 %v4103
    %v4216 = vpop.f32.mrb[0].mxu0
    %v4217 = vadd.f32 %v4168, %v4216
    %v4218 = vpop.f32.mrb[0].mxu0
    %v4219 = vpop.f32.mrb[0].mxu0
    %v4220 = vadd.f32 %v4171, %v4219
    %v4221 = vpop.f32.mrb[0].mxu0
    %4222 = vdwg.mxu0
    %v4223 = vmul.f32 %v4209, 0.00390625
    %v4224 = vmul.f32 %v4212, 0.00390625
    %v4225 = vmul.f32 %v4217, 0.00390625
    %v4226 = vmul.f32 %v4220, 0.00390625
    %v4227 = vmul.f32 %v4089, %v4089
    %v4228 = vmul.f32 %v4090, %v4090
    %v4229 = vmul.f32 %v4091, %v4091
    %v4230 = vmul.f32 %v4092, %v4092
    %v4231 = vsub.f32 %v4223, %v4227
    %v4232 = vsub.f32 %v4224, %v4228
    %v4233 = vsub.f32 %v4225, %v4229
    %v4234 = vsub.f32 %v4226, %v4230
    %v4235 = vmax.f32 %v4231, 0.0
    %v4236 = vmax.f32 %v4232, 0.0
    %v4237 = vmax.f32 %v4233, 0.0
    %v4238 = vmax.f32 %v4234, 0.0
    %s4239 = scalar_lea.vmem %s7, 32
    %v4240 = vld [vmem:[%s4239] sm:$0xff]
    %v4241 = vld [vmem:[%s4239 + $0x8] sm:$0xff]
    %v4242 = vld [vmem:[%s4239 + $0x10] sm:$0xff]
    %v4243 = vld [vmem:[%s4239 + $0x18] sm:$0xff]
    %v4244 = vadd.f32 %v4235, 1e-05
    %v4245 = vadd.f32 %v4236, 1e-05
    %v4246 = vadd.f32 %v4237, 1e-05
    %v4247 = vadd.f32 %v4238, 1e-05
    %v4248 = vrsqrt.pop %v4244
    %v4249 = vrsqrt.pop %v4245
    %v4250 = vrsqrt.pop %v4246
    %v4251 = vrsqrt.pop %v4247
    %v4252 = vmul.f32 %v4240, %v4248
    %v4253 = vmul.f32 %v4241, %v4249
    %v4254 = vmul.f32 %v4242, %v4250
    %v4255 = vmul.f32 %v4243, %v4251
    %s4256 = scalar_lea.vmem %s8, 32
    %v4257 = vld [vmem:[%s4256] sm:$0xff]
    %v4258 = vld [vmem:[%s4256 + $0x8] sm:$0xff]
    %v4259 = vld [vmem:[%s4256 + $0x10] sm:$0xff]
    %v4260 = vld [vmem:[%s4256 + $0x18] sm:$0xff]
    %v4261 = vmul.f32 %v4089, %v4252
    %v4262 = vmul.f32 %v4090, %v4253
    %v4263 = vmul.f32 %v4091, %v4254
    %v4264 = vmul.f32 %v4092, %v4255
    %v4265 = vsub.f32 %v4257, %v4261
    %v4266 = vsub.f32 %v4258, %v4262
    %v4267 = vsub.f32 %v4259, %v4263
    %v4268 = vsub.f32 %v4260, %v4264
    %4270 = vset.pattern.permute.xlu0 0
    %4271 = vperm.xlu0 %4270, %v4252
    %v4272 = vpop.permute.xlu0 %4271
    %4275 = vset.pattern.permute.xlu0 0
    %4276 = vperm.xlu0 %4275, %v4253
    %v4277 = vpop.permute.xlu0 %4276
    %4280 = vset.pattern.permute.xlu0 0
    %4281 = vperm.xlu0 %4280, %v4254
    %v4282 = vpop.permute.xlu0 %4281
    %4285 = vset.pattern.permute.xlu0 0
    %4286 = vperm.xlu0 %4285, %v4255
    %v4287 = vpop.permute.xlu0 %4286
    %v4289 = vmul.f32 %v3945, %v4272
    %v4290 = vmul.f32 %v3947, %v4272
    %v4291 = vmul.f32 %v3951, %v4277
    %v4292 = vmul.f32 %v3953, %v4277
    %v4293 = vmul.f32 %v3957, %v4282
    %v4294 = vmul.f32 %v3959, %v4282
    %v4295 = vmul.f32 %v3963, %v4287
    %v4296 = vmul.f32 %v3965, %v4287
    %4298 = vset.pattern.permute.xlu0 0
    %4299 = vperm.xlu0 %4298, %v4265
    %v4300 = vpop.permute.xlu0 %4299
    %4303 = vset.pattern.permute.xlu0 0
    %4304 = vperm.xlu0 %4303, %v4266
    %v4305 = vpop.permute.xlu0 %4304
    %4308 = vset.pattern.permute.xlu0 0
    %4309 = vperm.xlu0 %4308, %v4267
    %v4310 = vpop.permute.xlu0 %4309
    %4313 = vset.pattern.permute.xlu0 0
    %4314 = vperm.xlu0 %4313, %v4268
    %v4315 = vpop.permute.xlu0 %4314
    %v4317 = vadd.f32 %v4289, %v4300
    %v4318 = vadd.f32 %v4290, %v4300
    %v4319 = vadd.f32 %v4291, %v4305
    %v4320 = vadd.f32 %v4292, %v4305
    %v4321 = vadd.f32 %v4293, %v4310
    %v4322 = vadd.f32 %v4294, %v4310
    %v4323 = vadd.f32 %v4295, %v4315
    %v4324 = vadd.f32 %v4296, %v4315
    %v4325 = vmax.f32 %v4317, 0.0
    %v4326 = vmax.f32 %v4318, 0.0
    %v4327 = vmax.f32 %v4319, 0.0
    %v4328 = vmax.f32 %v4320, 0.0
    %v4329 = vmax.f32 %v4321, 0.0
    %v4330 = vmax.f32 %v4322, 0.0
    %v4331 = vmax.f32 %v4323, 0.0
    %v4332 = vmax.f32 %v4324, 0.0
    %s4333 = scalar_lea.vmem %s6, 32
    %v4334 = vld [vmem:[%s4333] sm:$0xff]
    %v4335 = vld [vmem:[%s4333 + $0x8] sm:$0xff]
    %v4336 = vld [vmem:[%s4333 + $0x10] sm:$0xff]
    %v4337 = vld [vmem:[%s4333 + $0x18] sm:$0xff]
    %v4339 = vsel %vm617, %v4334, 0
    %v4342 = vsel %vm617, %v4335, 0
    %v4345 = vsel %vm617, %v4336, 0
    %v4348 = vsel %vm617, %v4337, 0
    %4350 = vmatprep.subr.mxu0 %v4326
    %4351 = vmatpush1.msra.mxu0 %v4325
    %4352 = vmatprep.subr.mxu0 %v4328
    %4353 = vmatpush1.msra.mxu0 %v4327
    %4354 = vmatprep.subr.mxu0 %v4330
    %4355 = vmatpush1.msra.mxu0 %v4329
    %4356 = vmatprep.subr.mxu0 %v4332
    %4357 = vmatpush1.msra.mxu0 %v4331
    %4358 = vmatprep.subr.mxu0 0.0
    %4359 = vmatpush1.msra.mxu0 0.0
    %4360 = vmatprep.subr.mxu0 0.0
    %4361 = vmatpush1.msra.mxu0 0.0
    %4362 = vmatprep.subr.mxu0 0.0
    %4363 = vmatpush1.msra.mxu0 0.0
    %4364 = vmatprep.subr.mxu0 0.0
    %4365 = vmatpush1.msra.mxu0 0.0
    %4366 = vmatprep.subr.mxu0 0.0
    %4367 = vmatpush1.msra.mxu0 0.0
    %4368 = vmatprep.subr.mxu0 0.0
    %4369 = vmatpush1.msra.mxu0 0.0
    %4370 = vmatprep.subr.mxu0 0.0
    %4371 = vmatpush1.msra.mxu0 0.0
    %4372 = vmatprep.subr.mxu0 0.0
    %4373 = vmatpush1.msra.mxu0 0.0
    %4374 = vmatprep.subr.mxu0 0.0
    %4375 = vmatpush1.msra.mxu0 0.0
    %4376 = vmatprep.subr.mxu0 0.0
    %4377 = vmatpush1.msra.mxu0 0.0
    %4378 = vmatprep.subr.mxu0 0.0
    %4379 = vmatpush1.msra.mxu0 0.0
    %4380 = vmatprep.subr.mxu0 0.0
    %4381 = vmatpush1.msra.mxu0 0.0
    %4382 = vmatprep.subr.mxu0 0.0
    %4383 = vmatpush1.msra.mxu0 0.0
    %4384 = vmatprep.subr.mxu0 0.0
    %4385 = vmatpush1.msra.mxu0 0.0
    %4386 = vmatprep.subr.mxu0 0.0
    %4387 = vmatpush1.msra.mxu0 0.0
    %4388 = vmatprep.subr.mxu0 0.0
    %4389 = vmatpush1.msra.mxu0 0.0
    %4390 = vmatprep.subr.mxu0 0.0
    %4391 = vmatpush1.msra.mxu0 0.0
    %4392 = vmatprep.subr.mxu0 0.0
    %4393 = vmatpush1.msra.mxu0 0.0
    %4394 = vmatprep.subr.mxu0 0.0
    %4395 = vmatpush1.msra.mxu0 0.0
    %4396 = vmatprep.subr.mxu0 0.0
    %4397 = vmatpush1.msra.mxu0 0.0
    %4398 = vmatprep.subr.mxu0 0.0
    %4399 = vmatpush1.msra.mxu0 0.0
    %4400 = vmatprep.subr.mxu0 0.0
    %4401 = vmatpush1.msra.mxu0 0.0
    %4402 = vmatprep.subr.mxu0 0.0
    %4403 = vmatpush1.msra.mxu0 0.0
    %4404 = vmatprep.subr.mxu0 0.0
    %4405 = vmatpush1.msra.mxu0 0.0
    %4406 = vmatprep.subr.mxu0 0.0
    %4407 = vmatpush1.msra.mxu0 0.0
    %4408 = vmatprep.subr.mxu0 0.0
    %4409 = vmatpush1.msra.mxu0 0.0
    %4410 = vmatprep.subr.mxu0 0.0
    %4411 = vmatpush1.msra.mxu0 0.0
    %4412 = vmatprep.subr.mxu0 0.0
    %4413 = vmatpush1.msra.mxu0 0.0
    %4414 = vmatprep.mubr.f32.mxu0 0.0
    %4415 = vmatmul.mubr.f32.gmra.mrb[0].mxu0 %v4339
    %v4416 = vpop.f32.mrb[0].mxu0
    %v4417 = vadd.f32 0.0, %v4416
    %v4418 = vpop.f32.mrb[0].mxu0
    %v4419 = vadd.f32 0.0, %v4418
    %4420 = vmatprep.mubr.f32.mxu0 0.0
    %4421 = vmatmul.mubr.f32.gmra.mrb[0].mxu0 %v4342
    %v4422 = vpop.f32.mrb[0].mxu0
    %v4423 = vadd.f32 0.0, %v4422
    %v4424 = vpop.f32.mrb[0].mxu0
    %v4425 = vadd.f32 0.0, %v4424
    %4426 = vmatprep.mubr.f32.mxu0 0.0
    %4427 = vmatmul.mubr.f32.gmra.mrb[0].mxu0 %v4345
    %v4428 = vpop.f32.mrb[0].mxu0
    %v4429 = vadd.f32 0.0, %v4428
    %v4430 = vpop.f32.mrb[0].mxu0
    %v4431 = vadd.f32 0.0, %v4430
    %4432 = vmatprep.mubr.f32.mxu0 0.0
    %4433 = vmatmul.mubr.f32.gmra.mrb[0].mxu0 %v4348
    %v4434 = vpop.f32.mrb[0].mxu0
    %v4435 = vadd.f32 0.0, %v4434
    %v4436 = vpop.f32.mrb[0].mxu0
    %v4437 = vadd.f32 0.0, %v4436
    %4438 = vdwg.mxu0
    %s4439 = scalar_lea.vmem %s6, 64
    %v4440 = vld [vmem:[%s4439] sm:$0xff]
    %v4441 = vld [vmem:[%s4439 + $0x8] sm:$0xff]
    %v4442 = vld [vmem:[%s4439 + $0x10] sm:$0xff]
    %v4443 = vld [vmem:[%s4439 + $0x18] sm:$0xff]
    %v4444 = vpack.c.bf16 %v4423, %v4417
    %v4445 = vpack.c.bf16 %v4425, %v4419
    %v4446 = vpack.c.bf16 %v4435, %v4429
    %v4447 = vpack.c.bf16 %v4437, %v4431
    %v4448 = vunpack.c.l.bf16 %v4444
    %v4449 = vunpack.c.l.bf16 %v4445
    %v4450 = vunpack.c.h.bf16 %v4444
    %v4451 = vunpack.c.h.bf16 %v4445
    %v4452 = vunpack.c.l.bf16 %v4446
    %v4453 = vunpack.c.l.bf16 %v4447
    %v4454 = vunpack.c.h.bf16 %v4446
    %v4455 = vunpack.c.h.bf16 %v4447
    %v4456 = vsub.f32 %v4417, %v4448
    %v4457 = vsub.f32 %v4419, %v4449
    %v4458 = vsub.f32 %v4423, %v4450
    %v4459 = vsub.f32 %v4425, %v4451
    %v4460 = vsub.f32 %v4429, %v4452
    %v4461 = vsub.f32 %v4431, %v4453
    %v4462 = vsub.f32 %v4435, %v4454
    %v4463 = vsub.f32 %v4437, %v4455
    %v4464 = vpack.c.bf16 %v4458, %v4456
    %v4465 = vpack.c.bf16 %v4459, %v4457
    %v4466 = vpack.c.bf16 %v4462, %v4460
    %v4467 = vpack.c.bf16 %v4463, %v4461
    %4468 = vmatprep.subr.bf16.mxu0 0
    %4469 = vmatpush1.bf16.msra.mxu0 1065369472
    %4470 = vmatprep.subr.bf16.mxu0 0
    %4471 = vmatpush1.bf16.msra.mxu0 1065369472
    %4472 = vmatprep.subr.bf16.mxu0 0
    %4473 = vmatpush1.bf16.msra.mxu0 1065369472
    %4474 = vmatprep.subr.bf16.mxu0 0
    %4475 = vmatpush1.bf16.msra.mxu0 1065369472
    %4476 = vmatprep.subr.bf16.mxu0 0
    %4477 = vmatpush1.bf16.msra.mxu0 1065369472
    %4478 = vmatprep.subr.bf16.mxu0 0
    %4479 = vmatpush1.bf16.msra.mxu0 1065369472
    %4480 = vmatprep.subr.bf16.mxu0 0
    %4481 = vmatpush1.bf16.msra.mxu0 1065369472
    %4482 = vmatprep.subr.bf16.mxu0 0
    %4483 = vmatpush1.bf16.msra.mxu0 1065369472
    %4484 = vmatprep.subr.bf16.mxu0 0
    %4485 = vmatpush1.bf16.msra.mxu0 1065369472
    %4486 = vmatprep.subr.bf16.mxu0 0
    %4487 = vmatpush1.bf16.msra.mxu0 1065369472
    %4488 = vmatprep.subr.bf16.mxu0 0
    %4489 = vmatpush1.bf16.msra.mxu0 1065369472
    %4490 = vmatprep.subr.bf16.mxu0 0
    %4491 = vmatpush1.bf16.msra.mxu0 1065369472
    %4492 = vmatprep.subr.bf16.mxu0 0
    %4493 = vmatpush1.bf16.msra.mxu0 1065369472
    %4494 = vmatprep.subr.bf16.mxu0 0
    %4495 = vmatpush1.bf16.msra.mxu0 1065369472
    %4496 = vmatprep.subr.bf16.mxu0 0
    %4497 = vmatpush1.bf16.msra.mxu0 1065369472
    %4498 = vmatprep.subr.bf16.mxu0 0
    %4499 = vmatpush1.bf16.msra.mxu0 1065369472
    %4500 = vmatprep.mubr.bf16.mxu0 %v4465
    %4501 = vmatmul.mubr.bf16.gmra.mrb[0].mxu0 %v4464
    %v4502 = vpop.f32.mrb[0].mxu0
    %v4503 = vadd.f32 0.0, %v4502
    %v4504 = vpop.f32.mrb[0].mxu0
    %v4505 = vpop.f32.mrb[0].mxu0
    %v4506 = vadd.f32 0.0, %v4505
    %v4507 = vpop.f32.mrb[0].mxu0
    %4508 = vmatprep.mubr.bf16.mxu0 %v4467
    %4509 = vmatmul.mubr.bf16.gmra.mrb[0].mxu0 %v4466
    %v4510 = vpop.f32.mrb[0].mxu0
    %v4511 = vadd.f32 0.0, %v4510
    %v4512 = vpop.f32.mrb[0].mxu0
    %v4513 = vpop.f32.mrb[0].mxu0
    %v4514 = vadd.f32 0.0, %v4513
    %v4515 = vpop.f32.mrb[0].mxu0
    %4516 = vdwg.mxu0
    %4517 = vmatprep.subr.bf16.mxu0 0
    %4518 = vmatpush1.bf16.msra.mxu0 1065369472
    %4519 = vmatprep.subr.bf16.mxu0 0
    %4520 = vmatpush1.bf16.msra.mxu0 1065369472
    %4521 = vmatprep.subr.bf16.mxu0 0
    %4522 = vmatpush1.bf16.msra.mxu0 1065369472
    %4523 = vmatprep.subr.bf16.mxu0 0
    %4524 = vmatpush1.bf16.msra.mxu0 1065369472
    %4525 = vmatprep.subr.bf16.mxu0 0
    %4526 = vmatpush1.bf16.msra.mxu0 1065369472
    %4527 = vmatprep.subr.bf16.mxu0 0
    %4528 = vmatpush1.bf16.msra.mxu0 1065369472
    %4529 = vmatprep.subr.bf16.mxu0 0
    %4530 = vmatpush1.bf16.msra.mxu0 1065369472
    %4531 = vmatprep.subr.bf16.mxu0 0
    %4532 = vmatpush1.bf16.msra.mxu0 1065369472
    %4533 = vmatprep.subr.bf16.mxu0 0
    %4534 = vmatpush1.bf16.msra.mxu0 1065369472
    %4535 = vmatprep.subr.bf16.mxu0 0
    %4536 = vmatpush1.bf16.msra.mxu0 1065369472
    %4537 = vmatprep.subr.bf16.mxu0 0
    %4538 = vmatpush1.bf16.msra.mxu0 1065369472
    %4539 = vmatprep.subr.bf16.mxu0 0
    %4540 = vmatpush1.bf16.msra.mxu0 1065369472
    %4541 = vmatprep.subr.bf16.mxu0 0
    %4542 = vmatpush1.bf16.msra.mxu0 1065369472
    %4543 = vmatprep.subr.bf16.mxu0 0
    %4544 = vmatpush1.bf16.msra.mxu0 1065369472
    %4545 = vmatprep.subr.bf16.mxu0 0
    %4546 = vmatpush1.bf16.msra.mxu0 1065369472
    %4547 = vmatprep.subr.bf16.mxu0 0
    %4548 = vmatpush1.bf16.msra.mxu0 1065369472
    %4549 = vmatprep.mubr.bf16.mxu0 %v4445
    %4550 = vmatmul.mubr.bf16.gmra.mrb[0].mxu0 %v4444
    %v4551 = vpop.f32.mrb[0].mxu0
    %v4552 = vadd.f32 %v4503, %v4551
    %v4553 = vpop.f32.mrb[0].mxu0
    %v4554 = vpop.f32.mrb[0].mxu0
    %v4555 = vadd.f32 %v4506, %v4554
    %v4556 = vpop.f32.mrb[0].mxu0
    %4557 = vmatprep.mubr.bf16.mxu0 %v4447
    %4558 = vmatmul.mubr.bf16.gmra.mrb[0].mxu0 %v4446
    %v4559 = vpop.f32.mrb[0].mxu0
    %v4560 = vadd.f32 %v4511, %v4559
    %v4561 = vpop.f32.mrb[0].mxu0
    %v4562 = vpop.f32.mrb[0].mxu0
    %v4563 = vadd.f32 %v4514, %v4562
    %v4564 = vpop.f32.mrb[0].mxu0
    %4565 = vdwg.mxu0
    %v4566 = vmul.f32 %v4552, 0.00390625
    %v4567 = vmul.f32 %v4555, 0.00390625
    %v4568 = vmul.f32 %v4560, 0.00390625
    %v4569 = vmul.f32 %v4563, 0.00390625
    %v4570 = vmul.f32 %v4417, %v4417
    %v4571 = vmul.f32 %v4419, %v4419
    %v4572 = vmul.f32 %v4423, %v4423
    %v4573 = vmul.f32 %v4425, %v4425
    %v4574 = vmul.f32 %v4429, %v4429
    %v4575 = vmul.f32 %v4431, %v4431
    %v4576 = vmul.f32 %v4435, %v4435
    %v4577 = vmul.f32 %v4437, %v4437
    %v4578 = vpack.c.bf16 %v4572, %v4570
    %v4579 = vpack.c.bf16 %v4573, %v4571
    %v4580 = vpack.c.bf16 %v4576, %v4574
    %v4581 = vpack.c.bf16 %v4577, %v4575
    %v4582 = vunpack.c.l.bf16 %v4578
    %v4583 = vunpack.c.l.bf16 %v4579
    %v4584 = vunpack.c.h.bf16 %v4578
    %v4585 = vunpack.c.h.bf16 %v4579
    %v4586 = vunpack.c.l.bf16 %v4580
    %v4587 = vunpack.c.l.bf16 %v4581
    %v4588 = vunpack.c.h.bf16 %v4580
    %v4589 = vunpack.c.h.bf16 %v4581
    %v4590 = vsub.f32 %v4570, %v4582
    %v4591 = vsub.f32 %v4571, %v4583
    %v4592 = vsub.f32 %v4572, %v4584
    %v4593 = vsub.f32 %v4573, %v4585
    %v4594 = vsub.f32 %v4574, %v4586
    %v4595 = vsub.f32 %v4575, %v4587
    %v4596 = vsub.f32 %v4576, %v4588
    %v4597 = vsub.f32 %v4577, %v4589
    %v4598 = vpack.c.bf16 %v4592, %v4590
    %v4599 = vpack.c.bf16 %v4593, %v4591
    %v4600 = vpack.c.bf16 %v4596, %v4594
    %v4601 = vpack.c.bf16 %v4597, %v4595
    %4602 = vmatprep.subr.bf16.mxu0 0
    %4603 = vmatpush1.bf16.msra.mxu0 1065369472
    %4604 = vmatprep.subr.bf16.mxu0 0
    %4605 = vmatpush1.bf16.msra.mxu0 1065369472
    %4606 = vmatprep.subr.bf16.mxu0 0
    %4607 = vmatpush1.bf16.msra.mxu0 1065369472
    %4608 = vmatprep.subr.bf16.mxu0 0
    %4609 = vmatpush1.bf16.msra.mxu0 1065369472
    %4610 = vmatprep.subr.bf16.mxu0 0
    %4611 = vmatpush1.bf16.msra.mxu0 1065369472
    %4612 = vmatprep.subr.bf16.mxu0 0
    %4613 = vmatpush1.bf16.msra.mxu0 1065369472
    %4614 = vmatprep.subr.bf16.mxu0 0
    %4615 = vmatpush1.bf16.msra.mxu0 1065369472
    %4616 = vmatprep.subr.bf16.mxu0 0
    %4617 = vmatpush1.bf16.msra.mxu0 1065369472
    %4618 = vmatprep.subr.bf16.mxu0 0
    %4619 = vmatpush1.bf16.msra.mxu0 1065369472
    %4620 = vmatprep.subr.bf16.mxu0 0
    %4621 = vmatpush1.bf16.msra.mxu0 1065369472
    %4622 = vmatprep.subr.bf16.mxu0 0
    %4623 = vmatpush1.bf16.msra.mxu0 1065369472
    %4624 = vmatprep.subr.bf16.mxu0 0
    %4625 = vmatpush1.bf16.msra.mxu0 1065369472
    %4626 = vmatprep.subr.bf16.mxu0 0
    %4627 = vmatpush1.bf16.msra.mxu0 1065369472
    %4628 = vmatprep.subr.bf16.mxu0 0
    %4629 = vmatpush1.bf16.msra.mxu0 1065369472
    %4630 = vmatprep.subr.bf16.mxu0 0
    %4631 = vmatpush1.bf16.msra.mxu0 1065369472
    %4632 = vmatprep.subr.bf16.mxu0 0
    %4633 = vmatpush1.bf16.msra.mxu0 1065369472
    %4634 = vmatprep.mubr.bf16.mxu0 %v4599
    %4635 = vmatmul.mubr.bf16.gmra.mrb[0].mxu0 %v4598
    %v4636 = vpop.f32.mrb[0].mxu0
    %v4637 = vadd.f32 0.0, %v4636
    %v4638 = vpop.f32.mrb[0].mxu0
    %v4639 = vpop.f32.mrb[0].mxu0
    %v4640 = vadd.f32 0.0, %v4639
    %v4641 = vpop.f32.mrb[0].mxu0
    %4642 = vmatprep.mubr.bf16.mxu0 %v4601
    %4643 = vmatmul.mubr.bf16.gmra.mrb[0].mxu0 %v4600
    %v4644 = vpop.f32.mrb[0].mxu0
    %v4645 = vadd.f32 0.0, %v4644
    %v4646 = vpop.f32.mrb[0].mxu0
    %v4647 = vpop.f32.mrb[0].mxu0
    %v4648 = vadd.f32 0.0, %v4647
    %v4649 = vpop.f32.mrb[0].mxu0
    %4650 = vdwg.mxu0
    %4651 = vmatprep.subr.bf16.mxu0 0
    %4652 = vmatpush1.bf16.msra.mxu0 1065369472
    %4653 = vmatprep.subr.bf16.mxu0 0
    %4654 = vmatpush1.bf16.msra.mxu0 1065369472
    %4655 = vmatprep.subr.bf16.mxu0 0
    %4656 = vmatpush1.bf16.msra.mxu0 1065369472
    %4657 = vmatprep.subr.bf16.mxu0 0
    %4658 = vmatpush1.bf16.msra.mxu0 1065369472
    %4659 = vmatprep.subr.bf16.mxu0 0
    %4660 = vmatpush1.bf16.msra.mxu0 1065369472
    %4661 = vmatprep.subr.bf16.mxu0 0
    %4662 = vmatpush1.bf16.msra.mxu0 1065369472
    %4663 = vmatprep.subr.bf16.mxu0 0
    %4664 = vmatpush1.bf16.msra.mxu0 1065369472
    %4665 = vmatprep.subr.bf16.mxu0 0
    %4666 = vmatpush1.bf16.msra.mxu0 1065369472
    %4667 = vmatprep.subr.bf16.mxu0 0
    %4668 = vmatpush1.bf16.msra.mxu0 1065369472
    %4669 = vmatprep.subr.bf16.mxu0 0
    %4670 = vmatpush1.bf16.msra.mxu0 1065369472
    %4671 = vmatprep.subr.bf16.mxu0 0
    %4672 = vmatpush1.bf16.msra.mxu0 1065369472
    %4673 = vmatprep.subr.bf16.mxu0 0
    %4674 = vmatpush1.bf16.msra.mxu0 1065369472
    %4675 = vmatprep.subr.bf16.mxu0 0
    %4676 = vmatpush1.bf16.msra.mxu0 1065369472
    %4677 = vmatprep.subr.bf16.mxu0 0
    %4678 = vmatpush1.bf16.msra.mxu0 1065369472
    %4679 = vmatprep.subr.bf16.mxu0 0
    %4680 = vmatpush1.bf16.msra.mxu0 1065369472
    %4681 = vmatprep.subr.bf16.mxu0 0
    %4682 = vmatpush1.bf16.msra.mxu0 1065369472
    %4683 = vmatprep.mubr.bf16.mxu0 %v4579
    %4684 = vmatmul.mubr.bf16.gmra.mrb[0].mxu0 %v4578
    %v4685 = vpop.f32.mrb[0].mxu0
    %v4686 = vadd.f32 %v4637, %v4685
    %v4687 = vpop.f32.mrb[0].mxu0
    %v4688 = vpop.f32.mrb[0].mxu0
    %v4689 = vadd.f32 %v4640, %v4688
    %v4690 = vpop.f32.mrb[0].mxu0
    %4691 = vmatprep.mubr.bf16.mxu0 %v4581
    %4692 = vmatmul.mubr.bf16.gmra.mrb[0].mxu0 %v4580
    %v4693 = vpop.f32.mrb[0].mxu0
    %v4694 = vadd.f32 %v4645, %v4693
    %v4695 = vpop.f32.mrb[0].mxu0
    %v4696 = vpop.f32.mrb[0].mxu0
    %v4697 = vadd.f32 %v4648, %v4696
    %v4698 = vpop.f32.mrb[0].mxu0
    %4699 = vdwg.mxu0
    %v4700 = vmul.f32 %v4686, 0.00390625
    %v4701 = vmul.f32 %v4689, 0.00390625
    %v4702 = vmul.f32 %v4694, 0.00390625
    %v4703 = vmul.f32 %v4697, 0.00390625
    %v4704 = vmul.f32 %v4566, %v4566
    %v4705 = vmul.f32 %v4567, %v4567
    %v4706 = vmul.f32 %v4568, %v4568
    %v4707 = vmul.f32 %v4569, %v4569
    %v4708 = vsub.f32 %v4700, %v4704
    %v4709 = vsub.f32 %v4701, %v4705
    %v4710 = vsub.f32 %v4702, %v4706
    %v4711 = vsub.f32 %v4703, %v4707
    %v4712 = vmax.f32 %v4708, 0.0
    %v4713 = vmax.f32 %v4709, 0.0
    %v4714 = vmax.f32 %v4710, 0.0
    %v4715 = vmax.f32 %v4711, 0.0
    %s4716 = scalar_lea.vmem %s7, 64
    %v4717 = vld [vmem:[%s4716] sm:$0xff]
    %v4718 = vld [vmem:[%s4716 + $0x8] sm:$0xff]
    %v4719 = vld [vmem:[%s4716 + $0x10] sm:$0xff]
    %v4720 = vld [vmem:[%s4716 + $0x18] sm:$0xff]
    %v4721 = vadd.f32 %v4712, 1e-05
    %v4722 = vadd.f32 %v4713, 1e-05
    %v4723 = vadd.f32 %v4714, 1e-05
    %v4724 = vadd.f32 %v4715, 1e-05
    %v4725 = vrsqrt.pop %v4721
    %v4726 = vrsqrt.pop %v4722
    %v4727 = vrsqrt.pop %v4723
    %v4728 = vrsqrt.pop %v4724
    %v4729 = vmul.f32 %v4717, %v4725
    %v4730 = vmul.f32 %v4718, %v4726
    %v4731 = vmul.f32 %v4719, %v4727
    %v4732 = vmul.f32 %v4720, %v4728
    %s4733 = scalar_lea.vmem %s8, 64
    %v4734 = vld [vmem:[%s4733] sm:$0xff]
    %v4735 = vld [vmem:[%s4733 + $0x8] sm:$0xff]
    %v4736 = vld [vmem:[%s4733 + $0x10] sm:$0xff]
    %v4737 = vld [vmem:[%s4733 + $0x18] sm:$0xff]
    %v4738 = vmul.f32 %v4566, %v4729
    %v4739 = vmul.f32 %v4567, %v4730
    %v4740 = vmul.f32 %v4568, %v4731
    %v4741 = vmul.f32 %v4569, %v4732
    %v4742 = vsub.f32 %v4734, %v4738
    %v4743 = vsub.f32 %v4735, %v4739
    %v4744 = vsub.f32 %v4736, %v4740
    %v4745 = vsub.f32 %v4737, %v4741
    %4747 = vset.pattern.permute.xlu0 0
    %4748 = vperm.xlu0 %4747, %v4729
    %v4749 = vpop.permute.xlu0 %4748
    %4752 = vset.pattern.permute.xlu0 0
    %4753 = vperm.xlu0 %4752, %v4730
    %v4754 = vpop.permute.xlu0 %4753
    %4757 = vset.pattern.permute.xlu0 0
    %4758 = vperm.xlu0 %4757, %v4731
    %v4759 = vpop.permute.xlu0 %4758
    %4762 = vset.pattern.permute.xlu0 0
    %4763 = vperm.xlu0 %4762, %v4732
    %v4764 = vpop.permute.xlu0 %4763
    %v4766 = vmul.f32 %v4417, %v4749
    %v4767 = vmul.f32 %v4419, %v4749
    %v4768 = vmul.f32 %v4423, %v4754
    %v4769 = vmul.f32 %v4425, %v4754
    %v4770 = vmul.f32 %v4429, %v4759
    %v4771 = vmul.f32 %v4431, %v4759
    %v4772 = vmul.f32 %v4435, %v4764
    %v4773 = vmul.f32 %v4437, %v4764
    %4775 = vset.pattern.permute.xlu0 0
    %4776 = vperm.xlu0 %4775, %v4742
    %v4777 = vpop.permute.xlu0 %4776
    %4780 = vset.pattern.permute.xlu0 0
    %4781 = vperm.xlu0 %4780, %v4743
    %v4782 = vpop.permute.xlu0 %4781
    %4785 = vset.pattern.permute.xlu0 0
    %4786 = vperm.xlu0 %4785, %v4744
    %v4787 = vpop.permute.xlu0 %4786
    %4790 = vset.pattern.permute.xlu0 0
    %4791 = vperm.xlu0 %4790, %v4745
    %v4792 = vpop.permute.xlu0 %4791
    %v4794 = vadd.f32 %v4766, %v4777
    %v4795 = vadd.f32 %v4767, %v4777
    %v4796 = vadd.f32 %v4768, %v4782
    %v4797 = vadd.f32 %v4769, %v4782
    %v4798 = vadd.f32 %v4770, %v4787
    %v4799 = vadd.f32 %v4771, %v4787
    %v4800 = vadd.f32 %v4772, %v4792
    %v4801 = vadd.f32 %v4773, %v4792
    %v4802 = vmax.f32 %v4794, 0.0
    %v4803 = vmax.f32 %v4795, 0.0
    %v4804 = vmax.f32 %v4796, 0.0
    %v4805 = vmax.f32 %v4797, 0.0
    %v4806 = vmax.f32 %v4798, 0.0
    %v4807 = vmax.f32 %v4799, 0.0
    %v4808 = vmax.f32 %v4800, 0.0
    %v4809 = vmax.f32 %v4801, 0.0
    %4810 = vrot.lane.b32.xlu0 %v4802, 127
    %v4811 = vpop.permute.xlu0 %4810
    %4812 = vrot.lane.b32.xlu0 %v4803, 127
    %v4813 = vpop.permute.xlu0 %4812
    %v4814 = vsel %vm591, %v4811, %v4813
    %v4815 = vsel %vm591, %v4813, %v4811
    %v4816 = vsel %vm596, %v4814, 0.0
    %v4817 = vsel %vm597, %v4815, 0.0
    %4818 = vrot.lane.b32.xlu0 %v4802, 1
    %v4819 = vpop.permute.xlu0 %4818
    %4820 = vrot.lane.b32.xlu0 %v4803, 1
    %v4821 = vpop.permute.xlu0 %4820
    %v4822 = vsel %vm604, %v4819, %v4821
    %v4823 = vsel %vm604, %v4821, %v4819
    %v4824 = vsel %vm609, %v4823, 0.0
    %v4825 = vsel %vm610, %v4822, 0.0
    %v4826 = vsel %vm614, %v4816, %v4824
    %v4827 = vsel %vm614, %v4817, %v4825
    %v4829 = vsel %vm617, %v4440, 0
    %v4832 = vsel %vm617, %v4441, 0
    %v4835 = vsel %vm617, %v4442, 0
    %v4838 = vsel %vm617, %v4443, 0
    %4840 = vmatprep.subr.mxu0 %v4827
    %4841 = vmatpush1.msra.mxu0 %v4826
    %4842 = vmatprep.subr.mxu0 %v4805
    %4843 = vmatpush1.msra.mxu0 %v4804
    %4844 = vmatprep.subr.mxu0 %v4807
    %4845 = vmatpush1.msra.mxu0 %v4806
    %4846 = vmatprep.subr.mxu0 %v4809
    %4847 = vmatpush1.msra.mxu0 %v4808
    %4848 = vmatprep.subr.mxu0 0.0
    %4849 = vmatpush1.msra.mxu0 0.0
    %4850 = vmatprep.subr.mxu0 0.0
    %4851 = vmatpush1.msra.mxu0 0.0
    %4852 = vmatprep.subr.mxu0 0.0
    %4853 = vmatpush1.msra.mxu0 0.0
    %4854 = vmatprep.subr.mxu0 0.0
    %4855 = vmatpush1.msra.mxu0 0.0
    %4856 = vmatprep.subr.mxu0 0.0
    %4857 = vmatpush1.msra.mxu0 0.0
    %4858 = vmatprep.subr.mxu0 0.0
    %4859 = vmatpush1.msra.mxu0 0.0
    %4860 = vmatprep.subr.mxu0 0.0
    %4861 = vmatpush1.msra.mxu0 0.0
    %4862 = vmatprep.subr.mxu0 0.0
    %4863 = vmatpush1.msra.mxu0 0.0
    %4864 = vmatprep.subr.mxu0 0.0
    %4865 = vmatpush1.msra.mxu0 0.0
    %4866 = vmatprep.subr.mxu0 0.0
    %4867 = vmatpush1.msra.mxu0 0.0
    %4868 = vmatprep.subr.mxu0 0.0
    %4869 = vmatpush1.msra.mxu0 0.0
    %4870 = vmatprep.subr.mxu0 0.0
    %4871 = vmatpush1.msra.mxu0 0.0
    %4872 = vmatprep.subr.mxu0 0.0
    %4873 = vmatpush1.msra.mxu0 0.0
    %4874 = vmatprep.subr.mxu0 0.0
    %4875 = vmatpush1.msra.mxu0 0.0
    %4876 = vmatprep.subr.mxu0 0.0
    %4877 = vmatpush1.msra.mxu0 0.0
    %4878 = vmatprep.subr.mxu0 0.0
    %4879 = vmatpush1.msra.mxu0 0.0
    %4880 = vmatprep.subr.mxu0 0.0
    %4881 = vmatpush1.msra.mxu0 0.0
    %4882 = vmatprep.subr.mxu0 0.0
    %4883 = vmatpush1.msra.mxu0 0.0
    %4884 = vmatprep.subr.mxu0 0.0
    %4885 = vmatpush1.msra.mxu0 0.0
    %4886 = vmatprep.subr.mxu0 0.0
    %4887 = vmatpush1.msra.mxu0 0.0
    %4888 = vmatprep.subr.mxu0 0.0
    %4889 = vmatpush1.msra.mxu0 0.0
    %4890 = vmatprep.subr.mxu0 0.0
    %4891 = vmatpush1.msra.mxu0 0.0
    %4892 = vmatprep.subr.mxu0 0.0
    %4893 = vmatpush1.msra.mxu0 0.0
    %4894 = vmatprep.subr.mxu0 0.0
    %4895 = vmatpush1.msra.mxu0 0.0
    %4896 = vmatprep.subr.mxu0 0.0
    %4897 = vmatpush1.msra.mxu0 0.0
    %4898 = vmatprep.subr.mxu0 0.0
    %4899 = vmatpush1.msra.mxu0 0.0
    %4900 = vmatprep.subr.mxu0 0.0
    %4901 = vmatpush1.msra.mxu0 0.0
    %4902 = vmatprep.subr.mxu0 0.0
    %4903 = vmatpush1.msra.mxu0 0.0
    %4904 = vmatprep.mubr.f32.mxu0 0.0
    %4905 = vmatmul.mubr.f32.gmra.mrb[0].mxu0 %v4829
    %v4906 = vpop.f32.mrb[0].mxu0
    %v4907 = vadd.f32 0.0, %v4906
    %v4908 = vpop.f32.mrb[0].mxu0
    %v4909 = vadd.f32 0.0, %v4908
    %4910 = vmatprep.mubr.f32.mxu0 0.0
    %4911 = vmatmul.mubr.f32.gmra.mrb[0].mxu0 %v4832
    %v4912 = vpop.f32.mrb[0].mxu0
    %v4913 = vadd.f32 0.0, %v4912
    %v4914 = vpop.f32.mrb[0].mxu0
    %v4915 = vadd.f32 0.0, %v4914
    %4916 = vmatprep.mubr.f32.mxu0 0.0
    %4917 = vmatmul.mubr.f32.gmra.mrb[0].mxu0 %v4835
    %v4918 = vpop.f32.mrb[0].mxu0
    %v4919 = vadd.f32 0.0, %v4918
    %v4920 = vpop.f32.mrb[0].mxu0
    %v4921 = vadd.f32 0.0, %v4920
    %4922 = vmatprep.mubr.f32.mxu0 0.0
    %4923 = vmatmul.mubr.f32.gmra.mrb[0].mxu0 %v4838
    %v4924 = vpop.f32.mrb[0].mxu0
    %v4925 = vadd.f32 0.0, %v4924
    %v4926 = vpop.f32.mrb[0].mxu0
    %v4927 = vadd.f32 0.0, %v4926
    %4928 = vdwg.mxu0
    %v4929 = vpack.c.bf16 %v4913, %v4907
    %v4930 = vpack.c.bf16 %v4915, %v4909
    %v4931 = vpack.c.bf16 %v4925, %v4919
    %v4932 = vpack.c.bf16 %v4927, %v4921
    %v4933 = vunpack.c.l.bf16 %v4929
    %v4934 = vunpack.c.l.bf16 %v4930
    %v4935 = vunpack.c.h.bf16 %v4929
    %v4936 = vunpack.c.h.bf16 %v4930
    %v4937 = vunpack.c.l.bf16 %v4931
    %v4938 = vunpack.c.l.bf16 %v4932
    %v4939 = vunpack.c.h.bf16 %v4931
    %v4940 = vunpack.c.h.bf16 %v4932
    %v4941 = vsub.f32 %v4907, %v4933
    %v4942 = vsub.f32 %v4909, %v4934
    %v4943 = vsub.f32 %v4913, %v4935
    %v4944 = vsub.f32 %v4915, %v4936
    %v4945 = vsub.f32 %v4919, %v4937
    %v4946 = vsub.f32 %v4921, %v4938
    %v4947 = vsub.f32 %v4925, %v4939
    %v4948 = vsub.f32 %v4927, %v4940
    %v4949 = vpack.c.bf16 %v4943, %v4941
    %v4950 = vpack.c.bf16 %v4944, %v4942
    %v4951 = vpack.c.bf16 %v4947, %v4945
    %v4952 = vpack.c.bf16 %v4948, %v4946
    %4953 = vmatprep.subr.bf16.mxu0 0
    %4954 = vmatpush1.bf16.msra.mxu0 1065369472
    %4955 = vmatprep.subr.bf16.mxu0 0
    %4956 = vmatpush1.bf16.msra.mxu0 1065369472
    %4957 = vmatprep.subr.bf16.mxu0 0
    %4958 = vmatpush1.bf16.msra.mxu0 1065369472
    %4959 = vmatprep.subr.bf16.mxu0 0
    %4960 = vmatpush1.bf16.msra.mxu0 1065369472
    %4961 = vmatprep.subr.bf16.mxu0 0
    %4962 = vmatpush1.bf16.msra.mxu0 1065369472
    %4963 = vmatprep.subr.bf16.mxu0 0
    %4964 = vmatpush1.bf16.msra.mxu0 1065369472
    %4965 = vmatprep.subr.bf16.mxu0 0
    %4966 = vmatpush1.bf16.msra.mxu0 1065369472
    %4967 = vmatprep.subr.bf16.mxu0 0
    %4968 = vmatpush1.bf16.msra.mxu0 1065369472
    %4969 = vmatprep.subr.bf16.mxu0 0
    %4970 = vmatpush1.bf16.msra.mxu0 1065369472
    %4971 = vmatprep.subr.bf16.mxu0 0
    %4972 = vmatpush1.bf16.msra.mxu0 1065369472
    %4973 = vmatprep.subr.bf16.mxu0 0
    %4974 = vmatpush1.bf16.msra.mxu0 1065369472
    %4975 = vmatprep.subr.bf16.mxu0 0
    %4976 = vmatpush1.bf16.msra.mxu0 1065369472
    %4977 = vmatprep.subr.bf16.mxu0 0
    %4978 = vmatpush1.bf16.msra.mxu0 1065369472
    %4979 = vmatprep.subr.bf16.mxu0 0
    %4980 = vmatpush1.bf16.msra.mxu0 1065369472
    %4981 = vmatprep.subr.bf16.mxu0 0
    %4982 = vmatpush1.bf16.msra.mxu0 1065369472
    %4983 = vmatprep.subr.bf16.mxu0 0
    %4984 = vmatpush1.bf16.msra.mxu0 1065369472
    %4985 = vmatprep.mubr.bf16.mxu0 %v4950
    %4986 = vmatmul.mubr.bf16.gmra.mrb[0].mxu0 %v4949
    %v4987 = vpop.f32.mrb[0].mxu0
    %v4988 = vadd.f32 0.0, %v4987
    %v4989 = vpop.f32.mrb[0].mxu0
    %v4990 = vpop.f32.mrb[0].mxu0
    %v4991 = vadd.f32 0.0, %v4990
    %v4992 = vpop.f32.mrb[0].mxu0
    %4993 = vmatprep.mubr.bf16.mxu0 %v4952
    %4994 = vmatmul.mubr.bf16.gmra.mrb[0].mxu0 %v4951
    %v4995 = vpop.f32.mrb[0].mxu0
    %v4996 = vadd.f32 0.0, %v4995
    %v4997 = vpop.f32.mrb[0].mxu0
    %v4998 = vpop.f32.mrb[0].mxu0
    %v4999 = vadd.f32 0.0, %v4998
    %v5000 = vpop.f32.mrb[0].mxu0
    %5001 = vdwg.mxu0
    %5002 = vmatprep.subr.bf16.mxu0 0
    %5003 = vmatpush1.bf16.msra.mxu0 1065369472
    %5004 = vmatprep.subr.bf16.mxu0 0
    %5005 = vmatpush1.bf16.msra.mxu0 1065369472
    %5006 = vmatprep.subr.bf16.mxu0 0
    %5007 = vmatpush1.bf16.msra.mxu0 1065369472
    %5008 = vmatprep.subr.bf16.mxu0 0
    %5009 = vmatpush1.bf16.msra.mxu0 1065369472
    %5010 = vmatprep.subr.bf16.mxu0 0
    %5011 = vmatpush1.bf16.msra.mxu0 1065369472
    %5012 = vmatprep.subr.bf16.mxu0 0
    %5013 = vmatpush1.bf16.msra.mxu0 1065369472
    %5014 = vmatprep.subr.bf16.mxu0 0
    %5015 = vmatpush1.bf16.msra.mxu0 1065369472
    %5016 = vmatprep.subr.bf16.mxu0 0
    %5017 = vmatpush1.bf16.msra.mxu0 1065369472
    %5018 = vmatprep.subr.bf16.mxu0 0
    %5019 = vmatpush1.bf16.msra.mxu0 1065369472
    %5020 = vmatprep.subr.bf16.mxu0 0
    %5021 = vmatpush1.bf16.msra.mxu0 1065369472
    %5022 = vmatprep.subr.bf16.mxu0 0
    %5023 = vmatpush1.bf16.msra.mxu0 1065369472
    %5024 = vmatprep.subr.bf16.mxu0 0
    %5025 = vmatpush1.bf16.msra.mxu0 1065369472
    %5026 = vmatprep.subr.bf16.mxu0 0
    %5027 = vmatpush1.bf16.msra.mxu0 1065369472
    %5028 = vmatprep.subr.bf16.mxu0 0
    %5029 = vmatpush1.bf16.msra.mxu0 1065369472
    %5030 = vmatprep.subr.bf16.mxu0 0
    %5031 = vmatpush1.bf16.msra.mxu0 1065369472
    %5032 = vmatprep.subr.bf16.mxu0 0
    %5033 = vmatpush1.bf16.msra.mxu0 1065369472
    %5034 = vmatprep.mubr.bf16.mxu0 %v4930
    %5035 = vmatmul.mubr.bf16.gmra.mrb[0].mxu0 %v4929
    %v5036 = vpop.f32.mrb[0].mxu0
    %v5037 = vadd.f32 %v4988, %v5036
    %v5038 = vpop.f32.mrb[0].mxu0
    %v5039 = vpop.f32.mrb[0].mxu0
    %v5040 = vadd.f32 %v4991, %v5039
    %v5041 = vpop.f32.mrb[0].mxu0
    %5042 = vmatprep.mubr.bf16.mxu0 %v4932
    %5043 = vmatmul.mubr.bf16.gmra.mrb[0].mxu0 %v4931
    %v5044 = vpop.f32.mrb[0].mxu0
    %v5045 = vadd.f32 %v4996, %v5044
    %v5046 = vpop.f32.mrb[0].mxu0
    %v5047 = vpop.f32.mrb[0].mxu0
    %v5048 = vadd.f32 %v4999, %v5047
    %v5049 = vpop.f32.mrb[0].mxu0
    %5050 = vdwg.mxu0
    %v5051 = vmul.f32 %v5037, 0.00390625
    %v5052 = vmul.f32 %v5040, 0.00390625
    %v5053 = vmul.f32 %v5045, 0.00390625
    %v5054 = vmul.f32 %v5048, 0.00390625
    %v5055 = vmul.f32 %v4907, %v4907
    %v5056 = vmul.f32 %v4909, %v4909
    %v5057 = vmul.f32 %v4913, %v4913
    %v5058 = vmul.f32 %v4915, %v4915
    %v5059 = vmul.f32 %v4919, %v4919
    %v5060 = vmul.f32 %v4921, %v4921
    %v5061 = vmul.f32 %v4925, %v4925
    %v5062 = vmul.f32 %v4927, %v4927
    %v5063 = vpack.c.bf16 %v5057, %v5055
    %v5064 = vpack.c.bf16 %v5058, %v5056
    %v5065 = vpack.c.bf16 %v5061, %v5059
    %v5066 = vpack.c.bf16 %v5062, %v5060
    %v5067 = vunpack.c.l.bf16 %v5063
    %v5068 = vunpack.c.l.bf16 %v5064
    %v5069 = vunpack.c.h.bf16 %v5063
    %v5070 = vunpack.c.h.bf16 %v5064
    %v5071 = vunpack.c.l.bf16 %v5065
    %v5072 = vunpack.c.l.bf16 %v5066
    %v5073 = vunpack.c.h.bf16 %v5065
    %v5074 = vunpack.c.h.bf16 %v5066
    %v5075 = vsub.f32 %v5055, %v5067
    %v5076 = vsub.f32 %v5056, %v5068
    %v5077 = vsub.f32 %v5057, %v5069
    %v5078 = vsub.f32 %v5058, %v5070
    %v5079 = vsub.f32 %v5059, %v5071
    %v5080 = vsub.f32 %v5060, %v5072
    %v5081 = vsub.f32 %v5061, %v5073
    %v5082 = vsub.f32 %v5062, %v5074
    %v5083 = vpack.c.bf16 %v5077, %v5075
    %v5084 = vpack.c.bf16 %v5078, %v5076
    %v5085 = vpack.c.bf16 %v5081, %v5079
    %v5086 = vpack.c.bf16 %v5082, %v5080
    %5087 = vmatprep.subr.bf16.mxu0 0
    %5088 = vmatpush1.bf16.msra.mxu0 1065369472
    %5089 = vmatprep.subr.bf16.mxu0 0
    %5090 = vmatpush1.bf16.msra.mxu0 1065369472
    %5091 = vmatprep.subr.bf16.mxu0 0
    %5092 = vmatpush1.bf16.msra.mxu0 1065369472
    %5093 = vmatprep.subr.bf16.mxu0 0
    %5094 = vmatpush1.bf16.msra.mxu0 1065369472
    %5095 = vmatprep.subr.bf16.mxu0 0
    %5096 = vmatpush1.bf16.msra.mxu0 1065369472
    %5097 = vmatprep.subr.bf16.mxu0 0
    %5098 = vmatpush1.bf16.msra.mxu0 1065369472
    %5099 = vmatprep.subr.bf16.mxu0 0
    %5100 = vmatpush1.bf16.msra.mxu0 1065369472
    %5101 = vmatprep.subr.bf16.mxu0 0
    %5102 = vmatpush1.bf16.msra.mxu0 1065369472
    %5103 = vmatprep.subr.bf16.mxu0 0
    %5104 = vmatpush1.bf16.msra.mxu0 1065369472
    %5105 = vmatprep.subr.bf16.mxu0 0
    %5106 = vmatpush1.bf16.msra.mxu0 1065369472
    %5107 = vmatprep.subr.bf16.mxu0 0
    %5108 = vmatpush1.bf16.msra.mxu0 1065369472
    %5109 = vmatprep.subr.bf16.mxu0 0
    %5110 = vmatpush1.bf16.msra.mxu0 1065369472
    %5111 = vmatprep.subr.bf16.mxu0 0
    %5112 = vmatpush1.bf16.msra.mxu0 1065369472
    %5113 = vmatprep.subr.bf16.mxu0 0
    %5114 = vmatpush1.bf16.msra.mxu0 1065369472
    %5115 = vmatprep.subr.bf16.mxu0 0
    %5116 = vmatpush1.bf16.msra.mxu0 1065369472
    %5117 = vmatprep.subr.bf16.mxu0 0
    %5118 = vmatpush1.bf16.msra.mxu0 1065369472
    %5119 = vmatprep.mubr.bf16.mxu0 %v5084
    %5120 = vmatmul.mubr.bf16.gmra.mrb[0].mxu0 %v5083
    %v5121 = vpop.f32.mrb[0].mxu0
    %v5122 = vadd.f32 0.0, %v5121
    %v5123 = vpop.f32.mrb[0].mxu0
    %v5124 = vpop.f32.mrb[0].mxu0
    %v5125 = vadd.f32 0.0, %v5124
    %v5126 = vpop.f32.mrb[0].mxu0
    %5127 = vmatprep.mubr.bf16.mxu0 %v5086
    %5128 = vmatmul.mubr.bf16.gmra.mrb[0].mxu0 %v5085
    %v5129 = vpop.f32.mrb[0].mxu0
    %v5130 = vadd.f32 0.0, %v5129
    %v5131 = vpop.f32.mrb[0].mxu0
    %v5132 = vpop.f32.mrb[0].mxu0
    %v5133 = vadd.f32 0.0, %v5132
    %v5134 = vpop.f32.mrb[0].mxu0
    %5135 = vdwg.mxu0
    %5136 = vmatprep.subr.bf16.mxu0 0
    %5137 = vmatpush1.bf16.msra.mxu0 1065369472
    %5138 = vmatprep.subr.bf16.mxu0 0
    %5139 = vmatpush1.bf16.msra.mxu0 1065369472
    %5140 = vmatprep.subr.bf16.mxu0 0
    %5141 = vmatpush1.bf16.msra.mxu0 1065369472
    %5142 = vmatprep.subr.bf16.mxu0 0
    %5143 = vmatpush1.bf16.msra.mxu0 1065369472
    %5144 = vmatprep.subr.bf16.mxu0 0
    %5145 = vmatpush1.bf16.msra.mxu0 1065369472
    %5146 = vmatprep.subr.bf16.mxu0 0
    %5147 = vmatpush1.bf16.msra.mxu0 1065369472
    %5148 = vmatprep.subr.bf16.mxu0 0
    %5149 = vmatpush1.bf16.msra.mxu0 1065369472
    %5150 = vmatprep.subr.bf16.mxu0 0
    %5151 = vmatpush1.bf16.msra.mxu0 1065369472
    %5152 = vmatprep.subr.bf16.mxu0 0
    %5153 = vmatpush1.bf16.msra.mxu0 1065369472
    %5154 = vmatprep.subr.bf16.mxu0 0
    %5155 = vmatpush1.bf16.msra.mxu0 1065369472
    %5156 = vmatprep.subr.bf16.mxu0 0
    %5157 = vmatpush1.bf16.msra.mxu0 1065369472
    %5158 = vmatprep.subr.bf16.mxu0 0
    %5159 = vmatpush1.bf16.msra.mxu0 1065369472
    %5160 = vmatprep.subr.bf16.mxu0 0
    %5161 = vmatpush1.bf16.msra.mxu0 1065369472
    %5162 = vmatprep.subr.bf16.mxu0 0
    %5163 = vmatpush1.bf16.msra.mxu0 1065369472
    %5164 = vmatprep.subr.bf16.mxu0 0
    %5165 = vmatpush1.bf16.msra.mxu0 1065369472
    %5166 = vmatprep.subr.bf16.mxu0 0
    %5167 = vmatpush1.bf16.msra.mxu0 1065369472
    %5168 = vmatprep.mubr.bf16.mxu0 %v5064
    %5169 = vmatmul.mubr.bf16.gmra.mrb[0].mxu0 %v5063
    %v5170 = vpop.f32.mrb[0].mxu0
    %v5171 = vadd.f32 %v5122, %v5170
    %v5172 = vpop.f32.mrb[0].mxu0
    %v5173 = vpop.f32.mrb[0].mxu0
    %v5174 = vadd.f32 %v5125, %v5173
    %v5175 = vpop.f32.mrb[0].mxu0
    %5176 = vmatprep.mubr.bf16.mxu0 %v5066
    %5177 = vmatmul.mubr.bf16.gmra.mrb[0].mxu0 %v5065
    %v5178 = vpop.f32.mrb[0].mxu0
    %v5179 = vadd.f32 %v5130, %v5178
    %v5180 = vpop.f32.mrb[0].mxu0
    %v5181 = vpop.f32.mrb[0].mxu0
    %v5182 = vadd.f32 %v5133, %v5181
    %v5183 = vpop.f32.mrb[0].mxu0
    %5184 = vdwg.mxu0
    %v5185 = vmul.f32 %v5171, 0.00390625
    %v5186 = vmul.f32 %v5174, 0.00390625
    %v5187 = vmul.f32 %v5179, 0.00390625
    %v5188 = vmul.f32 %v5182, 0.00390625
    %v5189 = vmul.f32 %v5051, %v5051
    %v5190 = vmul.f32 %v5052, %v5052
    %v5191 = vmul.f32 %v5053, %v5053
    %v5192 = vmul.f32 %v5054, %v5054
    %v5193 = vsub.f32 %v5185, %v5189
    %v5194 = vsub.f32 %v5186, %v5190
    %v5195 = vsub.f32 %v5187, %v5191
    %v5196 = vsub.f32 %v5188, %v5192
    %v5197 = vmax.f32 %v5193, 0.0
    %v5198 = vmax.f32 %v5194, 0.0
    %v5199 = vmax.f32 %v5195, 0.0
    %v5200 = vmax.f32 %v5196, 0.0
    %s5201 = scalar_lea.vmem %s7, 96
    %v5202 = vld [vmem:[%s5201] sm:$0xff]
    %v5203 = vld [vmem:[%s5201 + $0x8] sm:$0xff]
    %v5204 = vld [vmem:[%s5201 + $0x10] sm:$0xff]
    %v5205 = vld [vmem:[%s5201 + $0x18] sm:$0xff]
    %v5206 = vadd.f32 %v5197, 1e-05
    %v5207 = vadd.f32 %v5198, 1e-05
    %v5208 = vadd.f32 %v5199, 1e-05
    %v5209 = vadd.f32 %v5200, 1e-05
    %v5210 = vrsqrt.pop %v5206
    %v5211 = vrsqrt.pop %v5207
    %v5212 = vrsqrt.pop %v5208
    %v5213 = vrsqrt.pop %v5209
    %v5214 = vmul.f32 %v5202, %v5210
    %v5215 = vmul.f32 %v5203, %v5211
    %v5216 = vmul.f32 %v5204, %v5212
    %v5217 = vmul.f32 %v5205, %v5213
    %s5218 = scalar_lea.vmem %s8, 96
    %v5219 = vld [vmem:[%s5218] sm:$0xff]
    %v5220 = vld [vmem:[%s5218 + $0x8] sm:$0xff]
    %v5221 = vld [vmem:[%s5218 + $0x10] sm:$0xff]
    %v5222 = vld [vmem:[%s5218 + $0x18] sm:$0xff]
    %v5223 = vmul.f32 %v5051, %v5214
    %v5224 = vmul.f32 %v5052, %v5215
    %v5225 = vmul.f32 %v5053, %v5216
    %v5226 = vmul.f32 %v5054, %v5217
    %v5227 = vsub.f32 %v5219, %v5223
    %v5228 = vsub.f32 %v5220, %v5224
    %v5229 = vsub.f32 %v5221, %v5225
    %v5230 = vsub.f32 %v5222, %v5226
    %5232 = vset.pattern.permute.xlu0 0
    %5233 = vperm.xlu0 %5232, %v5214
    %v5234 = vpop.permute.xlu0 %5233
    %5237 = vset.pattern.permute.xlu0 0
    %5238 = vperm.xlu0 %5237, %v5215
    %v5239 = vpop.permute.xlu0 %5238
    %5242 = vset.pattern.permute.xlu0 0
    %5243 = vperm.xlu0 %5242, %v5216
    %v5244 = vpop.permute.xlu0 %5243
    %5247 = vset.pattern.permute.xlu0 0
    %5248 = vperm.xlu0 %5247, %v5217
    %v5249 = vpop.permute.xlu0 %5248
    %v5251 = vmul.f32 %v4907, %v5234
    %v5252 = vmul.f32 %v4909, %v5234
    %v5253 = vmul.f32 %v4913, %v5239
    %v5254 = vmul.f32 %v4915, %v5239
    %v5255 = vmul.f32 %v4919, %v5244
    %v5256 = vmul.f32 %v4921, %v5244
    %v5257 = vmul.f32 %v4925, %v5249
    %v5258 = vmul.f32 %v4927, %v5249
    %5260 = vset.pattern.permute.xlu0 0
    %5261 = vperm.xlu0 %5260, %v5227
    %v5262 = vpop.permute.xlu0 %5261
    %5265 = vset.pattern.permute.xlu0 0
    %5266 = vperm.xlu0 %5265, %v5228
    %v5267 = vpop.permute.xlu0 %5266
    %5270 = vset.pattern.permute.xlu0 0
    %5271 = vperm.xlu0 %5270, %v5229
    %v5272 = vpop.permute.xlu0 %5271
    %5275 = vset.pattern.permute.xlu0 0
    %5276 = vperm.xlu0 %5275, %v5230
    %v5277 = vpop.permute.xlu0 %5276
    %v5279 = vadd.f32 %v5251, %v5262
    %v5280 = vadd.f32 %v5252, %v5262
    %v5281 = vadd.f32 %v5253, %v5267
    %v5282 = vadd.f32 %v5254, %v5267
    %v5283 = vadd.f32 %v5255, %v5272
    %v5284 = vadd.f32 %v5256, %v5272
    %v5285 = vadd.f32 %v5257, %v5277
    %v5286 = vadd.f32 %v5258, %v5277
    %v5287 = vmax.f32 %v5279, 0.0
    %v5288 = vmax.f32 %v5280, 0.0
    %v5289 = vmax.f32 %v5281, 0.0
    %v5290 = vmax.f32 %v5282, 0.0
    %v5291 = vmax.f32 %v5283, 0.0
    %v5292 = vmax.f32 %v5284, 0.0
    %v5293 = vmax.f32 %v5285, 0.0
    %v5294 = vmax.f32 %v5286, 0.0
    %s5295 = scalar_lea.vmem %s6, 96
    %v5296 = vld [vmem:[%s5295] sm:$0xff]
    %v5297 = vld [vmem:[%s5295 + $0x8] sm:$0xff]
    %v5298 = vld [vmem:[%s5295 + $0x10] sm:$0xff]
    %v5299 = vld [vmem:[%s5295 + $0x18] sm:$0xff]
    %v5301 = vsel %vm617, %v5296, 0
    %v5304 = vsel %vm617, %v5297, 0
    %v5307 = vsel %vm617, %v5298, 0
    %v5310 = vsel %vm617, %v5299, 0
    %5312 = vmatprep.subr.mxu0 %v5288
    %5313 = vmatpush1.msra.mxu0 %v5287
    %5314 = vmatprep.subr.mxu0 %v5290
    %5315 = vmatpush1.msra.mxu0 %v5289
    %5316 = vmatprep.subr.mxu0 %v5292
    %5317 = vmatpush1.msra.mxu0 %v5291
    %5318 = vmatprep.subr.mxu0 %v5294
    %5319 = vmatpush1.msra.mxu0 %v5293
    %5320 = vmatprep.subr.mxu0 0.0
    %5321 = vmatpush1.msra.mxu0 0.0
    %5322 = vmatprep.subr.mxu0 0.0
    %5323 = vmatpush1.msra.mxu0 0.0
    %5324 = vmatprep.subr.mxu0 0.0
    %5325 = vmatpush1.msra.mxu0 0.0
    %5326 = vmatprep.subr.mxu0 0.0
    %5327 = vmatpush1.msra.mxu0 0.0
    %5328 = vmatprep.subr.mxu0 0.0
    %5329 = vmatpush1.msra.mxu0 0.0
    %5330 = vmatprep.subr.mxu0 0.0
    %5331 = vmatpush1.msra.mxu0 0.0
    %5332 = vmatprep.subr.mxu0 0.0
    %5333 = vmatpush1.msra.mxu0 0.0
    %5334 = vmatprep.subr.mxu0 0.0
    %5335 = vmatpush1.msra.mxu0 0.0
    %5336 = vmatprep.subr.mxu0 0.0
    %5337 = vmatpush1.msra.mxu0 0.0
    %5338 = vmatprep.subr.mxu0 0.0
    %5339 = vmatpush1.msra.mxu0 0.0
    %5340 = vmatprep.subr.mxu0 0.0
    %5341 = vmatpush1.msra.mxu0 0.0
    %5342 = vmatprep.subr.mxu0 0.0
    %5343 = vmatpush1.msra.mxu0 0.0
    %5344 = vmatprep.subr.mxu0 0.0
    %5345 = vmatpush1.msra.mxu0 0.0
    %5346 = vmatprep.subr.mxu0 0.0
    %5347 = vmatpush1.msra.mxu0 0.0
    %5348 = vmatprep.subr.mxu0 0.0
    %5349 = vmatpush1.msra.mxu0 0.0
    %5350 = vmatprep.subr.mxu0 0.0
    %5351 = vmatpush1.msra.mxu0 0.0
    %5352 = vmatprep.subr.mxu0 0.0
    %5353 = vmatpush1.msra.mxu0 0.0
    %5354 = vmatprep.subr.mxu0 0.0
    %5355 = vmatpush1.msra.mxu0 0.0
    %5356 = vmatprep.subr.mxu0 0.0
    %5357 = vmatpush1.msra.mxu0 0.0
    %5358 = vmatprep.subr.mxu0 0.0
    %5359 = vmatpush1.msra.mxu0 0.0
    %5360 = vmatprep.subr.mxu0 0.0
    %5361 = vmatpush1.msra.mxu0 0.0
    %5362 = vmatprep.subr.mxu0 0.0
    %5363 = vmatpush1.msra.mxu0 0.0
    %5364 = vmatprep.subr.mxu0 0.0
    %5365 = vmatpush1.msra.mxu0 0.0
    %5366 = vmatprep.subr.mxu0 0.0
    %5367 = vmatpush1.msra.mxu0 0.0
    %5368 = vmatprep.subr.mxu0 0.0
    %5369 = vmatpush1.msra.mxu0 0.0
    %5370 = vmatprep.subr.mxu0 0.0
    %5371 = vmatpush1.msra.mxu0 0.0
    %5372 = vmatprep.subr.mxu0 0.0
    %5373 = vmatpush1.msra.mxu0 0.0
    %5374 = vmatprep.subr.mxu0 0.0
    %5375 = vmatpush1.msra.mxu0 0.0
    %5376 = vmatprep.mubr.f32.mxu0 0.0
    %5377 = vmatmul.mubr.f32.gmra.mrb[0].mxu0 %v5301
    %v5378 = vpop.f32.mrb[0].mxu0
    %v5379 = vadd.f32 0.0, %v5378
    %v5380 = vpop.f32.mrb[0].mxu0
    %v5381 = vadd.f32 0.0, %v5380
    %5382 = vmatprep.mubr.f32.mxu0 0.0
    %5383 = vmatmul.mubr.f32.gmra.mrb[0].mxu0 %v5304
    %v5384 = vpop.f32.mrb[0].mxu0
    %v5385 = vadd.f32 0.0, %v5384
    %v5386 = vpop.f32.mrb[0].mxu0
    %v5387 = vadd.f32 0.0, %v5386
    %5388 = vmatprep.mubr.f32.mxu0 0.0
    %5389 = vmatmul.mubr.f32.gmra.mrb[0].mxu0 %v5307
    %v5390 = vpop.f32.mrb[0].mxu0
    %v5391 = vadd.f32 0.0, %v5390
    %v5392 = vpop.f32.mrb[0].mxu0
    %v5393 = vadd.f32 0.0, %v5392
    %5394 = vmatprep.mubr.f32.mxu0 0.0
    %5395 = vmatmul.mubr.f32.gmra.mrb[0].mxu0 %v5310
    %v5396 = vpop.f32.mrb[0].mxu0
    %v5397 = vadd.f32 0.0, %v5396
    %v5398 = vpop.f32.mrb[0].mxu0
    %v5399 = vadd.f32 0.0, %v5398
    %5400 = vdwg.mxu0
    %s5401 = scalar_lea.vmem %s6, 128
    %v5402 = vld [vmem:[%s5401] sm:$0xff]
    %v5403 = vld [vmem:[%s5401 + $0x8] sm:$0xff]
    %v5404 = vld [vmem:[%s5401 + $0x10] sm:$0xff]
    %v5405 = vld [vmem:[%s5401 + $0x18] sm:$0xff]
    %v5406 = vpack.c.bf16 %v5385, %v5379
    %v5407 = vpack.c.bf16 %v5387, %v5381
    %v5408 = vpack.c.bf16 %v5397, %v5391
    %v5409 = vpack.c.bf16 %v5399, %v5393
    %v5410 = vunpack.c.l.bf16 %v5406
    %v5411 = vunpack.c.l.bf16 %v5407
    %v5412 = vunpack.c.h.bf16 %v5406
    %v5413 = vunpack.c.h.bf16 %v5407
    %v5414 = vunpack.c.l.bf16 %v5408
    %v5415 = vunpack.c.l.bf16 %v5409
    %v5416 = vunpack.c.h.bf16 %v5408
    %v5417 = vunpack.c.h.bf16 %v5409
    %v5418 = vsub.f32 %v5379, %v5410
    %v5419 = vsub.f32 %v5381, %v5411
    %v5420 = vsub.f32 %v5385, %v5412
    %v5421 = vsub.f32 %v5387, %v5413
    %v5422 = vsub.f32 %v5391, %v5414
    %v5423 = vsub.f32 %v5393, %v5415
    %v5424 = vsub.f32 %v5397, %v5416
    %v5425 = vsub.f32 %v5399, %v5417
    %v5426 = vpack.c.bf16 %v5420, %v5418
    %v5427 = vpack.c.bf16 %v5421, %v5419
    %v5428 = vpack.c.bf16 %v5424, %v5422
    %v5429 = vpack.c.bf16 %v5425, %v5423
    %5430 = vmatprep.subr.bf16.mxu0 0
    %5431 = vmatpush1.bf16.msra.mxu0 1065369472
    %5432 = vmatprep.subr.bf16.mxu0 0
    %5433 = vmatpush1.bf16.msra.mxu0 1065369472
    %5434 = vmatprep.subr.bf16.mxu0 0
    %5435 = vmatpush1.bf16.msra.mxu0 1065369472
    %5436 = vmatprep.subr.bf16.mxu0 0
    %5437 = vmatpush1.bf16.msra.mxu0 1065369472
    %5438 = vmatprep.subr.bf16.mxu0 0
    %5439 = vmatpush1.bf16.msra.mxu0 1065369472
    %5440 = vmatprep.subr.bf16.mxu0 0
    %5441 = vmatpush1.bf16.msra.mxu0 1065369472
    %5442 = vmatprep.subr.bf16.mxu0 0
    %5443 = vmatpush1.bf16.msra.mxu0 1065369472
    %5444 = vmatprep.subr.bf16.mxu0 0
    %5445 = vmatpush1.bf16.msra.mxu0 1065369472
    %5446 = vmatprep.subr.bf16.mxu0 0
    %5447 = vmatpush1.bf16.msra.mxu0 1065369472
    %5448 = vmatprep.subr.bf16.mxu0 0
    %5449 = vmatpush1.bf16.msra.mxu0 1065369472
    %5450 = vmatprep.subr.bf16.mxu0 0
    %5451 = vmatpush1.bf16.msra.mxu0 1065369472
    %5452 = vmatprep.subr.bf16.mxu0 0
    %5453 = vmatpush1.bf16.msra.mxu0 1065369472
    %5454 = vmatprep.subr.bf16.mxu0 0
    %5455 = vmatpush1.bf16.msra.mxu0 1065369472
    %5456 = vmatprep.subr.bf16.mxu0 0
    %5457 = vmatpush1.bf16.msra.mxu0 1065369472
    %5458 = vmatprep.subr.bf16.mxu0 0
    %5459 = vmatpush1.bf16.msra.mxu0 1065369472
    %5460 = vmatprep.subr.bf16.mxu0 0
    %5461 = vmatpush1.bf16.msra.mxu0 1065369472
    %5462 = vmatprep.mubr.bf16.mxu0 %v5427
    %5463 = vmatmul.mubr.bf16.gmra.mrb[0].mxu0 %v5426
    %v5464 = vpop.f32.mrb[0].mxu0
    %v5465 = vadd.f32 0.0, %v5464
    %v5466 = vpop.f32.mrb[0].mxu0
    %v5467 = vpop.f32.mrb[0].mxu0
    %v5468 = vadd.f32 0.0, %v5467
    %v5469 = vpop.f32.mrb[0].mxu0
    %5470 = vmatprep.mubr.bf16.mxu0 %v5429
    %5471 = vmatmul.mubr.bf16.gmra.mrb[0].mxu0 %v5428
    %v5472 = vpop.f32.mrb[0].mxu0
    %v5473 = vadd.f32 0.0, %v5472
    %v5474 = vpop.f32.mrb[0].mxu0
    %v5475 = vpop.f32.mrb[0].mxu0
    %v5476 = vadd.f32 0.0, %v5475
    %v5477 = vpop.f32.mrb[0].mxu0
    %5478 = vdwg.mxu0
    %5479 = vmatprep.subr.bf16.mxu0 0
    %5480 = vmatpush1.bf16.msra.mxu0 1065369472
    %5481 = vmatprep.subr.bf16.mxu0 0
    %5482 = vmatpush1.bf16.msra.mxu0 1065369472
    %5483 = vmatprep.subr.bf16.mxu0 0
    %5484 = vmatpush1.bf16.msra.mxu0 1065369472
    %5485 = vmatprep.subr.bf16.mxu0 0
    %5486 = vmatpush1.bf16.msra.mxu0 1065369472
    %5487 = vmatprep.subr.bf16.mxu0 0
    %5488 = vmatpush1.bf16.msra.mxu0 1065369472
    %5489 = vmatprep.subr.bf16.mxu0 0
    %5490 = vmatpush1.bf16.msra.mxu0 1065369472
    %5491 = vmatprep.subr.bf16.mxu0 0
    %5492 = vmatpush1.bf16.msra.mxu0 1065369472
    %5493 = vmatprep.subr.bf16.mxu0 0
    %5494 = vmatpush1.bf16.msra.mxu0 1065369472
    %5495 = vmatprep.subr.bf16.mxu0 0
    %5496 = vmatpush1.bf16.msra.mxu0 1065369472
    %5497 = vmatprep.subr.bf16.mxu0 0
    %5498 = vmatpush1.bf16.msra.mxu0 1065369472
    %5499 = vmatprep.subr.bf16.mxu0 0
    %5500 = vmatpush1.bf16.msra.mxu0 1065369472
    %5501 = vmatprep.subr.bf16.mxu0 0
    %5502 = vmatpush1.bf16.msra.mxu0 1065369472
    %5503 = vmatprep.subr.bf16.mxu0 0
    %5504 = vmatpush1.bf16.msra.mxu0 1065369472
    %5505 = vmatprep.subr.bf16.mxu0 0
    %5506 = vmatpush1.bf16.msra.mxu0 1065369472
    %5507 = vmatprep.subr.bf16.mxu0 0
    %5508 = vmatpush1.bf16.msra.mxu0 1065369472
    %5509 = vmatprep.subr.bf16.mxu0 0
    %5510 = vmatpush1.bf16.msra.mxu0 1065369472
    %5511 = vmatprep.mubr.bf16.mxu0 %v5407
    %5512 = vmatmul.mubr.bf16.gmra.mrb[0].mxu0 %v5406
    %v5513 = vpop.f32.mrb[0].mxu0
    %v5514 = vadd.f32 %v5465, %v5513
    %v5515 = vpop.f32.mrb[0].mxu0
    %v5516 = vpop.f32.mrb[0].mxu0
    %v5517 = vadd.f32 %v5468, %v5516
    %v5518 = vpop.f32.mrb[0].mxu0
    %5519 = vmatprep.mubr.bf16.mxu0 %v5409
    %5520 = vmatmul.mubr.bf16.gmra.mrb[0].mxu0 %v5408
    %v5521 = vpop.f32.mrb[0].mxu0
    %v5522 = vadd.f32 %v5473, %v5521
    %v5523 = vpop.f32.mrb[0].mxu0
    %v5524 = vpop.f32.mrb[0].mxu0
    %v5525 = vadd.f32 %v5476, %v5524
    %v5526 = vpop.f32.mrb[0].mxu0
    %5527 = vdwg.mxu0
    %v5528 = vmul.f32 %v5514, 0.00390625
    %v5529 = vmul.f32 %v5517, 0.00390625
    %v5530 = vmul.f32 %v5522, 0.00390625
    %v5531 = vmul.f32 %v5525, 0.00390625
    %v5532 = vmul.f32 %v5379, %v5379
    %v5533 = vmul.f32 %v5381, %v5381
    %v5534 = vmul.f32 %v5385, %v5385
    %v5535 = vmul.f32 %v5387, %v5387
    %v5536 = vmul.f32 %v5391, %v5391
    %v5537 = vmul.f32 %v5393, %v5393
    %v5538 = vmul.f32 %v5397, %v5397
    %v5539 = vmul.f32 %v5399, %v5399
    %v5540 = vpack.c.bf16 %v5534, %v5532
    %v5541 = vpack.c.bf16 %v5535, %v5533
    %v5542 = vpack.c.bf16 %v5538, %v5536
    %v5543 = vpack.c.bf16 %v5539, %v5537
    %v5544 = vunpack.c.l.bf16 %v5540
    %v5545 = vunpack.c.l.bf16 %v5541
    %v5546 = vunpack.c.h.bf16 %v5540
    %v5547 = vunpack.c.h.bf16 %v5541
    %v5548 = vunpack.c.l.bf16 %v5542
    %v5549 = vunpack.c.l.bf16 %v5543
    %v5550 = vunpack.c.h.bf16 %v5542
    %v5551 = vunpack.c.h.bf16 %v5543
    %v5552 = vsub.f32 %v5532, %v5544
    %v5553 = vsub.f32 %v5533, %v5545
    %v5554 = vsub.f32 %v5534, %v5546
    %v5555 = vsub.f32 %v5535, %v5547
    %v5556 = vsub.f32 %v5536, %v5548
    %v5557 = vsub.f32 %v5537, %v5549
    %v5558 = vsub.f32 %v5538, %v5550
    %v5559 = vsub.f32 %v5539, %v5551
    %v5560 = vpack.c.bf16 %v5554, %v5552
    %v5561 = vpack.c.bf16 %v5555, %v5553
    %v5562 = vpack.c.bf16 %v5558, %v5556
    %v5563 = vpack.c.bf16 %v5559, %v5557
    %5564 = vmatprep.subr.bf16.mxu0 0
    %5565 = vmatpush1.bf16.msra.mxu0 1065369472
    %5566 = vmatprep.subr.bf16.mxu0 0
    %5567 = vmatpush1.bf16.msra.mxu0 1065369472
    %5568 = vmatprep.subr.bf16.mxu0 0
    %5569 = vmatpush1.bf16.msra.mxu0 1065369472
    %5570 = vmatprep.subr.bf16.mxu0 0
    %5571 = vmatpush1.bf16.msra.mxu0 1065369472
    %5572 = vmatprep.subr.bf16.mxu0 0
    %5573 = vmatpush1.bf16.msra.mxu0 1065369472
    %5574 = vmatprep.subr.bf16.mxu0 0
    %5575 = vmatpush1.bf16.msra.mxu0 1065369472
    %5576 = vmatprep.subr.bf16.mxu0 0
    %5577 = vmatpush1.bf16.msra.mxu0 1065369472
    %5578 = vmatprep.subr.bf16.mxu0 0
    %5579 = vmatpush1.bf16.msra.mxu0 1065369472
    %5580 = vmatprep.subr.bf16.mxu0 0
    %5581 = vmatpush1.bf16.msra.mxu0 1065369472
    %5582 = vmatprep.subr.bf16.mxu0 0
    %5583 = vmatpush1.bf16.msra.mxu0 1065369472
    %5584 = vmatprep.subr.bf16.mxu0 0
    %5585 = vmatpush1.bf16.msra.mxu0 1065369472
    %5586 = vmatprep.subr.bf16.mxu0 0
    %5587 = vmatpush1.bf16.msra.mxu0 1065369472
    %5588 = vmatprep.subr.bf16.mxu0 0
    %5589 = vmatpush1.bf16.msra.mxu0 1065369472
    %5590 = vmatprep.subr.bf16.mxu0 0
    %5591 = vmatpush1.bf16.msra.mxu0 1065369472
    %5592 = vmatprep.subr.bf16.mxu0 0
    %5593 = vmatpush1.bf16.msra.mxu0 1065369472
    %5594 = vmatprep.subr.bf16.mxu0 0
    %5595 = vmatpush1.bf16.msra.mxu0 1065369472
    %5596 = vmatprep.mubr.bf16.mxu0 %v5561
    %5597 = vmatmul.mubr.bf16.gmra.mrb[0].mxu0 %v5560
    %v5598 = vpop.f32.mrb[0].mxu0
    %v5599 = vadd.f32 0.0, %v5598
    %v5600 = vpop.f32.mrb[0].mxu0
    %v5601 = vpop.f32.mrb[0].mxu0
    %v5602 = vadd.f32 0.0, %v5601
    %v5603 = vpop.f32.mrb[0].mxu0
    %5604 = vmatprep.mubr.bf16.mxu0 %v5563
    %5605 = vmatmul.mubr.bf16.gmra.mrb[0].mxu0 %v5562
    %v5606 = vpop.f32.mrb[0].mxu0
    %v5607 = vadd.f32 0.0, %v5606
    %v5608 = vpop.f32.mrb[0].mxu0
    %v5609 = vpop.f32.mrb[0].mxu0
    %v5610 = vadd.f32 0.0, %v5609
    %v5611 = vpop.f32.mrb[0].mxu0
    %5612 = vdwg.mxu0
    %5613 = vmatprep.subr.bf16.mxu0 0
    %5614 = vmatpush1.bf16.msra.mxu0 1065369472
    %5615 = vmatprep.subr.bf16.mxu0 0
    %5616 = vmatpush1.bf16.msra.mxu0 1065369472
    %5617 = vmatprep.subr.bf16.mxu0 0
    %5618 = vmatpush1.bf16.msra.mxu0 1065369472
    %5619 = vmatprep.subr.bf16.mxu0 0
    %5620 = vmatpush1.bf16.msra.mxu0 1065369472
    %5621 = vmatprep.subr.bf16.mxu0 0
    %5622 = vmatpush1.bf16.msra.mxu0 1065369472
    %5623 = vmatprep.subr.bf16.mxu0 0
    %5624 = vmatpush1.bf16.msra.mxu0 1065369472
    %5625 = vmatprep.subr.bf16.mxu0 0
    %5626 = vmatpush1.bf16.msra.mxu0 1065369472
    %5627 = vmatprep.subr.bf16.mxu0 0
    %5628 = vmatpush1.bf16.msra.mxu0 1065369472
    %5629 = vmatprep.subr.bf16.mxu0 0
    %5630 = vmatpush1.bf16.msra.mxu0 1065369472
    %5631 = vmatprep.subr.bf16.mxu0 0
    %5632 = vmatpush1.bf16.msra.mxu0 1065369472
    %5633 = vmatprep.subr.bf16.mxu0 0
    %5634 = vmatpush1.bf16.msra.mxu0 1065369472
    %5635 = vmatprep.subr.bf16.mxu0 0
    %5636 = vmatpush1.bf16.msra.mxu0 1065369472
    %5637 = vmatprep.subr.bf16.mxu0 0
    %5638 = vmatpush1.bf16.msra.mxu0 1065369472
    %5639 = vmatprep.subr.bf16.mxu0 0
    %5640 = vmatpush1.bf16.msra.mxu0 1065369472
    %5641 = vmatprep.subr.bf16.mxu0 0
    %5642 = vmatpush1.bf16.msra.mxu0 1065369472
    %5643 = vmatprep.subr.bf16.mxu0 0
    %5644 = vmatpush1.bf16.msra.mxu0 1065369472
    %5645 = vmatprep.mubr.bf16.mxu0 %v5541
    %5646 = vmatmul.mubr.bf16.gmra.mrb[0].mxu0 %v5540
    %v5647 = vpop.f32.mrb[0].mxu0
    %v5648 = vadd.f32 %v5599, %v5647
    %v5649 = vpop.f32.mrb[0].mxu0
    %v5650 = vpop.f32.mrb[0].mxu0
    %v5651 = vadd.f32 %v5602, %v5650
    %v5652 = vpop.f32.mrb[0].mxu0
    %5653 = vmatprep.mubr.bf16.mxu0 %v5543
    %5654 = vmatmul.mubr.bf16.gmra.mrb[0].mxu0 %v5542
    %v5655 = vpop.f32.mrb[0].mxu0
    %v5656 = vadd.f32 %v5607, %v5655
    %v5657 = vpop.f32.mrb[0].mxu0
    %v5658 = vpop.f32.mrb[0].mxu0
    %v5659 = vadd.f32 %v5610, %v5658
    %v5660 = vpop.f32.mrb[0].mxu0
    %5661 = vdwg.mxu0
    %v5662 = vmul.f32 %v5648, 0.00390625
    %v5663 = vmul.f32 %v5651, 0.00390625
    %v5664 = vmul.f32 %v5656, 0.00390625
    %v5665 = vmul.f32 %v5659, 0.00390625
    %v5666 = vmul.f32 %v5528, %v5528
    %v5667 = vmul.f32 %v5529, %v5529
    %v5668 = vmul.f32 %v5530, %v5530
    %v5669 = vmul.f32 %v5531, %v5531
    %v5670 = vsub.f32 %v5662, %v5666
    %v5671 = vsub.f32 %v5663, %v5667
    %v5672 = vsub.f32 %v5664, %v5668
    %v5673 = vsub.f32 %v5665, %v5669
    %v5674 = vmax.f32 %v5670, 0.0
    %v5675 = vmax.f32 %v5671, 0.0
    %v5676 = vmax.f32 %v5672, 0.0
    %v5677 = vmax.f32 %v5673, 0.0
    %s5678 = scalar_lea.vmem %s7, 128
    %v5679 = vld [vmem:[%s5678] sm:$0xff]
    %v5680 = vld [vmem:[%s5678 + $0x8] sm:$0xff]
    %v5681 = vld [vmem:[%s5678 + $0x10] sm:$0xff]
    %v5682 = vld [vmem:[%s5678 + $0x18] sm:$0xff]
    %v5683 = vadd.f32 %v5674, 1e-05
    %v5684 = vadd.f32 %v5675, 1e-05
    %v5685 = vadd.f32 %v5676, 1e-05
    %v5686 = vadd.f32 %v5677, 1e-05
    %v5687 = vrsqrt.pop %v5683
    %v5688 = vrsqrt.pop %v5684
    %v5689 = vrsqrt.pop %v5685
    %v5690 = vrsqrt.pop %v5686
    %v5691 = vmul.f32 %v5679, %v5687
    %v5692 = vmul.f32 %v5680, %v5688
    %v5693 = vmul.f32 %v5681, %v5689
    %v5694 = vmul.f32 %v5682, %v5690
    %s5695 = scalar_lea.vmem %s8, 128
    %v5696 = vld [vmem:[%s5695] sm:$0xff]
    %v5697 = vld [vmem:[%s5695 + $0x8] sm:$0xff]
    %v5698 = vld [vmem:[%s5695 + $0x10] sm:$0xff]
    %v5699 = vld [vmem:[%s5695 + $0x18] sm:$0xff]
    %v5700 = vmul.f32 %v5528, %v5691
    %v5701 = vmul.f32 %v5529, %v5692
    %v5702 = vmul.f32 %v5530, %v5693
    %v5703 = vmul.f32 %v5531, %v5694
    %v5704 = vsub.f32 %v5696, %v5700
    %v5705 = vsub.f32 %v5697, %v5701
    %v5706 = vsub.f32 %v5698, %v5702
    %v5707 = vsub.f32 %v5699, %v5703
    %5709 = vset.pattern.permute.xlu0 0
    %5710 = vperm.xlu0 %5709, %v5691
    %v5711 = vpop.permute.xlu0 %5710
    %5714 = vset.pattern.permute.xlu0 0
    %5715 = vperm.xlu0 %5714, %v5692
    %v5716 = vpop.permute.xlu0 %5715
    %5719 = vset.pattern.permute.xlu0 0
    %5720 = vperm.xlu0 %5719, %v5693
    %v5721 = vpop.permute.xlu0 %5720
    %5724 = vset.pattern.permute.xlu0 0
    %5725 = vperm.xlu0 %5724, %v5694
    %v5726 = vpop.permute.xlu0 %5725
    %v5728 = vmul.f32 %v5379, %v5711
    %v5729 = vmul.f32 %v5381, %v5711
    %v5730 = vmul.f32 %v5385, %v5716
    %v5731 = vmul.f32 %v5387, %v5716
    %v5732 = vmul.f32 %v5391, %v5721
    %v5733 = vmul.f32 %v5393, %v5721
    %v5734 = vmul.f32 %v5397, %v5726
    %v5735 = vmul.f32 %v5399, %v5726
    %5737 = vset.pattern.permute.xlu0 0
    %5738 = vperm.xlu0 %5737, %v5704
    %v5739 = vpop.permute.xlu0 %5738
    %5742 = vset.pattern.permute.xlu0 0
    %5743 = vperm.xlu0 %5742, %v5705
    %v5744 = vpop.permute.xlu0 %5743
    %5747 = vset.pattern.permute.xlu0 0
    %5748 = vperm.xlu0 %5747, %v5706
    %v5749 = vpop.permute.xlu0 %5748
    %5752 = vset.pattern.permute.xlu0 0
    %5753 = vperm.xlu0 %5752, %v5707
    %v5754 = vpop.permute.xlu0 %5753
    %v5756 = vadd.f32 %v5728, %v5739
    %v5757 = vadd.f32 %v5729, %v5739
    %v5758 = vadd.f32 %v5730, %v5744
    %v5759 = vadd.f32 %v5731, %v5744
    %v5760 = vadd.f32 %v5732, %v5749
    %v5761 = vadd.f32 %v5733, %v5749
    %v5762 = vadd.f32 %v5734, %v5754
    %v5763 = vadd.f32 %v5735, %v5754
    %v5764 = vmax.f32 %v5756, 0.0
    %v5765 = vmax.f32 %v5757, 0.0
    %v5766 = vmax.f32 %v5758, 0.0
    %v5767 = vmax.f32 %v5759, 0.0
    %v5768 = vmax.f32 %v5760, 0.0
    %v5769 = vmax.f32 %v5761, 0.0
    %v5770 = vmax.f32 %v5762, 0.0
    %v5771 = vmax.f32 %v5763, 0.0
    %5772 = vrot.lane.b32.xlu0 %v5764, 127
    %v5773 = vpop.permute.xlu0 %5772
    %5774 = vrot.lane.b32.xlu0 %v5765, 127
    %v5775 = vpop.permute.xlu0 %5774
    %v5776 = vsel %vm591, %v5773, %v5775
    %v5777 = vsel %vm591, %v5775, %v5773
    %v5778 = vsel %vm596, %v5776, 0.0
    %v5779 = vsel %vm597, %v5777, 0.0
    %5780 = vrot.lane.b32.xlu0 %v5764, 1
    %v5781 = vpop.permute.xlu0 %5780
    %5782 = vrot.lane.b32.xlu0 %v5765, 1
    %v5783 = vpop.permute.xlu0 %5782
    %v5784 = vsel %vm604, %v5781, %v5783
    %v5785 = vsel %vm604, %v5783, %v5781
    %v5786 = vsel %vm609, %v5785, 0.0
    %v5787 = vsel %vm610, %v5784, 0.0
    %v5788 = vsel %vm614, %v5778, %v5786
    %v5789 = vsel %vm614, %v5779, %v5787
    %v5791 = vsel %vm617, %v5402, 0
    %v5794 = vsel %vm617, %v5403, 0
    %v5797 = vsel %vm617, %v5404, 0
    %v5800 = vsel %vm617, %v5405, 0
    %5802 = vmatprep.subr.mxu0 %v5789
    %5803 = vmatpush1.msra.mxu0 %v5788
    %5804 = vmatprep.subr.mxu0 %v5767
    %5805 = vmatpush1.msra.mxu0 %v5766
    %5806 = vmatprep.subr.mxu0 %v5769
    %5807 = vmatpush1.msra.mxu0 %v5768
    %5808 = vmatprep.subr.mxu0 %v5771
    %5809 = vmatpush1.msra.mxu0 %v5770
    %5810 = vmatprep.subr.mxu0 0.0
    %5811 = vmatpush1.msra.mxu0 0.0
    %5812 = vmatprep.subr.mxu0 0.0
    %5813 = vmatpush1.msra.mxu0 0.0
    %5814 = vmatprep.subr.mxu0 0.0
    %5815 = vmatpush1.msra.mxu0 0.0
    %5816 = vmatprep.subr.mxu0 0.0
    %5817 = vmatpush1.msra.mxu0 0.0
    %5818 = vmatprep.subr.mxu0 0.0
    %5819 = vmatpush1.msra.mxu0 0.0
    %5820 = vmatprep.subr.mxu0 0.0
    %5821 = vmatpush1.msra.mxu0 0.0
    %5822 = vmatprep.subr.mxu0 0.0
    %5823 = vmatpush1.msra.mxu0 0.0
    %5824 = vmatprep.subr.mxu0 0.0
    %5825 = vmatpush1.msra.mxu0 0.0
    %5826 = vmatprep.subr.mxu0 0.0
    %5827 = vmatpush1.msra.mxu0 0.0
    %5828 = vmatprep.subr.mxu0 0.0
    %5829 = vmatpush1.msra.mxu0 0.0
    %5830 = vmatprep.subr.mxu0 0.0
    %5831 = vmatpush1.msra.mxu0 0.0
    %5832 = vmatprep.subr.mxu0 0.0
    %5833 = vmatpush1.msra.mxu0 0.0
    %5834 = vmatprep.subr.mxu0 0.0
    %5835 = vmatpush1.msra.mxu0 0.0
    %5836 = vmatprep.subr.mxu0 0.0
    %5837 = vmatpush1.msra.mxu0 0.0
    %5838 = vmatprep.subr.mxu0 0.0
    %5839 = vmatpush1.msra.mxu0 0.0
    %5840 = vmatprep.subr.mxu0 0.0
    %5841 = vmatpush1.msra.mxu0 0.0
    %5842 = vmatprep.subr.mxu0 0.0
    %5843 = vmatpush1.msra.mxu0 0.0
    %5844 = vmatprep.subr.mxu0 0.0
    %5845 = vmatpush1.msra.mxu0 0.0
    %5846 = vmatprep.subr.mxu0 0.0
    %5847 = vmatpush1.msra.mxu0 0.0
    %5848 = vmatprep.subr.mxu0 0.0
    %5849 = vmatpush1.msra.mxu0 0.0
    %5850 = vmatprep.subr.mxu0 0.0
    %5851 = vmatpush1.msra.mxu0 0.0
    %5852 = vmatprep.subr.mxu0 0.0
    %5853 = vmatpush1.msra.mxu0 0.0
    %5854 = vmatprep.subr.mxu0 0.0
    %5855 = vmatpush1.msra.mxu0 0.0
    %5856 = vmatprep.subr.mxu0 0.0
    %5857 = vmatpush1.msra.mxu0 0.0
    %5858 = vmatprep.subr.mxu0 0.0
    %5859 = vmatpush1.msra.mxu0 0.0
    %5860 = vmatprep.subr.mxu0 0.0
    %5861 = vmatpush1.msra.mxu0 0.0
    %5862 = vmatprep.subr.mxu0 0.0
    %5863 = vmatpush1.msra.mxu0 0.0
    %5864 = vmatprep.subr.mxu0 0.0
    %5865 = vmatpush1.msra.mxu0 0.0
    %5866 = vmatprep.mubr.f32.mxu0 0.0
    %5867 = vmatmul.mubr.f32.gmra.mrb[0].mxu0 %v5791
    %v5868 = vpop.f32.mrb[0].mxu0
    %v5869 = vadd.f32 0.0, %v5868
    %v5870 = vpop.f32.mrb[0].mxu0
    %v5871 = vadd.f32 0.0, %v5870
    %5872 = vmatprep.mubr.f32.mxu0 0.0
    %5873 = vmatmul.mubr.f32.gmra.mrb[0].mxu0 %v5794
    %v5874 = vpop.f32.mrb[0].mxu0
    %v5875 = vadd.f32 0.0, %v5874
    %v5876 = vpop.f32.mrb[0].mxu0
    %v5877 = vadd.f32 0.0, %v5876
    %5878 = vmatprep.mubr.f32.mxu0 0.0
    %5879 = vmatmul.mubr.f32.gmra.mrb[0].mxu0 %v5797
    %v5880 = vpop.f32.mrb[0].mxu0
    %v5881 = vadd.f32 0.0, %v5880
    %v5882 = vpop.f32.mrb[0].mxu0
    %v5883 = vadd.f32 0.0, %v5882
    %5884 = vmatprep.mubr.f32.mxu0 0.0
    %5885 = vmatmul.mubr.f32.gmra.mrb[0].mxu0 %v5800
    %v5886 = vpop.f32.mrb[0].mxu0
    %v5887 = vadd.f32 0.0, %v5886
    %v5888 = vpop.f32.mrb[0].mxu0
    %v5889 = vadd.f32 0.0, %v5888
    %5890 = vdwg.mxu0
    %v5891 = vpack.c.bf16 %v5875, %v5869
    %v5892 = vpack.c.bf16 %v5877, %v5871
    %v5893 = vpack.c.bf16 %v5887, %v5881
    %v5894 = vpack.c.bf16 %v5889, %v5883
    %v5895 = vunpack.c.l.bf16 %v5891
    %v5896 = vunpack.c.l.bf16 %v5892
    %v5897 = vunpack.c.h.bf16 %v5891
    %v5898 = vunpack.c.h.bf16 %v5892
    %v5899 = vunpack.c.l.bf16 %v5893
    %v5900 = vunpack.c.l.bf16 %v5894
    %v5901 = vunpack.c.h.bf16 %v5893
    %v5902 = vunpack.c.h.bf16 %v5894
    %v5903 = vsub.f32 %v5869, %v5895
    %v5904 = vsub.f32 %v5871, %v5896
    %v5905 = vsub.f32 %v5875, %v5897
    %v5906 = vsub.f32 %v5877, %v5898
    %v5907 = vsub.f32 %v5881, %v5899
    %v5908 = vsub.f32 %v5883, %v5900
    %v5909 = vsub.f32 %v5887, %v5901
    %v5910 = vsub.f32 %v5889, %v5902
    %v5911 = vpack.c.bf16 %v5905, %v5903
    %v5912 = vpack.c.bf16 %v5906, %v5904
    %v5913 = vpack.c.bf16 %v5909, %v5907
    %v5914 = vpack.c.bf16 %v5910, %v5908
    %5915 = vmatprep.subr.bf16.mxu0 0
    %5916 = vmatpush1.bf16.msra.mxu0 1065369472
    %5917 = vmatprep.subr.bf16.mxu0 0
    %5918 = vmatpush1.bf16.msra.mxu0 1065369472
    %5919 = vmatprep.subr.bf16.mxu0 0
    %5920 = vmatpush1.bf16.msra.mxu0 1065369472
    %5921 = vmatprep.subr.bf16.mxu0 0
    %5922 = vmatpush1.bf16.msra.mxu0 1065369472
    %5923 = vmatprep.subr.bf16.mxu0 0
    %5924 = vmatpush1.bf16.msra.mxu0 1065369472
    %5925 = vmatprep.subr.bf16.mxu0 0
    %5926 = vmatpush1.bf16.msra.mxu0 1065369472
    %5927 = vmatprep.subr.bf16.mxu0 0
    %5928 = vmatpush1.bf16.msra.mxu0 1065369472
    %5929 = vmatprep.subr.bf16.mxu0 0
    %5930 = vmatpush1.bf16.msra.mxu0 1065369472
    %5931 = vmatprep.subr.bf16.mxu0 0
    %5932 = vmatpush1.bf16.msra.mxu0 1065369472
    %5933 = vmatprep.subr.bf16.mxu0 0
    %5934 = vmatpush1.bf16.msra.mxu0 1065369472
    %5935 = vmatprep.subr.bf16.mxu0 0
    %5936 = vmatpush1.bf16.msra.mxu0 1065369472
    %5937 = vmatprep.subr.bf16.mxu0 0
    %5938 = vmatpush1.bf16.msra.mxu0 1065369472
    %5939 = vmatprep.subr.bf16.mxu0 0
    %5940 = vmatpush1.bf16.msra.mxu0 1065369472
    %5941 = vmatprep.subr.bf16.mxu0 0
    %5942 = vmatpush1.bf16.msra.mxu0 1065369472
    %5943 = vmatprep.subr.bf16.mxu0 0
    %5944 = vmatpush1.bf16.msra.mxu0 1065369472
    %5945 = vmatprep.subr.bf16.mxu0 0
    %5946 = vmatpush1.bf16.msra.mxu0 1065369472
    %5947 = vmatprep.mubr.bf16.mxu0 %v5912
    %5948 = vmatmul.mubr.bf16.gmra.mrb[0].mxu0 %v5911
    %v5949 = vpop.f32.mrb[0].mxu0
    %v5950 = vadd.f32 0.0, %v5949
    %v5951 = vpop.f32.mrb[0].mxu0
    %v5952 = vpop.f32.mrb[0].mxu0
    %v5953 = vadd.f32 0.0, %v5952
    %v5954 = vpop.f32.mrb[0].mxu0
    %5955 = vmatprep.mubr.bf16.mxu0 %v5914
    %5956 = vmatmul.mubr.bf16.gmra.mrb[0].mxu0 %v5913
    %v5957 = vpop.f32.mrb[0].mxu0
    %v5958 = vadd.f32 0.0, %v5957
    %v5959 = vpop.f32.mrb[0].mxu0
    %v5960 = vpop.f32.mrb[0].mxu0
    %v5961 = vadd.f32 0.0, %v5960
    %v5962 = vpop.f32.mrb[0].mxu0
    %5963 = vdwg.mxu0
    %5964 = vmatprep.subr.bf16.mxu0 0
    %5965 = vmatpush1.bf16.msra.mxu0 1065369472
    %5966 = vmatprep.subr.bf16.mxu0 0
    %5967 = vmatpush1.bf16.msra.mxu0 1065369472
    %5968 = vmatprep.subr.bf16.mxu0 0
    %5969 = vmatpush1.bf16.msra.mxu0 1065369472
    %5970 = vmatprep.subr.bf16.mxu0 0
    %5971 = vmatpush1.bf16.msra.mxu0 1065369472
    %5972 = vmatprep.subr.bf16.mxu0 0
    %5973 = vmatpush1.bf16.msra.mxu0 1065369472
    %5974 = vmatprep.subr.bf16.mxu0 0
    %5975 = vmatpush1.bf16.msra.mxu0 1065369472
    %5976 = vmatprep.subr.bf16.mxu0 0
    %5977 = vmatpush1.bf16.msra.mxu0 1065369472
    %5978 = vmatprep.subr.bf16.mxu0 0
    %5979 = vmatpush1.bf16.msra.mxu0 1065369472
    %5980 = vmatprep.subr.bf16.mxu0 0
    %5981 = vmatpush1.bf16.msra.mxu0 1065369472
    %5982 = vmatprep.subr.bf16.mxu0 0
    %5983 = vmatpush1.bf16.msra.mxu0 1065369472
    %5984 = vmatprep.subr.bf16.mxu0 0
    %5985 = vmatpush1.bf16.msra.mxu0 1065369472
    %5986 = vmatprep.subr.bf16.mxu0 0
    %5987 = vmatpush1.bf16.msra.mxu0 1065369472
    %5988 = vmatprep.subr.bf16.mxu0 0
    %5989 = vmatpush1.bf16.msra.mxu0 1065369472
    %5990 = vmatprep.subr.bf16.mxu0 0
    %5991 = vmatpush1.bf16.msra.mxu0 1065369472
    %5992 = vmatprep.subr.bf16.mxu0 0
    %5993 = vmatpush1.bf16.msra.mxu0 1065369472
    %5994 = vmatprep.subr.bf16.mxu0 0
    %5995 = vmatpush1.bf16.msra.mxu0 1065369472
    %5996 = vmatprep.mubr.bf16.mxu0 %v5892
    %5997 = vmatmul.mubr.bf16.gmra.mrb[0].mxu0 %v5891
    %v5998 = vpop.f32.mrb[0].mxu0
    %v5999 = vadd.f32 %v5950, %v5998
    %v6000 = vpop.f32.mrb[0].mxu0
    %v6001 = vpop.f32.mrb[0].mxu0
    %v6002 = vadd.f32 %v5953, %v6001
    %v6003 = vpop.f32.mrb[0].mxu0
    %6004 = vmatprep.mubr.bf16.mxu0 %v5894
    %6005 = vmatmul.mubr.bf16.gmra.mrb[0].mxu0 %v5893
    %v6006 = vpop.f32.mrb[0].mxu0
    %v6007 = vadd.f32 %v5958, %v6006
    %v6008 = vpop.f32.mrb[0].mxu0
    %v6009 = vpop.f32.mrb[0].mxu0
    %v6010 = vadd.f32 %v5961, %v6009
    %v6011 = vpop.f32.mrb[0].mxu0
    %6012 = vdwg.mxu0
    %v6013 = vmul.f32 %v5999, 0.00390625
    %v6014 = vmul.f32 %v6002, 0.00390625
    %v6015 = vmul.f32 %v6007, 0.00390625
    %v6016 = vmul.f32 %v6010, 0.00390625
    %v6017 = vmul.f32 %v5869, %v5869
    %v6018 = vmul.f32 %v5871, %v5871
    %v6019 = vmul.f32 %v5875, %v5875
    %v6020 = vmul.f32 %v5877, %v5877
    %v6021 = vmul.f32 %v5881, %v5881
    %v6022 = vmul.f32 %v5883, %v5883
    %v6023 = vmul.f32 %v5887, %v5887
    %v6024 = vmul.f32 %v5889, %v5889
    %v6025 = vpack.c.bf16 %v6019, %v6017
    %v6026 = vpack.c.bf16 %v6020, %v6018
    %v6027 = vpack.c.bf16 %v6023, %v6021
    %v6028 = vpack.c.bf16 %v6024, %v6022
    %v6029 = vunpack.c.l.bf16 %v6025
    %v6030 = vunpack.c.l.bf16 %v6026
    %v6031 = vunpack.c.h.bf16 %v6025
    %v6032 = vunpack.c.h.bf16 %v6026
    %v6033 = vunpack.c.l.bf16 %v6027
    %v6034 = vunpack.c.l.bf16 %v6028
    %v6035 = vunpack.c.h.bf16 %v6027
    %v6036 = vunpack.c.h.bf16 %v6028
    %v6037 = vsub.f32 %v6017, %v6029
    %v6038 = vsub.f32 %v6018, %v6030
    %v6039 = vsub.f32 %v6019, %v6031
    %v6040 = vsub.f32 %v6020, %v6032
    %v6041 = vsub.f32 %v6021, %v6033
    %v6042 = vsub.f32 %v6022, %v6034
    %v6043 = vsub.f32 %v6023, %v6035
    %v6044 = vsub.f32 %v6024, %v6036
    %v6045 = vpack.c.bf16 %v6039, %v6037
    %v6046 = vpack.c.bf16 %v6040, %v6038
    %v6047 = vpack.c.bf16 %v6043, %v6041
    %v6048 = vpack.c.bf16 %v6044, %v6042
    %6049 = vmatprep.subr.bf16.mxu0 0
    %6050 = vmatpush1.bf16.msra.mxu0 1065369472
    %6051 = vmatprep.subr.bf16.mxu0 0
    %6052 = vmatpush1.bf16.msra.mxu0 1065369472
    %6053 = vmatprep.subr.bf16.mxu0 0
    %6054 = vmatpush1.bf16.msra.mxu0 1065369472
    %6055 = vmatprep.subr.bf16.mxu0 0
    %6056 = vmatpush1.bf16.msra.mxu0 1065369472
    %6057 = vmatprep.subr.bf16.mxu0 0
    %6058 = vmatpush1.bf16.msra.mxu0 1065369472
    %6059 = vmatprep.subr.bf16.mxu0 0
    %6060 = vmatpush1.bf16.msra.mxu0 1065369472
    %6061 = vmatprep.subr.bf16.mxu0 0
    %6062 = vmatpush1.bf16.msra.mxu0 1065369472
    %6063 = vmatprep.subr.bf16.mxu0 0
    %6064 = vmatpush1.bf16.msra.mxu0 1065369472
    %6065 = vmatprep.subr.bf16.mxu0 0
    %6066 = vmatpush1.bf16.msra.mxu0 1065369472
    %6067 = vmatprep.subr.bf16.mxu0 0
    %6068 = vmatpush1.bf16.msra.mxu0 1065369472
    %6069 = vmatprep.subr.bf16.mxu0 0
    %6070 = vmatpush1.bf16.msra.mxu0 1065369472
    %6071 = vmatprep.subr.bf16.mxu0 0
    %6072 = vmatpush1.bf16.msra.mxu0 1065369472
    %6073 = vmatprep.subr.bf16.mxu0 0
    %6074 = vmatpush1.bf16.msra.mxu0 1065369472
    %6075 = vmatprep.subr.bf16.mxu0 0
    %6076 = vmatpush1.bf16.msra.mxu0 1065369472
    %6077 = vmatprep.subr.bf16.mxu0 0
    %6078 = vmatpush1.bf16.msra.mxu0 1065369472
    %6079 = vmatprep.subr.bf16.mxu0 0
    %6080 = vmatpush1.bf16.msra.mxu0 1065369472
    %6081 = vmatprep.mubr.bf16.mxu0 %v6046
    %6082 = vmatmul.mubr.bf16.gmra.mrb[0].mxu0 %v6045
    %v6083 = vpop.f32.mrb[0].mxu0
    %v6084 = vadd.f32 0.0, %v6083
    %v6085 = vpop.f32.mrb[0].mxu0
    %v6086 = vpop.f32.mrb[0].mxu0
    %v6087 = vadd.f32 0.0, %v6086
    %v6088 = vpop.f32.mrb[0].mxu0
    %6089 = vmatprep.mubr.bf16.mxu0 %v6048
    %6090 = vmatmul.mubr.bf16.gmra.mrb[0].mxu0 %v6047
    %v6091 = vpop.f32.mrb[0].mxu0
    %v6092 = vadd.f32 0.0, %v6091
    %v6093 = vpop.f32.mrb[0].mxu0
    %v6094 = vpop.f32.mrb[0].mxu0
    %v6095 = vadd.f32 0.0, %v6094
    %v6096 = vpop.f32.mrb[0].mxu0
    %6097 = vdwg.mxu0
    %6098 = vmatprep.subr.bf16.mxu0 0
    %6099 = vmatpush1.bf16.msra.mxu0 1065369472
    %6100 = vmatprep.subr.bf16.mxu0 0
    %6101 = vmatpush1.bf16.msra.mxu0 1065369472
    %6102 = vmatprep.subr.bf16.mxu0 0
    %6103 = vmatpush1.bf16.msra.mxu0 1065369472
    %6104 = vmatprep.subr.bf16.mxu0 0
    %6105 = vmatpush1.bf16.msra.mxu0 1065369472
    %6106 = vmatprep.subr.bf16.mxu0 0
    %6107 = vmatpush1.bf16.msra.mxu0 1065369472
    %6108 = vmatprep.subr.bf16.mxu0 0
    %6109 = vmatpush1.bf16.msra.mxu0 1065369472
    %6110 = vmatprep.subr.bf16.mxu0 0
    %6111 = vmatpush1.bf16.msra.mxu0 1065369472
    %6112 = vmatprep.subr.bf16.mxu0 0
    %6113 = vmatpush1.bf16.msra.mxu0 1065369472
    %6114 = vmatprep.subr.bf16.mxu0 0
    %6115 = vmatpush1.bf16.msra.mxu0 1065369472
    %6116 = vmatprep.subr.bf16.mxu0 0
    %6117 = vmatpush1.bf16.msra.mxu0 1065369472
    %6118 = vmatprep.subr.bf16.mxu0 0
    %6119 = vmatpush1.bf16.msra.mxu0 1065369472
    %6120 = vmatprep.subr.bf16.mxu0 0
    %6121 = vmatpush1.bf16.msra.mxu0 1065369472
    %6122 = vmatprep.subr.bf16.mxu0 0
    %6123 = vmatpush1.bf16.msra.mxu0 1065369472
    %6124 = vmatprep.subr.bf16.mxu0 0
    %6125 = vmatpush1.bf16.msra.mxu0 1065369472
    %6126 = vmatprep.subr.bf16.mxu0 0
    %6127 = vmatpush1.bf16.msra.mxu0 1065369472
    %6128 = vmatprep.subr.bf16.mxu0 0
    %6129 = vmatpush1.bf16.msra.mxu0 1065369472
    %6130 = vmatprep.mubr.bf16.mxu0 %v6026
    %6131 = vmatmul.mubr.bf16.gmra.mrb[0].mxu0 %v6025
    %v6132 = vpop.f32.mrb[0].mxu0
    %v6133 = vadd.f32 %v6084, %v6132
    %v6134 = vpop.f32.mrb[0].mxu0
    %v6135 = vpop.f32.mrb[0].mxu0
    %v6136 = vadd.f32 %v6087, %v6135
    %v6137 = vpop.f32.mrb[0].mxu0
    %6138 = vmatprep.mubr.bf16.mxu0 %v6028
    %6139 = vmatmul.mubr.bf16.gmra.mrb[0].mxu0 %v6027
    %v6140 = vpop.f32.mrb[0].mxu0
    %v6141 = vadd.f32 %v6092, %v6140
    %v6142 = vpop.f32.mrb[0].mxu0
    %v6143 = vpop.f32.mrb[0].mxu0
    %v6144 = vadd.f32 %v6095, %v6143
    %v6145 = vpop.f32.mrb[0].mxu0
    %6146 = vdwg.mxu0
    %v6147 = vmul.f32 %v6133, 0.00390625
    %v6148 = vmul.f32 %v6136, 0.00390625
    %v6149 = vmul.f32 %v6141, 0.00390625
    %v6150 = vmul.f32 %v6144, 0.00390625
    %v6151 = vmul.f32 %v6013, %v6013
    %v6152 = vmul.f32 %v6014, %v6014
    %v6153 = vmul.f32 %v6015, %v6015
    %v6154 = vmul.f32 %v6016, %v6016
    %v6155 = vsub.f32 %v6147, %v6151
    %v6156 = vsub.f32 %v6148, %v6152
    %v6157 = vsub.f32 %v6149, %v6153
    %v6158 = vsub.f32 %v6150, %v6154
    %v6159 = vmax.f32 %v6155, 0.0
    %v6160 = vmax.f32 %v6156, 0.0
    %v6161 = vmax.f32 %v6157, 0.0
    %v6162 = vmax.f32 %v6158, 0.0
    %s6163 = scalar_lea.vmem %s7, 160
    %v6164 = vld [vmem:[%s6163] sm:$0xff]
    %v6165 = vld [vmem:[%s6163 + $0x8] sm:$0xff]
    %v6166 = vld [vmem:[%s6163 + $0x10] sm:$0xff]
    %v6167 = vld [vmem:[%s6163 + $0x18] sm:$0xff]
    %v6168 = vadd.f32 %v6159, 1e-05
    %v6169 = vadd.f32 %v6160, 1e-05
    %v6170 = vadd.f32 %v6161, 1e-05
    %v6171 = vadd.f32 %v6162, 1e-05
    %v6172 = vrsqrt.pop %v6168
    %v6173 = vrsqrt.pop %v6169
    %v6174 = vrsqrt.pop %v6170
    %v6175 = vrsqrt.pop %v6171
    %v6176 = vmul.f32 %v6164, %v6172
    %v6177 = vmul.f32 %v6165, %v6173
    %v6178 = vmul.f32 %v6166, %v6174
    %v6179 = vmul.f32 %v6167, %v6175
    %s6180 = scalar_lea.vmem %s8, 160
    %v6181 = vld [vmem:[%s6180] sm:$0xff]
    %v6182 = vld [vmem:[%s6180 + $0x8] sm:$0xff]
    %v6183 = vld [vmem:[%s6180 + $0x10] sm:$0xff]
    %v6184 = vld [vmem:[%s6180 + $0x18] sm:$0xff]
    %v6185 = vmul.f32 %v6013, %v6176
    %v6186 = vmul.f32 %v6014, %v6177
    %v6187 = vmul.f32 %v6015, %v6178
    %v6188 = vmul.f32 %v6016, %v6179
    %v6189 = vsub.f32 %v6181, %v6185
    %v6190 = vsub.f32 %v6182, %v6186
    %v6191 = vsub.f32 %v6183, %v6187
    %v6192 = vsub.f32 %v6184, %v6188
    %6194 = vset.pattern.permute.xlu0 0
    %6195 = vperm.xlu0 %6194, %v6176
    %v6196 = vpop.permute.xlu0 %6195
    %6199 = vset.pattern.permute.xlu0 0
    %6200 = vperm.xlu0 %6199, %v6177
    %v6201 = vpop.permute.xlu0 %6200
    %6204 = vset.pattern.permute.xlu0 0
    %6205 = vperm.xlu0 %6204, %v6178
    %v6206 = vpop.permute.xlu0 %6205
    %6209 = vset.pattern.permute.xlu0 0
    %6210 = vperm.xlu0 %6209, %v6179
    %v6211 = vpop.permute.xlu0 %6210
    %v6213 = vmul.f32 %v5869, %v6196
    %v6214 = vmul.f32 %v5871, %v6196
    %v6215 = vmul.f32 %v5875, %v6201
    %v6216 = vmul.f32 %v5877, %v6201
    %v6217 = vmul.f32 %v5881, %v6206
    %v6218 = vmul.f32 %v5883, %v6206
    %v6219 = vmul.f32 %v5887, %v6211
    %v6220 = vmul.f32 %v5889, %v6211
    %6222 = vset.pattern.permute.xlu0 0
    %6223 = vperm.xlu0 %6222, %v6189
    %v6224 = vpop.permute.xlu0 %6223
    %6227 = vset.pattern.permute.xlu0 0
    %6228 = vperm.xlu0 %6227, %v6190
    %v6229 = vpop.permute.xlu0 %6228
    %6232 = vset.pattern.permute.xlu0 0
    %6233 = vperm.xlu0 %6232, %v6191
    %v6234 = vpop.permute.xlu0 %6233
    %6237 = vset.pattern.permute.xlu0 0
    %6238 = vperm.xlu0 %6237, %v6192
    %v6239 = vpop.permute.xlu0 %6238
    %v6241 = vadd.f32 %v6213, %v6224
    %v6242 = vadd.f32 %v6214, %v6224
    %v6243 = vadd.f32 %v6215, %v6229
    %v6244 = vadd.f32 %v6216, %v6229
    %v6245 = vadd.f32 %v6217, %v6234
    %v6246 = vadd.f32 %v6218, %v6234
    %v6247 = vadd.f32 %v6219, %v6239
    %v6248 = vadd.f32 %v6220, %v6239
    %v6249 = vpack.c.bf16 %v3369, %v3367
    %v6250 = vpack.c.bf16 %v3370, %v3368
    %v6251 = vpack.c.bf16 %v3373, %v3371
    %v6252 = vpack.c.bf16 %v3374, %v3372
    %v6253 = vunpack.c.l.bf16 %v6249
    %v6254 = vunpack.c.l.bf16 %v6250
    %v6255 = vunpack.c.h.bf16 %v6249
    %v6256 = vunpack.c.h.bf16 %v6250
    %v6257 = vunpack.c.l.bf16 %v6251
    %v6258 = vunpack.c.l.bf16 %v6252
    %v6259 = vunpack.c.h.bf16 %v6251
    %v6260 = vunpack.c.h.bf16 %v6252
    %v6261 = vsub.f32 %v3367, %v6253
    %v6262 = vsub.f32 %v3368, %v6254
    %v6263 = vsub.f32 %v3369, %v6255
    %v6264 = vsub.f32 %v3370, %v6256
    %v6265 = vsub.f32 %v3371, %v6257
    %v6266 = vsub.f32 %v3372, %v6258
    %v6267 = vsub.f32 %v3373, %v6259
    %v6268 = vsub.f32 %v3374, %v6260
    %v6269 = vpack.c.bf16 %v6263, %v6261
    %v6270 = vpack.c.bf16 %v6264, %v6262
    %v6271 = vpack.c.bf16 %v6267, %v6265
    %v6272 = vpack.c.bf16 %v6268, %v6266
    %6273 = vmatprep.subr.bf16.mxu0 0
    %6274 = vmatpush1.bf16.msra.mxu0 1065369472
    %6275 = vmatprep.subr.bf16.mxu0 0
    %6276 = vmatpush1.bf16.msra.mxu0 1065369472
    %6277 = vmatprep.subr.bf16.mxu0 0
    %6278 = vmatpush1.bf16.msra.mxu0 1065369472
    %6279 = vmatprep.subr.bf16.mxu0 0
    %6280 = vmatpush1.bf16.msra.mxu0 1065369472
    %6281 = vmatprep.subr.bf16.mxu0 0
    %6282 = vmatpush1.bf16.msra.mxu0 1065369472
    %6283 = vmatprep.subr.bf16.mxu0 0
    %6284 = vmatpush1.bf16.msra.mxu0 1065369472
    %6285 = vmatprep.subr.bf16.mxu0 0
    %6286 = vmatpush1.bf16.msra.mxu0 1065369472
    %6287 = vmatprep.subr.bf16.mxu0 0
    %6288 = vmatpush1.bf16.msra.mxu0 1065369472
    %6289 = vmatprep.subr.bf16.mxu0 0
    %6290 = vmatpush1.bf16.msra.mxu0 1065369472
    %6291 = vmatprep.subr.bf16.mxu0 0
    %6292 = vmatpush1.bf16.msra.mxu0 1065369472
    %6293 = vmatprep.subr.bf16.mxu0 0
    %6294 = vmatpush1.bf16.msra.mxu0 1065369472
    %6295 = vmatprep.subr.bf16.mxu0 0
    %6296 = vmatpush1.bf16.msra.mxu0 1065369472
    %6297 = vmatprep.subr.bf16.mxu0 0
    %6298 = vmatpush1.bf16.msra.mxu0 1065369472
    %6299 = vmatprep.subr.bf16.mxu0 0
    %6300 = vmatpush1.bf16.msra.mxu0 1065369472
    %6301 = vmatprep.subr.bf16.mxu0 0
    %6302 = vmatpush1.bf16.msra.mxu0 1065369472
    %6303 = vmatprep.subr.bf16.mxu0 0
    %6304 = vmatpush1.bf16.msra.mxu0 1065369472
    %6305 = vmatprep.mubr.bf16.mxu0 %v6270
    %6306 = vmatmul.mubr.bf16.gmra.mrb[0].mxu0 %v6269
    %v6307 = vpop.f32.mrb[0].mxu0
    %v6308 = vadd.f32 0.0, %v6307
    %v6309 = vpop.f32.mrb[0].mxu0
    %v6310 = vpop.f32.mrb[0].mxu0
    %v6311 = vadd.f32 0.0, %v6310
    %v6312 = vpop.f32.mrb[0].mxu0
    %6313 = vmatprep.mubr.bf16.mxu0 %v6272
    %6314 = vmatmul.mubr.bf16.gmra.mrb[0].mxu0 %v6271
    %v6315 = vpop.f32.mrb[0].mxu0
    %v6316 = vadd.f32 0.0, %v6315
    %v6317 = vpop.f32.mrb[0].mxu0
    %v6318 = vpop.f32.mrb[0].mxu0
    %v6319 = vadd.f32 0.0, %v6318
    %v6320 = vpop.f32.mrb[0].mxu0
    %6321 = vdwg.mxu0
    %6322 = vmatprep.subr.bf16.mxu0 0
    %6323 = vmatpush1.bf16.msra.mxu0 1065369472
    %6324 = vmatprep.subr.bf16.mxu0 0
    %6325 = vmatpush1.bf16.msra.mxu0 1065369472
    %6326 = vmatprep.subr.bf16.mxu0 0
    %6327 = vmatpush1.bf16.msra.mxu0 1065369472
    %6328 = vmatprep.subr.bf16.mxu0 0
    %6329 = vmatpush1.bf16.msra.mxu0 1065369472
    %6330 = vmatprep.subr.bf16.mxu0 0
    %6331 = vmatpush1.bf16.msra.mxu0 1065369472
    %6332 = vmatprep.subr.bf16.mxu0 0
    %6333 = vmatpush1.bf16.msra.mxu0 1065369472
    %6334 = vmatprep.subr.bf16.mxu0 0
    %6335 = vmatpush1.bf16.msra.mxu0 1065369472
    %6336 = vmatprep.subr.bf16.mxu0 0
    %6337 = vmatpush1.bf16.msra.mxu0 1065369472
    %6338 = vmatprep.subr.bf16.mxu0 0
    %6339 = vmatpush1.bf16.msra.mxu0 1065369472
    %6340 = vmatprep.subr.bf16.mxu0 0
    %6341 = vmatpush1.bf16.msra.mxu0 1065369472
    %6342 = vmatprep.subr.bf16.mxu0 0
    %6343 = vmatpush1.bf16.msra.mxu0 1065369472
    %6344 = vmatprep.subr.bf16.mxu0 0
    %6345 = vmatpush1.bf16.msra.mxu0 1065369472
    %6346 = vmatprep.subr.bf16.mxu0 0
    %6347 = vmatpush1.bf16.msra.mxu0 1065369472
    %6348 = vmatprep.subr.bf16.mxu0 0
    %6349 = vmatpush1.bf16.msra.mxu0 1065369472
    %6350 = vmatprep.subr.bf16.mxu0 0
    %6351 = vmatpush1.bf16.msra.mxu0 1065369472
    %6352 = vmatprep.subr.bf16.mxu0 0
    %6353 = vmatpush1.bf16.msra.mxu0 1065369472
    %6354 = vmatprep.mubr.bf16.mxu0 %v6250
    %6355 = vmatmul.mubr.bf16.gmra.mrb[0].mxu0 %v6249
    %v6356 = vpop.f32.mrb[0].mxu0
    %v6357 = vadd.f32 %v6308, %v6356
    %v6358 = vpop.f32.mrb[0].mxu0
    %v6359 = vpop.f32.mrb[0].mxu0
    %v6360 = vadd.f32 %v6311, %v6359
    %v6361 = vpop.f32.mrb[0].mxu0
    %6362 = vmatprep.mubr.bf16.mxu0 %v6252
    %6363 = vmatmul.mubr.bf16.gmra.mrb[0].mxu0 %v6251
    %v6364 = vpop.f32.mrb[0].mxu0
    %v6365 = vadd.f32 %v6316, %v6364
    %v6366 = vpop.f32.mrb[0].mxu0
    %v6367 = vpop.f32.mrb[0].mxu0
    %v6368 = vadd.f32 %v6319, %v6367
    %v6369 = vpop.f32.mrb[0].mxu0
    %6370 = vdwg.mxu0
    %v6371 = vmul.f32 %v6357, 0.00390625
    %v6372 = vmul.f32 %v6360, 0.00390625
    %v6373 = vmul.f32 %v6365, 0.00390625
    %v6374 = vmul.f32 %v6368, 0.00390625
    %v6375 = vmul.f32 %v3367, %v3367
    %v6376 = vmul.f32 %v3368, %v3368
    %v6377 = vmul.f32 %v3369, %v3369
    %v6378 = vmul.f32 %v3370, %v3370
    %v6379 = vmul.f32 %v3371, %v3371
    %v6380 = vmul.f32 %v3372, %v3372
    %v6381 = vmul.f32 %v3373, %v3373
    %v6382 = vmul.f32 %v3374, %v3374
    %v6383 = vpack.c.bf16 %v6377, %v6375
    %v6384 = vpack.c.bf16 %v6378, %v6376
    %v6385 = vpack.c.bf16 %v6381, %v6379
    %v6386 = vpack.c.bf16 %v6382, %v6380
    %v6387 = vunpack.c.l.bf16 %v6383
    %v6388 = vunpack.c.l.bf16 %v6384
    %v6389 = vunpack.c.h.bf16 %v6383
    %v6390 = vunpack.c.h.bf16 %v6384
    %v6391 = vunpack.c.l.bf16 %v6385
    %v6392 = vunpack.c.l.bf16 %v6386
    %v6393 = vunpack.c.h.bf16 %v6385
    %v6394 = vunpack.c.h.bf16 %v6386
    %v6395 = vsub.f32 %v6375, %v6387
    %v6396 = vsub.f32 %v6376, %v6388
    %v6397 = vsub.f32 %v6377, %v6389
    %v6398 = vsub.f32 %v6378, %v6390
    %v6399 = vsub.f32 %v6379, %v6391
    %v6400 = vsub.f32 %v6380, %v6392
    %v6401 = vsub.f32 %v6381, %v6393
    %v6402 = vsub.f32 %v6382, %v6394
    %v6403 = vpack.c.bf16 %v6397, %v6395
    %v6404 = vpack.c.bf16 %v6398, %v6396
    %v6405 = vpack.c.bf16 %v6401, %v6399
    %v6406 = vpack.c.bf16 %v6402, %v6400
    %6407 = vmatprep.subr.bf16.mxu0 0
    %6408 = vmatpush1.bf16.msra.mxu0 1065369472
    %6409 = vmatprep.subr.bf16.mxu0 0
    %6410 = vmatpush1.bf16.msra.mxu0 1065369472
    %6411 = vmatprep.subr.bf16.mxu0 0
    %6412 = vmatpush1.bf16.msra.mxu0 1065369472
    %6413 = vmatprep.subr.bf16.mxu0 0
    %6414 = vmatpush1.bf16.msra.mxu0 1065369472
    %6415 = vmatprep.subr.bf16.mxu0 0
    %6416 = vmatpush1.bf16.msra.mxu0 1065369472
    %6417 = vmatprep.subr.bf16.mxu0 0
    %6418 = vmatpush1.bf16.msra.mxu0 1065369472
    %6419 = vmatprep.subr.bf16.mxu0 0
    %6420 = vmatpush1.bf16.msra.mxu0 1065369472
    %6421 = vmatprep.subr.bf16.mxu0 0
    %6422 = vmatpush1.bf16.msra.mxu0 1065369472
    %6423 = vmatprep.subr.bf16.mxu0 0
    %6424 = vmatpush1.bf16.msra.mxu0 1065369472
    %6425 = vmatprep.subr.bf16.mxu0 0
    %6426 = vmatpush1.bf16.msra.mxu0 1065369472
    %6427 = vmatprep.subr.bf16.mxu0 0
    %6428 = vmatpush1.bf16.msra.mxu0 1065369472
    %6429 = vmatprep.subr.bf16.mxu0 0
    %6430 = vmatpush1.bf16.msra.mxu0 1065369472
    %6431 = vmatprep.subr.bf16.mxu0 0
    %6432 = vmatpush1.bf16.msra.mxu0 1065369472
    %6433 = vmatprep.subr.bf16.mxu0 0
    %6434 = vmatpush1.bf16.msra.mxu0 1065369472
    %6435 = vmatprep.subr.bf16.mxu0 0
    %6436 = vmatpush1.bf16.msra.mxu0 1065369472
    %6437 = vmatprep.subr.bf16.mxu0 0
    %6438 = vmatpush1.bf16.msra.mxu0 1065369472
    %6439 = vmatprep.mubr.bf16.mxu0 %v6404
    %6440 = vmatmul.mubr.bf16.gmra.mrb[0].mxu0 %v6403
    %v6441 = vpop.f32.mrb[0].mxu0
    %v6442 = vadd.f32 0.0, %v6441
    %v6443 = vpop.f32.mrb[0].mxu0
    %v6444 = vpop.f32.mrb[0].mxu0
    %v6445 = vadd.f32 0.0, %v6444
    %v6446 = vpop.f32.mrb[0].mxu0
    %6447 = vmatprep.mubr.bf16.mxu0 %v6406
    %6448 = vmatmul.mubr.bf16.gmra.mrb[0].mxu0 %v6405
    %v6449 = vpop.f32.mrb[0].mxu0
    %v6450 = vadd.f32 0.0, %v6449
    %v6451 = vpop.f32.mrb[0].mxu0
    %v6452 = vpop.f32.mrb[0].mxu0
    %v6453 = vadd.f32 0.0, %v6452
    %v6454 = vpop.f32.mrb[0].mxu0
    %6455 = vdwg.mxu0
    %6456 = vmatprep.subr.bf16.mxu0 0
    %6457 = vmatpush1.bf16.msra.mxu0 1065369472
    %6458 = vmatprep.subr.bf16.mxu0 0
    %6459 = vmatpush1.bf16.msra.mxu0 1065369472
    %6460 = vmatprep.subr.bf16.mxu0 0
    %6461 = vmatpush1.bf16.msra.mxu0 1065369472
    %6462 = vmatprep.subr.bf16.mxu0 0
    %6463 = vmatpush1.bf16.msra.mxu0 1065369472
    %6464 = vmatprep.subr.bf16.mxu0 0
    %6465 = vmatpush1.bf16.msra.mxu0 1065369472
    %6466 = vmatprep.subr.bf16.mxu0 0
    %6467 = vmatpush1.bf16.msra.mxu0 1065369472
    %6468 = vmatprep.subr.bf16.mxu0 0
    %6469 = vmatpush1.bf16.msra.mxu0 1065369472
    %6470 = vmatprep.subr.bf16.mxu0 0
    %6471 = vmatpush1.bf16.msra.mxu0 1065369472
    %6472 = vmatprep.subr.bf16.mxu0 0
    %6473 = vmatpush1.bf16.msra.mxu0 1065369472
    %6474 = vmatprep.subr.bf16.mxu0 0
    %6475 = vmatpush1.bf16.msra.mxu0 1065369472
    %6476 = vmatprep.subr.bf16.mxu0 0
    %6477 = vmatpush1.bf16.msra.mxu0 1065369472
    %6478 = vmatprep.subr.bf16.mxu0 0
    %6479 = vmatpush1.bf16.msra.mxu0 1065369472
    %6480 = vmatprep.subr.bf16.mxu0 0
    %6481 = vmatpush1.bf16.msra.mxu0 1065369472
    %6482 = vmatprep.subr.bf16.mxu0 0
    %6483 = vmatpush1.bf16.msra.mxu0 1065369472
    %6484 = vmatprep.subr.bf16.mxu0 0
    %6485 = vmatpush1.bf16.msra.mxu0 1065369472
    %6486 = vmatprep.subr.bf16.mxu0 0
    %6487 = vmatpush1.bf16.msra.mxu0 1065369472
    %6488 = vmatprep.mubr.bf16.mxu0 %v6384
    %6489 = vmatmul.mubr.bf16.gmra.mrb[0].mxu0 %v6383
    %v6490 = vpop.f32.mrb[0].mxu0
    %v6491 = vadd.f32 %v6442, %v6490
    %v6492 = vpop.f32.mrb[0].mxu0
    %v6493 = vpop.f32.mrb[0].mxu0
    %v6494 = vadd.f32 %v6445, %v6493
    %v6495 = vpop.f32.mrb[0].mxu0
    %6496 = vmatprep.mubr.bf16.mxu0 %v6386
    %6497 = vmatmul.mubr.bf16.gmra.mrb[0].mxu0 %v6385
    %v6498 = vpop.f32.mrb[0].mxu0
    %v6499 = vadd.f32 %v6450, %v6498
    %v6500 = vpop.f32.mrb[0].mxu0
    %v6501 = vpop.f32.mrb[0].mxu0
    %v6502 = vadd.f32 %v6453, %v6501
    %v6503 = vpop.f32.mrb[0].mxu0
    %6504 = vdwg.mxu0
    %v6505 = vmul.f32 %v6491, 0.00390625
    %v6506 = vmul.f32 %v6494, 0.00390625
    %v6507 = vmul.f32 %v6499, 0.00390625
    %v6508 = vmul.f32 %v6502, 0.00390625
    %v6509 = vmul.f32 %v6371, %v6371
    %v6510 = vmul.f32 %v6372, %v6372
    %v6511 = vmul.f32 %v6373, %v6373
    %v6512 = vmul.f32 %v6374, %v6374
    %v6513 = vsub.f32 %v6505, %v6509
    %v6514 = vsub.f32 %v6506, %v6510
    %v6515 = vsub.f32 %v6507, %v6511
    %v6516 = vsub.f32 %v6508, %v6512
    %v6517 = vmax.f32 %v6513, 0.0
    %v6518 = vmax.f32 %v6514, 0.0
    %v6519 = vmax.f32 %v6515, 0.0
    %v6520 = vmax.f32 %v6516, 0.0
    %s6521 = scalar_lea.vmem %s7, 192
    %v6522 = vld [vmem:[%s6521] sm:$0xff]
    %v6523 = vld [vmem:[%s6521 + $0x8] sm:$0xff]
    %v6524 = vld [vmem:[%s6521 + $0x10] sm:$0xff]
    %v6525 = vld [vmem:[%s6521 + $0x18] sm:$0xff]
    %v6526 = vadd.f32 %v6517, 1e-05
    %v6527 = vadd.f32 %v6518, 1e-05
    %v6528 = vadd.f32 %v6519, 1e-05
    %v6529 = vadd.f32 %v6520, 1e-05
    %v6530 = vrsqrt.pop %v6526
    %v6531 = vrsqrt.pop %v6527
    %v6532 = vrsqrt.pop %v6528
    %v6533 = vrsqrt.pop %v6529
    %v6534 = vmul.f32 %v6522, %v6530
    %v6535 = vmul.f32 %v6523, %v6531
    %v6536 = vmul.f32 %v6524, %v6532
    %v6537 = vmul.f32 %v6525, %v6533
    %s6538 = scalar_lea.vmem %s8, 192
    %v6539 = vld [vmem:[%s6538] sm:$0xff]
    %v6540 = vld [vmem:[%s6538 + $0x8] sm:$0xff]
    %v6541 = vld [vmem:[%s6538 + $0x10] sm:$0xff]
    %v6542 = vld [vmem:[%s6538 + $0x18] sm:$0xff]
    %v6543 = vmul.f32 %v6371, %v6534
    %v6544 = vmul.f32 %v6372, %v6535
    %v6545 = vmul.f32 %v6373, %v6536
    %v6546 = vmul.f32 %v6374, %v6537
    %v6547 = vsub.f32 %v6539, %v6543
    %v6548 = vsub.f32 %v6540, %v6544
    %v6549 = vsub.f32 %v6541, %v6545
    %v6550 = vsub.f32 %v6542, %v6546
    %6552 = vset.pattern.permute.xlu0 0
    %6553 = vperm.xlu0 %6552, %v6534
    %v6554 = vpop.permute.xlu0 %6553
    %6557 = vset.pattern.permute.xlu0 0
    %6558 = vperm.xlu0 %6557, %v6535
    %v6559 = vpop.permute.xlu0 %6558
    %6562 = vset.pattern.permute.xlu0 0
    %6563 = vperm.xlu0 %6562, %v6536
    %v6564 = vpop.permute.xlu0 %6563
    %6567 = vset.pattern.permute.xlu0 0
    %6568 = vperm.xlu0 %6567, %v6537
    %v6569 = vpop.permute.xlu0 %6568
    %v6571 = vmul.f32 %v3367, %v6554
    %v6572 = vmul.f32 %v3368, %v6554
    %v6573 = vmul.f32 %v3369, %v6559
    %v6574 = vmul.f32 %v3370, %v6559
    %v6575 = vmul.f32 %v3371, %v6564
    %v6576 = vmul.f32 %v3372, %v6564
    %v6577 = vmul.f32 %v3373, %v6569
    %v6578 = vmul.f32 %v3374, %v6569
    %6580 = vset.pattern.permute.xlu0 0
    %6581 = vperm.xlu0 %6580, %v6547
    %v6582 = vpop.permute.xlu0 %6581
    %6585 = vset.pattern.permute.xlu0 0
    %6586 = vperm.xlu0 %6585, %v6548
    %v6587 = vpop.permute.xlu0 %6586
    %6590 = vset.pattern.permute.xlu0 0
    %6591 = vperm.xlu0 %6590, %v6549
    %v6592 = vpop.permute.xlu0 %6591
    %6595 = vset.pattern.permute.xlu0 0
    %6596 = vperm.xlu0 %6595, %v6550
    %v6597 = vpop.permute.xlu0 %6596
    %v6599 = vadd.f32 %v6571, %v6582
    %v6600 = vadd.f32 %v6572, %v6582
    %v6601 = vadd.f32 %v6573, %v6587
    %v6602 = vadd.f32 %v6574, %v6587
    %v6603 = vadd.f32 %v6575, %v6592
    %v6604 = vadd.f32 %v6576, %v6592
    %v6605 = vadd.f32 %v6577, %v6597
    %v6606 = vadd.f32 %v6578, %v6597
    %v6607 = vadd.f32 %v6241, %v6599
    %v6608 = vadd.f32 %v6242, %v6600
    %v6609 = vadd.f32 %v6243, %v6601
    %v6610 = vadd.f32 %v6244, %v6602
    %v6611 = vadd.f32 %v6245, %v6603
    %v6612 = vadd.f32 %v6246, %v6604
    %v6613 = vadd.f32 %v6247, %v6605
    %v6614 = vadd.f32 %v6248, %v6606
    %v6615 = vmax.f32 %v6607, 0.0
    %v6616 = vmax.f32 %v6608, 0.0
    %v6617 = vmax.f32 %v6609, 0.0
    %v6618 = vmax.f32 %v6610, 0.0
    %v6619 = vmax.f32 %v6611, 0.0
    %v6620 = vmax.f32 %v6612, 0.0
    %v6621 = vmax.f32 %v6613, 0.0
    %v6622 = vmax.f32 %v6614, 0.0
    %6623 = vst [vmem:[#allocation2] sm:$0xff] %v6615
    %6624 = vst [vmem:[#allocation2 + $0x8] sm:$0xff] %v6616
    %6625 = vst [vmem:[#allocation2 + $0x10] sm:$0xff] %v6617
    %6626 = vst [vmem:[#allocation2 + $0x18] sm:$0xff] %v6618
    %6627 = vst [vmem:[#allocation2 + $0x20] sm:$0xff] %v6619
    %6628 = vst [vmem:[#allocation2 + $0x28] sm:$0xff] %v6620
    %6629 = vst [vmem:[#allocation2 + $0x30] sm:$0xff] %v6621
    %6630 = vst [vmem:[#allocation2 + $0x38] sm:$0xff] %v6622
    // Predicated region
    $region38: #{tpu_custom_call.1} parent=1 // pred_check
      _
    $region39: #{tpu_custom_call.1} parent=1 // pred_check_branch
      %6632 = sbr.rel (0) target = $region41
    $region40: #{tpu_custom_call.1} parent=1 // pred_region
      %s6634 = ssub.s32 1024, 1024
      %6635 = vsyncadd [#allocation3], %s6634
      %s6636 = sshll.u32 [#allocation2], 4
      %s6637 = int_to_ptr.vmem [resolvable:$true] %s6636
      %6642 = dma.vmem_to_hbm [thread:$0]  %s6637, 1024, %s9, [#allocation3], 256, 256, 16
    $region41: #{tpu_custom_call.1} parent=1 // pred_fallthru
      _
    // Predicated region
    $region42: #{tpu_custom_call.1} parent=1 // pred_check
      _
    $region43: #{tpu_custom_call.1} parent=1 // pred_check_branch
      %6644 = sbr.rel (0) target = $region45
    $region44: #{tpu_custom_call.1} parent=1 // pred_region
      %6645 = dma.done [#allocation3], 1024
    $region45: #{tpu_custom_call.1} parent=1 // pred_fallthru
      _
    %6646 = vsyncpa [#allocation3], 1

</llo_original>
